<compile_context>
chip_gen: v7x
topology: tpu7x:2x2x1
jax: 0.10.0
libtpu: 0.0.40
codegen_flags: <defaults>
</compile_context>

<pallas_src>
import functools

import jax
import jax.numpy as jnp
from jax import lax
from jax.experimental import pallas as pl
from jax.experimental.pallas import tpu as pltpu


def _conv3x3_kernel(x_ref, w_ref, o_ref, *, H, W):
    # x_ref: (1, Cin, Lpad)   flattened zero-padded image, Lpad = (H+3)*(W+2)
    # w_ref: (9, Cout, Cin)   conv taps; tap k = (dy, dx) = (k // 3, k % 3)
    # o_ref: (1, Cout, H*(W+2)) conv output over the width-padded row layout
    Wp = W + 2
    n = H * Wp
    Cout = o_ref.shape[1]
    acc = jnp.zeros((Cout, n), dtype=jnp.float32)
    for dy in range(3):
        for dx in range(3):
            k = dy * 3 + dx
            off = dy * Wp + dx
            xs = x_ref[0, :, off:off + n]          # (Cin, n)   contiguous lane window
            wk = w_ref[k]                          # (Cout, Cin)
            acc = acc + jnp.dot(
                wk, xs,
                preferred_element_type=jnp.float32,
                precision=lax.Precision.HIGHEST,
            )
    o_ref[0] = acc.astype(o_ref.dtype)


def upsample(x, weight):
    """Conv2d(Cin -> Cout=2*Cin, 3x3, stride 1, pad 1, no bias) + PixelShuffle(2).

    x:      (B, Cin, H, W)
    weight: (Cout, Cin, 3, 3) with Cout = 2 * Cin (Cout must be divisible by 4)
    returns (B, Cout // 4, 2*H, 2*W)   -- same semantics as the PyTorch module.
    """
    B, Cin, H, W = x.shape
    Cout = weight.shape[0]
    assert weight.shape == (Cout, Cin, 3, 3)
    assert Cout % 4 == 0, "PixelShuffle(2) needs conv output channels divisible by 4"

    Wp = W + 2
    n = H * Wp                    # conv output columns per image (width-padded rows)
    Lpad = (H + 3) * Wp           # flattened padded image (extra tail row keeps all
                                  # shifted windows in bounds)

    # Single spatial zero-pad (the conv halo); flatten is a free row-major view.
    xpad = jnp.pad(x, ((0, 0), (0, 0), (1, 2), (1, 1)))
    xflat = xpad.reshape(B, Cin, Lpad)

    # Taps laid out as (9, Cout, Cin): tap k=(dy,dx) multiplies xpad[:, h+dy, w+dx].
    w_taps = jnp.transpose(weight, (2, 3, 0, 1)).reshape(9, Cout, Cin).astype(x.dtype)

    kernel = functools.partial(_conv3x3_kernel, H=H, W=W)

    itemsize = jnp.dtype(x.dtype).itemsize
    cost = pl.CostEstimate(
        flops=2 * B * 9 * Cin * Cout * n,
        transcendentals=0,
        bytes_accessed=(B * Cin * Lpad + 9 * Cout * Cin + B * Cout * n) * itemsize,
    )

    y = pl.pallas_call(
        kernel,
        out_shape=jax.ShapeDtypeStruct((B, Cout, n), x.dtype),
        grid_spec=pltpu.PrefetchScalarGridSpec(
            num_scalar_prefetch=0,
            grid=(B,),
            in_specs=[
                pl.BlockSpec((1, Cin, Lpad), lambda b: (b, 0, 0)),   # one image / step
                pl.BlockSpec((9, Cout, Cin), lambda b: (0, 0, 0)),   # taps resident
            ],
            out_specs=pl.BlockSpec((1, Cout, n), lambda b: (b, 0, 0)),
        ),
        compiler_params=pltpu.CompilerParams(
            dimension_semantics=("parallel",),
            vmem_limit_bytes=32 * 1024 * 1024,   # safe on v5e/v6e/v7x; blocks are small
        ),
        cost_estimate=cost,
    )(xflat, w_taps)

    # Drop the 2 wrap-around junk columns per row -> conv output in NCHW.
    y = y.reshape(B, Cout, H, Wp)[:, :, :, :W]
    # PixelShuffle(2): out[b, c, 2h+i, 2w+j] = y[b, 4c + 2i + j, h, w]
    Cps = Cout // 4
    out = (y.reshape(B, Cps, 2, 2, H, W)
             .transpose(0, 1, 4, 2, 5, 3)
             .reshape(B, Cps, 2 * H, 2 * W))
    return out


def _reference(x, weight):
    y = lax.conv_general_dilated(
        x, weight, window_strides=(1, 1), padding=((1, 1), (1, 1)),
        dimension_numbers=("NCHW", "OIHW", "NCHW"),
        precision=lax.Precision.HIGHEST)
    B, Cout, H, W = y.shape
    Cps = Cout // 4
    return (y.reshape(B, Cps, 2, 2, H, W)
              .transpose(0, 1, 4, 2, 5, 3)
              .reshape(B, Cps, 2 * H, 2 * W))


if __name__ == "__main__":
    key = jax.random.PRNGKey(0)
    kx, kw = jax.random.split(key)

    B, n_feat, H, W = 2, 4, 16, 16                  # small shapes; Upsample(n_feat=4)
    x = jax.random.normal(kx, (B, n_feat, H, W), dtype=jnp.float32)

    # Conv2d(n_feat, 2*n_feat, 3, padding=1, bias=False) weight (Kaiming-uniform-like).
    fan_in = n_feat * 9
    bound = 1.0 / (fan_in ** 0.5)
    weight = jax.random.uniform(kw, (2 * n_feat, n_feat, 3, 3),
                                dtype=jnp.float32, minval=-bound, maxval=bound)

    out = upsample(x, weight)
    out = jax.block_until_ready(out)

    ref = _reference(x, weight)
    assert out.shape == (B, n_feat // 2, 2 * H, 2 * W)
    assert jnp.allclose(out, ref, atol=2e-5, rtol=2e-5)

    print("KERNEL_OK")
</pallas_src>

<mosaic_0001>
module attributes {stable_mosaic.version = 11 : i64} {
  func.func @_conv3x3_kernel(%arg0: i32, %arg1: memref<1x4x342xf32, #tpu.memory_space<vmem>>, %arg2: memref<9x8x4xf32, #tpu.memory_space<vmem>>, %arg3: memref<1x8x288xf32, #tpu.memory_space<vmem>>) attributes {dimension_semantics = [#tpu.dimension_semantics<parallel>], iteration_bounds = array<i64: 2>, scalar_prefetch = 0 : i64, scratch_operands = 0 : i64, tpu.core_type = #tpu.core_type<tc>, window_params = [{transform_indices = @transform_0, window_bounds = array<i64: 1, 4, 342>}, {pipeline_mode = #tpu.pipeline_mode<synchronous>, transform_indices = @transform_1, window_bounds = array<i64: 9, 8, 4>}, {transform_indices = @transform_2, window_bounds = array<i64: 1, 8, 288>}]} {
    %cst = arith.constant 0.000000e+00 : f32
    %0 = vector.broadcast %cst : f32 to vector<8x288xf32>
    %c0 = arith.constant 0 : index
    %c0_0 = arith.constant 0 : index
    %c0_1 = arith.constant 0 : index
    %1 = vector.load %arg1[%c0, %c0_0, %c0_1] : memref<1x4x342xf32, #tpu.memory_space<vmem>>, vector<1x4x288xf32>
    %2 = vector.shape_cast %1 : vector<1x4x288xf32> to vector<4x288xf32>
    %c0_2 = arith.constant 0 : index
    %c0_3 = arith.constant 0 : index
    %c0_4 = arith.constant 0 : index
    %3 = vector.load %arg2[%c0_2, %c0_3, %c0_4] : memref<9x8x4xf32, #tpu.memory_space<vmem>>, vector<1x8x4xf32>
    %4 = vector.shape_cast %3 : vector<1x8x4xf32> to vector<8x4xf32>
    %cst_5 = arith.constant dense<0.000000e+00> : vector<8x288xf32>
    %5 = tpu.matmul %4, %2, %cst_5 {dimension_numbers = #tpu.dot_dimension_numbers<[1], [0], [0], [1], [0, 0, 1, 1], [], []>, precision = #tpu.contract_precision<fp32>} : vector<8x4xf32>, vector<4x288xf32>, vector<8x288xf32> -> vector<8x288xf32>
    %6 = arith.addf %0, %5 : vector<8x288xf32>
    %c0_6 = arith.constant 0 : index
    %c0_7 = arith.constant 0 : index
    %c1 = arith.constant 1 : index
    %7 = vector.load %arg1[%c0_6, %c0_7, %c1] : memref<1x4x342xf32, #tpu.memory_space<vmem>>, vector<1x4x288xf32>
    %8 = vector.shape_cast %7 : vector<1x4x288xf32> to vector<4x288xf32>
    %c1_8 = arith.constant 1 : index
    %c0_9 = arith.constant 0 : index
    %c0_10 = arith.constant 0 : index
    %9 = vector.load %arg2[%c1_8, %c0_9, %c0_10] : memref<9x8x4xf32, #tpu.memory_space<vmem>>, vector<1x8x4xf32>
    %10 = vector.shape_cast %9 : vector<1x8x4xf32> to vector<8x4xf32>
    %cst_11 = arith.constant dense<0.000000e+00> : vector<8x288xf32>
    %11 = tpu.matmul %10, %8, %cst_11 {dimension_numbers = #tpu.dot_dimension_numbers<[1], [0], [0], [1], [0, 0, 1, 1], [], []>, precision = #tpu.contract_precision<fp32>} : vector<8x4xf32>, vector<4x288xf32>, vector<8x288xf32> -> vector<8x288xf32>
    %12 = arith.addf %6, %11 : vector<8x288xf32>
    %c0_12 = arith.constant 0 : index
    %c0_13 = arith.constant 0 : index
    %c2 = arith.constant 2 : index
    %13 = vector.load %arg1[%c0_12, %c0_13, %c2] : memref<1x4x342xf32, #tpu.memory_space<vmem>>, vector<1x4x288xf32>
    %14 = vector.shape_cast %13 : vector<1x4x288xf32> to vector<4x288xf32>
    %c2_14 = arith.constant 2 : index
    %c0_15 = arith.constant 0 : index
    %c0_16 = arith.constant 0 : index
    %15 = vector.load %arg2[%c2_14, %c0_15, %c0_16] : memref<9x8x4xf32, #tpu.memory_space<vmem>>, vector<1x8x4xf32>
    %16 = vector.shape_cast %15 : vector<1x8x4xf32> to vector<8x4xf32>
    %cst_17 = arith.constant dense<0.000000e+00> : vector<8x288xf32>
    %17 = tpu.matmul %16, %14, %cst_17 {dimension_numbers = #tpu.dot_dimension_numbers<[1], [0], [0], [1], [0, 0, 1, 1], [], []>, precision = #tpu.contract_precision<fp32>} : vector<8x4xf32>, vector<4x288xf32>, vector<8x288xf32> -> vector<8x288xf32>
    %18 = arith.addf %12, %17 : vector<8x288xf32>
    %c0_18 = arith.constant 0 : index
    %c0_19 = arith.constant 0 : index
    %c18 = arith.constant 18 : index
    %19 = vector.load %arg1[%c0_18, %c0_19, %c18] : memref<1x4x342xf32, #tpu.memory_space<vmem>>, vector<1x4x288xf32>
    %20 = vector.shape_cast %19 : vector<1x4x288xf32> to vector<4x288xf32>
    %c3 = arith.constant 3 : index
    %c0_20 = arith.constant 0 : index
    %c0_21 = arith.constant 0 : index
    %21 = vector.load %arg2[%c3, %c0_20, %c0_21] : memref<9x8x4xf32, #tpu.memory_space<vmem>>, vector<1x8x4xf32>
    %22 = vector.shape_cast %21 : vector<1x8x4xf32> to vector<8x4xf32>
    %cst_22 = arith.constant dense<0.000000e+00> : vector<8x288xf32>
    %23 = tpu.matmul %22, %20, %cst_22 {dimension_numbers = #tpu.dot_dimension_numbers<[1], [0], [0], [1], [0, 0, 1, 1], [], []>, precision = #tpu.contract_precision<fp32>} : vector<8x4xf32>, vector<4x288xf32>, vector<8x288xf32> -> vector<8x288xf32>
    %24 = arith.addf %18, %23 : vector<8x288xf32>
    %c0_23 = arith.constant 0 : index
    %c0_24 = arith.constant 0 : index
    %c19 = arith.constant 19 : index
    %25 = vector.load %arg1[%c0_23, %c0_24, %c19] : memref<1x4x342xf32, #tpu.memory_space<vmem>>, vector<1x4x288xf32>
    %26 = vector.shape_cast %25 : vector<1x4x288xf32> to vector<4x288xf32>
    %c4 = arith.constant 4 : index
    %c0_25 = arith.constant 0 : index
    %c0_26 = arith.constant 0 : index
    %27 = vector.load %arg2[%c4, %c0_25, %c0_26] : memref<9x8x4xf32, #tpu.memory_space<vmem>>, vector<1x8x4xf32>
    %28 = vector.shape_cast %27 : vector<1x8x4xf32> to vector<8x4xf32>
    %cst_27 = arith.constant dense<0.000000e+00> : vector<8x288xf32>
    %29 = tpu.matmul %28, %26, %cst_27 {dimension_numbers = #tpu.dot_dimension_numbers<[1], [0], [0], [1], [0, 0, 1, 1], [], []>, precision = #tpu.contract_precision<fp32>} : vector<8x4xf32>, vector<4x288xf32>, vector<8x288xf32> -> vector<8x288xf32>
    %30 = arith.addf %24, %29 : vector<8x288xf32>
    %c0_28 = arith.constant 0 : index
    %c0_29 = arith.constant 0 : index
    %c20 = arith.constant 20 : index
    %31 = vector.load %arg1[%c0_28, %c0_29, %c20] : memref<1x4x342xf32, #tpu.memory_space<vmem>>, vector<1x4x288xf32>
    %32 = vector.shape_cast %31 : vector<1x4x288xf32> to vector<4x288xf32>
    %c5 = arith.constant 5 : index
    %c0_30 = arith.constant 0 : index
    %c0_31 = arith.constant 0 : index
    %33 = vector.load %arg2[%c5, %c0_30, %c0_31] : memref<9x8x4xf32, #tpu.memory_space<vmem>>, vector<1x8x4xf32>
    %34 = vector.shape_cast %33 : vector<1x8x4xf32> to vector<8x4xf32>
    %cst_32 = arith.constant dense<0.000000e+00> : vector<8x288xf32>
    %35 = tpu.matmul %34, %32, %cst_32 {dimension_numbers = #tpu.dot_dimension_numbers<[1], [0], [0], [1], [0, 0, 1, 1], [], []>, precision = #tpu.contract_precision<fp32>} : vector<8x4xf32>, vector<4x288xf32>, vector<8x288xf32> -> vector<8x288xf32>
    %36 = arith.addf %30, %35 : vector<8x288xf32>
    %c0_33 = arith.constant 0 : index
    %c0_34 = arith.constant 0 : index
    %c36 = arith.constant 36 : index
    %37 = vector.load %arg1[%c0_33, %c0_34, %c36] : memref<1x4x342xf32, #tpu.memory_space<vmem>>, vector<1x4x288xf32>
    %38 = vector.shape_cast %37 : vector<1x4x288xf32> to vector<4x288xf32>
    %c6 = arith.constant 6 : index
    %c0_35 = arith.constant 0 : index
    %c0_36 = arith.constant 0 : index
    %39 = vector.load %arg2[%c6, %c0_35, %c0_36] : memref<9x8x4xf32, #tpu.memory_space<vmem>>, vector<1x8x4xf32>
    %40 = vector.shape_cast %39 : vector<1x8x4xf32> to vector<8x4xf32>
    %cst_37 = arith.constant dense<0.000000e+00> : vector<8x288xf32>
    %41 = tpu.matmul %40, %38, %cst_37 {dimension_numbers = #tpu.dot_dimension_numbers<[1], [0], [0], [1], [0, 0, 1, 1], [], []>, precision = #tpu.contract_precision<fp32>} : vector<8x4xf32>, vector<4x288xf32>, vector<8x288xf32> -> vector<8x288xf32>
    %42 = arith.addf %36, %41 : vector<8x288xf32>
    %c0_38 = arith.constant 0 : index
    %c0_39 = arith.constant 0 : index
    %c37 = arith.constant 37 : index
    %43 = vector.load %arg1[%c0_38, %c0_39, %c37] : memref<1x4x342xf32, #tpu.memory_space<vmem>>, vector<1x4x288xf32>
    %44 = vector.shape_cast %43 : vector<1x4x288xf32> to vector<4x288xf32>
    %c7 = arith.constant 7 : index
    %c0_40 = arith.constant 0 : index
    %c0_41 = arith.constant 0 : index
    %45 = vector.load %arg2[%c7, %c0_40, %c0_41] : memref<9x8x4xf32, #tpu.memory_space<vmem>>, vector<1x8x4xf32>
    %46 = vector.shape_cast %45 : vector<1x8x4xf32> to vector<8x4xf32>
    %cst_42 = arith.constant dense<0.000000e+00> : vector<8x288xf32>
    %47 = tpu.matmul %46, %44, %cst_42 {dimension_numbers = #tpu.dot_dimension_numbers<[1], [0], [0], [1], [0, 0, 1, 1], [], []>, precision = #tpu.contract_precision<fp32>} : vector<8x4xf32>, vector<4x288xf32>, vector<8x288xf32> -> vector<8x288xf32>
    %48 = arith.addf %42, %47 : vector<8x288xf32>
    %c0_43 = arith.constant 0 : index
    %c0_44 = arith.constant 0 : index
    %c38 = arith.constant 38 : index
    %49 = vector.load %arg1[%c0_43, %c0_44, %c38] : memref<1x4x342xf32, #tpu.memory_space<vmem>>, vector<1x4x288xf32>
    %50 = vector.shape_cast %49 : vector<1x4x288xf32> to vector<4x288xf32>
    %c8 = arith.constant 8 : index
    %c0_45 = arith.constant 0 : index
    %c0_46 = arith.constant 0 : index
    %51 = vector.load %arg2[%c8, %c0_45, %c0_46] : memref<9x8x4xf32, #tpu.memory_space<vmem>>, vector<1x8x4xf32>
    %52 = vector.shape_cast %51 : vector<1x8x4xf32> to vector<8x4xf32>
    %cst_47 = arith.constant dense<0.000000e+00> : vector<8x288xf32>
    %53 = tpu.matmul %52, %50, %cst_47 {dimension_numbers = #tpu.dot_dimension_numbers<[1], [0], [0], [1], [0, 0, 1, 1], [], []>, precision = #tpu.contract_precision<fp32>} : vector<8x4xf32>, vector<4x288xf32>, vector<8x288xf32> -> vector<8x288xf32>
    %54 = arith.addf %48, %53 : vector<8x288xf32>
    %c0_48 = arith.constant 0 : index
    %c0_49 = arith.constant 0 : index
    %c0_50 = arith.constant 0 : index
    %55 = vector.load %arg3[%c0_48, %c0_49, %c0_50] : memref<1x8x288xf32, #tpu.memory_space<vmem>>, vector<1x8x288xf32>
    %56 = vector.shape_cast %55 : vector<1x8x288xf32> to vector<8x288xf32>
    %57 = vector.shape_cast %54 : vector<8x288xf32> to vector<1x8x288xf32>
    tpu.vector_store %arg3[%c0_48, %c0_49, %c0_50], %57 {strides = array<i32>} : memref<1x8x288xf32, #tpu.memory_space<vmem>>, vector<1x8x288xf32>,
    return
  }
  func.func @transform_0(%arg0: i32) -> (i32, i32, i32) {
    %c0_i32 = arith.constant 0 : i32
    %c0_i32_0 = arith.constant 0 : i32
    %c0_i32_1 = arith.constant 0 : i32
    return %arg0, %c0_i32, %c0_i32_0 : i32, i32, i32
  }
  func.func @transform_1(%arg0: i32) -> (i32, i32, i32) {
    %c0_i32 = arith.constant 0 : i32
    %c0_i32_0 = arith.constant 0 : i32
    %c0_i32_1 = arith.constant 0 : i32
    %c0_i32_2 = arith.constant 0 : i32
    return %c0_i32, %c0_i32_0, %c0_i32_1 : i32, i32, i32
  }
  func.func @transform_2(%arg0: i32) -> (i32, i32, i32) {
    %c0_i32 = arith.constant 0 : i32
    %c0_i32_0 = arith.constant 0 : i32
    %c0_i32_1 = arith.constant 0 : i32
    return %arg0, %c0_i32, %c0_i32_0 : i32, i32, i32
  }
}

</mosaic_0001>

<llo_original>
// kernel: tpu_custom_call.1
$region0: #{tpu_custom_call.1}
  #allocation0 [shape = 'u32[]', space=smem, size = 0x4, offset = 0x4, fixed_abs, tag = 'smem constant byte address 0x4 - core index']
  #allocation1 [shape = 'u32[144,128]{1,0:T(1,128)}', space=vmem, size = 0x12000, scoped, tag = 'internal scratch']
  %s0 = inlined_call_operand.vmem [shape: f32[2,4,342], index: 0, kind: input, shape index: {}]
  %s1 = inlined_call_operand.vmem [shape: f32[9,8,4], index: 1, kind: input, shape index: {}]
  %s2 = inlined_call_operand.hbm [shape: f32[2,8,288], index: 2, kind: output, shape index: {}]
  %s3 = sld [smem:[#allocation0]]
  $region41: #{tpu_custom_call.1} parent=0
    _
  %s5 = ssub.s32 1, %s3
  %s6 = scalar_select 0, %s5, %s3
  $region1: #{tpu_custom_call.1} parent=0
    #allocation2 [shape = 'u8[24576]{0}', space=vmem, size = 0x6000, scoped, tag = 'output window, operand 0']
    #allocation3 [shape = 's32[2]{0}', space=sflag, size = 0x8, scoped, tag = 'scoped memory for tpu_custom_call.1']
    %7 = vsyncpa [#allocation3], 0
    %s8 = scalar_lea.sflag [#allocation3], 1
    %9 = vsyncpa %s8, 0
    loop: start=0, step=1, limit=4
    $region2: #{tpu_custom_call.1} parent=1 // loop_pre_header
      _
    $region3: #{tpu_custom_call.1} parent=1 // loop_header
      %s11 = sphi 0, %s15
      %p12 = scmp.ge.s32.totalorder %s11, 4
      %s21 = sphi 0, %s23
      %s24 = sphi 0, %s21
      %s25 = sphi 0, %s24
      %s41 = sphi 0, %s25
      %s45 = sphi 0, %s45
      %s47 = sphi 0, %s45
      %s48 = sphi 0, %s47
      %s62 = sphi 0, %s48
      %s68 = sphi 0, %s70
      %s71 = sphi 0, %s68
      %s72 = sphi 0, %s71
      %s88 = sphi 0, %s72
    $region4: #{tpu_custom_call.1} parent=1 // loop_header_branch
      %14 = sbr.rel (%p12) target = $region8
    $region5: #{tpu_custom_call.1} parent=1 // loop_body
      %s16 = ssub.s32 %s11, 1
      %s17 = ssub.s32 %s11, 2
      %s18 = sadd.s32 %s11, 1
      %s19 = ssub.s32 %s11, %s18
      %p20 = scmp.eq.s32.totalorder %s19, 0
      %s22 = sadd.s32 %s21, 1
      %s23 = scalar_select %p20, %s21, %s22
      %p26 = pneg %p20
      %p27 = scmp.eq.s32.totalorder %s11, 1
      %p28 = por %p26, %p27
      %p29 = scmp.ne.s32.totalorder %s21, %s24
      %p30 = scmp.eq.s32.totalorder %s11, 0
      %p31 = por %p29, %p30
      %p32 = scmp.ne.s32.totalorder %s21, %s24
      %p33 = scmp.eq.s32.totalorder %s16, 1
      %p34 = por %p32, %p33
      %p35 = scmp.ne.s32.totalorder %s24, %s25
      %p36 = scmp.eq.s32.totalorder %s16, 0
      %p37 = por %p35, %p36
      %p38 = scmp.ne.s32.totalorder %s24, %s25
      %p39 = scmp.eq.s32.totalorder %s17, 1
      %p40 = por %p38, %p39
      %p42 = scmp.ne.s32.totalorder %s25, %s41
      %p43 = scmp.eq.s32.totalorder %s17, 0
      %p44 = por %p42, %p43
      %s46 = sadd.s32 %s45, 1
      %p49 = scmp.eq.s32.totalorder %s11, 1
      %p50 = scmp.ne.s32.totalorder %s45, %s47
      %p51 = scmp.eq.s32.totalorder %s11, 0
      %p52 = por %p50, %p51
      %p53 = scmp.ne.s32.totalorder %s45, %s47
      %p54 = scmp.eq.s32.totalorder %s16, 1
      %p55 = por %p53, %p54
      %p56 = scmp.ne.s32.totalorder %s47, %s48
      %p57 = scmp.eq.s32.totalorder %s16, 0
      %p58 = por %p56, %p57
      %p59 = scmp.ne.s32.totalorder %s47, %s48
      %p60 = scmp.eq.s32.totalorder %s17, 1
      %p61 = por %p59, %p60
      %p63 = scmp.ne.s32.totalorder %s48, %s62
      %p64 = scmp.eq.s32.totalorder %s17, 0
      %p65 = por %p63, %p64
      %s66 = ssub.s32 %s11, %s18
      %p67 = scmp.eq.s32.totalorder %s66, 0
      %s69 = sadd.s32 %s68, 1
      %s70 = scalar_select %p67, %s68, %s69
      %p73 = pneg %p67
      %p74 = scmp.eq.s32.totalorder %s11, 1
      %p75 = por %p73, %p74
      %p76 = scmp.ne.s32.totalorder %s68, %s71
      %p77 = scmp.eq.s32.totalorder %s11, 0
      %p78 = por %p76, %p77
      %p79 = scmp.ne.s32.totalorder %s68, %s71
      %p80 = scmp.eq.s32.totalorder %s16, 1
      %p81 = por %p79, %p80
      %p82 = scmp.ne.s32.totalorder %s71, %s72
      %p83 = scmp.eq.s32.totalorder %s16, 0
      %p84 = por %p82, %p83
      %p85 = scmp.ne.s32.totalorder %s71, %s72
      %p86 = scmp.eq.s32.totalorder %s17, 1
      %p87 = por %p85, %p86
      %p89 = scmp.ne.s32.totalorder %s72, %s88
      %p90 = scmp.eq.s32.totalorder %s17, 0
      %p91 = por %p89, %p90
      %p92 = scmp.le.s32.totalorder 1, %s11
      %p93 = scmp.lt.s32.totalorder %s11, 3
      %p94 = pnand %p92, %p93
      %p95 = pneg %p94
      // Predicated region
      $region9: #{tpu_custom_call.1} parent=5 // pred_check
        _
      $region10: #{tpu_custom_call.1} parent=5 // pred_check_branch
        %97 = sbr.rel (%p94) target = $region12
      $region11: #{tpu_custom_call.1} parent=5 // pred_region
        %s98 = ssub.s32 %s11, 1
        // Predicated region
        $region13: #{tpu_custom_call.1} parent=11 // pred_check
          %p99 = pneg %p58
        $region14: #{tpu_custom_call.1} parent=11 // pred_check_branch
          %101 = sbr.rel (%p99) target = $region16
        $region15: #{tpu_custom_call.1} parent=11 // pred_region
          _
        $region16: #{tpu_custom_call.1} parent=11 // pred_fallthru
          _
      $region12: #{tpu_custom_call.1} parent=5 // pred_fallthru
        _
      %p102 = scmp.lt.s32.totalorder %s11, 2
      // Predicated region
      $region17: #{tpu_custom_call.1} parent=5 // pred_check
        %p103 = pneg %p102
      $region18: #{tpu_custom_call.1} parent=5 // pred_check_branch
        %105 = sbr.rel (%p103) target = $region20
      $region19: #{tpu_custom_call.1} parent=5 // pred_region
        // Predicated region
        $region21: #{tpu_custom_call.1} parent=19 // pred_check
          %p106 = pneg %p31
        $region22: #{tpu_custom_call.1} parent=19 // pred_check_branch
          %108 = sbr.rel (%p106) target = $region24
        $region23: #{tpu_custom_call.1} parent=19 // pred_region
          %p109 = scmp.lt.s32.totalorder %s11, 1
          %s110 = scalar_select %p109, %s11, 1
          %s111 = smul.addr %s110, 3
          %s112 = smul.addr %s111, 4
          %s113 = scalar_lea.vmem %s0, %s112
        $region24: #{tpu_custom_call.1} parent=19 // pred_fallthru
          _
      $region20: #{tpu_custom_call.1} parent=5 // pred_fallthru
        _
      %p114 = scmp.le.s32.totalorder 1, %s11
      %p115 = scmp.lt.s32.totalorder %s11, 3
      %p116 = pnand %p114, %p115
      %p117 = pneg %p116
      // Predicated region
      $region25: #{tpu_custom_call.1} parent=5 // pred_check
        _
      $region26: #{tpu_custom_call.1} parent=5 // pred_check_branch
        %119 = sbr.rel (%p116) target = $region28
      $region27: #{tpu_custom_call.1} parent=5 // pred_region
        %s120 = ssub.s32 %s11, 1
        %p121 = scmp.lt.s32.totalorder %s16, 1
        %s122 = scalar_select %p121, %s16, 1
        %s123 = smul.addr %s122, 3
        %s124 = smul.addr %s123, 4
        %s125 = scalar_lea.vmem %s0, %s124
        %p126 = pneg %p37
        %p127 = pneg %p34
        %p128 = pneg %p58
        %p129 = pneg %p55
        %p130 = pneg %p84
        %p131 = pneg %p81
        %s132 = sand.u32 %s71, 1
        %s133 = scalar_lea.sflag [#allocation3], %s132
        %s134 = sand.u32 %s71, 1
        %s135 = smul.addr %s134, 24
        %s136 = scalar_lea.vmem [#allocation2], %s135
        %p137 = scmp.lt.s32.totalorder %s16, 1
        %s138 = scalar_select %p137, %s16, 1
        %s139 = smul.addr %s138, 3
        %s140 = smul.addr %s139, 4
        %s141 = scalar_lea.vmem %s0, %s140
        %v142 = vld [vmem:[%s141] sm:$0xff]
        %v143 = vld [vmem:[%s141 + $0x8] sm:$0xf]
        %v144 = vld [vmem:[%s1] sm:$0xff]
        %s145 = scalar_lea.vmem %s1, 8
        %v146 = vld [vmem:[%s145] sm:$0xff]
        %v149 = vcombine.high %v142, %v142
        %150 = vrot.lane.b32.xlu0 %v142, 127
        %v151 = vpop.permute.xlu0 %150
        %152 = vrot.lane.b32.xlu0 %v149, 127
        %v153 = vpop.permute.xlu0 %152
        %154 = vrot.lane.b32.xlu0 %v143, 127
        %v155 = vpop.permute.xlu0 %154
        %vm156 = vcmask 1039360
        %v157 = vsel %vm156, %v151, %v153
        %v158 = vsel %vm156, %v153, %v155
        %vm159 = vcmask 31744
        %v161 = vsel %vm159, %v146, 0
        %vm163 = vcmask 1043456
        %v164 = vsel %vm163, %v157, 0
        %v166 = vsel %vm163, %v158, 0
        %v168 = vsel %vm163, %v155, 0
        %v170 = vand.u32 %v166, 4294901760
        %171 = vmatprep.subr.mxu0 %v170
        %v172 = vand.u32 %v164, 4294901760
        %173 = vmatpush1.msra.mxu0 %v172
        %174 = vmatprep.subr.mxu0 0.0
        %175 = vmatpush1.msra.mxu0 0.0
        %176 = vmatprep.subr.mxu0 0.0
        %177 = vmatpush1.msra.mxu0 0.0
        %178 = vmatprep.subr.mxu0 0.0
        %179 = vmatpush1.msra.mxu0 0.0
        %180 = vmatprep.subr.mxu0 0.0
        %181 = vmatpush1.msra.mxu0 0.0
        %182 = vmatprep.subr.mxu0 0.0
        %183 = vmatpush1.msra.mxu0 0.0
        %184 = vmatprep.subr.mxu0 0.0
        %185 = vmatpush1.msra.mxu0 0.0
        %186 = vmatprep.subr.mxu0 0.0
        %187 = vmatpush1.msra.mxu0 0.0
        %188 = vmatprep.subr.mxu0 0.0
        %189 = vmatpush1.msra.mxu0 0.0
        %190 = vmatprep.subr.mxu0 0.0
        %191 = vmatpush1.msra.mxu0 0.0
        %192 = vmatprep.subr.mxu0 0.0
        %193 = vmatpush1.msra.mxu0 0.0
        %194 = vmatprep.subr.mxu0 0.0
        %195 = vmatpush1.msra.mxu0 0.0
        %196 = vmatprep.subr.mxu0 0.0
        %197 = vmatpush1.msra.mxu0 0.0
        %198 = vmatprep.subr.mxu0 0.0
        %199 = vmatpush1.msra.mxu0 0.0
        %200 = vmatprep.subr.mxu0 0.0
        %201 = vmatpush1.msra.mxu0 0.0
        %202 = vmatprep.subr.mxu0 0.0
        %203 = vmatpush1.msra.mxu0 0.0
        %204 = vmatprep.subr.mxu0 0.0
        %205 = vmatpush1.msra.mxu0 0.0
        %206 = vmatprep.subr.mxu0 0.0
        %207 = vmatpush1.msra.mxu0 0.0
        %208 = vmatprep.subr.mxu0 0.0
        %209 = vmatpush1.msra.mxu0 0.0
        %210 = vmatprep.subr.mxu0 0.0
        %211 = vmatpush1.msra.mxu0 0.0
        %212 = vmatprep.subr.mxu0 0.0
        %213 = vmatpush1.msra.mxu0 0.0
        %214 = vmatprep.subr.mxu0 0.0
        %215 = vmatpush1.msra.mxu0 0.0
        %216 = vmatprep.subr.mxu0 0.0
        %217 = vmatpush1.msra.mxu0 0.0
        %218 = vmatprep.subr.mxu0 0.0
        %219 = vmatpush1.msra.mxu0 0.0
        %220 = vmatprep.subr.mxu0 0.0
        %221 = vmatpush1.msra.mxu0 0.0
        %222 = vmatprep.subr.mxu0 0.0
        %223 = vmatpush1.msra.mxu0 0.0
        %224 = vmatprep.subr.mxu0 0.0
        %225 = vmatpush1.msra.mxu0 0.0
        %226 = vmatprep.subr.mxu0 0.0
        %227 = vmatpush1.msra.mxu0 0.0
        %228 = vmatprep.subr.mxu0 0.0
        %229 = vmatpush1.msra.mxu0 0.0
        %230 = vmatprep.subr.mxu0 0.0
        %231 = vmatpush1.msra.mxu0 0.0
        %232 = vmatprep.subr.mxu0 0.0
        %233 = vmatpush1.msra.mxu0 0.0
        %234 = vmatprep.subr.mxu0 0.0
        %235 = vmatpush1.msra.mxu0 0.0
        %236 = vmatprep.mubr.f32.mxu0 0.0
        %v237 = vand.u32 %v161, 4294901760
        %v238 = vsub.f32 %v161, %v237
        %v239 = vand.u32 %v238, 4294901760
        %v240 = vsub.f32 %v238, %v239
        %v241 = vand.u32 %v240, 4294901760
        %242 = vmatmul.mubr.f32.gmra.mrb[0].mxu0 %v241
        %v243 = vpop.f32.mrb[0].mxu0
        %v244 = vadd.f32 0.0, %v243
        %v245 = vpop.f32.mrb[0].mxu0
        %v246 = vadd.f32 0.0, %v245
        %247 = vdwg.mxu0
        %v248 = vand.u32 %v166, 4294901760
        %v249 = vsub.f32 %v166, %v248
        %v250 = vand.u32 %v249, 4294901760
        %v251 = vsub.f32 %v249, %v250
        %v252 = vand.u32 %v251, 4294901760
        %253 = vmatprep.subr.mxu0 %v252
        %v254 = vand.u32 %v164, 4294901760
        %v255 = vsub.f32 %v164, %v254
        %v256 = vand.u32 %v255, 4294901760
        %v257 = vsub.f32 %v255, %v256
        %v258 = vand.u32 %v257, 4294901760
        %259 = vmatpush1.msra.mxu0 %v258
        %260 = vmatprep.subr.mxu0 0.0
        %261 = vmatpush1.msra.mxu0 0.0
        %262 = vmatprep.subr.mxu0 0.0
        %263 = vmatpush1.msra.mxu0 0.0
        %264 = vmatprep.subr.mxu0 0.0
        %265 = vmatpush1.msra.mxu0 0.0
        %266 = vmatprep.subr.mxu0 0.0
        %267 = vmatpush1.msra.mxu0 0.0
        %268 = vmatprep.subr.mxu0 0.0
        %269 = vmatpush1.msra.mxu0 0.0
        %270 = vmatprep.subr.mxu0 0.0
        %271 = vmatpush1.msra.mxu0 0.0
        %272 = vmatprep.subr.mxu0 0.0
        %273 = vmatpush1.msra.mxu0 0.0
        %274 = vmatprep.subr.mxu0 0.0
        %275 = vmatpush1.msra.mxu0 0.0
        %276 = vmatprep.subr.mxu0 0.0
        %277 = vmatpush1.msra.mxu0 0.0
        %278 = vmatprep.subr.mxu0 0.0
        %279 = vmatpush1.msra.mxu0 0.0
        %280 = vmatprep.subr.mxu0 0.0
        %281 = vmatpush1.msra.mxu0 0.0
        %282 = vmatprep.subr.mxu0 0.0
        %283 = vmatpush1.msra.mxu0 0.0
        %284 = vmatprep.subr.mxu0 0.0
        %285 = vmatpush1.msra.mxu0 0.0
        %286 = vmatprep.subr.mxu0 0.0
        %287 = vmatpush1.msra.mxu0 0.0
        %288 = vmatprep.subr.mxu0 0.0
        %289 = vmatpush1.msra.mxu0 0.0
        %290 = vmatprep.subr.mxu0 0.0
        %291 = vmatpush1.msra.mxu0 0.0
        %292 = vmatprep.subr.mxu0 0.0
        %293 = vmatpush1.msra.mxu0 0.0
        %294 = vmatprep.subr.mxu0 0.0
        %295 = vmatpush1.msra.mxu0 0.0
        %296 = vmatprep.subr.mxu0 0.0
        %297 = vmatpush1.msra.mxu0 0.0
        %298 = vmatprep.subr.mxu0 0.0
        %299 = vmatpush1.msra.mxu0 0.0
        %300 = vmatprep.subr.mxu0 0.0
        %301 = vmatpush1.msra.mxu0 0.0
        %302 = vmatprep.subr.mxu0 0.0
        %303 = vmatpush1.msra.mxu0 0.0
        %304 = vmatprep.subr.mxu0 0.0
        %305 = vmatpush1.msra.mxu0 0.0
        %306 = vmatprep.subr.mxu0 0.0
        %307 = vmatpush1.msra.mxu0 0.0
        %308 = vmatprep.subr.mxu0 0.0
        %309 = vmatpush1.msra.mxu0 0.0
        %310 = vmatprep.subr.mxu0 0.0
        %311 = vmatpush1.msra.mxu0 0.0
        %312 = vmatprep.subr.mxu0 0.0
        %313 = vmatpush1.msra.mxu0 0.0
        %314 = vmatprep.subr.mxu0 0.0
        %315 = vmatpush1.msra.mxu0 0.0
        %316 = vmatprep.subr.mxu0 0.0
        %317 = vmatpush1.msra.mxu0 0.0
        %318 = vmatprep.subr.mxu0 0.0
        %319 = vmatpush1.msra.mxu0 0.0
        %320 = vmatprep.subr.mxu0 0.0
        %321 = vmatpush1.msra.mxu0 0.0
        %322 = vmatprep.mubr.f32.mxu0 0.0
        %v323 = vand.u32 %v161, 4294901760
        %324 = vmatmul.mubr.f32.gmra.mrb[0].mxu0 %v323
        %v325 = vpop.f32.mrb[0].mxu0
        %v326 = vadd.f32 %v244, %v325
        %v327 = vpop.f32.mrb[0].mxu0
        %v328 = vadd.f32 %v246, %v327
        %329 = vdwg.mxu0
        %v330 = vand.u32 %v166, 4294901760
        %v331 = vsub.f32 %v166, %v330
        %332 = vmatprep.subr.mxu0 %v331
        %v333 = vand.u32 %v164, 4294901760
        %v334 = vsub.f32 %v164, %v333
        %335 = vmatpush1.msra.mxu0 %v334
        %336 = vmatprep.subr.mxu0 0.0
        %337 = vmatpush1.msra.mxu0 0.0
        %338 = vmatprep.subr.mxu0 0.0
        %339 = vmatpush1.msra.mxu0 0.0
        %340 = vmatprep.subr.mxu0 0.0
        %341 = vmatpush1.msra.mxu0 0.0
        %342 = vmatprep.subr.mxu0 0.0
        %343 = vmatpush1.msra.mxu0 0.0
        %344 = vmatprep.subr.mxu0 0.0
        %345 = vmatpush1.msra.mxu0 0.0
        %346 = vmatprep.subr.mxu0 0.0
        %347 = vmatpush1.msra.mxu0 0.0
        %348 = vmatprep.subr.mxu0 0.0
        %349 = vmatpush1.msra.mxu0 0.0
        %350 = vmatprep.subr.mxu0 0.0
        %351 = vmatpush1.msra.mxu0 0.0
        %352 = vmatprep.subr.mxu0 0.0
        %353 = vmatpush1.msra.mxu0 0.0
        %354 = vmatprep.subr.mxu0 0.0
        %355 = vmatpush1.msra.mxu0 0.0
        %356 = vmatprep.subr.mxu0 0.0
        %357 = vmatpush1.msra.mxu0 0.0
        %358 = vmatprep.subr.mxu0 0.0
        %359 = vmatpush1.msra.mxu0 0.0
        %360 = vmatprep.subr.mxu0 0.0
        %361 = vmatpush1.msra.mxu0 0.0
        %362 = vmatprep.subr.mxu0 0.0
        %363 = vmatpush1.msra.mxu0 0.0
        %364 = vmatprep.subr.mxu0 0.0
        %365 = vmatpush1.msra.mxu0 0.0
        %366 = vmatprep.subr.mxu0 0.0
        %367 = vmatpush1.msra.mxu0 0.0
        %368 = vmatprep.subr.mxu0 0.0
        %369 = vmatpush1.msra.mxu0 0.0
        %370 = vmatprep.subr.mxu0 0.0
        %371 = vmatpush1.msra.mxu0 0.0
        %372 = vmatprep.subr.mxu0 0.0
        %373 = vmatpush1.msra.mxu0 0.0
        %374 = vmatprep.subr.mxu0 0.0
        %375 = vmatpush1.msra.mxu0 0.0
        %376 = vmatprep.subr.mxu0 0.0
        %377 = vmatpush1.msra.mxu0 0.0
        %378 = vmatprep.subr.mxu0 0.0
        %379 = vmatpush1.msra.mxu0 0.0
        %380 = vmatprep.subr.mxu0 0.0
        %381 = vmatpush1.msra.mxu0 0.0
        %382 = vmatprep.subr.mxu0 0.0
        %383 = vmatpush1.msra.mxu0 0.0
        %384 = vmatprep.subr.mxu0 0.0
        %385 = vmatpush1.msra.mxu0 0.0
        %386 = vmatprep.subr.mxu0 0.0
        %387 = vmatpush1.msra.mxu0 0.0
        %388 = vmatprep.subr.mxu0 0.0
        %389 = vmatpush1.msra.mxu0 0.0
        %390 = vmatprep.subr.mxu0 0.0
        %391 = vmatpush1.msra.mxu0 0.0
        %392 = vmatprep.subr.mxu0 0.0
        %393 = vmatpush1.msra.mxu0 0.0
        %394 = vmatprep.subr.mxu0 0.0
        %395 = vmatpush1.msra.mxu0 0.0
        %396 = vmatprep.subr.mxu0 0.0
        %397 = vmatpush1.msra.mxu0 0.0
        %398 = vmatprep.mubr.f32.mxu0 0.0
        %v399 = vand.u32 %v161, 4294901760
        %v400 = vsub.f32 %v161, %v399
        %401 = vmatmul.mubr.f32.gmra.mrb[0].mxu0 %v400
        %v402 = vpop.f32.mrb[0].mxu0
        %v403 = vadd.f32 %v326, %v402
        %v404 = vpop.f32.mrb[0].mxu0
        %v405 = vadd.f32 %v328, %v404
        %406 = vdwg.mxu0
        %v407 = vand.u32 %v166, 4294901760
        %408 = vmatprep.subr.mxu0 %v407
        %v409 = vand.u32 %v164, 4294901760
        %410 = vmatpush1.msra.mxu0 %v409
        %411 = vmatprep.subr.mxu0 0.0
        %412 = vmatpush1.msra.mxu0 0.0
        %413 = vmatprep.subr.mxu0 0.0
        %414 = vmatpush1.msra.mxu0 0.0
        %415 = vmatprep.subr.mxu0 0.0
        %416 = vmatpush1.msra.mxu0 0.0
        %417 = vmatprep.subr.mxu0 0.0
        %418 = vmatpush1.msra.mxu0 0.0
        %419 = vmatprep.subr.mxu0 0.0
        %420 = vmatpush1.msra.mxu0 0.0
        %421 = vmatprep.subr.mxu0 0.0
        %422 = vmatpush1.msra.mxu0 0.0
        %423 = vmatprep.subr.mxu0 0.0
        %424 = vmatpush1.msra.mxu0 0.0
        %425 = vmatprep.subr.mxu0 0.0
        %426 = vmatpush1.msra.mxu0 0.0
        %427 = vmatprep.subr.mxu0 0.0
        %428 = vmatpush1.msra.mxu0 0.0
        %429 = vmatprep.subr.mxu0 0.0
        %430 = vmatpush1.msra.mxu0 0.0
        %431 = vmatprep.subr.mxu0 0.0
        %432 = vmatpush1.msra.mxu0 0.0
        %433 = vmatprep.subr.mxu0 0.0
        %434 = vmatpush1.msra.mxu0 0.0
        %435 = vmatprep.subr.mxu0 0.0
        %436 = vmatpush1.msra.mxu0 0.0
        %437 = vmatprep.subr.mxu0 0.0
        %438 = vmatpush1.msra.mxu0 0.0
        %439 = vmatprep.subr.mxu0 0.0
        %440 = vmatpush1.msra.mxu0 0.0
        %441 = vmatprep.subr.mxu0 0.0
        %442 = vmatpush1.msra.mxu0 0.0
        %443 = vmatprep.subr.mxu0 0.0
        %444 = vmatpush1.msra.mxu0 0.0
        %445 = vmatprep.subr.mxu0 0.0
        %446 = vmatpush1.msra.mxu0 0.0
        %447 = vmatprep.subr.mxu0 0.0
        %448 = vmatpush1.msra.mxu0 0.0
        %449 = vmatprep.subr.mxu0 0.0
        %450 = vmatpush1.msra.mxu0 0.0
        %451 = vmatprep.subr.mxu0 0.0
        %452 = vmatpush1.msra.mxu0 0.0
        %453 = vmatprep.subr.mxu0 0.0
        %454 = vmatpush1.msra.mxu0 0.0
        %455 = vmatprep.subr.mxu0 0.0
        %456 = vmatpush1.msra.mxu0 0.0
        %457 = vmatprep.subr.mxu0 0.0
        %458 = vmatpush1.msra.mxu0 0.0
        %459 = vmatprep.subr.mxu0 0.0
        %460 = vmatpush1.msra.mxu0 0.0
        %461 = vmatprep.subr.mxu0 0.0
        %462 = vmatpush1.msra.mxu0 0.0
        %463 = vmatprep.subr.mxu0 0.0
        %464 = vmatpush1.msra.mxu0 0.0
        %465 = vmatprep.subr.mxu0 0.0
        %466 = vmatpush1.msra.mxu0 0.0
        %467 = vmatprep.subr.mxu0 0.0
        %468 = vmatpush1.msra.mxu0 0.0
        %469 = vmatprep.subr.mxu0 0.0
        %470 = vmatpush1.msra.mxu0 0.0
        %471 = vmatprep.subr.mxu0 0.0
        %472 = vmatpush1.msra.mxu0 0.0
        %473 = vmatprep.mubr.f32.mxu0 0.0
        %v474 = vand.u32 %v161, 4294901760
        %v475 = vsub.f32 %v161, %v474
        %v476 = vand.u32 %v475, 4294901760
        %477 = vmatmul.mubr.f32.gmra.mrb[0].mxu0 %v476
        %v478 = vpop.f32.mrb[0].mxu0
        %v479 = vadd.f32 %v403, %v478
        %v480 = vpop.f32.mrb[0].mxu0
        %v481 = vadd.f32 %v405, %v480
        %482 = vdwg.mxu0
        %v483 = vand.u32 %v166, 4294901760
        %v484 = vsub.f32 %v166, %v483
        %v485 = vand.u32 %v484, 4294901760
        %486 = vmatprep.subr.mxu0 %v485
        %v487 = vand.u32 %v164, 4294901760
        %v488 = vsub.f32 %v164, %v487
        %v489 = vand.u32 %v488, 4294901760
        %490 = vmatpush1.msra.mxu0 %v489
        %491 = vmatprep.subr.mxu0 0.0
        %492 = vmatpush1.msra.mxu0 0.0
        %493 = vmatprep.subr.mxu0 0.0
        %494 = vmatpush1.msra.mxu0 0.0
        %495 = vmatprep.subr.mxu0 0.0
        %496 = vmatpush1.msra.mxu0 0.0
        %497 = vmatprep.subr.mxu0 0.0
        %498 = vmatpush1.msra.mxu0 0.0
        %499 = vmatprep.subr.mxu0 0.0
        %500 = vmatpush1.msra.mxu0 0.0
        %501 = vmatprep.subr.mxu0 0.0
        %502 = vmatpush1.msra.mxu0 0.0
        %503 = vmatprep.subr.mxu0 0.0
        %504 = vmatpush1.msra.mxu0 0.0
        %505 = vmatprep.subr.mxu0 0.0
        %506 = vmatpush1.msra.mxu0 0.0
        %507 = vmatprep.subr.mxu0 0.0
        %508 = vmatpush1.msra.mxu0 0.0
        %509 = vmatprep.subr.mxu0 0.0
        %510 = vmatpush1.msra.mxu0 0.0
        %511 = vmatprep.subr.mxu0 0.0
        %512 = vmatpush1.msra.mxu0 0.0
        %513 = vmatprep.subr.mxu0 0.0
        %514 = vmatpush1.msra.mxu0 0.0
        %515 = vmatprep.subr.mxu0 0.0
        %516 = vmatpush1.msra.mxu0 0.0
        %517 = vmatprep.subr.mxu0 0.0
        %518 = vmatpush1.msra.mxu0 0.0
        %519 = vmatprep.subr.mxu0 0.0
        %520 = vmatpush1.msra.mxu0 0.0
        %521 = vmatprep.subr.mxu0 0.0
        %522 = vmatpush1.msra.mxu0 0.0
        %523 = vmatprep.subr.mxu0 0.0
        %524 = vmatpush1.msra.mxu0 0.0
        %525 = vmatprep.subr.mxu0 0.0
        %526 = vmatpush1.msra.mxu0 0.0
        %527 = vmatprep.subr.mxu0 0.0
        %528 = vmatpush1.msra.mxu0 0.0
        %529 = vmatprep.subr.mxu0 0.0
        %530 = vmatpush1.msra.mxu0 0.0
        %531 = vmatprep.subr.mxu0 0.0
        %532 = vmatpush1.msra.mxu0 0.0
        %533 = vmatprep.subr.mxu0 0.0
        %534 = vmatpush1.msra.mxu0 0.0
        %535 = vmatprep.subr.mxu0 0.0
        %536 = vmatpush1.msra.mxu0 0.0
        %537 = vmatprep.subr.mxu0 0.0
        %538 = vmatpush1.msra.mxu0 0.0
        %539 = vmatprep.subr.mxu0 0.0
        %540 = vmatpush1.msra.mxu0 0.0
        %541 = vmatprep.subr.mxu0 0.0
        %542 = vmatpush1.msra.mxu0 0.0
        %543 = vmatprep.subr.mxu0 0.0
        %544 = vmatpush1.msra.mxu0 0.0
        %545 = vmatprep.subr.mxu0 0.0
        %546 = vmatpush1.msra.mxu0 0.0
        %547 = vmatprep.subr.mxu0 0.0
        %548 = vmatpush1.msra.mxu0 0.0
        %549 = vmatprep.subr.mxu0 0.0
        %550 = vmatpush1.msra.mxu0 0.0
        %551 = vmatprep.subr.mxu0 0.0
        %552 = vmatpush1.msra.mxu0 0.0
        %553 = vmatprep.mubr.f32.mxu0 0.0
        %v554 = vand.u32 %v161, 4294901760
        %555 = vmatmul.mubr.f32.gmra.mrb[0].mxu0 %v554
        %v556 = vpop.f32.mrb[0].mxu0
        %v557 = vadd.f32 %v479, %v556
        %v558 = vpop.f32.mrb[0].mxu0
        %v559 = vadd.f32 %v481, %v558
        %560 = vdwg.mxu0
        %v561 = vand.u32 %v166, 4294901760
        %562 = vmatprep.subr.mxu0 %v561
        %v563 = vand.u32 %v164, 4294901760
        %564 = vmatpush1.msra.mxu0 %v563
        %565 = vmatprep.subr.mxu0 0.0
        %566 = vmatpush1.msra.mxu0 0.0
        %567 = vmatprep.subr.mxu0 0.0
        %568 = vmatpush1.msra.mxu0 0.0
        %569 = vmatprep.subr.mxu0 0.0
        %570 = vmatpush1.msra.mxu0 0.0
        %571 = vmatprep.subr.mxu0 0.0
        %572 = vmatpush1.msra.mxu0 0.0
        %573 = vmatprep.subr.mxu0 0.0
        %574 = vmatpush1.msra.mxu0 0.0
        %575 = vmatprep.subr.mxu0 0.0
        %576 = vmatpush1.msra.mxu0 0.0
        %577 = vmatprep.subr.mxu0 0.0
        %578 = vmatpush1.msra.mxu0 0.0
        %579 = vmatprep.subr.mxu0 0.0
        %580 = vmatpush1.msra.mxu0 0.0
        %581 = vmatprep.subr.mxu0 0.0
        %582 = vmatpush1.msra.mxu0 0.0
        %583 = vmatprep.subr.mxu0 0.0
        %584 = vmatpush1.msra.mxu0 0.0
        %585 = vmatprep.subr.mxu0 0.0
        %586 = vmatpush1.msra.mxu0 0.0
        %587 = vmatprep.subr.mxu0 0.0
        %588 = vmatpush1.msra.mxu0 0.0
        %589 = vmatprep.subr.mxu0 0.0
        %590 = vmatpush1.msra.mxu0 0.0
        %591 = vmatprep.subr.mxu0 0.0
        %592 = vmatpush1.msra.mxu0 0.0
        %593 = vmatprep.subr.mxu0 0.0
        %594 = vmatpush1.msra.mxu0 0.0
        %595 = vmatprep.subr.mxu0 0.0
        %596 = vmatpush1.msra.mxu0 0.0
        %597 = vmatprep.subr.mxu0 0.0
        %598 = vmatpush1.msra.mxu0 0.0
        %599 = vmatprep.subr.mxu0 0.0
        %600 = vmatpush1.msra.mxu0 0.0
        %601 = vmatprep.subr.mxu0 0.0
        %602 = vmatpush1.msra.mxu0 0.0
        %603 = vmatprep.subr.mxu0 0.0
        %604 = vmatpush1.msra.mxu0 0.0
        %605 = vmatprep.subr.mxu0 0.0
        %606 = vmatpush1.msra.mxu0 0.0
        %607 = vmatprep.subr.mxu0 0.0
        %608 = vmatpush1.msra.mxu0 0.0
        %609 = vmatprep.subr.mxu0 0.0
        %610 = vmatpush1.msra.mxu0 0.0
        %611 = vmatprep.subr.mxu0 0.0
        %612 = vmatpush1.msra.mxu0 0.0
        %613 = vmatprep.subr.mxu0 0.0
        %614 = vmatpush1.msra.mxu0 0.0
        %615 = vmatprep.subr.mxu0 0.0
        %616 = vmatpush1.msra.mxu0 0.0
        %617 = vmatprep.subr.mxu0 0.0
        %618 = vmatpush1.msra.mxu0 0.0
        %619 = vmatprep.subr.mxu0 0.0
        %620 = vmatpush1.msra.mxu0 0.0
        %621 = vmatprep.subr.mxu0 0.0
        %622 = vmatpush1.msra.mxu0 0.0
        %623 = vmatprep.subr.mxu0 0.0
        %624 = vmatpush1.msra.mxu0 0.0
        %625 = vmatprep.subr.mxu0 0.0
        %626 = vmatpush1.msra.mxu0 0.0
        %627 = vmatprep.mubr.f32.mxu0 0.0
        %v628 = vand.u32 %v161, 4294901760
        %629 = vmatmul.mubr.f32.gmra.mrb[0].mxu0 %v628
        %v630 = vpop.f32.mrb[0].mxu0
        %v631 = vadd.f32 %v557, %v630
        %v632 = vpop.f32.mrb[0].mxu0
        %v633 = vadd.f32 %v559, %v632
        %634 = vdwg.mxu0
        %635 = vmatprep.subr.mxu0 0.0
        %v636 = vand.u32 %v168, 4294901760
        %637 = vmatpush1.msra.mxu0 %v636
        %638 = vmatprep.subr.mxu0 0.0
        %639 = vmatpush1.msra.mxu0 0.0
        %640 = vmatprep.subr.mxu0 0.0
        %641 = vmatpush1.msra.mxu0 0.0
        %642 = vmatprep.subr.mxu0 0.0
        %643 = vmatpush1.msra.mxu0 0.0
        %644 = vmatprep.subr.mxu0 0.0
        %645 = vmatpush1.msra.mxu0 0.0
        %646 = vmatprep.subr.mxu0 0.0
        %647 = vmatpush1.msra.mxu0 0.0
        %648 = vmatprep.subr.mxu0 0.0
        %649 = vmatpush1.msra.mxu0 0.0
        %650 = vmatprep.subr.mxu0 0.0
        %651 = vmatpush1.msra.mxu0 0.0
        %652 = vmatprep.subr.mxu0 0.0
        %653 = vmatpush1.msra.mxu0 0.0
        %654 = vmatprep.subr.mxu0 0.0
        %655 = vmatpush1.msra.mxu0 0.0
        %656 = vmatprep.subr.mxu0 0.0
        %657 = vmatpush1.msra.mxu0 0.0
        %658 = vmatprep.subr.mxu0 0.0
        %659 = vmatpush1.msra.mxu0 0.0
        %660 = vmatprep.subr.mxu0 0.0
        %661 = vmatpush1.msra.mxu0 0.0
        %662 = vmatprep.subr.mxu0 0.0
        %663 = vmatpush1.msra.mxu0 0.0
        %664 = vmatprep.subr.mxu0 0.0
        %665 = vmatpush1.msra.mxu0 0.0
        %666 = vmatprep.subr.mxu0 0.0
        %667 = vmatpush1.msra.mxu0 0.0
        %668 = vmatprep.subr.mxu0 0.0
        %669 = vmatpush1.msra.mxu0 0.0
        %670 = vmatprep.subr.mxu0 0.0
        %671 = vmatpush1.msra.mxu0 0.0
        %672 = vmatprep.subr.mxu0 0.0
        %673 = vmatpush1.msra.mxu0 0.0
        %674 = vmatprep.subr.mxu0 0.0
        %675 = vmatpush1.msra.mxu0 0.0
        %676 = vmatprep.subr.mxu0 0.0
        %677 = vmatpush1.msra.mxu0 0.0
        %678 = vmatprep.subr.mxu0 0.0
        %679 = vmatpush1.msra.mxu0 0.0
        %680 = vmatprep.subr.mxu0 0.0
        %681 = vmatpush1.msra.mxu0 0.0
        %682 = vmatprep.subr.mxu0 0.0
        %683 = vmatpush1.msra.mxu0 0.0
        %684 = vmatprep.subr.mxu0 0.0
        %685 = vmatpush1.msra.mxu0 0.0
        %686 = vmatprep.subr.mxu0 0.0
        %687 = vmatpush1.msra.mxu0 0.0
        %688 = vmatprep.subr.mxu0 0.0
        %689 = vmatpush1.msra.mxu0 0.0
        %690 = vmatprep.subr.mxu0 0.0
        %691 = vmatpush1.msra.mxu0 0.0
        %692 = vmatprep.subr.mxu0 0.0
        %693 = vmatpush1.msra.mxu0 0.0
        %694 = vmatprep.subr.mxu0 0.0
        %695 = vmatpush1.msra.mxu0 0.0
        %696 = vmatprep.subr.mxu0 0.0
        %697 = vmatpush1.msra.mxu0 0.0
        %698 = vmatprep.subr.mxu0 0.0
        %699 = vmatpush1.msra.mxu0 0.0
        %700 = vmatprep.mubr.f32.mxu0 0.0
        %v701 = vand.u32 %v161, 4294901760
        %v702 = vsub.f32 %v161, %v701
        %v703 = vand.u32 %v702, 4294901760
        %v704 = vsub.f32 %v702, %v703
        %v705 = vand.u32 %v704, 4294901760
        %706 = vmatmul.mubr.f32.gmra.mrb[0].mxu0 %v705
        %v707 = vpop.f32.mrb[0].mxu0
        %v708 = vadd.f32 0.0, %v707
        %v709 = vpop.f32.mrb[0].mxu0
        %710 = vdwg.mxu0
        %711 = vmatprep.subr.mxu0 0.0
        %v712 = vand.u32 %v168, 4294901760
        %v713 = vsub.f32 %v168, %v712
        %v714 = vand.u32 %v713, 4294901760
        %v715 = vsub.f32 %v713, %v714
        %v716 = vand.u32 %v715, 4294901760
        %717 = vmatpush1.msra.mxu0 %v716
        %718 = vmatprep.subr.mxu0 0.0
        %719 = vmatpush1.msra.mxu0 0.0
        %720 = vmatprep.subr.mxu0 0.0
        %721 = vmatpush1.msra.mxu0 0.0
        %722 = vmatprep.subr.mxu0 0.0
        %723 = vmatpush1.msra.mxu0 0.0
        %724 = vmatprep.subr.mxu0 0.0
        %725 = vmatpush1.msra.mxu0 0.0
        %726 = vmatprep.subr.mxu0 0.0
        %727 = vmatpush1.msra.mxu0 0.0
        %728 = vmatprep.subr.mxu0 0.0
        %729 = vmatpush1.msra.mxu0 0.0
        %730 = vmatprep.subr.mxu0 0.0
        %731 = vmatpush1.msra.mxu0 0.0
        %732 = vmatprep.subr.mxu0 0.0
        %733 = vmatpush1.msra.mxu0 0.0
        %734 = vmatprep.subr.mxu0 0.0
        %735 = vmatpush1.msra.mxu0 0.0
        %736 = vmatprep.subr.mxu0 0.0
        %737 = vmatpush1.msra.mxu0 0.0
        %738 = vmatprep.subr.mxu0 0.0
        %739 = vmatpush1.msra.mxu0 0.0
        %740 = vmatprep.subr.mxu0 0.0
        %741 = vmatpush1.msra.mxu0 0.0
        %742 = vmatprep.subr.mxu0 0.0
        %743 = vmatpush1.msra.mxu0 0.0
        %744 = vmatprep.subr.mxu0 0.0
        %745 = vmatpush1.msra.mxu0 0.0
        %746 = vmatprep.subr.mxu0 0.0
        %747 = vmatpush1.msra.mxu0 0.0
        %748 = vmatprep.subr.mxu0 0.0
        %749 = vmatpush1.msra.mxu0 0.0
        %750 = vmatprep.subr.mxu0 0.0
        %751 = vmatpush1.msra.mxu0 0.0
        %752 = vmatprep.subr.mxu0 0.0
        %753 = vmatpush1.msra.mxu0 0.0
        %754 = vmatprep.subr.mxu0 0.0
        %755 = vmatpush1.msra.mxu0 0.0
        %756 = vmatprep.subr.mxu0 0.0
        %757 = vmatpush1.msra.mxu0 0.0
        %758 = vmatprep.subr.mxu0 0.0
        %759 = vmatpush1.msra.mxu0 0.0
        %760 = vmatprep.subr.mxu0 0.0
        %761 = vmatpush1.msra.mxu0 0.0
        %762 = vmatprep.subr.mxu0 0.0
        %763 = vmatpush1.msra.mxu0 0.0
        %764 = vmatprep.subr.mxu0 0.0
        %765 = vmatpush1.msra.mxu0 0.0
        %766 = vmatprep.subr.mxu0 0.0
        %767 = vmatpush1.msra.mxu0 0.0
        %768 = vmatprep.subr.mxu0 0.0
        %769 = vmatpush1.msra.mxu0 0.0
        %770 = vmatprep.subr.mxu0 0.0
        %771 = vmatpush1.msra.mxu0 0.0
        %772 = vmatprep.subr.mxu0 0.0
        %773 = vmatpush1.msra.mxu0 0.0
        %774 = vmatprep.subr.mxu0 0.0
        %775 = vmatpush1.msra.mxu0 0.0
        %776 = vmatprep.subr.mxu0 0.0
        %777 = vmatpush1.msra.mxu0 0.0
        %778 = vmatprep.subr.mxu0 0.0
        %779 = vmatpush1.msra.mxu0 0.0
        %780 = vmatprep.mubr.f32.mxu0 0.0
        %v781 = vand.u32 %v161, 4294901760
        %782 = vmatmul.mubr.f32.gmra.mrb[0].mxu0 %v781
        %v783 = vpop.f32.mrb[0].mxu0
        %v784 = vadd.f32 %v708, %v783
        %v785 = vpop.f32.mrb[0].mxu0
        %786 = vdwg.mxu0
        %787 = vmatprep.subr.mxu0 0.0
        %v788 = vand.u32 %v168, 4294901760
        %v789 = vsub.f32 %v168, %v788
        %790 = vmatpush1.msra.mxu0 %v789
        %791 = vmatprep.subr.mxu0 0.0
        %792 = vmatpush1.msra.mxu0 0.0
        %793 = vmatprep.subr.mxu0 0.0
        %794 = vmatpush1.msra.mxu0 0.0
        %795 = vmatprep.subr.mxu0 0.0
        %796 = vmatpush1.msra.mxu0 0.0
        %797 = vmatprep.subr.mxu0 0.0
        %798 = vmatpush1.msra.mxu0 0.0
        %799 = vmatprep.subr.mxu0 0.0
        %800 = vmatpush1.msra.mxu0 0.0
        %801 = vmatprep.subr.mxu0 0.0
        %802 = vmatpush1.msra.mxu0 0.0
        %803 = vmatprep.subr.mxu0 0.0
        %804 = vmatpush1.msra.mxu0 0.0
        %805 = vmatprep.subr.mxu0 0.0
        %806 = vmatpush1.msra.mxu0 0.0
        %807 = vmatprep.subr.mxu0 0.0
        %808 = vmatpush1.msra.mxu0 0.0
        %809 = vmatprep.subr.mxu0 0.0
        %810 = vmatpush1.msra.mxu0 0.0
        %811 = vmatprep.subr.mxu0 0.0
        %812 = vmatpush1.msra.mxu0 0.0
        %813 = vmatprep.subr.mxu0 0.0
        %814 = vmatpush1.msra.mxu0 0.0
        %815 = vmatprep.subr.mxu0 0.0
        %816 = vmatpush1.msra.mxu0 0.0
        %817 = vmatprep.subr.mxu0 0.0
        %818 = vmatpush1.msra.mxu0 0.0
        %819 = vmatprep.subr.mxu0 0.0
        %820 = vmatpush1.msra.mxu0 0.0
        %821 = vmatprep.subr.mxu0 0.0
        %822 = vmatpush1.msra.mxu0 0.0
        %823 = vmatprep.subr.mxu0 0.0
        %824 = vmatpush1.msra.mxu0 0.0
        %825 = vmatprep.subr.mxu0 0.0
        %826 = vmatpush1.msra.mxu0 0.0
        %827 = vmatprep.subr.mxu0 0.0
        %828 = vmatpush1.msra.mxu0 0.0
        %829 = vmatprep.subr.mxu0 0.0
        %830 = vmatpush1.msra.mxu0 0.0
        %831 = vmatprep.subr.mxu0 0.0
        %832 = vmatpush1.msra.mxu0 0.0
        %833 = vmatprep.subr.mxu0 0.0
        %834 = vmatpush1.msra.mxu0 0.0
        %835 = vmatprep.subr.mxu0 0.0
        %836 = vmatpush1.msra.mxu0 0.0
        %837 = vmatprep.subr.mxu0 0.0
        %838 = vmatpush1.msra.mxu0 0.0
        %839 = vmatprep.subr.mxu0 0.0
        %840 = vmatpush1.msra.mxu0 0.0
        %841 = vmatprep.subr.mxu0 0.0
        %842 = vmatpush1.msra.mxu0 0.0
        %843 = vmatprep.subr.mxu0 0.0
        %844 = vmatpush1.msra.mxu0 0.0
        %845 = vmatprep.subr.mxu0 0.0
        %846 = vmatpush1.msra.mxu0 0.0
        %847 = vmatprep.subr.mxu0 0.0
        %848 = vmatpush1.msra.mxu0 0.0
        %849 = vmatprep.subr.mxu0 0.0
        %850 = vmatpush1.msra.mxu0 0.0
        %851 = vmatprep.subr.mxu0 0.0
        %852 = vmatpush1.msra.mxu0 0.0
        %853 = vmatprep.mubr.f32.mxu0 0.0
        %v854 = vand.u32 %v161, 4294901760
        %v855 = vsub.f32 %v161, %v854
        %856 = vmatmul.mubr.f32.gmra.mrb[0].mxu0 %v855
        %v857 = vpop.f32.mrb[0].mxu0
        %v858 = vadd.f32 %v784, %v857
        %v859 = vpop.f32.mrb[0].mxu0
        %860 = vdwg.mxu0
        %861 = vmatprep.subr.mxu0 0.0
        %v862 = vand.u32 %v168, 4294901760
        %863 = vmatpush1.msra.mxu0 %v862
        %864 = vmatprep.subr.mxu0 0.0
        %865 = vmatpush1.msra.mxu0 0.0
        %866 = vmatprep.subr.mxu0 0.0
        %867 = vmatpush1.msra.mxu0 0.0
        %868 = vmatprep.subr.mxu0 0.0
        %869 = vmatpush1.msra.mxu0 0.0
        %870 = vmatprep.subr.mxu0 0.0
        %871 = vmatpush1.msra.mxu0 0.0
        %872 = vmatprep.subr.mxu0 0.0
        %873 = vmatpush1.msra.mxu0 0.0
        %874 = vmatprep.subr.mxu0 0.0
        %875 = vmatpush1.msra.mxu0 0.0
        %876 = vmatprep.subr.mxu0 0.0
        %877 = vmatpush1.msra.mxu0 0.0
        %878 = vmatprep.subr.mxu0 0.0
        %879 = vmatpush1.msra.mxu0 0.0
        %880 = vmatprep.subr.mxu0 0.0
        %881 = vmatpush1.msra.mxu0 0.0
        %882 = vmatprep.subr.mxu0 0.0
        %883 = vmatpush1.msra.mxu0 0.0
        %884 = vmatprep.subr.mxu0 0.0
        %885 = vmatpush1.msra.mxu0 0.0
        %886 = vmatprep.subr.mxu0 0.0
        %887 = vmatpush1.msra.mxu0 0.0
        %888 = vmatprep.subr.mxu0 0.0
        %889 = vmatpush1.msra.mxu0 0.0
        %890 = vmatprep.subr.mxu0 0.0
        %891 = vmatpush1.msra.mxu0 0.0
        %892 = vmatprep.subr.mxu0 0.0
        %893 = vmatpush1.msra.mxu0 0.0
        %894 = vmatprep.subr.mxu0 0.0
        %895 = vmatpush1.msra.mxu0 0.0
        %896 = vmatprep.subr.mxu0 0.0
        %897 = vmatpush1.msra.mxu0 0.0
        %898 = vmatprep.subr.mxu0 0.0
        %899 = vmatpush1.msra.mxu0 0.0
        %900 = vmatprep.subr.mxu0 0.0
        %901 = vmatpush1.msra.mxu0 0.0
        %902 = vmatprep.subr.mxu0 0.0
        %903 = vmatpush1.msra.mxu0 0.0
        %904 = vmatprep.subr.mxu0 0.0
        %905 = vmatpush1.msra.mxu0 0.0
        %906 = vmatprep.subr.mxu0 0.0
        %907 = vmatpush1.msra.mxu0 0.0
        %908 = vmatprep.subr.mxu0 0.0
        %909 = vmatpush1.msra.mxu0 0.0
        %910 = vmatprep.subr.mxu0 0.0
        %911 = vmatpush1.msra.mxu0 0.0
        %912 = vmatprep.subr.mxu0 0.0
        %913 = vmatpush1.msra.mxu0 0.0
        %914 = vmatprep.subr.mxu0 0.0
        %915 = vmatpush1.msra.mxu0 0.0
        %916 = vmatprep.subr.mxu0 0.0
        %917 = vmatpush1.msra.mxu0 0.0
        %918 = vmatprep.subr.mxu0 0.0
        %919 = vmatpush1.msra.mxu0 0.0
        %920 = vmatprep.subr.mxu0 0.0
        %921 = vmatpush1.msra.mxu0 0.0
        %922 = vmatprep.subr.mxu0 0.0
        %923 = vmatpush1.msra.mxu0 0.0
        %924 = vmatprep.subr.mxu0 0.0
        %925 = vmatpush1.msra.mxu0 0.0
        %926 = vmatprep.mubr.f32.mxu0 0.0
        %v927 = vand.u32 %v161, 4294901760
        %v928 = vsub.f32 %v161, %v927
        %v929 = vand.u32 %v928, 4294901760
        %930 = vmatmul.mubr.f32.gmra.mrb[0].mxu0 %v929
        %v931 = vpop.f32.mrb[0].mxu0
        %v932 = vadd.f32 %v858, %v931
        %v933 = vpop.f32.mrb[0].mxu0
        %934 = vdwg.mxu0
        %935 = vmatprep.subr.mxu0 0.0
        %v936 = vand.u32 %v168, 4294901760
        %v937 = vsub.f32 %v168, %v936
        %v938 = vand.u32 %v937, 4294901760
        %939 = vmatpush1.msra.mxu0 %v938
        %940 = vmatprep.subr.mxu0 0.0
        %941 = vmatpush1.msra.mxu0 0.0
        %942 = vmatprep.subr.mxu0 0.0
        %943 = vmatpush1.msra.mxu0 0.0
        %944 = vmatprep.subr.mxu0 0.0
        %945 = vmatpush1.msra.mxu0 0.0
        %946 = vmatprep.subr.mxu0 0.0
        %947 = vmatpush1.msra.mxu0 0.0
        %948 = vmatprep.subr.mxu0 0.0
        %949 = vmatpush1.msra.mxu0 0.0
        %950 = vmatprep.subr.mxu0 0.0
        %951 = vmatpush1.msra.mxu0 0.0
        %952 = vmatprep.subr.mxu0 0.0
        %953 = vmatpush1.msra.mxu0 0.0
        %954 = vmatprep.subr.mxu0 0.0
        %955 = vmatpush1.msra.mxu0 0.0
        %956 = vmatprep.subr.mxu0 0.0
        %957 = vmatpush1.msra.mxu0 0.0
        %958 = vmatprep.subr.mxu0 0.0
        %959 = vmatpush1.msra.mxu0 0.0
        %960 = vmatprep.subr.mxu0 0.0
        %961 = vmatpush1.msra.mxu0 0.0
        %962 = vmatprep.subr.mxu0 0.0
        %963 = vmatpush1.msra.mxu0 0.0
        %964 = vmatprep.subr.mxu0 0.0
        %965 = vmatpush1.msra.mxu0 0.0
        %966 = vmatprep.subr.mxu0 0.0
        %967 = vmatpush1.msra.mxu0 0.0
        %968 = vmatprep.subr.mxu0 0.0
        %969 = vmatpush1.msra.mxu0 0.0
        %970 = vmatprep.subr.mxu0 0.0
        %971 = vmatpush1.msra.mxu0 0.0
        %972 = vmatprep.subr.mxu0 0.0
        %973 = vmatpush1.msra.mxu0 0.0
        %974 = vmatprep.subr.mxu0 0.0
        %975 = vmatpush1.msra.mxu0 0.0
        %976 = vmatprep.subr.mxu0 0.0
        %977 = vmatpush1.msra.mxu0 0.0
        %978 = vmatprep.subr.mxu0 0.0
        %979 = vmatpush1.msra.mxu0 0.0
        %980 = vmatprep.subr.mxu0 0.0
        %981 = vmatpush1.msra.mxu0 0.0
        %982 = vmatprep.subr.mxu0 0.0
        %983 = vmatpush1.msra.mxu0 0.0
        %984 = vmatprep.subr.mxu0 0.0
        %985 = vmatpush1.msra.mxu0 0.0
        %986 = vmatprep.subr.mxu0 0.0
        %987 = vmatpush1.msra.mxu0 0.0
        %988 = vmatprep.subr.mxu0 0.0
        %989 = vmatpush1.msra.mxu0 0.0
        %990 = vmatprep.subr.mxu0 0.0
        %991 = vmatpush1.msra.mxu0 0.0
        %992 = vmatprep.subr.mxu0 0.0
        %993 = vmatpush1.msra.mxu0 0.0
        %994 = vmatprep.subr.mxu0 0.0
        %995 = vmatpush1.msra.mxu0 0.0
        %996 = vmatprep.subr.mxu0 0.0
        %997 = vmatpush1.msra.mxu0 0.0
        %998 = vmatprep.subr.mxu0 0.0
        %999 = vmatpush1.msra.mxu0 0.0
        %1000 = vmatprep.subr.mxu0 0.0
        %1001 = vmatpush1.msra.mxu0 0.0
        %1002 = vmatprep.mubr.f32.mxu0 0.0
        %v1003 = vand.u32 %v161, 4294901760
        %1004 = vmatmul.mubr.f32.gmra.mrb[0].mxu0 %v1003
        %v1005 = vpop.f32.mrb[0].mxu0
        %v1006 = vadd.f32 %v932, %v1005
        %v1007 = vpop.f32.mrb[0].mxu0
        %1008 = vdwg.mxu0
        %1009 = vmatprep.subr.mxu0 0.0
        %v1010 = vand.u32 %v168, 4294901760
        %1011 = vmatpush1.msra.mxu0 %v1010
        %1012 = vmatprep.subr.mxu0 0.0
        %1013 = vmatpush1.msra.mxu0 0.0
        %1014 = vmatprep.subr.mxu0 0.0
        %1015 = vmatpush1.msra.mxu0 0.0
        %1016 = vmatprep.subr.mxu0 0.0
        %1017 = vmatpush1.msra.mxu0 0.0
        %1018 = vmatprep.subr.mxu0 0.0
        %1019 = vmatpush1.msra.mxu0 0.0
        %1020 = vmatprep.subr.mxu0 0.0
        %1021 = vmatpush1.msra.mxu0 0.0
        %1022 = vmatprep.subr.mxu0 0.0
        %1023 = vmatpush1.msra.mxu0 0.0
        %1024 = vmatprep.subr.mxu0 0.0
        %1025 = vmatpush1.msra.mxu0 0.0
        %1026 = vmatprep.subr.mxu0 0.0
        %1027 = vmatpush1.msra.mxu0 0.0
        %1028 = vmatprep.subr.mxu0 0.0
        %1029 = vmatpush1.msra.mxu0 0.0
        %1030 = vmatprep.subr.mxu0 0.0
        %1031 = vmatpush1.msra.mxu0 0.0
        %1032 = vmatprep.subr.mxu0 0.0
        %1033 = vmatpush1.msra.mxu0 0.0
        %1034 = vmatprep.subr.mxu0 0.0
        %1035 = vmatpush1.msra.mxu0 0.0
        %1036 = vmatprep.subr.mxu0 0.0
        %1037 = vmatpush1.msra.mxu0 0.0
        %1038 = vmatprep.subr.mxu0 0.0
        %1039 = vmatpush1.msra.mxu0 0.0
        %1040 = vmatprep.subr.mxu0 0.0
        %1041 = vmatpush1.msra.mxu0 0.0
        %1042 = vmatprep.subr.mxu0 0.0
        %1043 = vmatpush1.msra.mxu0 0.0
        %1044 = vmatprep.subr.mxu0 0.0
        %1045 = vmatpush1.msra.mxu0 0.0
        %1046 = vmatprep.subr.mxu0 0.0
        %1047 = vmatpush1.msra.mxu0 0.0
        %1048 = vmatprep.subr.mxu0 0.0
        %1049 = vmatpush1.msra.mxu0 0.0
        %1050 = vmatprep.subr.mxu0 0.0
        %1051 = vmatpush1.msra.mxu0 0.0
        %1052 = vmatprep.subr.mxu0 0.0
        %1053 = vmatpush1.msra.mxu0 0.0
        %1054 = vmatprep.subr.mxu0 0.0
        %1055 = vmatpush1.msra.mxu0 0.0
        %1056 = vmatprep.subr.mxu0 0.0
        %1057 = vmatpush1.msra.mxu0 0.0
        %1058 = vmatprep.subr.mxu0 0.0
        %1059 = vmatpush1.msra.mxu0 0.0
        %1060 = vmatprep.subr.mxu0 0.0
        %1061 = vmatpush1.msra.mxu0 0.0
        %1062 = vmatprep.subr.mxu0 0.0
        %1063 = vmatpush1.msra.mxu0 0.0
        %1064 = vmatprep.subr.mxu0 0.0
        %1065 = vmatpush1.msra.mxu0 0.0
        %1066 = vmatprep.subr.mxu0 0.0
        %1067 = vmatpush1.msra.mxu0 0.0
        %1068 = vmatprep.subr.mxu0 0.0
        %1069 = vmatpush1.msra.mxu0 0.0
        %1070 = vmatprep.subr.mxu0 0.0
        %1071 = vmatpush1.msra.mxu0 0.0
        %1072 = vmatprep.subr.mxu0 0.0
        %1073 = vmatpush1.msra.mxu0 0.0
        %1074 = vmatprep.mubr.f32.mxu0 0.0
        %v1075 = vand.u32 %v161, 4294901760
        %1076 = vmatmul.mubr.f32.gmra.mrb[0].mxu0 %v1075
        %v1077 = vpop.f32.mrb[0].mxu0
        %v1078 = vadd.f32 %v1006, %v1077
        %v1079 = vpop.f32.mrb[0].mxu0
        %1080 = vdwg.mxu0
        %v1082 = vsel %vm159, %v144, 0
        %v1084 = vsel %vm163, %v142, 0
        %v1086 = vsel %vm163, %v149, 0
        %v1088 = vsel %vm163, %v143, 0
        %v1090 = vand.u32 %v1086, 4294901760
        %1091 = vmatprep.subr.mxu0 %v1090
        %v1092 = vand.u32 %v1084, 4294901760
        %1093 = vmatpush1.msra.mxu0 %v1092
        %1094 = vmatprep.subr.mxu0 0.0
        %1095 = vmatpush1.msra.mxu0 0.0
        %1096 = vmatprep.subr.mxu0 0.0
        %1097 = vmatpush1.msra.mxu0 0.0
        %1098 = vmatprep.subr.mxu0 0.0
        %1099 = vmatpush1.msra.mxu0 0.0
        %1100 = vmatprep.subr.mxu0 0.0
        %1101 = vmatpush1.msra.mxu0 0.0
        %1102 = vmatprep.subr.mxu0 0.0
        %1103 = vmatpush1.msra.mxu0 0.0
        %1104 = vmatprep.subr.mxu0 0.0
        %1105 = vmatpush1.msra.mxu0 0.0
        %1106 = vmatprep.subr.mxu0 0.0
        %1107 = vmatpush1.msra.mxu0 0.0
        %1108 = vmatprep.subr.mxu0 0.0
        %1109 = vmatpush1.msra.mxu0 0.0
        %1110 = vmatprep.subr.mxu0 0.0
        %1111 = vmatpush1.msra.mxu0 0.0
        %1112 = vmatprep.subr.mxu0 0.0
        %1113 = vmatpush1.msra.mxu0 0.0
        %1114 = vmatprep.subr.mxu0 0.0
        %1115 = vmatpush1.msra.mxu0 0.0
        %1116 = vmatprep.subr.mxu0 0.0
        %1117 = vmatpush1.msra.mxu0 0.0
        %1118 = vmatprep.subr.mxu0 0.0
        %1119 = vmatpush1.msra.mxu0 0.0
        %1120 = vmatprep.subr.mxu0 0.0
        %1121 = vmatpush1.msra.mxu0 0.0
        %1122 = vmatprep.subr.mxu0 0.0
        %1123 = vmatpush1.msra.mxu0 0.0
        %1124 = vmatprep.subr.mxu0 0.0
        %1125 = vmatpush1.msra.mxu0 0.0
        %1126 = vmatprep.subr.mxu0 0.0
        %1127 = vmatpush1.msra.mxu0 0.0
        %1128 = vmatprep.subr.mxu0 0.0
        %1129 = vmatpush1.msra.mxu0 0.0
        %1130 = vmatprep.subr.mxu0 0.0
        %1131 = vmatpush1.msra.mxu0 0.0
        %1132 = vmatprep.subr.mxu0 0.0
        %1133 = vmatpush1.msra.mxu0 0.0
        %1134 = vmatprep.subr.mxu0 0.0
        %1135 = vmatpush1.msra.mxu0 0.0
        %1136 = vmatprep.subr.mxu0 0.0
        %1137 = vmatpush1.msra.mxu0 0.0
        %1138 = vmatprep.subr.mxu0 0.0
        %1139 = vmatpush1.msra.mxu0 0.0
        %1140 = vmatprep.subr.mxu0 0.0
        %1141 = vmatpush1.msra.mxu0 0.0
        %1142 = vmatprep.subr.mxu0 0.0
        %1143 = vmatpush1.msra.mxu0 0.0
        %1144 = vmatprep.subr.mxu0 0.0
        %1145 = vmatpush1.msra.mxu0 0.0
        %1146 = vmatprep.subr.mxu0 0.0
        %1147 = vmatpush1.msra.mxu0 0.0
        %1148 = vmatprep.subr.mxu0 0.0
        %1149 = vmatpush1.msra.mxu0 0.0
        %1150 = vmatprep.subr.mxu0 0.0
        %1151 = vmatpush1.msra.mxu0 0.0
        %1152 = vmatprep.subr.mxu0 0.0
        %1153 = vmatpush1.msra.mxu0 0.0
        %1154 = vmatprep.subr.mxu0 0.0
        %1155 = vmatpush1.msra.mxu0 0.0
        %1156 = vmatprep.mubr.f32.mxu0 0.0
        %v1157 = vand.u32 %v1082, 4294901760
        %v1158 = vsub.f32 %v1082, %v1157
        %v1159 = vand.u32 %v1158, 4294901760
        %v1160 = vsub.f32 %v1158, %v1159
        %v1161 = vand.u32 %v1160, 4294901760
        %1162 = vmatmul.mubr.f32.gmra.mrb[0].mxu0 %v1161
        %v1163 = vpop.f32.mrb[0].mxu0
        %v1164 = vadd.f32 %v631, %v1163
        %v1165 = vpop.f32.mrb[0].mxu0
        %v1166 = vadd.f32 %v633, %v1165
        %1167 = vdwg.mxu0
        %v1168 = vand.u32 %v1086, 4294901760
        %v1169 = vsub.f32 %v1086, %v1168
        %v1170 = vand.u32 %v1169, 4294901760
        %v1171 = vsub.f32 %v1169, %v1170
        %v1172 = vand.u32 %v1171, 4294901760
        %1173 = vmatprep.subr.mxu0 %v1172
        %v1174 = vand.u32 %v1084, 4294901760
        %v1175 = vsub.f32 %v1084, %v1174
        %v1176 = vand.u32 %v1175, 4294901760
        %v1177 = vsub.f32 %v1175, %v1176
        %v1178 = vand.u32 %v1177, 4294901760
        %1179 = vmatpush1.msra.mxu0 %v1178
        %1180 = vmatprep.subr.mxu0 0.0
        %1181 = vmatpush1.msra.mxu0 0.0
        %1182 = vmatprep.subr.mxu0 0.0
        %1183 = vmatpush1.msra.mxu0 0.0
        %1184 = vmatprep.subr.mxu0 0.0
        %1185 = vmatpush1.msra.mxu0 0.0
        %1186 = vmatprep.subr.mxu0 0.0
        %1187 = vmatpush1.msra.mxu0 0.0
        %1188 = vmatprep.subr.mxu0 0.0
        %1189 = vmatpush1.msra.mxu0 0.0
        %1190 = vmatprep.subr.mxu0 0.0
        %1191 = vmatpush1.msra.mxu0 0.0
        %1192 = vmatprep.subr.mxu0 0.0
        %1193 = vmatpush1.msra.mxu0 0.0
        %1194 = vmatprep.subr.mxu0 0.0
        %1195 = vmatpush1.msra.mxu0 0.0
        %1196 = vmatprep.subr.mxu0 0.0
        %1197 = vmatpush1.msra.mxu0 0.0
        %1198 = vmatprep.subr.mxu0 0.0
        %1199 = vmatpush1.msra.mxu0 0.0
        %1200 = vmatprep.subr.mxu0 0.0
        %1201 = vmatpush1.msra.mxu0 0.0
        %1202 = vmatprep.subr.mxu0 0.0
        %1203 = vmatpush1.msra.mxu0 0.0
        %1204 = vmatprep.subr.mxu0 0.0
        %1205 = vmatpush1.msra.mxu0 0.0
        %1206 = vmatprep.subr.mxu0 0.0
        %1207 = vmatpush1.msra.mxu0 0.0
        %1208 = vmatprep.subr.mxu0 0.0
        %1209 = vmatpush1.msra.mxu0 0.0
        %1210 = vmatprep.subr.mxu0 0.0
        %1211 = vmatpush1.msra.mxu0 0.0
        %1212 = vmatprep.subr.mxu0 0.0
        %1213 = vmatpush1.msra.mxu0 0.0
        %1214 = vmatprep.subr.mxu0 0.0
        %1215 = vmatpush1.msra.mxu0 0.0
        %1216 = vmatprep.subr.mxu0 0.0
        %1217 = vmatpush1.msra.mxu0 0.0
        %1218 = vmatprep.subr.mxu0 0.0
        %1219 = vmatpush1.msra.mxu0 0.0
        %1220 = vmatprep.subr.mxu0 0.0
        %1221 = vmatpush1.msra.mxu0 0.0
        %1222 = vmatprep.subr.mxu0 0.0
        %1223 = vmatpush1.msra.mxu0 0.0
        %1224 = vmatprep.subr.mxu0 0.0
        %1225 = vmatpush1.msra.mxu0 0.0
        %1226 = vmatprep.subr.mxu0 0.0
        %1227 = vmatpush1.msra.mxu0 0.0
        %1228 = vmatprep.subr.mxu0 0.0
        %1229 = vmatpush1.msra.mxu0 0.0
        %1230 = vmatprep.subr.mxu0 0.0
        %1231 = vmatpush1.msra.mxu0 0.0
        %1232 = vmatprep.subr.mxu0 0.0
        %1233 = vmatpush1.msra.mxu0 0.0
        %1234 = vmatprep.subr.mxu0 0.0
        %1235 = vmatpush1.msra.mxu0 0.0
        %1236 = vmatprep.subr.mxu0 0.0
        %1237 = vmatpush1.msra.mxu0 0.0
        %1238 = vmatprep.subr.mxu0 0.0
        %1239 = vmatpush1.msra.mxu0 0.0
        %1240 = vmatprep.subr.mxu0 0.0
        %1241 = vmatpush1.msra.mxu0 0.0
        %1242 = vmatprep.mubr.f32.mxu0 0.0
        %v1243 = vand.u32 %v1082, 4294901760
        %1244 = vmatmul.mubr.f32.gmra.mrb[0].mxu0 %v1243
        %v1245 = vpop.f32.mrb[0].mxu0
        %v1246 = vadd.f32 %v1164, %v1245
        %v1247 = vpop.f32.mrb[0].mxu0
        %v1248 = vadd.f32 %v1166, %v1247
        %1249 = vdwg.mxu0
        %v1250 = vand.u32 %v1086, 4294901760
        %v1251 = vsub.f32 %v1086, %v1250
        %1252 = vmatprep.subr.mxu0 %v1251
        %v1253 = vand.u32 %v1084, 4294901760
        %v1254 = vsub.f32 %v1084, %v1253
        %1255 = vmatpush1.msra.mxu0 %v1254
        %1256 = vmatprep.subr.mxu0 0.0
        %1257 = vmatpush1.msra.mxu0 0.0
        %1258 = vmatprep.subr.mxu0 0.0
        %1259 = vmatpush1.msra.mxu0 0.0
        %1260 = vmatprep.subr.mxu0 0.0
        %1261 = vmatpush1.msra.mxu0 0.0
        %1262 = vmatprep.subr.mxu0 0.0
        %1263 = vmatpush1.msra.mxu0 0.0
        %1264 = vmatprep.subr.mxu0 0.0
        %1265 = vmatpush1.msra.mxu0 0.0
        %1266 = vmatprep.subr.mxu0 0.0
        %1267 = vmatpush1.msra.mxu0 0.0
        %1268 = vmatprep.subr.mxu0 0.0
        %1269 = vmatpush1.msra.mxu0 0.0
        %1270 = vmatprep.subr.mxu0 0.0
        %1271 = vmatpush1.msra.mxu0 0.0
        %1272 = vmatprep.subr.mxu0 0.0
        %1273 = vmatpush1.msra.mxu0 0.0
        %1274 = vmatprep.subr.mxu0 0.0
        %1275 = vmatpush1.msra.mxu0 0.0
        %1276 = vmatprep.subr.mxu0 0.0
        %1277 = vmatpush1.msra.mxu0 0.0
        %1278 = vmatprep.subr.mxu0 0.0
        %1279 = vmatpush1.msra.mxu0 0.0
        %1280 = vmatprep.subr.mxu0 0.0
        %1281 = vmatpush1.msra.mxu0 0.0
        %1282 = vmatprep.subr.mxu0 0.0
        %1283 = vmatpush1.msra.mxu0 0.0
        %1284 = vmatprep.subr.mxu0 0.0
        %1285 = vmatpush1.msra.mxu0 0.0
        %1286 = vmatprep.subr.mxu0 0.0
        %1287 = vmatpush1.msra.mxu0 0.0
        %1288 = vmatprep.subr.mxu0 0.0
        %1289 = vmatpush1.msra.mxu0 0.0
        %1290 = vmatprep.subr.mxu0 0.0
        %1291 = vmatpush1.msra.mxu0 0.0
        %1292 = vmatprep.subr.mxu0 0.0
        %1293 = vmatpush1.msra.mxu0 0.0
        %1294 = vmatprep.subr.mxu0 0.0
        %1295 = vmatpush1.msra.mxu0 0.0
        %1296 = vmatprep.subr.mxu0 0.0
        %1297 = vmatpush1.msra.mxu0 0.0
        %1298 = vmatprep.subr.mxu0 0.0
        %1299 = vmatpush1.msra.mxu0 0.0
        %1300 = vmatprep.subr.mxu0 0.0
        %1301 = vmatpush1.msra.mxu0 0.0
        %1302 = vmatprep.subr.mxu0 0.0
        %1303 = vmatpush1.msra.mxu0 0.0
        %1304 = vmatprep.subr.mxu0 0.0
        %1305 = vmatpush1.msra.mxu0 0.0
        %1306 = vmatprep.subr.mxu0 0.0
        %1307 = vmatpush1.msra.mxu0 0.0
        %1308 = vmatprep.subr.mxu0 0.0
        %1309 = vmatpush1.msra.mxu0 0.0
        %1310 = vmatprep.subr.mxu0 0.0
        %1311 = vmatpush1.msra.mxu0 0.0
        %1312 = vmatprep.subr.mxu0 0.0
        %1313 = vmatpush1.msra.mxu0 0.0
        %1314 = vmatprep.subr.mxu0 0.0
        %1315 = vmatpush1.msra.mxu0 0.0
        %1316 = vmatprep.subr.mxu0 0.0
        %1317 = vmatpush1.msra.mxu0 0.0
        %1318 = vmatprep.mubr.f32.mxu0 0.0
        %v1319 = vand.u32 %v1082, 4294901760
        %v1320 = vsub.f32 %v1082, %v1319
        %1321 = vmatmul.mubr.f32.gmra.mrb[0].mxu0 %v1320
        %v1322 = vpop.f32.mrb[0].mxu0
        %v1323 = vadd.f32 %v1246, %v1322
        %v1324 = vpop.f32.mrb[0].mxu0
        %v1325 = vadd.f32 %v1248, %v1324
        %1326 = vdwg.mxu0
        %v1327 = vand.u32 %v1086, 4294901760
        %1328 = vmatprep.subr.mxu0 %v1327
        %v1329 = vand.u32 %v1084, 4294901760
        %1330 = vmatpush1.msra.mxu0 %v1329
        %1331 = vmatprep.subr.mxu0 0.0
        %1332 = vmatpush1.msra.mxu0 0.0
        %1333 = vmatprep.subr.mxu0 0.0
        %1334 = vmatpush1.msra.mxu0 0.0
        %1335 = vmatprep.subr.mxu0 0.0
        %1336 = vmatpush1.msra.mxu0 0.0
        %1337 = vmatprep.subr.mxu0 0.0
        %1338 = vmatpush1.msra.mxu0 0.0
        %1339 = vmatprep.subr.mxu0 0.0
        %1340 = vmatpush1.msra.mxu0 0.0
        %1341 = vmatprep.subr.mxu0 0.0
        %1342 = vmatpush1.msra.mxu0 0.0
        %1343 = vmatprep.subr.mxu0 0.0
        %1344 = vmatpush1.msra.mxu0 0.0
        %1345 = vmatprep.subr.mxu0 0.0
        %1346 = vmatpush1.msra.mxu0 0.0
        %1347 = vmatprep.subr.mxu0 0.0
        %1348 = vmatpush1.msra.mxu0 0.0
        %1349 = vmatprep.subr.mxu0 0.0
        %1350 = vmatpush1.msra.mxu0 0.0
        %1351 = vmatprep.subr.mxu0 0.0
        %1352 = vmatpush1.msra.mxu0 0.0
        %1353 = vmatprep.subr.mxu0 0.0
        %1354 = vmatpush1.msra.mxu0 0.0
        %1355 = vmatprep.subr.mxu0 0.0
        %1356 = vmatpush1.msra.mxu0 0.0
        %1357 = vmatprep.subr.mxu0 0.0
        %1358 = vmatpush1.msra.mxu0 0.0
        %1359 = vmatprep.subr.mxu0 0.0
        %1360 = vmatpush1.msra.mxu0 0.0
        %1361 = vmatprep.subr.mxu0 0.0
        %1362 = vmatpush1.msra.mxu0 0.0
        %1363 = vmatprep.subr.mxu0 0.0
        %1364 = vmatpush1.msra.mxu0 0.0
        %1365 = vmatprep.subr.mxu0 0.0
        %1366 = vmatpush1.msra.mxu0 0.0
        %1367 = vmatprep.subr.mxu0 0.0
        %1368 = vmatpush1.msra.mxu0 0.0
        %1369 = vmatprep.subr.mxu0 0.0
        %1370 = vmatpush1.msra.mxu0 0.0
        %1371 = vmatprep.subr.mxu0 0.0
        %1372 = vmatpush1.msra.mxu0 0.0
        %1373 = vmatprep.subr.mxu0 0.0
        %1374 = vmatpush1.msra.mxu0 0.0
        %1375 = vmatprep.subr.mxu0 0.0
        %1376 = vmatpush1.msra.mxu0 0.0
        %1377 = vmatprep.subr.mxu0 0.0
        %1378 = vmatpush1.msra.mxu0 0.0
        %1379 = vmatprep.subr.mxu0 0.0
        %1380 = vmatpush1.msra.mxu0 0.0
        %1381 = vmatprep.subr.mxu0 0.0
        %1382 = vmatpush1.msra.mxu0 0.0
        %1383 = vmatprep.subr.mxu0 0.0
        %1384 = vmatpush1.msra.mxu0 0.0
        %1385 = vmatprep.subr.mxu0 0.0
        %1386 = vmatpush1.msra.mxu0 0.0
        %1387 = vmatprep.subr.mxu0 0.0
        %1388 = vmatpush1.msra.mxu0 0.0
        %1389 = vmatprep.subr.mxu0 0.0
        %1390 = vmatpush1.msra.mxu0 0.0
        %1391 = vmatprep.subr.mxu0 0.0
        %1392 = vmatpush1.msra.mxu0 0.0
        %1393 = vmatprep.mubr.f32.mxu0 0.0
        %v1394 = vand.u32 %v1082, 4294901760
        %v1395 = vsub.f32 %v1082, %v1394
        %v1396 = vand.u32 %v1395, 4294901760
        %1397 = vmatmul.mubr.f32.gmra.mrb[0].mxu0 %v1396
        %v1398 = vpop.f32.mrb[0].mxu0
        %v1399 = vadd.f32 %v1323, %v1398
        %v1400 = vpop.f32.mrb[0].mxu0
        %v1401 = vadd.f32 %v1325, %v1400
        %1402 = vdwg.mxu0
        %v1403 = vand.u32 %v1086, 4294901760
        %v1404 = vsub.f32 %v1086, %v1403
        %v1405 = vand.u32 %v1404, 4294901760
        %1406 = vmatprep.subr.mxu0 %v1405
        %v1407 = vand.u32 %v1084, 4294901760
        %v1408 = vsub.f32 %v1084, %v1407
        %v1409 = vand.u32 %v1408, 4294901760
        %1410 = vmatpush1.msra.mxu0 %v1409
        %1411 = vmatprep.subr.mxu0 0.0
        %1412 = vmatpush1.msra.mxu0 0.0
        %1413 = vmatprep.subr.mxu0 0.0
        %1414 = vmatpush1.msra.mxu0 0.0
        %1415 = vmatprep.subr.mxu0 0.0
        %1416 = vmatpush1.msra.mxu0 0.0
        %1417 = vmatprep.subr.mxu0 0.0
        %1418 = vmatpush1.msra.mxu0 0.0
        %1419 = vmatprep.subr.mxu0 0.0
        %1420 = vmatpush1.msra.mxu0 0.0
        %1421 = vmatprep.subr.mxu0 0.0
        %1422 = vmatpush1.msra.mxu0 0.0
        %1423 = vmatprep.subr.mxu0 0.0
        %1424 = vmatpush1.msra.mxu0 0.0
        %1425 = vmatprep.subr.mxu0 0.0
        %1426 = vmatpush1.msra.mxu0 0.0
        %1427 = vmatprep.subr.mxu0 0.0
        %1428 = vmatpush1.msra.mxu0 0.0
        %1429 = vmatprep.subr.mxu0 0.0
        %1430 = vmatpush1.msra.mxu0 0.0
        %1431 = vmatprep.subr.mxu0 0.0
        %1432 = vmatpush1.msra.mxu0 0.0
        %1433 = vmatprep.subr.mxu0 0.0
        %1434 = vmatpush1.msra.mxu0 0.0
        %1435 = vmatprep.subr.mxu0 0.0
        %1436 = vmatpush1.msra.mxu0 0.0
        %1437 = vmatprep.subr.mxu0 0.0
        %1438 = vmatpush1.msra.mxu0 0.0
        %1439 = vmatprep.subr.mxu0 0.0
        %1440 = vmatpush1.msra.mxu0 0.0
        %1441 = vmatprep.subr.mxu0 0.0
        %1442 = vmatpush1.msra.mxu0 0.0
        %1443 = vmatprep.subr.mxu0 0.0
        %1444 = vmatpush1.msra.mxu0 0.0
        %1445 = vmatprep.subr.mxu0 0.0
        %1446 = vmatpush1.msra.mxu0 0.0
        %1447 = vmatprep.subr.mxu0 0.0
        %1448 = vmatpush1.msra.mxu0 0.0
        %1449 = vmatprep.subr.mxu0 0.0
        %1450 = vmatpush1.msra.mxu0 0.0
        %1451 = vmatprep.subr.mxu0 0.0
        %1452 = vmatpush1.msra.mxu0 0.0
        %1453 = vmatprep.subr.mxu0 0.0
        %1454 = vmatpush1.msra.mxu0 0.0
        %1455 = vmatprep.subr.mxu0 0.0
        %1456 = vmatpush1.msra.mxu0 0.0
        %1457 = vmatprep.subr.mxu0 0.0
        %1458 = vmatpush1.msra.mxu0 0.0
        %1459 = vmatprep.subr.mxu0 0.0
        %1460 = vmatpush1.msra.mxu0 0.0
        %1461 = vmatprep.subr.mxu0 0.0
        %1462 = vmatpush1.msra.mxu0 0.0
        %1463 = vmatprep.subr.mxu0 0.0
        %1464 = vmatpush1.msra.mxu0 0.0
        %1465 = vmatprep.subr.mxu0 0.0
        %1466 = vmatpush1.msra.mxu0 0.0
        %1467 = vmatprep.subr.mxu0 0.0
        %1468 = vmatpush1.msra.mxu0 0.0
        %1469 = vmatprep.subr.mxu0 0.0
        %1470 = vmatpush1.msra.mxu0 0.0
        %1471 = vmatprep.subr.mxu0 0.0
        %1472 = vmatpush1.msra.mxu0 0.0
        %1473 = vmatprep.mubr.f32.mxu0 0.0
        %v1474 = vand.u32 %v1082, 4294901760
        %1475 = vmatmul.mubr.f32.gmra.mrb[0].mxu0 %v1474
        %v1476 = vpop.f32.mrb[0].mxu0
        %v1477 = vadd.f32 %v1399, %v1476
        %v1478 = vpop.f32.mrb[0].mxu0
        %v1479 = vadd.f32 %v1401, %v1478
        %1480 = vdwg.mxu0
        %v1481 = vand.u32 %v1086, 4294901760
        %1482 = vmatprep.subr.mxu0 %v1481
        %v1483 = vand.u32 %v1084, 4294901760
        %1484 = vmatpush1.msra.mxu0 %v1483
        %1485 = vmatprep.subr.mxu0 0.0
        %1486 = vmatpush1.msra.mxu0 0.0
        %1487 = vmatprep.subr.mxu0 0.0
        %1488 = vmatpush1.msra.mxu0 0.0
        %1489 = vmatprep.subr.mxu0 0.0
        %1490 = vmatpush1.msra.mxu0 0.0
        %1491 = vmatprep.subr.mxu0 0.0
        %1492 = vmatpush1.msra.mxu0 0.0
        %1493 = vmatprep.subr.mxu0 0.0
        %1494 = vmatpush1.msra.mxu0 0.0
        %1495 = vmatprep.subr.mxu0 0.0
        %1496 = vmatpush1.msra.mxu0 0.0
        %1497 = vmatprep.subr.mxu0 0.0
        %1498 = vmatpush1.msra.mxu0 0.0
        %1499 = vmatprep.subr.mxu0 0.0
        %1500 = vmatpush1.msra.mxu0 0.0
        %1501 = vmatprep.subr.mxu0 0.0
        %1502 = vmatpush1.msra.mxu0 0.0
        %1503 = vmatprep.subr.mxu0 0.0
        %1504 = vmatpush1.msra.mxu0 0.0
        %1505 = vmatprep.subr.mxu0 0.0
        %1506 = vmatpush1.msra.mxu0 0.0
        %1507 = vmatprep.subr.mxu0 0.0
        %1508 = vmatpush1.msra.mxu0 0.0
        %1509 = vmatprep.subr.mxu0 0.0
        %1510 = vmatpush1.msra.mxu0 0.0
        %1511 = vmatprep.subr.mxu0 0.0
        %1512 = vmatpush1.msra.mxu0 0.0
        %1513 = vmatprep.subr.mxu0 0.0
        %1514 = vmatpush1.msra.mxu0 0.0
        %1515 = vmatprep.subr.mxu0 0.0
        %1516 = vmatpush1.msra.mxu0 0.0
        %1517 = vmatprep.subr.mxu0 0.0
        %1518 = vmatpush1.msra.mxu0 0.0
        %1519 = vmatprep.subr.mxu0 0.0
        %1520 = vmatpush1.msra.mxu0 0.0
        %1521 = vmatprep.subr.mxu0 0.0
        %1522 = vmatpush1.msra.mxu0 0.0
        %1523 = vmatprep.subr.mxu0 0.0
        %1524 = vmatpush1.msra.mxu0 0.0
        %1525 = vmatprep.subr.mxu0 0.0
        %1526 = vmatpush1.msra.mxu0 0.0
        %1527 = vmatprep.subr.mxu0 0.0
        %1528 = vmatpush1.msra.mxu0 0.0
        %1529 = vmatprep.subr.mxu0 0.0
        %1530 = vmatpush1.msra.mxu0 0.0
        %1531 = vmatprep.subr.mxu0 0.0
        %1532 = vmatpush1.msra.mxu0 0.0
        %1533 = vmatprep.subr.mxu0 0.0
        %1534 = vmatpush1.msra.mxu0 0.0
        %1535 = vmatprep.subr.mxu0 0.0
        %1536 = vmatpush1.msra.mxu0 0.0
        %1537 = vmatprep.subr.mxu0 0.0
        %1538 = vmatpush1.msra.mxu0 0.0
        %1539 = vmatprep.subr.mxu0 0.0
        %1540 = vmatpush1.msra.mxu0 0.0
        %1541 = vmatprep.subr.mxu0 0.0
        %1542 = vmatpush1.msra.mxu0 0.0
        %1543 = vmatprep.subr.mxu0 0.0
        %1544 = vmatpush1.msra.mxu0 0.0
        %1545 = vmatprep.subr.mxu0 0.0
        %1546 = vmatpush1.msra.mxu0 0.0
        %1547 = vmatprep.mubr.f32.mxu0 0.0
        %v1548 = vand.u32 %v1082, 4294901760
        %1549 = vmatmul.mubr.f32.gmra.mrb[0].mxu0 %v1548
        %v1550 = vpop.f32.mrb[0].mxu0
        %v1551 = vadd.f32 %v1477, %v1550
        %v1552 = vpop.f32.mrb[0].mxu0
        %v1553 = vadd.f32 %v1479, %v1552
        %1554 = vdwg.mxu0
        %1555 = vmatprep.subr.mxu0 0.0
        %v1556 = vand.u32 %v1088, 4294901760
        %1557 = vmatpush1.msra.mxu0 %v1556
        %1558 = vmatprep.subr.mxu0 0.0
        %1559 = vmatpush1.msra.mxu0 0.0
        %1560 = vmatprep.subr.mxu0 0.0
        %1561 = vmatpush1.msra.mxu0 0.0
        %1562 = vmatprep.subr.mxu0 0.0
        %1563 = vmatpush1.msra.mxu0 0.0
        %1564 = vmatprep.subr.mxu0 0.0
        %1565 = vmatpush1.msra.mxu0 0.0
        %1566 = vmatprep.subr.mxu0 0.0
        %1567 = vmatpush1.msra.mxu0 0.0
        %1568 = vmatprep.subr.mxu0 0.0
        %1569 = vmatpush1.msra.mxu0 0.0
        %1570 = vmatprep.subr.mxu0 0.0
        %1571 = vmatpush1.msra.mxu0 0.0
        %1572 = vmatprep.subr.mxu0 0.0
        %1573 = vmatpush1.msra.mxu0 0.0
        %1574 = vmatprep.subr.mxu0 0.0
        %1575 = vmatpush1.msra.mxu0 0.0
        %1576 = vmatprep.subr.mxu0 0.0
        %1577 = vmatpush1.msra.mxu0 0.0
        %1578 = vmatprep.subr.mxu0 0.0
        %1579 = vmatpush1.msra.mxu0 0.0
        %1580 = vmatprep.subr.mxu0 0.0
        %1581 = vmatpush1.msra.mxu0 0.0
        %1582 = vmatprep.subr.mxu0 0.0
        %1583 = vmatpush1.msra.mxu0 0.0
        %1584 = vmatprep.subr.mxu0 0.0
        %1585 = vmatpush1.msra.mxu0 0.0
        %1586 = vmatprep.subr.mxu0 0.0
        %1587 = vmatpush1.msra.mxu0 0.0
        %1588 = vmatprep.subr.mxu0 0.0
        %1589 = vmatpush1.msra.mxu0 0.0
        %1590 = vmatprep.subr.mxu0 0.0
        %1591 = vmatpush1.msra.mxu0 0.0
        %1592 = vmatprep.subr.mxu0 0.0
        %1593 = vmatpush1.msra.mxu0 0.0
        %1594 = vmatprep.subr.mxu0 0.0
        %1595 = vmatpush1.msra.mxu0 0.0
        %1596 = vmatprep.subr.mxu0 0.0
        %1597 = vmatpush1.msra.mxu0 0.0
        %1598 = vmatprep.subr.mxu0 0.0
        %1599 = vmatpush1.msra.mxu0 0.0
        %1600 = vmatprep.subr.mxu0 0.0
        %1601 = vmatpush1.msra.mxu0 0.0
        %1602 = vmatprep.subr.mxu0 0.0
        %1603 = vmatpush1.msra.mxu0 0.0
        %1604 = vmatprep.subr.mxu0 0.0
        %1605 = vmatpush1.msra.mxu0 0.0
        %1606 = vmatprep.subr.mxu0 0.0
        %1607 = vmatpush1.msra.mxu0 0.0
        %1608 = vmatprep.subr.mxu0 0.0
        %1609 = vmatpush1.msra.mxu0 0.0
        %1610 = vmatprep.subr.mxu0 0.0
        %1611 = vmatpush1.msra.mxu0 0.0
        %1612 = vmatprep.subr.mxu0 0.0
        %1613 = vmatpush1.msra.mxu0 0.0
        %1614 = vmatprep.subr.mxu0 0.0
        %1615 = vmatpush1.msra.mxu0 0.0
        %1616 = vmatprep.subr.mxu0 0.0
        %1617 = vmatpush1.msra.mxu0 0.0
        %1618 = vmatprep.subr.mxu0 0.0
        %1619 = vmatpush1.msra.mxu0 0.0
        %1620 = vmatprep.mubr.f32.mxu0 0.0
        %v1621 = vand.u32 %v1082, 4294901760
        %v1622 = vsub.f32 %v1082, %v1621
        %v1623 = vand.u32 %v1622, 4294901760
        %v1624 = vsub.f32 %v1622, %v1623
        %v1625 = vand.u32 %v1624, 4294901760
        %1626 = vmatmul.mubr.f32.gmra.mrb[0].mxu0 %v1625
        %v1627 = vpop.f32.mrb[0].mxu0
        %v1628 = vadd.f32 %v1078, %v1627
        %v1629 = vpop.f32.mrb[0].mxu0
        %1630 = vdwg.mxu0
        %1631 = vmatprep.subr.mxu0 0.0
        %v1632 = vand.u32 %v1088, 4294901760
        %v1633 = vsub.f32 %v1088, %v1632
        %v1634 = vand.u32 %v1633, 4294901760
        %v1635 = vsub.f32 %v1633, %v1634
        %v1636 = vand.u32 %v1635, 4294901760
        %1637 = vmatpush1.msra.mxu0 %v1636
        %1638 = vmatprep.subr.mxu0 0.0
        %1639 = vmatpush1.msra.mxu0 0.0
        %1640 = vmatprep.subr.mxu0 0.0
        %1641 = vmatpush1.msra.mxu0 0.0
        %1642 = vmatprep.subr.mxu0 0.0
        %1643 = vmatpush1.msra.mxu0 0.0
        %1644 = vmatprep.subr.mxu0 0.0
        %1645 = vmatpush1.msra.mxu0 0.0
        %1646 = vmatprep.subr.mxu0 0.0
        %1647 = vmatpush1.msra.mxu0 0.0
        %1648 = vmatprep.subr.mxu0 0.0
        %1649 = vmatpush1.msra.mxu0 0.0
        %1650 = vmatprep.subr.mxu0 0.0
        %1651 = vmatpush1.msra.mxu0 0.0
        %1652 = vmatprep.subr.mxu0 0.0
        %1653 = vmatpush1.msra.mxu0 0.0
        %1654 = vmatprep.subr.mxu0 0.0
        %1655 = vmatpush1.msra.mxu0 0.0
        %1656 = vmatprep.subr.mxu0 0.0
        %1657 = vmatpush1.msra.mxu0 0.0
        %1658 = vmatprep.subr.mxu0 0.0
        %1659 = vmatpush1.msra.mxu0 0.0
        %1660 = vmatprep.subr.mxu0 0.0
        %1661 = vmatpush1.msra.mxu0 0.0
        %1662 = vmatprep.subr.mxu0 0.0
        %1663 = vmatpush1.msra.mxu0 0.0
        %1664 = vmatprep.subr.mxu0 0.0
        %1665 = vmatpush1.msra.mxu0 0.0
        %1666 = vmatprep.subr.mxu0 0.0
        %1667 = vmatpush1.msra.mxu0 0.0
        %1668 = vmatprep.subr.mxu0 0.0
        %1669 = vmatpush1.msra.mxu0 0.0
        %1670 = vmatprep.subr.mxu0 0.0
        %1671 = vmatpush1.msra.mxu0 0.0
        %1672 = vmatprep.subr.mxu0 0.0
        %1673 = vmatpush1.msra.mxu0 0.0
        %1674 = vmatprep.subr.mxu0 0.0
        %1675 = vmatpush1.msra.mxu0 0.0
        %1676 = vmatprep.subr.mxu0 0.0
        %1677 = vmatpush1.msra.mxu0 0.0
        %1678 = vmatprep.subr.mxu0 0.0
        %1679 = vmatpush1.msra.mxu0 0.0
        %1680 = vmatprep.subr.mxu0 0.0
        %1681 = vmatpush1.msra.mxu0 0.0
        %1682 = vmatprep.subr.mxu0 0.0
        %1683 = vmatpush1.msra.mxu0 0.0
        %1684 = vmatprep.subr.mxu0 0.0
        %1685 = vmatpush1.msra.mxu0 0.0
        %1686 = vmatprep.subr.mxu0 0.0
        %1687 = vmatpush1.msra.mxu0 0.0
        %1688 = vmatprep.subr.mxu0 0.0
        %1689 = vmatpush1.msra.mxu0 0.0
        %1690 = vmatprep.subr.mxu0 0.0
        %1691 = vmatpush1.msra.mxu0 0.0
        %1692 = vmatprep.subr.mxu0 0.0
        %1693 = vmatpush1.msra.mxu0 0.0
        %1694 = vmatprep.subr.mxu0 0.0
        %1695 = vmatpush1.msra.mxu0 0.0
        %1696 = vmatprep.subr.mxu0 0.0
        %1697 = vmatpush1.msra.mxu0 0.0
        %1698 = vmatprep.subr.mxu0 0.0
        %1699 = vmatpush1.msra.mxu0 0.0
        %1700 = vmatprep.mubr.f32.mxu0 0.0
        %v1701 = vand.u32 %v1082, 4294901760
        %1702 = vmatmul.mubr.f32.gmra.mrb[0].mxu0 %v1701
        %v1703 = vpop.f32.mrb[0].mxu0
        %v1704 = vadd.f32 %v1628, %v1703
        %v1705 = vpop.f32.mrb[0].mxu0
        %1706 = vdwg.mxu0
        %1707 = vmatprep.subr.mxu0 0.0
        %v1708 = vand.u32 %v1088, 4294901760
        %v1709 = vsub.f32 %v1088, %v1708
        %1710 = vmatpush1.msra.mxu0 %v1709
        %1711 = vmatprep.subr.mxu0 0.0
        %1712 = vmatpush1.msra.mxu0 0.0
        %1713 = vmatprep.subr.mxu0 0.0
        %1714 = vmatpush1.msra.mxu0 0.0
        %1715 = vmatprep.subr.mxu0 0.0
        %1716 = vmatpush1.msra.mxu0 0.0
        %1717 = vmatprep.subr.mxu0 0.0
        %1718 = vmatpush1.msra.mxu0 0.0
        %1719 = vmatprep.subr.mxu0 0.0
        %1720 = vmatpush1.msra.mxu0 0.0
        %1721 = vmatprep.subr.mxu0 0.0
        %1722 = vmatpush1.msra.mxu0 0.0
        %1723 = vmatprep.subr.mxu0 0.0
        %1724 = vmatpush1.msra.mxu0 0.0
        %1725 = vmatprep.subr.mxu0 0.0
        %1726 = vmatpush1.msra.mxu0 0.0
        %1727 = vmatprep.subr.mxu0 0.0
        %1728 = vmatpush1.msra.mxu0 0.0
        %1729 = vmatprep.subr.mxu0 0.0
        %1730 = vmatpush1.msra.mxu0 0.0
        %1731 = vmatprep.subr.mxu0 0.0
        %1732 = vmatpush1.msra.mxu0 0.0
        %1733 = vmatprep.subr.mxu0 0.0
        %1734 = vmatpush1.msra.mxu0 0.0
        %1735 = vmatprep.subr.mxu0 0.0
        %1736 = vmatpush1.msra.mxu0 0.0
        %1737 = vmatprep.subr.mxu0 0.0
        %1738 = vmatpush1.msra.mxu0 0.0
        %1739 = vmatprep.subr.mxu0 0.0
        %1740 = vmatpush1.msra.mxu0 0.0
        %1741 = vmatprep.subr.mxu0 0.0
        %1742 = vmatpush1.msra.mxu0 0.0
        %1743 = vmatprep.subr.mxu0 0.0
        %1744 = vmatpush1.msra.mxu0 0.0
        %1745 = vmatprep.subr.mxu0 0.0
        %1746 = vmatpush1.msra.mxu0 0.0
        %1747 = vmatprep.subr.mxu0 0.0
        %1748 = vmatpush1.msra.mxu0 0.0
        %1749 = vmatprep.subr.mxu0 0.0
        %1750 = vmatpush1.msra.mxu0 0.0
        %1751 = vmatprep.subr.mxu0 0.0
        %1752 = vmatpush1.msra.mxu0 0.0
        %1753 = vmatprep.subr.mxu0 0.0
        %1754 = vmatpush1.msra.mxu0 0.0
        %1755 = vmatprep.subr.mxu0 0.0
        %1756 = vmatpush1.msra.mxu0 0.0
        %1757 = vmatprep.subr.mxu0 0.0
        %1758 = vmatpush1.msra.mxu0 0.0
        %1759 = vmatprep.subr.mxu0 0.0
        %1760 = vmatpush1.msra.mxu0 0.0
        %1761 = vmatprep.subr.mxu0 0.0
        %1762 = vmatpush1.msra.mxu0 0.0
        %1763 = vmatprep.subr.mxu0 0.0
        %1764 = vmatpush1.msra.mxu0 0.0
        %1765 = vmatprep.subr.mxu0 0.0
        %1766 = vmatpush1.msra.mxu0 0.0
        %1767 = vmatprep.subr.mxu0 0.0
        %1768 = vmatpush1.msra.mxu0 0.0
        %1769 = vmatprep.subr.mxu0 0.0
        %1770 = vmatpush1.msra.mxu0 0.0
        %1771 = vmatprep.subr.mxu0 0.0
        %1772 = vmatpush1.msra.mxu0 0.0
        %1773 = vmatprep.mubr.f32.mxu0 0.0
        %v1774 = vand.u32 %v1082, 4294901760
        %v1775 = vsub.f32 %v1082, %v1774
        %1776 = vmatmul.mubr.f32.gmra.mrb[0].mxu0 %v1775
        %v1777 = vpop.f32.mrb[0].mxu0
        %v1778 = vadd.f32 %v1704, %v1777
        %v1779 = vpop.f32.mrb[0].mxu0
        %1780 = vdwg.mxu0
        %1781 = vmatprep.subr.mxu0 0.0
        %v1782 = vand.u32 %v1088, 4294901760
        %1783 = vmatpush1.msra.mxu0 %v1782
        %1784 = vmatprep.subr.mxu0 0.0
        %1785 = vmatpush1.msra.mxu0 0.0
        %1786 = vmatprep.subr.mxu0 0.0
        %1787 = vmatpush1.msra.mxu0 0.0
        %1788 = vmatprep.subr.mxu0 0.0
        %1789 = vmatpush1.msra.mxu0 0.0
        %1790 = vmatprep.subr.mxu0 0.0
        %1791 = vmatpush1.msra.mxu0 0.0
        %1792 = vmatprep.subr.mxu0 0.0
        %1793 = vmatpush1.msra.mxu0 0.0
        %1794 = vmatprep.subr.mxu0 0.0
        %1795 = vmatpush1.msra.mxu0 0.0
        %1796 = vmatprep.subr.mxu0 0.0
        %1797 = vmatpush1.msra.mxu0 0.0
        %1798 = vmatprep.subr.mxu0 0.0
        %1799 = vmatpush1.msra.mxu0 0.0
        %1800 = vmatprep.subr.mxu0 0.0
        %1801 = vmatpush1.msra.mxu0 0.0
        %1802 = vmatprep.subr.mxu0 0.0
        %1803 = vmatpush1.msra.mxu0 0.0
        %1804 = vmatprep.subr.mxu0 0.0
        %1805 = vmatpush1.msra.mxu0 0.0
        %1806 = vmatprep.subr.mxu0 0.0
        %1807 = vmatpush1.msra.mxu0 0.0
        %1808 = vmatprep.subr.mxu0 0.0
        %1809 = vmatpush1.msra.mxu0 0.0
        %1810 = vmatprep.subr.mxu0 0.0
        %1811 = vmatpush1.msra.mxu0 0.0
        %1812 = vmatprep.subr.mxu0 0.0
        %1813 = vmatpush1.msra.mxu0 0.0
        %1814 = vmatprep.subr.mxu0 0.0
        %1815 = vmatpush1.msra.mxu0 0.0
        %1816 = vmatprep.subr.mxu0 0.0
        %1817 = vmatpush1.msra.mxu0 0.0
        %1818 = vmatprep.subr.mxu0 0.0
        %1819 = vmatpush1.msra.mxu0 0.0
        %1820 = vmatprep.subr.mxu0 0.0
        %1821 = vmatpush1.msra.mxu0 0.0
        %1822 = vmatprep.subr.mxu0 0.0
        %1823 = vmatpush1.msra.mxu0 0.0
        %1824 = vmatprep.subr.mxu0 0.0
        %1825 = vmatpush1.msra.mxu0 0.0
        %1826 = vmatprep.subr.mxu0 0.0
        %1827 = vmatpush1.msra.mxu0 0.0
        %1828 = vmatprep.subr.mxu0 0.0
        %1829 = vmatpush1.msra.mxu0 0.0
        %1830 = vmatprep.subr.mxu0 0.0
        %1831 = vmatpush1.msra.mxu0 0.0
        %1832 = vmatprep.subr.mxu0 0.0
        %1833 = vmatpush1.msra.mxu0 0.0
        %1834 = vmatprep.subr.mxu0 0.0
        %1835 = vmatpush1.msra.mxu0 0.0
        %1836 = vmatprep.subr.mxu0 0.0
        %1837 = vmatpush1.msra.mxu0 0.0
        %1838 = vmatprep.subr.mxu0 0.0
        %1839 = vmatpush1.msra.mxu0 0.0
        %1840 = vmatprep.subr.mxu0 0.0
        %1841 = vmatpush1.msra.mxu0 0.0
        %1842 = vmatprep.subr.mxu0 0.0
        %1843 = vmatpush1.msra.mxu0 0.0
        %1844 = vmatprep.subr.mxu0 0.0
        %1845 = vmatpush1.msra.mxu0 0.0
        %1846 = vmatprep.mubr.f32.mxu0 0.0
        %v1847 = vand.u32 %v1082, 4294901760
        %v1848 = vsub.f32 %v1082, %v1847
        %v1849 = vand.u32 %v1848, 4294901760
        %1850 = vmatmul.mubr.f32.gmra.mrb[0].mxu0 %v1849
        %v1851 = vpop.f32.mrb[0].mxu0
        %v1852 = vadd.f32 %v1778, %v1851
        %v1853 = vpop.f32.mrb[0].mxu0
        %1854 = vdwg.mxu0
        %1855 = vmatprep.subr.mxu0 0.0
        %v1856 = vand.u32 %v1088, 4294901760
        %v1857 = vsub.f32 %v1088, %v1856
        %v1858 = vand.u32 %v1857, 4294901760
        %1859 = vmatpush1.msra.mxu0 %v1858
        %1860 = vmatprep.subr.mxu0 0.0
        %1861 = vmatpush1.msra.mxu0 0.0
        %1862 = vmatprep.subr.mxu0 0.0
        %1863 = vmatpush1.msra.mxu0 0.0
        %1864 = vmatprep.subr.mxu0 0.0
        %1865 = vmatpush1.msra.mxu0 0.0
        %1866 = vmatprep.subr.mxu0 0.0
        %1867 = vmatpush1.msra.mxu0 0.0
        %1868 = vmatprep.subr.mxu0 0.0
        %1869 = vmatpush1.msra.mxu0 0.0
        %1870 = vmatprep.subr.mxu0 0.0
        %1871 = vmatpush1.msra.mxu0 0.0
        %1872 = vmatprep.subr.mxu0 0.0
        %1873 = vmatpush1.msra.mxu0 0.0
        %1874 = vmatprep.subr.mxu0 0.0
        %1875 = vmatpush1.msra.mxu0 0.0
        %1876 = vmatprep.subr.mxu0 0.0
        %1877 = vmatpush1.msra.mxu0 0.0
        %1878 = vmatprep.subr.mxu0 0.0
        %1879 = vmatpush1.msra.mxu0 0.0
        %1880 = vmatprep.subr.mxu0 0.0
        %1881 = vmatpush1.msra.mxu0 0.0
        %1882 = vmatprep.subr.mxu0 0.0
        %1883 = vmatpush1.msra.mxu0 0.0
        %1884 = vmatprep.subr.mxu0 0.0
        %1885 = vmatpush1.msra.mxu0 0.0
        %1886 = vmatprep.subr.mxu0 0.0
        %1887 = vmatpush1.msra.mxu0 0.0
        %1888 = vmatprep.subr.mxu0 0.0
        %1889 = vmatpush1.msra.mxu0 0.0
        %1890 = vmatprep.subr.mxu0 0.0
        %1891 = vmatpush1.msra.mxu0 0.0
        %1892 = vmatprep.subr.mxu0 0.0
        %1893 = vmatpush1.msra.mxu0 0.0
        %1894 = vmatprep.subr.mxu0 0.0
        %1895 = vmatpush1.msra.mxu0 0.0
        %1896 = vmatprep.subr.mxu0 0.0
        %1897 = vmatpush1.msra.mxu0 0.0
        %1898 = vmatprep.subr.mxu0 0.0
        %1899 = vmatpush1.msra.mxu0 0.0
        %1900 = vmatprep.subr.mxu0 0.0
        %1901 = vmatpush1.msra.mxu0 0.0
        %1902 = vmatprep.subr.mxu0 0.0
        %1903 = vmatpush1.msra.mxu0 0.0
        %1904 = vmatprep.subr.mxu0 0.0
        %1905 = vmatpush1.msra.mxu0 0.0
        %1906 = vmatprep.subr.mxu0 0.0
        %1907 = vmatpush1.msra.mxu0 0.0
        %1908 = vmatprep.subr.mxu0 0.0
        %1909 = vmatpush1.msra.mxu0 0.0
        %1910 = vmatprep.subr.mxu0 0.0
        %1911 = vmatpush1.msra.mxu0 0.0
        %1912 = vmatprep.subr.mxu0 0.0
        %1913 = vmatpush1.msra.mxu0 0.0
        %1914 = vmatprep.subr.mxu0 0.0
        %1915 = vmatpush1.msra.mxu0 0.0
        %1916 = vmatprep.subr.mxu0 0.0
        %1917 = vmatpush1.msra.mxu0 0.0
        %1918 = vmatprep.subr.mxu0 0.0
        %1919 = vmatpush1.msra.mxu0 0.0
        %1920 = vmatprep.subr.mxu0 0.0
        %1921 = vmatpush1.msra.mxu0 0.0
        %1922 = vmatprep.mubr.f32.mxu0 0.0
        %v1923 = vand.u32 %v1082, 4294901760
        %1924 = vmatmul.mubr.f32.gmra.mrb[0].mxu0 %v1923
        %v1925 = vpop.f32.mrb[0].mxu0
        %v1926 = vadd.f32 %v1852, %v1925
        %v1927 = vpop.f32.mrb[0].mxu0
        %1928 = vdwg.mxu0
        %1929 = vmatprep.subr.mxu0 0.0
        %v1930 = vand.u32 %v1088, 4294901760
        %1931 = vmatpush1.msra.mxu0 %v1930
        %1932 = vmatprep.subr.mxu0 0.0
        %1933 = vmatpush1.msra.mxu0 0.0
        %1934 = vmatprep.subr.mxu0 0.0
        %1935 = vmatpush1.msra.mxu0 0.0
        %1936 = vmatprep.subr.mxu0 0.0
        %1937 = vmatpush1.msra.mxu0 0.0
        %1938 = vmatprep.subr.mxu0 0.0
        %1939 = vmatpush1.msra.mxu0 0.0
        %1940 = vmatprep.subr.mxu0 0.0
        %1941 = vmatpush1.msra.mxu0 0.0
        %1942 = vmatprep.subr.mxu0 0.0
        %1943 = vmatpush1.msra.mxu0 0.0
        %1944 = vmatprep.subr.mxu0 0.0
        %1945 = vmatpush1.msra.mxu0 0.0
        %1946 = vmatprep.subr.mxu0 0.0
        %1947 = vmatpush1.msra.mxu0 0.0
        %1948 = vmatprep.subr.mxu0 0.0
        %1949 = vmatpush1.msra.mxu0 0.0
        %1950 = vmatprep.subr.mxu0 0.0
        %1951 = vmatpush1.msra.mxu0 0.0
        %1952 = vmatprep.subr.mxu0 0.0
        %1953 = vmatpush1.msra.mxu0 0.0
        %1954 = vmatprep.subr.mxu0 0.0
        %1955 = vmatpush1.msra.mxu0 0.0
        %1956 = vmatprep.subr.mxu0 0.0
        %1957 = vmatpush1.msra.mxu0 0.0
        %1958 = vmatprep.subr.mxu0 0.0
        %1959 = vmatpush1.msra.mxu0 0.0
        %1960 = vmatprep.subr.mxu0 0.0
        %1961 = vmatpush1.msra.mxu0 0.0
        %1962 = vmatprep.subr.mxu0 0.0
        %1963 = vmatpush1.msra.mxu0 0.0
        %1964 = vmatprep.subr.mxu0 0.0
        %1965 = vmatpush1.msra.mxu0 0.0
        %1966 = vmatprep.subr.mxu0 0.0
        %1967 = vmatpush1.msra.mxu0 0.0
        %1968 = vmatprep.subr.mxu0 0.0
        %1969 = vmatpush1.msra.mxu0 0.0
        %1970 = vmatprep.subr.mxu0 0.0
        %1971 = vmatpush1.msra.mxu0 0.0
        %1972 = vmatprep.subr.mxu0 0.0
        %1973 = vmatpush1.msra.mxu0 0.0
        %1974 = vmatprep.subr.mxu0 0.0
        %1975 = vmatpush1.msra.mxu0 0.0
        %1976 = vmatprep.subr.mxu0 0.0
        %1977 = vmatpush1.msra.mxu0 0.0
        %1978 = vmatprep.subr.mxu0 0.0
        %1979 = vmatpush1.msra.mxu0 0.0
        %1980 = vmatprep.subr.mxu0 0.0
        %1981 = vmatpush1.msra.mxu0 0.0
        %1982 = vmatprep.subr.mxu0 0.0
        %1983 = vmatpush1.msra.mxu0 0.0
        %1984 = vmatprep.subr.mxu0 0.0
        %1985 = vmatpush1.msra.mxu0 0.0
        %1986 = vmatprep.subr.mxu0 0.0
        %1987 = vmatpush1.msra.mxu0 0.0
        %1988 = vmatprep.subr.mxu0 0.0
        %1989 = vmatpush1.msra.mxu0 0.0
        %1990 = vmatprep.subr.mxu0 0.0
        %1991 = vmatpush1.msra.mxu0 0.0
        %1992 = vmatprep.subr.mxu0 0.0
        %1993 = vmatpush1.msra.mxu0 0.0
        %1994 = vmatprep.mubr.f32.mxu0 0.0
        %v1995 = vand.u32 %v1082, 4294901760
        %1996 = vmatmul.mubr.f32.gmra.mrb[0].mxu0 %v1995
        %v1997 = vpop.f32.mrb[0].mxu0
        %v1998 = vadd.f32 %v1926, %v1997
        %v1999 = vpop.f32.mrb[0].mxu0
        %2000 = vdwg.mxu0
        %v2001 = vld [vmem:[%s141] sm:$0xff]
        %v2002 = vld [vmem:[%s141 + $0x8] sm:$0xf]
        %s2003 = scalar_lea.vmem %s1, 16
        %v2004 = vld [vmem:[%s2003] sm:$0xff]
        %v2007 = vcombine.high %v2001, %v2001
        %2008 = vrot.lane.b32.xlu0 %v2001, 126
        %v2009 = vpop.permute.xlu0 %2008
        %2010 = vrot.lane.b32.xlu0 %v2007, 126
        %v2011 = vpop.permute.xlu0 %2010
        %2012 = vrot.lane.b32.xlu0 %v2002, 126
        %v2013 = vpop.permute.xlu0 %2012
        %vm2014 = vcmask 1031168
        %v2015 = vsel %vm2014, %v2009, %v2011
        %v2016 = vsel %vm2014, %v2011, %v2013
        %v2018 = vsel %vm159, %v2004, 0
        %v2020 = vsel %vm163, %v2015, 0
        %v2022 = vsel %vm163, %v2016, 0
        %v2024 = vsel %vm163, %v2013, 0
        %v2026 = vand.u32 %v2022, 4294901760
        %2027 = vmatprep.subr.mxu0 %v2026
        %v2028 = vand.u32 %v2020, 4294901760
        %2029 = vmatpush1.msra.mxu0 %v2028
        %2030 = vmatprep.subr.mxu0 0.0
        %2031 = vmatpush1.msra.mxu0 0.0
        %2032 = vmatprep.subr.mxu0 0.0
        %2033 = vmatpush1.msra.mxu0 0.0
        %2034 = vmatprep.subr.mxu0 0.0
        %2035 = vmatpush1.msra.mxu0 0.0
        %2036 = vmatprep.subr.mxu0 0.0
        %2037 = vmatpush1.msra.mxu0 0.0
        %2038 = vmatprep.subr.mxu0 0.0
        %2039 = vmatpush1.msra.mxu0 0.0
        %2040 = vmatprep.subr.mxu0 0.0
        %2041 = vmatpush1.msra.mxu0 0.0
        %2042 = vmatprep.subr.mxu0 0.0
        %2043 = vmatpush1.msra.mxu0 0.0
        %2044 = vmatprep.subr.mxu0 0.0
        %2045 = vmatpush1.msra.mxu0 0.0
        %2046 = vmatprep.subr.mxu0 0.0
        %2047 = vmatpush1.msra.mxu0 0.0
        %2048 = vmatprep.subr.mxu0 0.0
        %2049 = vmatpush1.msra.mxu0 0.0
        %2050 = vmatprep.subr.mxu0 0.0
        %2051 = vmatpush1.msra.mxu0 0.0
        %2052 = vmatprep.subr.mxu0 0.0
        %2053 = vmatpush1.msra.mxu0 0.0
        %2054 = vmatprep.subr.mxu0 0.0
        %2055 = vmatpush1.msra.mxu0 0.0
        %2056 = vmatprep.subr.mxu0 0.0
        %2057 = vmatpush1.msra.mxu0 0.0
        %2058 = vmatprep.subr.mxu0 0.0
        %2059 = vmatpush1.msra.mxu0 0.0
        %2060 = vmatprep.subr.mxu0 0.0
        %2061 = vmatpush1.msra.mxu0 0.0
        %2062 = vmatprep.subr.mxu0 0.0
        %2063 = vmatpush1.msra.mxu0 0.0
        %2064 = vmatprep.subr.mxu0 0.0
        %2065 = vmatpush1.msra.mxu0 0.0
        %2066 = vmatprep.subr.mxu0 0.0
        %2067 = vmatpush1.msra.mxu0 0.0
        %2068 = vmatprep.subr.mxu0 0.0
        %2069 = vmatpush1.msra.mxu0 0.0
        %2070 = vmatprep.subr.mxu0 0.0
        %2071 = vmatpush1.msra.mxu0 0.0
        %2072 = vmatprep.subr.mxu0 0.0
        %2073 = vmatpush1.msra.mxu0 0.0
        %2074 = vmatprep.subr.mxu0 0.0
        %2075 = vmatpush1.msra.mxu0 0.0
        %2076 = vmatprep.subr.mxu0 0.0
        %2077 = vmatpush1.msra.mxu0 0.0
        %2078 = vmatprep.subr.mxu0 0.0
        %2079 = vmatpush1.msra.mxu0 0.0
        %2080 = vmatprep.subr.mxu0 0.0
        %2081 = vmatpush1.msra.mxu0 0.0
        %2082 = vmatprep.subr.mxu0 0.0
        %2083 = vmatpush1.msra.mxu0 0.0
        %2084 = vmatprep.subr.mxu0 0.0
        %2085 = vmatpush1.msra.mxu0 0.0
        %2086 = vmatprep.subr.mxu0 0.0
        %2087 = vmatpush1.msra.mxu0 0.0
        %2088 = vmatprep.subr.mxu0 0.0
        %2089 = vmatpush1.msra.mxu0 0.0
        %2090 = vmatprep.subr.mxu0 0.0
        %2091 = vmatpush1.msra.mxu0 0.0
        %2092 = vmatprep.mubr.f32.mxu0 0.0
        %v2093 = vand.u32 %v2018, 4294901760
        %v2094 = vsub.f32 %v2018, %v2093
        %v2095 = vand.u32 %v2094, 4294901760
        %v2096 = vsub.f32 %v2094, %v2095
        %v2097 = vand.u32 %v2096, 4294901760
        %2098 = vmatmul.mubr.f32.gmra.mrb[0].mxu0 %v2097
        %v2099 = vpop.f32.mrb[0].mxu0
        %v2100 = vadd.f32 0.0, %v2099
        %v2101 = vpop.f32.mrb[0].mxu0
        %v2102 = vadd.f32 0.0, %v2101
        %2103 = vdwg.mxu0
        %v2104 = vand.u32 %v2022, 4294901760
        %v2105 = vsub.f32 %v2022, %v2104
        %v2106 = vand.u32 %v2105, 4294901760
        %v2107 = vsub.f32 %v2105, %v2106
        %v2108 = vand.u32 %v2107, 4294901760
        %2109 = vmatprep.subr.mxu0 %v2108
        %v2110 = vand.u32 %v2020, 4294901760
        %v2111 = vsub.f32 %v2020, %v2110
        %v2112 = vand.u32 %v2111, 4294901760
        %v2113 = vsub.f32 %v2111, %v2112
        %v2114 = vand.u32 %v2113, 4294901760
        %2115 = vmatpush1.msra.mxu0 %v2114
        %2116 = vmatprep.subr.mxu0 0.0
        %2117 = vmatpush1.msra.mxu0 0.0
        %2118 = vmatprep.subr.mxu0 0.0
        %2119 = vmatpush1.msra.mxu0 0.0
        %2120 = vmatprep.subr.mxu0 0.0
        %2121 = vmatpush1.msra.mxu0 0.0
        %2122 = vmatprep.subr.mxu0 0.0
        %2123 = vmatpush1.msra.mxu0 0.0
        %2124 = vmatprep.subr.mxu0 0.0
        %2125 = vmatpush1.msra.mxu0 0.0
        %2126 = vmatprep.subr.mxu0 0.0
        %2127 = vmatpush1.msra.mxu0 0.0
        %2128 = vmatprep.subr.mxu0 0.0
        %2129 = vmatpush1.msra.mxu0 0.0
        %2130 = vmatprep.subr.mxu0 0.0
        %2131 = vmatpush1.msra.mxu0 0.0
        %2132 = vmatprep.subr.mxu0 0.0
        %2133 = vmatpush1.msra.mxu0 0.0
        %2134 = vmatprep.subr.mxu0 0.0
        %2135 = vmatpush1.msra.mxu0 0.0
        %2136 = vmatprep.subr.mxu0 0.0
        %2137 = vmatpush1.msra.mxu0 0.0
        %2138 = vmatprep.subr.mxu0 0.0
        %2139 = vmatpush1.msra.mxu0 0.0
        %2140 = vmatprep.subr.mxu0 0.0
        %2141 = vmatpush1.msra.mxu0 0.0
        %2142 = vmatprep.subr.mxu0 0.0
        %2143 = vmatpush1.msra.mxu0 0.0
        %2144 = vmatprep.subr.mxu0 0.0
        %2145 = vmatpush1.msra.mxu0 0.0
        %2146 = vmatprep.subr.mxu0 0.0
        %2147 = vmatpush1.msra.mxu0 0.0
        %2148 = vmatprep.subr.mxu0 0.0
        %2149 = vmatpush1.msra.mxu0 0.0
        %2150 = vmatprep.subr.mxu0 0.0
        %2151 = vmatpush1.msra.mxu0 0.0
        %2152 = vmatprep.subr.mxu0 0.0
        %2153 = vmatpush1.msra.mxu0 0.0
        %2154 = vmatprep.subr.mxu0 0.0
        %2155 = vmatpush1.msra.mxu0 0.0
        %2156 = vmatprep.subr.mxu0 0.0
        %2157 = vmatpush1.msra.mxu0 0.0
        %2158 = vmatprep.subr.mxu0 0.0
        %2159 = vmatpush1.msra.mxu0 0.0
        %2160 = vmatprep.subr.mxu0 0.0
        %2161 = vmatpush1.msra.mxu0 0.0
        %2162 = vmatprep.subr.mxu0 0.0
        %2163 = vmatpush1.msra.mxu0 0.0
        %2164 = vmatprep.subr.mxu0 0.0
        %2165 = vmatpush1.msra.mxu0 0.0
        %2166 = vmatprep.subr.mxu0 0.0
        %2167 = vmatpush1.msra.mxu0 0.0
        %2168 = vmatprep.subr.mxu0 0.0
        %2169 = vmatpush1.msra.mxu0 0.0
        %2170 = vmatprep.subr.mxu0 0.0
        %2171 = vmatpush1.msra.mxu0 0.0
        %2172 = vmatprep.subr.mxu0 0.0
        %2173 = vmatpush1.msra.mxu0 0.0
        %2174 = vmatprep.subr.mxu0 0.0
        %2175 = vmatpush1.msra.mxu0 0.0
        %2176 = vmatprep.subr.mxu0 0.0
        %2177 = vmatpush1.msra.mxu0 0.0
        %2178 = vmatprep.mubr.f32.mxu0 0.0
        %v2179 = vand.u32 %v2018, 4294901760
        %2180 = vmatmul.mubr.f32.gmra.mrb[0].mxu0 %v2179
        %v2181 = vpop.f32.mrb[0].mxu0
        %v2182 = vadd.f32 %v2100, %v2181
        %v2183 = vpop.f32.mrb[0].mxu0
        %v2184 = vadd.f32 %v2102, %v2183
        %2185 = vdwg.mxu0
        %v2186 = vand.u32 %v2022, 4294901760
        %v2187 = vsub.f32 %v2022, %v2186
        %2188 = vmatprep.subr.mxu0 %v2187
        %v2189 = vand.u32 %v2020, 4294901760
        %v2190 = vsub.f32 %v2020, %v2189
        %2191 = vmatpush1.msra.mxu0 %v2190
        %2192 = vmatprep.subr.mxu0 0.0
        %2193 = vmatpush1.msra.mxu0 0.0
        %2194 = vmatprep.subr.mxu0 0.0
        %2195 = vmatpush1.msra.mxu0 0.0
        %2196 = vmatprep.subr.mxu0 0.0
        %2197 = vmatpush1.msra.mxu0 0.0
        %2198 = vmatprep.subr.mxu0 0.0
        %2199 = vmatpush1.msra.mxu0 0.0
        %2200 = vmatprep.subr.mxu0 0.0
        %2201 = vmatpush1.msra.mxu0 0.0
        %2202 = vmatprep.subr.mxu0 0.0
        %2203 = vmatpush1.msra.mxu0 0.0
        %2204 = vmatprep.subr.mxu0 0.0
        %2205 = vmatpush1.msra.mxu0 0.0
        %2206 = vmatprep.subr.mxu0 0.0
        %2207 = vmatpush1.msra.mxu0 0.0
        %2208 = vmatprep.subr.mxu0 0.0
        %2209 = vmatpush1.msra.mxu0 0.0
        %2210 = vmatprep.subr.mxu0 0.0
        %2211 = vmatpush1.msra.mxu0 0.0
        %2212 = vmatprep.subr.mxu0 0.0
        %2213 = vmatpush1.msra.mxu0 0.0
        %2214 = vmatprep.subr.mxu0 0.0
        %2215 = vmatpush1.msra.mxu0 0.0
        %2216 = vmatprep.subr.mxu0 0.0
        %2217 = vmatpush1.msra.mxu0 0.0
        %2218 = vmatprep.subr.mxu0 0.0
        %2219 = vmatpush1.msra.mxu0 0.0
        %2220 = vmatprep.subr.mxu0 0.0
        %2221 = vmatpush1.msra.mxu0 0.0
        %2222 = vmatprep.subr.mxu0 0.0
        %2223 = vmatpush1.msra.mxu0 0.0
        %2224 = vmatprep.subr.mxu0 0.0
        %2225 = vmatpush1.msra.mxu0 0.0
        %2226 = vmatprep.subr.mxu0 0.0
        %2227 = vmatpush1.msra.mxu0 0.0
        %2228 = vmatprep.subr.mxu0 0.0
        %2229 = vmatpush1.msra.mxu0 0.0
        %2230 = vmatprep.subr.mxu0 0.0
        %2231 = vmatpush1.msra.mxu0 0.0
        %2232 = vmatprep.subr.mxu0 0.0
        %2233 = vmatpush1.msra.mxu0 0.0
        %2234 = vmatprep.subr.mxu0 0.0
        %2235 = vmatpush1.msra.mxu0 0.0
        %2236 = vmatprep.subr.mxu0 0.0
        %2237 = vmatpush1.msra.mxu0 0.0
        %2238 = vmatprep.subr.mxu0 0.0
        %2239 = vmatpush1.msra.mxu0 0.0
        %2240 = vmatprep.subr.mxu0 0.0
        %2241 = vmatpush1.msra.mxu0 0.0
        %2242 = vmatprep.subr.mxu0 0.0
        %2243 = vmatpush1.msra.mxu0 0.0
        %2244 = vmatprep.subr.mxu0 0.0
        %2245 = vmatpush1.msra.mxu0 0.0
        %2246 = vmatprep.subr.mxu0 0.0
        %2247 = vmatpush1.msra.mxu0 0.0
        %2248 = vmatprep.subr.mxu0 0.0
        %2249 = vmatpush1.msra.mxu0 0.0
        %2250 = vmatprep.subr.mxu0 0.0
        %2251 = vmatpush1.msra.mxu0 0.0
        %2252 = vmatprep.subr.mxu0 0.0
        %2253 = vmatpush1.msra.mxu0 0.0
        %2254 = vmatprep.mubr.f32.mxu0 0.0
        %v2255 = vand.u32 %v2018, 4294901760
        %v2256 = vsub.f32 %v2018, %v2255
        %2257 = vmatmul.mubr.f32.gmra.mrb[0].mxu0 %v2256
        %v2258 = vpop.f32.mrb[0].mxu0
        %v2259 = vadd.f32 %v2182, %v2258
        %v2260 = vpop.f32.mrb[0].mxu0
        %v2261 = vadd.f32 %v2184, %v2260
        %2262 = vdwg.mxu0
        %v2263 = vand.u32 %v2022, 4294901760
        %2264 = vmatprep.subr.mxu0 %v2263
        %v2265 = vand.u32 %v2020, 4294901760
        %2266 = vmatpush1.msra.mxu0 %v2265
        %2267 = vmatprep.subr.mxu0 0.0
        %2268 = vmatpush1.msra.mxu0 0.0
        %2269 = vmatprep.subr.mxu0 0.0
        %2270 = vmatpush1.msra.mxu0 0.0
        %2271 = vmatprep.subr.mxu0 0.0
        %2272 = vmatpush1.msra.mxu0 0.0
        %2273 = vmatprep.subr.mxu0 0.0
        %2274 = vmatpush1.msra.mxu0 0.0
        %2275 = vmatprep.subr.mxu0 0.0
        %2276 = vmatpush1.msra.mxu0 0.0
        %2277 = vmatprep.subr.mxu0 0.0
        %2278 = vmatpush1.msra.mxu0 0.0
        %2279 = vmatprep.subr.mxu0 0.0
        %2280 = vmatpush1.msra.mxu0 0.0
        %2281 = vmatprep.subr.mxu0 0.0
        %2282 = vmatpush1.msra.mxu0 0.0
        %2283 = vmatprep.subr.mxu0 0.0
        %2284 = vmatpush1.msra.mxu0 0.0
        %2285 = vmatprep.subr.mxu0 0.0
        %2286 = vmatpush1.msra.mxu0 0.0
        %2287 = vmatprep.subr.mxu0 0.0
        %2288 = vmatpush1.msra.mxu0 0.0
        %2289 = vmatprep.subr.mxu0 0.0
        %2290 = vmatpush1.msra.mxu0 0.0
        %2291 = vmatprep.subr.mxu0 0.0
        %2292 = vmatpush1.msra.mxu0 0.0
        %2293 = vmatprep.subr.mxu0 0.0
        %2294 = vmatpush1.msra.mxu0 0.0
        %2295 = vmatprep.subr.mxu0 0.0
        %2296 = vmatpush1.msra.mxu0 0.0
        %2297 = vmatprep.subr.mxu0 0.0
        %2298 = vmatpush1.msra.mxu0 0.0
        %2299 = vmatprep.subr.mxu0 0.0
        %2300 = vmatpush1.msra.mxu0 0.0
        %2301 = vmatprep.subr.mxu0 0.0
        %2302 = vmatpush1.msra.mxu0 0.0
        %2303 = vmatprep.subr.mxu0 0.0
        %2304 = vmatpush1.msra.mxu0 0.0
        %2305 = vmatprep.subr.mxu0 0.0
        %2306 = vmatpush1.msra.mxu0 0.0
        %2307 = vmatprep.subr.mxu0 0.0
        %2308 = vmatpush1.msra.mxu0 0.0
        %2309 = vmatprep.subr.mxu0 0.0
        %2310 = vmatpush1.msra.mxu0 0.0
        %2311 = vmatprep.subr.mxu0 0.0
        %2312 = vmatpush1.msra.mxu0 0.0
        %2313 = vmatprep.subr.mxu0 0.0
        %2314 = vmatpush1.msra.mxu0 0.0
        %2315 = vmatprep.subr.mxu0 0.0
        %2316 = vmatpush1.msra.mxu0 0.0
        %2317 = vmatprep.subr.mxu0 0.0
        %2318 = vmatpush1.msra.mxu0 0.0
        %2319 = vmatprep.subr.mxu0 0.0
        %2320 = vmatpush1.msra.mxu0 0.0
        %2321 = vmatprep.subr.mxu0 0.0
        %2322 = vmatpush1.msra.mxu0 0.0
        %2323 = vmatprep.subr.mxu0 0.0
        %2324 = vmatpush1.msra.mxu0 0.0
        %2325 = vmatprep.subr.mxu0 0.0
        %2326 = vmatpush1.msra.mxu0 0.0
        %2327 = vmatprep.subr.mxu0 0.0
        %2328 = vmatpush1.msra.mxu0 0.0
        %2329 = vmatprep.mubr.f32.mxu0 0.0
        %v2330 = vand.u32 %v2018, 4294901760
        %v2331 = vsub.f32 %v2018, %v2330
        %v2332 = vand.u32 %v2331, 4294901760
        %2333 = vmatmul.mubr.f32.gmra.mrb[0].mxu0 %v2332
        %v2334 = vpop.f32.mrb[0].mxu0
        %v2335 = vadd.f32 %v2259, %v2334
        %v2336 = vpop.f32.mrb[0].mxu0
        %v2337 = vadd.f32 %v2261, %v2336
        %2338 = vdwg.mxu0
        %v2339 = vand.u32 %v2022, 4294901760
        %v2340 = vsub.f32 %v2022, %v2339
        %v2341 = vand.u32 %v2340, 4294901760
        %2342 = vmatprep.subr.mxu0 %v2341
        %v2343 = vand.u32 %v2020, 4294901760
        %v2344 = vsub.f32 %v2020, %v2343
        %v2345 = vand.u32 %v2344, 4294901760
        %2346 = vmatpush1.msra.mxu0 %v2345
        %2347 = vmatprep.subr.mxu0 0.0
        %2348 = vmatpush1.msra.mxu0 0.0
        %2349 = vmatprep.subr.mxu0 0.0
        %2350 = vmatpush1.msra.mxu0 0.0
        %2351 = vmatprep.subr.mxu0 0.0
        %2352 = vmatpush1.msra.mxu0 0.0
        %2353 = vmatprep.subr.mxu0 0.0
        %2354 = vmatpush1.msra.mxu0 0.0
        %2355 = vmatprep.subr.mxu0 0.0
        %2356 = vmatpush1.msra.mxu0 0.0
        %2357 = vmatprep.subr.mxu0 0.0
        %2358 = vmatpush1.msra.mxu0 0.0
        %2359 = vmatprep.subr.mxu0 0.0
        %2360 = vmatpush1.msra.mxu0 0.0
        %2361 = vmatprep.subr.mxu0 0.0
        %2362 = vmatpush1.msra.mxu0 0.0
        %2363 = vmatprep.subr.mxu0 0.0
        %2364 = vmatpush1.msra.mxu0 0.0
        %2365 = vmatprep.subr.mxu0 0.0
        %2366 = vmatpush1.msra.mxu0 0.0
        %2367 = vmatprep.subr.mxu0 0.0
        %2368 = vmatpush1.msra.mxu0 0.0
        %2369 = vmatprep.subr.mxu0 0.0
        %2370 = vmatpush1.msra.mxu0 0.0
        %2371 = vmatprep.subr.mxu0 0.0
        %2372 = vmatpush1.msra.mxu0 0.0
        %2373 = vmatprep.subr.mxu0 0.0
        %2374 = vmatpush1.msra.mxu0 0.0
        %2375 = vmatprep.subr.mxu0 0.0
        %2376 = vmatpush1.msra.mxu0 0.0
        %2377 = vmatprep.subr.mxu0 0.0
        %2378 = vmatpush1.msra.mxu0 0.0
        %2379 = vmatprep.subr.mxu0 0.0
        %2380 = vmatpush1.msra.mxu0 0.0
        %2381 = vmatprep.subr.mxu0 0.0
        %2382 = vmatpush1.msra.mxu0 0.0
        %2383 = vmatprep.subr.mxu0 0.0
        %2384 = vmatpush1.msra.mxu0 0.0
        %2385 = vmatprep.subr.mxu0 0.0
        %2386 = vmatpush1.msra.mxu0 0.0
        %2387 = vmatprep.subr.mxu0 0.0
        %2388 = vmatpush1.msra.mxu0 0.0
        %2389 = vmatprep.subr.mxu0 0.0
        %2390 = vmatpush1.msra.mxu0 0.0
        %2391 = vmatprep.subr.mxu0 0.0
        %2392 = vmatpush1.msra.mxu0 0.0
        %2393 = vmatprep.subr.mxu0 0.0
        %2394 = vmatpush1.msra.mxu0 0.0
        %2395 = vmatprep.subr.mxu0 0.0
        %2396 = vmatpush1.msra.mxu0 0.0
        %2397 = vmatprep.subr.mxu0 0.0
        %2398 = vmatpush1.msra.mxu0 0.0
        %2399 = vmatprep.subr.mxu0 0.0
        %2400 = vmatpush1.msra.mxu0 0.0
        %2401 = vmatprep.subr.mxu0 0.0
        %2402 = vmatpush1.msra.mxu0 0.0
        %2403 = vmatprep.subr.mxu0 0.0
        %2404 = vmatpush1.msra.mxu0 0.0
        %2405 = vmatprep.subr.mxu0 0.0
        %2406 = vmatpush1.msra.mxu0 0.0
        %2407 = vmatprep.subr.mxu0 0.0
        %2408 = vmatpush1.msra.mxu0 0.0
        %2409 = vmatprep.mubr.f32.mxu0 0.0
        %v2410 = vand.u32 %v2018, 4294901760
        %2411 = vmatmul.mubr.f32.gmra.mrb[0].mxu0 %v2410
        %v2412 = vpop.f32.mrb[0].mxu0
        %v2413 = vadd.f32 %v2335, %v2412
        %v2414 = vpop.f32.mrb[0].mxu0
        %v2415 = vadd.f32 %v2337, %v2414
        %2416 = vdwg.mxu0
        %v2417 = vand.u32 %v2022, 4294901760
        %2418 = vmatprep.subr.mxu0 %v2417
        %v2419 = vand.u32 %v2020, 4294901760
        %2420 = vmatpush1.msra.mxu0 %v2419
        %2421 = vmatprep.subr.mxu0 0.0
        %2422 = vmatpush1.msra.mxu0 0.0
        %2423 = vmatprep.subr.mxu0 0.0
        %2424 = vmatpush1.msra.mxu0 0.0
        %2425 = vmatprep.subr.mxu0 0.0
        %2426 = vmatpush1.msra.mxu0 0.0
        %2427 = vmatprep.subr.mxu0 0.0
        %2428 = vmatpush1.msra.mxu0 0.0
        %2429 = vmatprep.subr.mxu0 0.0
        %2430 = vmatpush1.msra.mxu0 0.0
        %2431 = vmatprep.subr.mxu0 0.0
        %2432 = vmatpush1.msra.mxu0 0.0
        %2433 = vmatprep.subr.mxu0 0.0
        %2434 = vmatpush1.msra.mxu0 0.0
        %2435 = vmatprep.subr.mxu0 0.0
        %2436 = vmatpush1.msra.mxu0 0.0
        %2437 = vmatprep.subr.mxu0 0.0
        %2438 = vmatpush1.msra.mxu0 0.0
        %2439 = vmatprep.subr.mxu0 0.0
        %2440 = vmatpush1.msra.mxu0 0.0
        %2441 = vmatprep.subr.mxu0 0.0
        %2442 = vmatpush1.msra.mxu0 0.0
        %2443 = vmatprep.subr.mxu0 0.0
        %2444 = vmatpush1.msra.mxu0 0.0
        %2445 = vmatprep.subr.mxu0 0.0
        %2446 = vmatpush1.msra.mxu0 0.0
        %2447 = vmatprep.subr.mxu0 0.0
        %2448 = vmatpush1.msra.mxu0 0.0
        %2449 = vmatprep.subr.mxu0 0.0
        %2450 = vmatpush1.msra.mxu0 0.0
        %2451 = vmatprep.subr.mxu0 0.0
        %2452 = vmatpush1.msra.mxu0 0.0
        %2453 = vmatprep.subr.mxu0 0.0
        %2454 = vmatpush1.msra.mxu0 0.0
        %2455 = vmatprep.subr.mxu0 0.0
        %2456 = vmatpush1.msra.mxu0 0.0
        %2457 = vmatprep.subr.mxu0 0.0
        %2458 = vmatpush1.msra.mxu0 0.0
        %2459 = vmatprep.subr.mxu0 0.0
        %2460 = vmatpush1.msra.mxu0 0.0
        %2461 = vmatprep.subr.mxu0 0.0
        %2462 = vmatpush1.msra.mxu0 0.0
        %2463 = vmatprep.subr.mxu0 0.0
        %2464 = vmatpush1.msra.mxu0 0.0
        %2465 = vmatprep.subr.mxu0 0.0
        %2466 = vmatpush1.msra.mxu0 0.0
        %2467 = vmatprep.subr.mxu0 0.0
        %2468 = vmatpush1.msra.mxu0 0.0
        %2469 = vmatprep.subr.mxu0 0.0
        %2470 = vmatpush1.msra.mxu0 0.0
        %2471 = vmatprep.subr.mxu0 0.0
        %2472 = vmatpush1.msra.mxu0 0.0
        %2473 = vmatprep.subr.mxu0 0.0
        %2474 = vmatpush1.msra.mxu0 0.0
        %2475 = vmatprep.subr.mxu0 0.0
        %2476 = vmatpush1.msra.mxu0 0.0
        %2477 = vmatprep.subr.mxu0 0.0
        %2478 = vmatpush1.msra.mxu0 0.0
        %2479 = vmatprep.subr.mxu0 0.0
        %2480 = vmatpush1.msra.mxu0 0.0
        %2481 = vmatprep.subr.mxu0 0.0
        %2482 = vmatpush1.msra.mxu0 0.0
        %2483 = vmatprep.mubr.f32.mxu0 0.0
        %v2484 = vand.u32 %v2018, 4294901760
        %2485 = vmatmul.mubr.f32.gmra.mrb[0].mxu0 %v2484
        %v2486 = vpop.f32.mrb[0].mxu0
        %v2487 = vadd.f32 %v2413, %v2486
        %v2488 = vpop.f32.mrb[0].mxu0
        %v2489 = vadd.f32 %v2415, %v2488
        %2490 = vdwg.mxu0
        %2491 = vmatprep.subr.mxu0 0.0
        %v2492 = vand.u32 %v2024, 4294901760
        %2493 = vmatpush1.msra.mxu0 %v2492
        %2494 = vmatprep.subr.mxu0 0.0
        %2495 = vmatpush1.msra.mxu0 0.0
        %2496 = vmatprep.subr.mxu0 0.0
        %2497 = vmatpush1.msra.mxu0 0.0
        %2498 = vmatprep.subr.mxu0 0.0
        %2499 = vmatpush1.msra.mxu0 0.0
        %2500 = vmatprep.subr.mxu0 0.0
        %2501 = vmatpush1.msra.mxu0 0.0
        %2502 = vmatprep.subr.mxu0 0.0
        %2503 = vmatpush1.msra.mxu0 0.0
        %2504 = vmatprep.subr.mxu0 0.0
        %2505 = vmatpush1.msra.mxu0 0.0
        %2506 = vmatprep.subr.mxu0 0.0
        %2507 = vmatpush1.msra.mxu0 0.0
        %2508 = vmatprep.subr.mxu0 0.0
        %2509 = vmatpush1.msra.mxu0 0.0
        %2510 = vmatprep.subr.mxu0 0.0
        %2511 = vmatpush1.msra.mxu0 0.0
        %2512 = vmatprep.subr.mxu0 0.0
        %2513 = vmatpush1.msra.mxu0 0.0
        %2514 = vmatprep.subr.mxu0 0.0
        %2515 = vmatpush1.msra.mxu0 0.0
        %2516 = vmatprep.subr.mxu0 0.0
        %2517 = vmatpush1.msra.mxu0 0.0
        %2518 = vmatprep.subr.mxu0 0.0
        %2519 = vmatpush1.msra.mxu0 0.0
        %2520 = vmatprep.subr.mxu0 0.0
        %2521 = vmatpush1.msra.mxu0 0.0
        %2522 = vmatprep.subr.mxu0 0.0
        %2523 = vmatpush1.msra.mxu0 0.0
        %2524 = vmatprep.subr.mxu0 0.0
        %2525 = vmatpush1.msra.mxu0 0.0
        %2526 = vmatprep.subr.mxu0 0.0
        %2527 = vmatpush1.msra.mxu0 0.0
        %2528 = vmatprep.subr.mxu0 0.0
        %2529 = vmatpush1.msra.mxu0 0.0
        %2530 = vmatprep.subr.mxu0 0.0
        %2531 = vmatpush1.msra.mxu0 0.0
        %2532 = vmatprep.subr.mxu0 0.0
        %2533 = vmatpush1.msra.mxu0 0.0
        %2534 = vmatprep.subr.mxu0 0.0
        %2535 = vmatpush1.msra.mxu0 0.0
        %2536 = vmatprep.subr.mxu0 0.0
        %2537 = vmatpush1.msra.mxu0 0.0
        %2538 = vmatprep.subr.mxu0 0.0
        %2539 = vmatpush1.msra.mxu0 0.0
        %2540 = vmatprep.subr.mxu0 0.0
        %2541 = vmatpush1.msra.mxu0 0.0
        %2542 = vmatprep.subr.mxu0 0.0
        %2543 = vmatpush1.msra.mxu0 0.0
        %2544 = vmatprep.subr.mxu0 0.0
        %2545 = vmatpush1.msra.mxu0 0.0
        %2546 = vmatprep.subr.mxu0 0.0
        %2547 = vmatpush1.msra.mxu0 0.0
        %2548 = vmatprep.subr.mxu0 0.0
        %2549 = vmatpush1.msra.mxu0 0.0
        %2550 = vmatprep.subr.mxu0 0.0
        %2551 = vmatpush1.msra.mxu0 0.0
        %2552 = vmatprep.subr.mxu0 0.0
        %2553 = vmatpush1.msra.mxu0 0.0
        %2554 = vmatprep.subr.mxu0 0.0
        %2555 = vmatpush1.msra.mxu0 0.0
        %2556 = vmatprep.mubr.f32.mxu0 0.0
        %v2557 = vand.u32 %v2018, 4294901760
        %v2558 = vsub.f32 %v2018, %v2557
        %v2559 = vand.u32 %v2558, 4294901760
        %v2560 = vsub.f32 %v2558, %v2559
        %v2561 = vand.u32 %v2560, 4294901760
        %2562 = vmatmul.mubr.f32.gmra.mrb[0].mxu0 %v2561
        %v2563 = vpop.f32.mrb[0].mxu0
        %v2564 = vadd.f32 0.0, %v2563
        %v2565 = vpop.f32.mrb[0].mxu0
        %2566 = vdwg.mxu0
        %2567 = vmatprep.subr.mxu0 0.0
        %v2568 = vand.u32 %v2024, 4294901760
        %v2569 = vsub.f32 %v2024, %v2568
        %v2570 = vand.u32 %v2569, 4294901760
        %v2571 = vsub.f32 %v2569, %v2570
        %v2572 = vand.u32 %v2571, 4294901760
        %2573 = vmatpush1.msra.mxu0 %v2572
        %2574 = vmatprep.subr.mxu0 0.0
        %2575 = vmatpush1.msra.mxu0 0.0
        %2576 = vmatprep.subr.mxu0 0.0
        %2577 = vmatpush1.msra.mxu0 0.0
        %2578 = vmatprep.subr.mxu0 0.0
        %2579 = vmatpush1.msra.mxu0 0.0
        %2580 = vmatprep.subr.mxu0 0.0
        %2581 = vmatpush1.msra.mxu0 0.0
        %2582 = vmatprep.subr.mxu0 0.0
        %2583 = vmatpush1.msra.mxu0 0.0
        %2584 = vmatprep.subr.mxu0 0.0
        %2585 = vmatpush1.msra.mxu0 0.0
        %2586 = vmatprep.subr.mxu0 0.0
        %2587 = vmatpush1.msra.mxu0 0.0
        %2588 = vmatprep.subr.mxu0 0.0
        %2589 = vmatpush1.msra.mxu0 0.0
        %2590 = vmatprep.subr.mxu0 0.0
        %2591 = vmatpush1.msra.mxu0 0.0
        %2592 = vmatprep.subr.mxu0 0.0
        %2593 = vmatpush1.msra.mxu0 0.0
        %2594 = vmatprep.subr.mxu0 0.0
        %2595 = vmatpush1.msra.mxu0 0.0
        %2596 = vmatprep.subr.mxu0 0.0
        %2597 = vmatpush1.msra.mxu0 0.0
        %2598 = vmatprep.subr.mxu0 0.0
        %2599 = vmatpush1.msra.mxu0 0.0
        %2600 = vmatprep.subr.mxu0 0.0
        %2601 = vmatpush1.msra.mxu0 0.0
        %2602 = vmatprep.subr.mxu0 0.0
        %2603 = vmatpush1.msra.mxu0 0.0
        %2604 = vmatprep.subr.mxu0 0.0
        %2605 = vmatpush1.msra.mxu0 0.0
        %2606 = vmatprep.subr.mxu0 0.0
        %2607 = vmatpush1.msra.mxu0 0.0
        %2608 = vmatprep.subr.mxu0 0.0
        %2609 = vmatpush1.msra.mxu0 0.0
        %2610 = vmatprep.subr.mxu0 0.0
        %2611 = vmatpush1.msra.mxu0 0.0
        %2612 = vmatprep.subr.mxu0 0.0
        %2613 = vmatpush1.msra.mxu0 0.0
        %2614 = vmatprep.subr.mxu0 0.0
        %2615 = vmatpush1.msra.mxu0 0.0
        %2616 = vmatprep.subr.mxu0 0.0
        %2617 = vmatpush1.msra.mxu0 0.0
        %2618 = vmatprep.subr.mxu0 0.0
        %2619 = vmatpush1.msra.mxu0 0.0
        %2620 = vmatprep.subr.mxu0 0.0
        %2621 = vmatpush1.msra.mxu0 0.0
        %2622 = vmatprep.subr.mxu0 0.0
        %2623 = vmatpush1.msra.mxu0 0.0
        %2624 = vmatprep.subr.mxu0 0.0
        %2625 = vmatpush1.msra.mxu0 0.0
        %2626 = vmatprep.subr.mxu0 0.0
        %2627 = vmatpush1.msra.mxu0 0.0
        %2628 = vmatprep.subr.mxu0 0.0
        %2629 = vmatpush1.msra.mxu0 0.0
        %2630 = vmatprep.subr.mxu0 0.0
        %2631 = vmatpush1.msra.mxu0 0.0
        %2632 = vmatprep.subr.mxu0 0.0
        %2633 = vmatpush1.msra.mxu0 0.0
        %2634 = vmatprep.subr.mxu0 0.0
        %2635 = vmatpush1.msra.mxu0 0.0
        %2636 = vmatprep.mubr.f32.mxu0 0.0
        %v2637 = vand.u32 %v2018, 4294901760
        %2638 = vmatmul.mubr.f32.gmra.mrb[0].mxu0 %v2637
        %v2639 = vpop.f32.mrb[0].mxu0
        %v2640 = vadd.f32 %v2564, %v2639
        %v2641 = vpop.f32.mrb[0].mxu0
        %2642 = vdwg.mxu0
        %2643 = vmatprep.subr.mxu0 0.0
        %v2644 = vand.u32 %v2024, 4294901760
        %v2645 = vsub.f32 %v2024, %v2644
        %2646 = vmatpush1.msra.mxu0 %v2645
        %2647 = vmatprep.subr.mxu0 0.0
        %2648 = vmatpush1.msra.mxu0 0.0
        %2649 = vmatprep.subr.mxu0 0.0
        %2650 = vmatpush1.msra.mxu0 0.0
        %2651 = vmatprep.subr.mxu0 0.0
        %2652 = vmatpush1.msra.mxu0 0.0
        %2653 = vmatprep.subr.mxu0 0.0
        %2654 = vmatpush1.msra.mxu0 0.0
        %2655 = vmatprep.subr.mxu0 0.0
        %2656 = vmatpush1.msra.mxu0 0.0
        %2657 = vmatprep.subr.mxu0 0.0
        %2658 = vmatpush1.msra.mxu0 0.0
        %2659 = vmatprep.subr.mxu0 0.0
        %2660 = vmatpush1.msra.mxu0 0.0
        %2661 = vmatprep.subr.mxu0 0.0
        %2662 = vmatpush1.msra.mxu0 0.0
        %2663 = vmatprep.subr.mxu0 0.0
        %2664 = vmatpush1.msra.mxu0 0.0
        %2665 = vmatprep.subr.mxu0 0.0
        %2666 = vmatpush1.msra.mxu0 0.0
        %2667 = vmatprep.subr.mxu0 0.0
        %2668 = vmatpush1.msra.mxu0 0.0
        %2669 = vmatprep.subr.mxu0 0.0
        %2670 = vmatpush1.msra.mxu0 0.0
        %2671 = vmatprep.subr.mxu0 0.0
        %2672 = vmatpush1.msra.mxu0 0.0
        %2673 = vmatprep.subr.mxu0 0.0
        %2674 = vmatpush1.msra.mxu0 0.0
        %2675 = vmatprep.subr.mxu0 0.0
        %2676 = vmatpush1.msra.mxu0 0.0
        %2677 = vmatprep.subr.mxu0 0.0
        %2678 = vmatpush1.msra.mxu0 0.0
        %2679 = vmatprep.subr.mxu0 0.0
        %2680 = vmatpush1.msra.mxu0 0.0
        %2681 = vmatprep.subr.mxu0 0.0
        %2682 = vmatpush1.msra.mxu0 0.0
        %2683 = vmatprep.subr.mxu0 0.0
        %2684 = vmatpush1.msra.mxu0 0.0
        %2685 = vmatprep.subr.mxu0 0.0
        %2686 = vmatpush1.msra.mxu0 0.0
        %2687 = vmatprep.subr.mxu0 0.0
        %2688 = vmatpush1.msra.mxu0 0.0
        %2689 = vmatprep.subr.mxu0 0.0
        %2690 = vmatpush1.msra.mxu0 0.0
        %2691 = vmatprep.subr.mxu0 0.0
        %2692 = vmatpush1.msra.mxu0 0.0
        %2693 = vmatprep.subr.mxu0 0.0
        %2694 = vmatpush1.msra.mxu0 0.0
        %2695 = vmatprep.subr.mxu0 0.0
        %2696 = vmatpush1.msra.mxu0 0.0
        %2697 = vmatprep.subr.mxu0 0.0
        %2698 = vmatpush1.msra.mxu0 0.0
        %2699 = vmatprep.subr.mxu0 0.0
        %2700 = vmatpush1.msra.mxu0 0.0
        %2701 = vmatprep.subr.mxu0 0.0
        %2702 = vmatpush1.msra.mxu0 0.0
        %2703 = vmatprep.subr.mxu0 0.0
        %2704 = vmatpush1.msra.mxu0 0.0
        %2705 = vmatprep.subr.mxu0 0.0
        %2706 = vmatpush1.msra.mxu0 0.0
        %2707 = vmatprep.subr.mxu0 0.0
        %2708 = vmatpush1.msra.mxu0 0.0
        %2709 = vmatprep.mubr.f32.mxu0 0.0
        %v2710 = vand.u32 %v2018, 4294901760
        %v2711 = vsub.f32 %v2018, %v2710
        %2712 = vmatmul.mubr.f32.gmra.mrb[0].mxu0 %v2711
        %v2713 = vpop.f32.mrb[0].mxu0
        %v2714 = vadd.f32 %v2640, %v2713
        %v2715 = vpop.f32.mrb[0].mxu0
        %2716 = vdwg.mxu0
        %2717 = vmatprep.subr.mxu0 0.0
        %v2718 = vand.u32 %v2024, 4294901760
        %2719 = vmatpush1.msra.mxu0 %v2718
        %2720 = vmatprep.subr.mxu0 0.0
        %2721 = vmatpush1.msra.mxu0 0.0
        %2722 = vmatprep.subr.mxu0 0.0
        %2723 = vmatpush1.msra.mxu0 0.0
        %2724 = vmatprep.subr.mxu0 0.0
        %2725 = vmatpush1.msra.mxu0 0.0
        %2726 = vmatprep.subr.mxu0 0.0
        %2727 = vmatpush1.msra.mxu0 0.0
        %2728 = vmatprep.subr.mxu0 0.0
        %2729 = vmatpush1.msra.mxu0 0.0
        %2730 = vmatprep.subr.mxu0 0.0
        %2731 = vmatpush1.msra.mxu0 0.0
        %2732 = vmatprep.subr.mxu0 0.0
        %2733 = vmatpush1.msra.mxu0 0.0
        %2734 = vmatprep.subr.mxu0 0.0
        %2735 = vmatpush1.msra.mxu0 0.0
        %2736 = vmatprep.subr.mxu0 0.0
        %2737 = vmatpush1.msra.mxu0 0.0
        %2738 = vmatprep.subr.mxu0 0.0
        %2739 = vmatpush1.msra.mxu0 0.0
        %2740 = vmatprep.subr.mxu0 0.0
        %2741 = vmatpush1.msra.mxu0 0.0
        %2742 = vmatprep.subr.mxu0 0.0
        %2743 = vmatpush1.msra.mxu0 0.0
        %2744 = vmatprep.subr.mxu0 0.0
        %2745 = vmatpush1.msra.mxu0 0.0
        %2746 = vmatprep.subr.mxu0 0.0
        %2747 = vmatpush1.msra.mxu0 0.0
        %2748 = vmatprep.subr.mxu0 0.0
        %2749 = vmatpush1.msra.mxu0 0.0
        %2750 = vmatprep.subr.mxu0 0.0
        %2751 = vmatpush1.msra.mxu0 0.0
        %2752 = vmatprep.subr.mxu0 0.0
        %2753 = vmatpush1.msra.mxu0 0.0
        %2754 = vmatprep.subr.mxu0 0.0
        %2755 = vmatpush1.msra.mxu0 0.0
        %2756 = vmatprep.subr.mxu0 0.0
        %2757 = vmatpush1.msra.mxu0 0.0
        %2758 = vmatprep.subr.mxu0 0.0
        %2759 = vmatpush1.msra.mxu0 0.0
        %2760 = vmatprep.subr.mxu0 0.0
        %2761 = vmatpush1.msra.mxu0 0.0
        %2762 = vmatprep.subr.mxu0 0.0
        %2763 = vmatpush1.msra.mxu0 0.0
        %2764 = vmatprep.subr.mxu0 0.0
        %2765 = vmatpush1.msra.mxu0 0.0
        %2766 = vmatprep.subr.mxu0 0.0
        %2767 = vmatpush1.msra.mxu0 0.0
        %2768 = vmatprep.subr.mxu0 0.0
        %2769 = vmatpush1.msra.mxu0 0.0
        %2770 = vmatprep.subr.mxu0 0.0
        %2771 = vmatpush1.msra.mxu0 0.0
        %2772 = vmatprep.subr.mxu0 0.0
        %2773 = vmatpush1.msra.mxu0 0.0
        %2774 = vmatprep.subr.mxu0 0.0
        %2775 = vmatpush1.msra.mxu0 0.0
        %2776 = vmatprep.subr.mxu0 0.0
        %2777 = vmatpush1.msra.mxu0 0.0
        %2778 = vmatprep.subr.mxu0 0.0
        %2779 = vmatpush1.msra.mxu0 0.0
        %2780 = vmatprep.subr.mxu0 0.0
        %2781 = vmatpush1.msra.mxu0 0.0
        %2782 = vmatprep.mubr.f32.mxu0 0.0
        %v2783 = vand.u32 %v2018, 4294901760
        %v2784 = vsub.f32 %v2018, %v2783
        %v2785 = vand.u32 %v2784, 4294901760
        %2786 = vmatmul.mubr.f32.gmra.mrb[0].mxu0 %v2785
        %v2787 = vpop.f32.mrb[0].mxu0
        %v2788 = vadd.f32 %v2714, %v2787
        %v2789 = vpop.f32.mrb[0].mxu0
        %2790 = vdwg.mxu0
        %2791 = vmatprep.subr.mxu0 0.0
        %v2792 = vand.u32 %v2024, 4294901760
        %v2793 = vsub.f32 %v2024, %v2792
        %v2794 = vand.u32 %v2793, 4294901760
        %2795 = vmatpush1.msra.mxu0 %v2794
        %2796 = vmatprep.subr.mxu0 0.0
        %2797 = vmatpush1.msra.mxu0 0.0
        %2798 = vmatprep.subr.mxu0 0.0
        %2799 = vmatpush1.msra.mxu0 0.0
        %2800 = vmatprep.subr.mxu0 0.0
        %2801 = vmatpush1.msra.mxu0 0.0
        %2802 = vmatprep.subr.mxu0 0.0
        %2803 = vmatpush1.msra.mxu0 0.0
        %2804 = vmatprep.subr.mxu0 0.0
        %2805 = vmatpush1.msra.mxu0 0.0
        %2806 = vmatprep.subr.mxu0 0.0
        %2807 = vmatpush1.msra.mxu0 0.0
        %2808 = vmatprep.subr.mxu0 0.0
        %2809 = vmatpush1.msra.mxu0 0.0
        %2810 = vmatprep.subr.mxu0 0.0
        %2811 = vmatpush1.msra.mxu0 0.0
        %2812 = vmatprep.subr.mxu0 0.0
        %2813 = vmatpush1.msra.mxu0 0.0
        %2814 = vmatprep.subr.mxu0 0.0
        %2815 = vmatpush1.msra.mxu0 0.0
        %2816 = vmatprep.subr.mxu0 0.0
        %2817 = vmatpush1.msra.mxu0 0.0
        %2818 = vmatprep.subr.mxu0 0.0
        %2819 = vmatpush1.msra.mxu0 0.0
        %2820 = vmatprep.subr.mxu0 0.0
        %2821 = vmatpush1.msra.mxu0 0.0
        %2822 = vmatprep.subr.mxu0 0.0
        %2823 = vmatpush1.msra.mxu0 0.0
        %2824 = vmatprep.subr.mxu0 0.0
        %2825 = vmatpush1.msra.mxu0 0.0
        %2826 = vmatprep.subr.mxu0 0.0
        %2827 = vmatpush1.msra.mxu0 0.0
        %2828 = vmatprep.subr.mxu0 0.0
        %2829 = vmatpush1.msra.mxu0 0.0
        %2830 = vmatprep.subr.mxu0 0.0
        %2831 = vmatpush1.msra.mxu0 0.0
        %2832 = vmatprep.subr.mxu0 0.0
        %2833 = vmatpush1.msra.mxu0 0.0
        %2834 = vmatprep.subr.mxu0 0.0
        %2835 = vmatpush1.msra.mxu0 0.0
        %2836 = vmatprep.subr.mxu0 0.0
        %2837 = vmatpush1.msra.mxu0 0.0
        %2838 = vmatprep.subr.mxu0 0.0
        %2839 = vmatpush1.msra.mxu0 0.0
        %2840 = vmatprep.subr.mxu0 0.0
        %2841 = vmatpush1.msra.mxu0 0.0
        %2842 = vmatprep.subr.mxu0 0.0
        %2843 = vmatpush1.msra.mxu0 0.0
        %2844 = vmatprep.subr.mxu0 0.0
        %2845 = vmatpush1.msra.mxu0 0.0
        %2846 = vmatprep.subr.mxu0 0.0
        %2847 = vmatpush1.msra.mxu0 0.0
        %2848 = vmatprep.subr.mxu0 0.0
        %2849 = vmatpush1.msra.mxu0 0.0
        %2850 = vmatprep.subr.mxu0 0.0
        %2851 = vmatpush1.msra.mxu0 0.0
        %2852 = vmatprep.subr.mxu0 0.0
        %2853 = vmatpush1.msra.mxu0 0.0
        %2854 = vmatprep.subr.mxu0 0.0
        %2855 = vmatpush1.msra.mxu0 0.0
        %2856 = vmatprep.subr.mxu0 0.0
        %2857 = vmatpush1.msra.mxu0 0.0
        %2858 = vmatprep.mubr.f32.mxu0 0.0
        %v2859 = vand.u32 %v2018, 4294901760
        %2860 = vmatmul.mubr.f32.gmra.mrb[0].mxu0 %v2859
        %v2861 = vpop.f32.mrb[0].mxu0
        %v2862 = vadd.f32 %v2788, %v2861
        %v2863 = vpop.f32.mrb[0].mxu0
        %2864 = vdwg.mxu0
        %2865 = vmatprep.subr.mxu0 0.0
        %v2866 = vand.u32 %v2024, 4294901760
        %2867 = vmatpush1.msra.mxu0 %v2866
        %2868 = vmatprep.subr.mxu0 0.0
        %2869 = vmatpush1.msra.mxu0 0.0
        %2870 = vmatprep.subr.mxu0 0.0
        %2871 = vmatpush1.msra.mxu0 0.0
        %2872 = vmatprep.subr.mxu0 0.0
        %2873 = vmatpush1.msra.mxu0 0.0
        %2874 = vmatprep.subr.mxu0 0.0
        %2875 = vmatpush1.msra.mxu0 0.0
        %2876 = vmatprep.subr.mxu0 0.0
        %2877 = vmatpush1.msra.mxu0 0.0
        %2878 = vmatprep.subr.mxu0 0.0
        %2879 = vmatpush1.msra.mxu0 0.0
        %2880 = vmatprep.subr.mxu0 0.0
        %2881 = vmatpush1.msra.mxu0 0.0
        %2882 = vmatprep.subr.mxu0 0.0
        %2883 = vmatpush1.msra.mxu0 0.0
        %2884 = vmatprep.subr.mxu0 0.0
        %2885 = vmatpush1.msra.mxu0 0.0
        %2886 = vmatprep.subr.mxu0 0.0
        %2887 = vmatpush1.msra.mxu0 0.0
        %2888 = vmatprep.subr.mxu0 0.0
        %2889 = vmatpush1.msra.mxu0 0.0
        %2890 = vmatprep.subr.mxu0 0.0
        %2891 = vmatpush1.msra.mxu0 0.0
        %2892 = vmatprep.subr.mxu0 0.0
        %2893 = vmatpush1.msra.mxu0 0.0
        %2894 = vmatprep.subr.mxu0 0.0
        %2895 = vmatpush1.msra.mxu0 0.0
        %2896 = vmatprep.subr.mxu0 0.0
        %2897 = vmatpush1.msra.mxu0 0.0
        %2898 = vmatprep.subr.mxu0 0.0
        %2899 = vmatpush1.msra.mxu0 0.0
        %2900 = vmatprep.subr.mxu0 0.0
        %2901 = vmatpush1.msra.mxu0 0.0
        %2902 = vmatprep.subr.mxu0 0.0
        %2903 = vmatpush1.msra.mxu0 0.0
        %2904 = vmatprep.subr.mxu0 0.0
        %2905 = vmatpush1.msra.mxu0 0.0
        %2906 = vmatprep.subr.mxu0 0.0
        %2907 = vmatpush1.msra.mxu0 0.0
        %2908 = vmatprep.subr.mxu0 0.0
        %2909 = vmatpush1.msra.mxu0 0.0
        %2910 = vmatprep.subr.mxu0 0.0
        %2911 = vmatpush1.msra.mxu0 0.0
        %2912 = vmatprep.subr.mxu0 0.0
        %2913 = vmatpush1.msra.mxu0 0.0
        %2914 = vmatprep.subr.mxu0 0.0
        %2915 = vmatpush1.msra.mxu0 0.0
        %2916 = vmatprep.subr.mxu0 0.0
        %2917 = vmatpush1.msra.mxu0 0.0
        %2918 = vmatprep.subr.mxu0 0.0
        %2919 = vmatpush1.msra.mxu0 0.0
        %2920 = vmatprep.subr.mxu0 0.0
        %2921 = vmatpush1.msra.mxu0 0.0
        %2922 = vmatprep.subr.mxu0 0.0
        %2923 = vmatpush1.msra.mxu0 0.0
        %2924 = vmatprep.subr.mxu0 0.0
        %2925 = vmatpush1.msra.mxu0 0.0
        %2926 = vmatprep.subr.mxu0 0.0
        %2927 = vmatpush1.msra.mxu0 0.0
        %2928 = vmatprep.subr.mxu0 0.0
        %2929 = vmatpush1.msra.mxu0 0.0
        %2930 = vmatprep.mubr.f32.mxu0 0.0
        %v2931 = vand.u32 %v2018, 4294901760
        %2932 = vmatmul.mubr.f32.gmra.mrb[0].mxu0 %v2931
        %v2933 = vpop.f32.mrb[0].mxu0
        %v2934 = vadd.f32 %v2862, %v2933
        %v2935 = vpop.f32.mrb[0].mxu0
        %2936 = vdwg.mxu0
        %v2937 = vadd.f32 %v1551, %v2487
        %v2938 = vadd.f32 %v1553, %v2489
        %v2939 = vadd.f32 %v1998, %v2934
        %v2940 = vld [vmem:[%s141] sm:$0xff]
        %v2941 = vld [vmem:[%s141 + $0x8] sm:$0xf]
        %s2942 = scalar_lea.vmem %s1, 24
        %v2943 = vld [vmem:[%s2942] sm:$0xff]
        %v2946 = vcombine.high %v2940, %v2940
        %2947 = vrot.lane.b32.xlu0 %v2940, 110
        %v2948 = vpop.permute.xlu0 %2947
        %2949 = vrot.lane.b32.xlu0 %v2946, 110
        %v2950 = vpop.permute.xlu0 %2949
        %2951 = vrot.lane.b32.xlu0 %v2941, 110
        %v2952 = vpop.permute.xlu0 %2951
        %vm2953 = vcmask 900096
        %v2954 = vsel %vm2953, %v2948, %v2950
        %v2955 = vsel %vm2953, %v2950, %v2952
        %v2957 = vsel %vm159, %v2943, 0
        %v2959 = vsel %vm163, %v2954, 0
        %v2961 = vsel %vm163, %v2955, 0
        %v2963 = vsel %vm163, %v2952, 0
        %v2965 = vand.u32 %v2961, 4294901760
        %2966 = vmatprep.subr.mxu0 %v2965
        %v2967 = vand.u32 %v2959, 4294901760
        %2968 = vmatpush1.msra.mxu0 %v2967
        %2969 = vmatprep.subr.mxu0 0.0
        %2970 = vmatpush1.msra.mxu0 0.0
        %2971 = vmatprep.subr.mxu0 0.0
        %2972 = vmatpush1.msra.mxu0 0.0
        %2973 = vmatprep.subr.mxu0 0.0
        %2974 = vmatpush1.msra.mxu0 0.0
        %2975 = vmatprep.subr.mxu0 0.0
        %2976 = vmatpush1.msra.mxu0 0.0
        %2977 = vmatprep.subr.mxu0 0.0
        %2978 = vmatpush1.msra.mxu0 0.0
        %2979 = vmatprep.subr.mxu0 0.0
        %2980 = vmatpush1.msra.mxu0 0.0
        %2981 = vmatprep.subr.mxu0 0.0
        %2982 = vmatpush1.msra.mxu0 0.0
        %2983 = vmatprep.subr.mxu0 0.0
        %2984 = vmatpush1.msra.mxu0 0.0
        %2985 = vmatprep.subr.mxu0 0.0
        %2986 = vmatpush1.msra.mxu0 0.0
        %2987 = vmatprep.subr.mxu0 0.0
        %2988 = vmatpush1.msra.mxu0 0.0
        %2989 = vmatprep.subr.mxu0 0.0
        %2990 = vmatpush1.msra.mxu0 0.0
        %2991 = vmatprep.subr.mxu0 0.0
        %2992 = vmatpush1.msra.mxu0 0.0
        %2993 = vmatprep.subr.mxu0 0.0
        %2994 = vmatpush1.msra.mxu0 0.0
        %2995 = vmatprep.subr.mxu0 0.0
        %2996 = vmatpush1.msra.mxu0 0.0
        %2997 = vmatprep.subr.mxu0 0.0
        %2998 = vmatpush1.msra.mxu0 0.0
        %2999 = vmatprep.subr.mxu0 0.0
        %3000 = vmatpush1.msra.mxu0 0.0
        %3001 = vmatprep.subr.mxu0 0.0
        %3002 = vmatpush1.msra.mxu0 0.0
        %3003 = vmatprep.subr.mxu0 0.0
        %3004 = vmatpush1.msra.mxu0 0.0
        %3005 = vmatprep.subr.mxu0 0.0
        %3006 = vmatpush1.msra.mxu0 0.0
        %3007 = vmatprep.subr.mxu0 0.0
        %3008 = vmatpush1.msra.mxu0 0.0
        %3009 = vmatprep.subr.mxu0 0.0
        %3010 = vmatpush1.msra.mxu0 0.0
        %3011 = vmatprep.subr.mxu0 0.0
        %3012 = vmatpush1.msra.mxu0 0.0
        %3013 = vmatprep.subr.mxu0 0.0
        %3014 = vmatpush1.msra.mxu0 0.0
        %3015 = vmatprep.subr.mxu0 0.0
        %3016 = vmatpush1.msra.mxu0 0.0
        %3017 = vmatprep.subr.mxu0 0.0
        %3018 = vmatpush1.msra.mxu0 0.0
        %3019 = vmatprep.subr.mxu0 0.0
        %3020 = vmatpush1.msra.mxu0 0.0
        %3021 = vmatprep.subr.mxu0 0.0
        %3022 = vmatpush1.msra.mxu0 0.0
        %3023 = vmatprep.subr.mxu0 0.0
        %3024 = vmatpush1.msra.mxu0 0.0
        %3025 = vmatprep.subr.mxu0 0.0
        %3026 = vmatpush1.msra.mxu0 0.0
        %3027 = vmatprep.subr.mxu0 0.0
        %3028 = vmatpush1.msra.mxu0 0.0
        %3029 = vmatprep.subr.mxu0 0.0
        %3030 = vmatpush1.msra.mxu0 0.0
        %3031 = vmatprep.mubr.f32.mxu0 0.0
        %v3032 = vand.u32 %v2957, 4294901760
        %v3033 = vsub.f32 %v2957, %v3032
        %v3034 = vand.u32 %v3033, 4294901760
        %v3035 = vsub.f32 %v3033, %v3034
        %v3036 = vand.u32 %v3035, 4294901760
        %3037 = vmatmul.mubr.f32.gmra.mrb[0].mxu0 %v3036
        %v3038 = vpop.f32.mrb[0].mxu0
        %v3039 = vadd.f32 0.0, %v3038
        %v3040 = vpop.f32.mrb[0].mxu0
        %v3041 = vadd.f32 0.0, %v3040
        %3042 = vdwg.mxu0
        %v3043 = vand.u32 %v2961, 4294901760
        %v3044 = vsub.f32 %v2961, %v3043
        %v3045 = vand.u32 %v3044, 4294901760
        %v3046 = vsub.f32 %v3044, %v3045
        %v3047 = vand.u32 %v3046, 4294901760
        %3048 = vmatprep.subr.mxu0 %v3047
        %v3049 = vand.u32 %v2959, 4294901760
        %v3050 = vsub.f32 %v2959, %v3049
        %v3051 = vand.u32 %v3050, 4294901760
        %v3052 = vsub.f32 %v3050, %v3051
        %v3053 = vand.u32 %v3052, 4294901760
        %3054 = vmatpush1.msra.mxu0 %v3053
        %3055 = vmatprep.subr.mxu0 0.0
        %3056 = vmatpush1.msra.mxu0 0.0
        %3057 = vmatprep.subr.mxu0 0.0
        %3058 = vmatpush1.msra.mxu0 0.0
        %3059 = vmatprep.subr.mxu0 0.0
        %3060 = vmatpush1.msra.mxu0 0.0
        %3061 = vmatprep.subr.mxu0 0.0
        %3062 = vmatpush1.msra.mxu0 0.0
        %3063 = vmatprep.subr.mxu0 0.0
        %3064 = vmatpush1.msra.mxu0 0.0
        %3065 = vmatprep.subr.mxu0 0.0
        %3066 = vmatpush1.msra.mxu0 0.0
        %3067 = vmatprep.subr.mxu0 0.0
        %3068 = vmatpush1.msra.mxu0 0.0
        %3069 = vmatprep.subr.mxu0 0.0
        %3070 = vmatpush1.msra.mxu0 0.0
        %3071 = vmatprep.subr.mxu0 0.0
        %3072 = vmatpush1.msra.mxu0 0.0
        %3073 = vmatprep.subr.mxu0 0.0
        %3074 = vmatpush1.msra.mxu0 0.0
        %3075 = vmatprep.subr.mxu0 0.0
        %3076 = vmatpush1.msra.mxu0 0.0
        %3077 = vmatprep.subr.mxu0 0.0
        %3078 = vmatpush1.msra.mxu0 0.0
        %3079 = vmatprep.subr.mxu0 0.0
        %3080 = vmatpush1.msra.mxu0 0.0
        %3081 = vmatprep.subr.mxu0 0.0
        %3082 = vmatpush1.msra.mxu0 0.0
        %3083 = vmatprep.subr.mxu0 0.0
        %3084 = vmatpush1.msra.mxu0 0.0
        %3085 = vmatprep.subr.mxu0 0.0
        %3086 = vmatpush1.msra.mxu0 0.0
        %3087 = vmatprep.subr.mxu0 0.0
        %3088 = vmatpush1.msra.mxu0 0.0
        %3089 = vmatprep.subr.mxu0 0.0
        %3090 = vmatpush1.msra.mxu0 0.0
        %3091 = vmatprep.subr.mxu0 0.0
        %3092 = vmatpush1.msra.mxu0 0.0
        %3093 = vmatprep.subr.mxu0 0.0
        %3094 = vmatpush1.msra.mxu0 0.0
        %3095 = vmatprep.subr.mxu0 0.0
        %3096 = vmatpush1.msra.mxu0 0.0
        %3097 = vmatprep.subr.mxu0 0.0
        %3098 = vmatpush1.msra.mxu0 0.0
        %3099 = vmatprep.subr.mxu0 0.0
        %3100 = vmatpush1.msra.mxu0 0.0
        %3101 = vmatprep.subr.mxu0 0.0
        %3102 = vmatpush1.msra.mxu0 0.0
        %3103 = vmatprep.subr.mxu0 0.0
        %3104 = vmatpush1.msra.mxu0 0.0
        %3105 = vmatprep.subr.mxu0 0.0
        %3106 = vmatpush1.msra.mxu0 0.0
        %3107 = vmatprep.subr.mxu0 0.0
        %3108 = vmatpush1.msra.mxu0 0.0
        %3109 = vmatprep.subr.mxu0 0.0
        %3110 = vmatpush1.msra.mxu0 0.0
        %3111 = vmatprep.subr.mxu0 0.0
        %3112 = vmatpush1.msra.mxu0 0.0
        %3113 = vmatprep.subr.mxu0 0.0
        %3114 = vmatpush1.msra.mxu0 0.0
        %3115 = vmatprep.subr.mxu0 0.0
        %3116 = vmatpush1.msra.mxu0 0.0
        %3117 = vmatprep.mubr.f32.mxu0 0.0
        %v3118 = vand.u32 %v2957, 4294901760
        %3119 = vmatmul.mubr.f32.gmra.mrb[0].mxu0 %v3118
        %v3120 = vpop.f32.mrb[0].mxu0
        %v3121 = vadd.f32 %v3039, %v3120
        %v3122 = vpop.f32.mrb[0].mxu0
        %v3123 = vadd.f32 %v3041, %v3122
        %3124 = vdwg.mxu0
        %v3125 = vand.u32 %v2961, 4294901760
        %v3126 = vsub.f32 %v2961, %v3125
        %3127 = vmatprep.subr.mxu0 %v3126
        %v3128 = vand.u32 %v2959, 4294901760
        %v3129 = vsub.f32 %v2959, %v3128
        %3130 = vmatpush1.msra.mxu0 %v3129
        %3131 = vmatprep.subr.mxu0 0.0
        %3132 = vmatpush1.msra.mxu0 0.0
        %3133 = vmatprep.subr.mxu0 0.0
        %3134 = vmatpush1.msra.mxu0 0.0
        %3135 = vmatprep.subr.mxu0 0.0
        %3136 = vmatpush1.msra.mxu0 0.0
        %3137 = vmatprep.subr.mxu0 0.0
        %3138 = vmatpush1.msra.mxu0 0.0
        %3139 = vmatprep.subr.mxu0 0.0
        %3140 = vmatpush1.msra.mxu0 0.0
        %3141 = vmatprep.subr.mxu0 0.0
        %3142 = vmatpush1.msra.mxu0 0.0
        %3143 = vmatprep.subr.mxu0 0.0
        %3144 = vmatpush1.msra.mxu0 0.0
        %3145 = vmatprep.subr.mxu0 0.0
        %3146 = vmatpush1.msra.mxu0 0.0
        %3147 = vmatprep.subr.mxu0 0.0
        %3148 = vmatpush1.msra.mxu0 0.0
        %3149 = vmatprep.subr.mxu0 0.0
        %3150 = vmatpush1.msra.mxu0 0.0
        %3151 = vmatprep.subr.mxu0 0.0
        %3152 = vmatpush1.msra.mxu0 0.0
        %3153 = vmatprep.subr.mxu0 0.0
        %3154 = vmatpush1.msra.mxu0 0.0
        %3155 = vmatprep.subr.mxu0 0.0
        %3156 = vmatpush1.msra.mxu0 0.0
        %3157 = vmatprep.subr.mxu0 0.0
        %3158 = vmatpush1.msra.mxu0 0.0
        %3159 = vmatprep.subr.mxu0 0.0
        %3160 = vmatpush1.msra.mxu0 0.0
        %3161 = vmatprep.subr.mxu0 0.0
        %3162 = vmatpush1.msra.mxu0 0.0
        %3163 = vmatprep.subr.mxu0 0.0
        %3164 = vmatpush1.msra.mxu0 0.0
        %3165 = vmatprep.subr.mxu0 0.0
        %3166 = vmatpush1.msra.mxu0 0.0
        %3167 = vmatprep.subr.mxu0 0.0
        %3168 = vmatpush1.msra.mxu0 0.0
        %3169 = vmatprep.subr.mxu0 0.0
        %3170 = vmatpush1.msra.mxu0 0.0
        %3171 = vmatprep.subr.mxu0 0.0
        %3172 = vmatpush1.msra.mxu0 0.0
        %3173 = vmatprep.subr.mxu0 0.0
        %3174 = vmatpush1.msra.mxu0 0.0
        %3175 = vmatprep.subr.mxu0 0.0
        %3176 = vmatpush1.msra.mxu0 0.0
        %3177 = vmatprep.subr.mxu0 0.0
        %3178 = vmatpush1.msra.mxu0 0.0
        %3179 = vmatprep.subr.mxu0 0.0
        %3180 = vmatpush1.msra.mxu0 0.0
        %3181 = vmatprep.subr.mxu0 0.0
        %3182 = vmatpush1.msra.mxu0 0.0
        %3183 = vmatprep.subr.mxu0 0.0
        %3184 = vmatpush1.msra.mxu0 0.0
        %3185 = vmatprep.subr.mxu0 0.0
        %3186 = vmatpush1.msra.mxu0 0.0
        %3187 = vmatprep.subr.mxu0 0.0
        %3188 = vmatpush1.msra.mxu0 0.0
        %3189 = vmatprep.subr.mxu0 0.0
        %3190 = vmatpush1.msra.mxu0 0.0
        %3191 = vmatprep.subr.mxu0 0.0
        %3192 = vmatpush1.msra.mxu0 0.0
        %3193 = vmatprep.mubr.f32.mxu0 0.0
        %v3194 = vand.u32 %v2957, 4294901760
        %v3195 = vsub.f32 %v2957, %v3194
        %3196 = vmatmul.mubr.f32.gmra.mrb[0].mxu0 %v3195
        %v3197 = vpop.f32.mrb[0].mxu0
        %v3198 = vadd.f32 %v3121, %v3197
        %v3199 = vpop.f32.mrb[0].mxu0
        %v3200 = vadd.f32 %v3123, %v3199
        %3201 = vdwg.mxu0
        %v3202 = vand.u32 %v2961, 4294901760
        %3203 = vmatprep.subr.mxu0 %v3202
        %v3204 = vand.u32 %v2959, 4294901760
        %3205 = vmatpush1.msra.mxu0 %v3204
        %3206 = vmatprep.subr.mxu0 0.0
        %3207 = vmatpush1.msra.mxu0 0.0
        %3208 = vmatprep.subr.mxu0 0.0
        %3209 = vmatpush1.msra.mxu0 0.0
        %3210 = vmatprep.subr.mxu0 0.0
        %3211 = vmatpush1.msra.mxu0 0.0
        %3212 = vmatprep.subr.mxu0 0.0
        %3213 = vmatpush1.msra.mxu0 0.0
        %3214 = vmatprep.subr.mxu0 0.0
        %3215 = vmatpush1.msra.mxu0 0.0
        %3216 = vmatprep.subr.mxu0 0.0
        %3217 = vmatpush1.msra.mxu0 0.0
        %3218 = vmatprep.subr.mxu0 0.0
        %3219 = vmatpush1.msra.mxu0 0.0
        %3220 = vmatprep.subr.mxu0 0.0
        %3221 = vmatpush1.msra.mxu0 0.0
        %3222 = vmatprep.subr.mxu0 0.0
        %3223 = vmatpush1.msra.mxu0 0.0
        %3224 = vmatprep.subr.mxu0 0.0
        %3225 = vmatpush1.msra.mxu0 0.0
        %3226 = vmatprep.subr.mxu0 0.0
        %3227 = vmatpush1.msra.mxu0 0.0
        %3228 = vmatprep.subr.mxu0 0.0
        %3229 = vmatpush1.msra.mxu0 0.0
        %3230 = vmatprep.subr.mxu0 0.0
        %3231 = vmatpush1.msra.mxu0 0.0
        %3232 = vmatprep.subr.mxu0 0.0
        %3233 = vmatpush1.msra.mxu0 0.0
        %3234 = vmatprep.subr.mxu0 0.0
        %3235 = vmatpush1.msra.mxu0 0.0
        %3236 = vmatprep.subr.mxu0 0.0
        %3237 = vmatpush1.msra.mxu0 0.0
        %3238 = vmatprep.subr.mxu0 0.0
        %3239 = vmatpush1.msra.mxu0 0.0
        %3240 = vmatprep.subr.mxu0 0.0
        %3241 = vmatpush1.msra.mxu0 0.0
        %3242 = vmatprep.subr.mxu0 0.0
        %3243 = vmatpush1.msra.mxu0 0.0
        %3244 = vmatprep.subr.mxu0 0.0
        %3245 = vmatpush1.msra.mxu0 0.0
        %3246 = vmatprep.subr.mxu0 0.0
        %3247 = vmatpush1.msra.mxu0 0.0
        %3248 = vmatprep.subr.mxu0 0.0
        %3249 = vmatpush1.msra.mxu0 0.0
        %3250 = vmatprep.subr.mxu0 0.0
        %3251 = vmatpush1.msra.mxu0 0.0
        %3252 = vmatprep.subr.mxu0 0.0
        %3253 = vmatpush1.msra.mxu0 0.0
        %3254 = vmatprep.subr.mxu0 0.0
        %3255 = vmatpush1.msra.mxu0 0.0
        %3256 = vmatprep.subr.mxu0 0.0
        %3257 = vmatpush1.msra.mxu0 0.0
        %3258 = vmatprep.subr.mxu0 0.0
        %3259 = vmatpush1.msra.mxu0 0.0
        %3260 = vmatprep.subr.mxu0 0.0
        %3261 = vmatpush1.msra.mxu0 0.0
        %3262 = vmatprep.subr.mxu0 0.0
        %3263 = vmatpush1.msra.mxu0 0.0
        %3264 = vmatprep.subr.mxu0 0.0
        %3265 = vmatpush1.msra.mxu0 0.0
        %3266 = vmatprep.subr.mxu0 0.0
        %3267 = vmatpush1.msra.mxu0 0.0
        %3268 = vmatprep.mubr.f32.mxu0 0.0
        %v3269 = vand.u32 %v2957, 4294901760
        %v3270 = vsub.f32 %v2957, %v3269
        %v3271 = vand.u32 %v3270, 4294901760
        %3272 = vmatmul.mubr.f32.gmra.mrb[0].mxu0 %v3271
        %v3273 = vpop.f32.mrb[0].mxu0
        %v3274 = vadd.f32 %v3198, %v3273
        %v3275 = vpop.f32.mrb[0].mxu0
        %v3276 = vadd.f32 %v3200, %v3275
        %3277 = vdwg.mxu0
        %v3278 = vand.u32 %v2961, 4294901760
        %v3279 = vsub.f32 %v2961, %v3278
        %v3280 = vand.u32 %v3279, 4294901760
        %3281 = vmatprep.subr.mxu0 %v3280
        %v3282 = vand.u32 %v2959, 4294901760
        %v3283 = vsub.f32 %v2959, %v3282
        %v3284 = vand.u32 %v3283, 4294901760
        %3285 = vmatpush1.msra.mxu0 %v3284
        %3286 = vmatprep.subr.mxu0 0.0
        %3287 = vmatpush1.msra.mxu0 0.0
        %3288 = vmatprep.subr.mxu0 0.0
        %3289 = vmatpush1.msra.mxu0 0.0
        %3290 = vmatprep.subr.mxu0 0.0
        %3291 = vmatpush1.msra.mxu0 0.0
        %3292 = vmatprep.subr.mxu0 0.0
        %3293 = vmatpush1.msra.mxu0 0.0
        %3294 = vmatprep.subr.mxu0 0.0
        %3295 = vmatpush1.msra.mxu0 0.0
        %3296 = vmatprep.subr.mxu0 0.0
        %3297 = vmatpush1.msra.mxu0 0.0
        %3298 = vmatprep.subr.mxu0 0.0
        %3299 = vmatpush1.msra.mxu0 0.0
        %3300 = vmatprep.subr.mxu0 0.0
        %3301 = vmatpush1.msra.mxu0 0.0
        %3302 = vmatprep.subr.mxu0 0.0
        %3303 = vmatpush1.msra.mxu0 0.0
        %3304 = vmatprep.subr.mxu0 0.0
        %3305 = vmatpush1.msra.mxu0 0.0
        %3306 = vmatprep.subr.mxu0 0.0
        %3307 = vmatpush1.msra.mxu0 0.0
        %3308 = vmatprep.subr.mxu0 0.0
        %3309 = vmatpush1.msra.mxu0 0.0
        %3310 = vmatprep.subr.mxu0 0.0
        %3311 = vmatpush1.msra.mxu0 0.0
        %3312 = vmatprep.subr.mxu0 0.0
        %3313 = vmatpush1.msra.mxu0 0.0
        %3314 = vmatprep.subr.mxu0 0.0
        %3315 = vmatpush1.msra.mxu0 0.0
        %3316 = vmatprep.subr.mxu0 0.0
        %3317 = vmatpush1.msra.mxu0 0.0
        %3318 = vmatprep.subr.mxu0 0.0
        %3319 = vmatpush1.msra.mxu0 0.0
        %3320 = vmatprep.subr.mxu0 0.0
        %3321 = vmatpush1.msra.mxu0 0.0
        %3322 = vmatprep.subr.mxu0 0.0
        %3323 = vmatpush1.msra.mxu0 0.0
        %3324 = vmatprep.subr.mxu0 0.0
        %3325 = vmatpush1.msra.mxu0 0.0
        %3326 = vmatprep.subr.mxu0 0.0
        %3327 = vmatpush1.msra.mxu0 0.0
        %3328 = vmatprep.subr.mxu0 0.0
        %3329 = vmatpush1.msra.mxu0 0.0
        %3330 = vmatprep.subr.mxu0 0.0
        %3331 = vmatpush1.msra.mxu0 0.0
        %3332 = vmatprep.subr.mxu0 0.0
        %3333 = vmatpush1.msra.mxu0 0.0
        %3334 = vmatprep.subr.mxu0 0.0
        %3335 = vmatpush1.msra.mxu0 0.0
        %3336 = vmatprep.subr.mxu0 0.0
        %3337 = vmatpush1.msra.mxu0 0.0
        %3338 = vmatprep.subr.mxu0 0.0
        %3339 = vmatpush1.msra.mxu0 0.0
        %3340 = vmatprep.subr.mxu0 0.0
        %3341 = vmatpush1.msra.mxu0 0.0
        %3342 = vmatprep.subr.mxu0 0.0
        %3343 = vmatpush1.msra.mxu0 0.0
        %3344 = vmatprep.subr.mxu0 0.0
        %3345 = vmatpush1.msra.mxu0 0.0
        %3346 = vmatprep.subr.mxu0 0.0
        %3347 = vmatpush1.msra.mxu0 0.0
        %3348 = vmatprep.mubr.f32.mxu0 0.0
        %v3349 = vand.u32 %v2957, 4294901760
        %3350 = vmatmul.mubr.f32.gmra.mrb[0].mxu0 %v3349
        %v3351 = vpop.f32.mrb[0].mxu0
        %v3352 = vadd.f32 %v3274, %v3351
        %v3353 = vpop.f32.mrb[0].mxu0
        %v3354 = vadd.f32 %v3276, %v3353
        %3355 = vdwg.mxu0
        %v3356 = vand.u32 %v2961, 4294901760
        %3357 = vmatprep.subr.mxu0 %v3356
        %v3358 = vand.u32 %v2959, 4294901760
        %3359 = vmatpush1.msra.mxu0 %v3358
        %3360 = vmatprep.subr.mxu0 0.0
        %3361 = vmatpush1.msra.mxu0 0.0
        %3362 = vmatprep.subr.mxu0 0.0
        %3363 = vmatpush1.msra.mxu0 0.0
        %3364 = vmatprep.subr.mxu0 0.0
        %3365 = vmatpush1.msra.mxu0 0.0
        %3366 = vmatprep.subr.mxu0 0.0
        %3367 = vmatpush1.msra.mxu0 0.0
        %3368 = vmatprep.subr.mxu0 0.0
        %3369 = vmatpush1.msra.mxu0 0.0
        %3370 = vmatprep.subr.mxu0 0.0
        %3371 = vmatpush1.msra.mxu0 0.0
        %3372 = vmatprep.subr.mxu0 0.0
        %3373 = vmatpush1.msra.mxu0 0.0
        %3374 = vmatprep.subr.mxu0 0.0
        %3375 = vmatpush1.msra.mxu0 0.0
        %3376 = vmatprep.subr.mxu0 0.0
        %3377 = vmatpush1.msra.mxu0 0.0
        %3378 = vmatprep.subr.mxu0 0.0
        %3379 = vmatpush1.msra.mxu0 0.0
        %3380 = vmatprep.subr.mxu0 0.0
        %3381 = vmatpush1.msra.mxu0 0.0
        %3382 = vmatprep.subr.mxu0 0.0
        %3383 = vmatpush1.msra.mxu0 0.0
        %3384 = vmatprep.subr.mxu0 0.0
        %3385 = vmatpush1.msra.mxu0 0.0
        %3386 = vmatprep.subr.mxu0 0.0
        %3387 = vmatpush1.msra.mxu0 0.0
        %3388 = vmatprep.subr.mxu0 0.0
        %3389 = vmatpush1.msra.mxu0 0.0
        %3390 = vmatprep.subr.mxu0 0.0
        %3391 = vmatpush1.msra.mxu0 0.0
        %3392 = vmatprep.subr.mxu0 0.0
        %3393 = vmatpush1.msra.mxu0 0.0
        %3394 = vmatprep.subr.mxu0 0.0
        %3395 = vmatpush1.msra.mxu0 0.0
        %3396 = vmatprep.subr.mxu0 0.0
        %3397 = vmatpush1.msra.mxu0 0.0
        %3398 = vmatprep.subr.mxu0 0.0
        %3399 = vmatpush1.msra.mxu0 0.0
        %3400 = vmatprep.subr.mxu0 0.0
        %3401 = vmatpush1.msra.mxu0 0.0
        %3402 = vmatprep.subr.mxu0 0.0
        %3403 = vmatpush1.msra.mxu0 0.0
        %3404 = vmatprep.subr.mxu0 0.0
        %3405 = vmatpush1.msra.mxu0 0.0
        %3406 = vmatprep.subr.mxu0 0.0
        %3407 = vmatpush1.msra.mxu0 0.0
        %3408 = vmatprep.subr.mxu0 0.0
        %3409 = vmatpush1.msra.mxu0 0.0
        %3410 = vmatprep.subr.mxu0 0.0
        %3411 = vmatpush1.msra.mxu0 0.0
        %3412 = vmatprep.subr.mxu0 0.0
        %3413 = vmatpush1.msra.mxu0 0.0
        %3414 = vmatprep.subr.mxu0 0.0
        %3415 = vmatpush1.msra.mxu0 0.0
        %3416 = vmatprep.subr.mxu0 0.0
        %3417 = vmatpush1.msra.mxu0 0.0
        %3418 = vmatprep.subr.mxu0 0.0
        %3419 = vmatpush1.msra.mxu0 0.0
        %3420 = vmatprep.subr.mxu0 0.0
        %3421 = vmatpush1.msra.mxu0 0.0
        %3422 = vmatprep.mubr.f32.mxu0 0.0
        %v3423 = vand.u32 %v2957, 4294901760
        %3424 = vmatmul.mubr.f32.gmra.mrb[0].mxu0 %v3423
        %v3425 = vpop.f32.mrb[0].mxu0
        %v3426 = vadd.f32 %v3352, %v3425
        %v3427 = vpop.f32.mrb[0].mxu0
        %v3428 = vadd.f32 %v3354, %v3427
        %3429 = vdwg.mxu0
        %3430 = vmatprep.subr.mxu0 0.0
        %v3431 = vand.u32 %v2963, 4294901760
        %3432 = vmatpush1.msra.mxu0 %v3431
        %3433 = vmatprep.subr.mxu0 0.0
        %3434 = vmatpush1.msra.mxu0 0.0
        %3435 = vmatprep.subr.mxu0 0.0
        %3436 = vmatpush1.msra.mxu0 0.0
        %3437 = vmatprep.subr.mxu0 0.0
        %3438 = vmatpush1.msra.mxu0 0.0
        %3439 = vmatprep.subr.mxu0 0.0
        %3440 = vmatpush1.msra.mxu0 0.0
        %3441 = vmatprep.subr.mxu0 0.0
        %3442 = vmatpush1.msra.mxu0 0.0
        %3443 = vmatprep.subr.mxu0 0.0
        %3444 = vmatpush1.msra.mxu0 0.0
        %3445 = vmatprep.subr.mxu0 0.0
        %3446 = vmatpush1.msra.mxu0 0.0
        %3447 = vmatprep.subr.mxu0 0.0
        %3448 = vmatpush1.msra.mxu0 0.0
        %3449 = vmatprep.subr.mxu0 0.0
        %3450 = vmatpush1.msra.mxu0 0.0
        %3451 = vmatprep.subr.mxu0 0.0
        %3452 = vmatpush1.msra.mxu0 0.0
        %3453 = vmatprep.subr.mxu0 0.0
        %3454 = vmatpush1.msra.mxu0 0.0
        %3455 = vmatprep.subr.mxu0 0.0
        %3456 = vmatpush1.msra.mxu0 0.0
        %3457 = vmatprep.subr.mxu0 0.0
        %3458 = vmatpush1.msra.mxu0 0.0
        %3459 = vmatprep.subr.mxu0 0.0
        %3460 = vmatpush1.msra.mxu0 0.0
        %3461 = vmatprep.subr.mxu0 0.0
        %3462 = vmatpush1.msra.mxu0 0.0
        %3463 = vmatprep.subr.mxu0 0.0
        %3464 = vmatpush1.msra.mxu0 0.0
        %3465 = vmatprep.subr.mxu0 0.0
        %3466 = vmatpush1.msra.mxu0 0.0
        %3467 = vmatprep.subr.mxu0 0.0
        %3468 = vmatpush1.msra.mxu0 0.0
        %3469 = vmatprep.subr.mxu0 0.0
        %3470 = vmatpush1.msra.mxu0 0.0
        %3471 = vmatprep.subr.mxu0 0.0
        %3472 = vmatpush1.msra.mxu0 0.0
        %3473 = vmatprep.subr.mxu0 0.0
        %3474 = vmatpush1.msra.mxu0 0.0
        %3475 = vmatprep.subr.mxu0 0.0
        %3476 = vmatpush1.msra.mxu0 0.0
        %3477 = vmatprep.subr.mxu0 0.0
        %3478 = vmatpush1.msra.mxu0 0.0
        %3479 = vmatprep.subr.mxu0 0.0
        %3480 = vmatpush1.msra.mxu0 0.0
        %3481 = vmatprep.subr.mxu0 0.0
        %3482 = vmatpush1.msra.mxu0 0.0
        %3483 = vmatprep.subr.mxu0 0.0
        %3484 = vmatpush1.msra.mxu0 0.0
        %3485 = vmatprep.subr.mxu0 0.0
        %3486 = vmatpush1.msra.mxu0 0.0
        %3487 = vmatprep.subr.mxu0 0.0
        %3488 = vmatpush1.msra.mxu0 0.0
        %3489 = vmatprep.subr.mxu0 0.0
        %3490 = vmatpush1.msra.mxu0 0.0
        %3491 = vmatprep.subr.mxu0 0.0
        %3492 = vmatpush1.msra.mxu0 0.0
        %3493 = vmatprep.subr.mxu0 0.0
        %3494 = vmatpush1.msra.mxu0 0.0
        %3495 = vmatprep.mubr.f32.mxu0 0.0
        %v3496 = vand.u32 %v2957, 4294901760
        %v3497 = vsub.f32 %v2957, %v3496
        %v3498 = vand.u32 %v3497, 4294901760
        %v3499 = vsub.f32 %v3497, %v3498
        %v3500 = vand.u32 %v3499, 4294901760
        %3501 = vmatmul.mubr.f32.gmra.mrb[0].mxu0 %v3500
        %v3502 = vpop.f32.mrb[0].mxu0
        %v3503 = vadd.f32 0.0, %v3502
        %v3504 = vpop.f32.mrb[0].mxu0
        %3505 = vdwg.mxu0
        %3506 = vmatprep.subr.mxu0 0.0
        %v3507 = vand.u32 %v2963, 4294901760
        %v3508 = vsub.f32 %v2963, %v3507
        %v3509 = vand.u32 %v3508, 4294901760
        %v3510 = vsub.f32 %v3508, %v3509
        %v3511 = vand.u32 %v3510, 4294901760
        %3512 = vmatpush1.msra.mxu0 %v3511
        %3513 = vmatprep.subr.mxu0 0.0
        %3514 = vmatpush1.msra.mxu0 0.0
        %3515 = vmatprep.subr.mxu0 0.0
        %3516 = vmatpush1.msra.mxu0 0.0
        %3517 = vmatprep.subr.mxu0 0.0
        %3518 = vmatpush1.msra.mxu0 0.0
        %3519 = vmatprep.subr.mxu0 0.0
        %3520 = vmatpush1.msra.mxu0 0.0
        %3521 = vmatprep.subr.mxu0 0.0
        %3522 = vmatpush1.msra.mxu0 0.0
        %3523 = vmatprep.subr.mxu0 0.0
        %3524 = vmatpush1.msra.mxu0 0.0
        %3525 = vmatprep.subr.mxu0 0.0
        %3526 = vmatpush1.msra.mxu0 0.0
        %3527 = vmatprep.subr.mxu0 0.0
        %3528 = vmatpush1.msra.mxu0 0.0
        %3529 = vmatprep.subr.mxu0 0.0
        %3530 = vmatpush1.msra.mxu0 0.0
        %3531 = vmatprep.subr.mxu0 0.0
        %3532 = vmatpush1.msra.mxu0 0.0
        %3533 = vmatprep.subr.mxu0 0.0
        %3534 = vmatpush1.msra.mxu0 0.0
        %3535 = vmatprep.subr.mxu0 0.0
        %3536 = vmatpush1.msra.mxu0 0.0
        %3537 = vmatprep.subr.mxu0 0.0
        %3538 = vmatpush1.msra.mxu0 0.0
        %3539 = vmatprep.subr.mxu0 0.0
        %3540 = vmatpush1.msra.mxu0 0.0
        %3541 = vmatprep.subr.mxu0 0.0
        %3542 = vmatpush1.msra.mxu0 0.0
        %3543 = vmatprep.subr.mxu0 0.0
        %3544 = vmatpush1.msra.mxu0 0.0
        %3545 = vmatprep.subr.mxu0 0.0
        %3546 = vmatpush1.msra.mxu0 0.0
        %3547 = vmatprep.subr.mxu0 0.0
        %3548 = vmatpush1.msra.mxu0 0.0
        %3549 = vmatprep.subr.mxu0 0.0
        %3550 = vmatpush1.msra.mxu0 0.0
        %3551 = vmatprep.subr.mxu0 0.0
        %3552 = vmatpush1.msra.mxu0 0.0
        %3553 = vmatprep.subr.mxu0 0.0
        %3554 = vmatpush1.msra.mxu0 0.0
        %3555 = vmatprep.subr.mxu0 0.0
        %3556 = vmatpush1.msra.mxu0 0.0
        %3557 = vmatprep.subr.mxu0 0.0
        %3558 = vmatpush1.msra.mxu0 0.0
        %3559 = vmatprep.subr.mxu0 0.0
        %3560 = vmatpush1.msra.mxu0 0.0
        %3561 = vmatprep.subr.mxu0 0.0
        %3562 = vmatpush1.msra.mxu0 0.0
        %3563 = vmatprep.subr.mxu0 0.0
        %3564 = vmatpush1.msra.mxu0 0.0
        %3565 = vmatprep.subr.mxu0 0.0
        %3566 = vmatpush1.msra.mxu0 0.0
        %3567 = vmatprep.subr.mxu0 0.0
        %3568 = vmatpush1.msra.mxu0 0.0
        %3569 = vmatprep.subr.mxu0 0.0
        %3570 = vmatpush1.msra.mxu0 0.0
        %3571 = vmatprep.subr.mxu0 0.0
        %3572 = vmatpush1.msra.mxu0 0.0
        %3573 = vmatprep.subr.mxu0 0.0
        %3574 = vmatpush1.msra.mxu0 0.0
        %3575 = vmatprep.mubr.f32.mxu0 0.0
        %v3576 = vand.u32 %v2957, 4294901760
        %3577 = vmatmul.mubr.f32.gmra.mrb[0].mxu0 %v3576
        %v3578 = vpop.f32.mrb[0].mxu0
        %v3579 = vadd.f32 %v3503, %v3578
        %v3580 = vpop.f32.mrb[0].mxu0
        %3581 = vdwg.mxu0
        %3582 = vmatprep.subr.mxu0 0.0
        %v3583 = vand.u32 %v2963, 4294901760
        %v3584 = vsub.f32 %v2963, %v3583
        %3585 = vmatpush1.msra.mxu0 %v3584
        %3586 = vmatprep.subr.mxu0 0.0
        %3587 = vmatpush1.msra.mxu0 0.0
        %3588 = vmatprep.subr.mxu0 0.0
        %3589 = vmatpush1.msra.mxu0 0.0
        %3590 = vmatprep.subr.mxu0 0.0
        %3591 = vmatpush1.msra.mxu0 0.0
        %3592 = vmatprep.subr.mxu0 0.0
        %3593 = vmatpush1.msra.mxu0 0.0
        %3594 = vmatprep.subr.mxu0 0.0
        %3595 = vmatpush1.msra.mxu0 0.0
        %3596 = vmatprep.subr.mxu0 0.0
        %3597 = vmatpush1.msra.mxu0 0.0
        %3598 = vmatprep.subr.mxu0 0.0
        %3599 = vmatpush1.msra.mxu0 0.0
        %3600 = vmatprep.subr.mxu0 0.0
        %3601 = vmatpush1.msra.mxu0 0.0
        %3602 = vmatprep.subr.mxu0 0.0
        %3603 = vmatpush1.msra.mxu0 0.0
        %3604 = vmatprep.subr.mxu0 0.0
        %3605 = vmatpush1.msra.mxu0 0.0
        %3606 = vmatprep.subr.mxu0 0.0
        %3607 = vmatpush1.msra.mxu0 0.0
        %3608 = vmatprep.subr.mxu0 0.0
        %3609 = vmatpush1.msra.mxu0 0.0
        %3610 = vmatprep.subr.mxu0 0.0
        %3611 = vmatpush1.msra.mxu0 0.0
        %3612 = vmatprep.subr.mxu0 0.0
        %3613 = vmatpush1.msra.mxu0 0.0
        %3614 = vmatprep.subr.mxu0 0.0
        %3615 = vmatpush1.msra.mxu0 0.0
        %3616 = vmatprep.subr.mxu0 0.0
        %3617 = vmatpush1.msra.mxu0 0.0
        %3618 = vmatprep.subr.mxu0 0.0
        %3619 = vmatpush1.msra.mxu0 0.0
        %3620 = vmatprep.subr.mxu0 0.0
        %3621 = vmatpush1.msra.mxu0 0.0
        %3622 = vmatprep.subr.mxu0 0.0
        %3623 = vmatpush1.msra.mxu0 0.0
        %3624 = vmatprep.subr.mxu0 0.0
        %3625 = vmatpush1.msra.mxu0 0.0
        %3626 = vmatprep.subr.mxu0 0.0
        %3627 = vmatpush1.msra.mxu0 0.0
        %3628 = vmatprep.subr.mxu0 0.0
        %3629 = vmatpush1.msra.mxu0 0.0
        %3630 = vmatprep.subr.mxu0 0.0
        %3631 = vmatpush1.msra.mxu0 0.0
        %3632 = vmatprep.subr.mxu0 0.0
        %3633 = vmatpush1.msra.mxu0 0.0
        %3634 = vmatprep.subr.mxu0 0.0
        %3635 = vmatpush1.msra.mxu0 0.0
        %3636 = vmatprep.subr.mxu0 0.0
        %3637 = vmatpush1.msra.mxu0 0.0
        %3638 = vmatprep.subr.mxu0 0.0
        %3639 = vmatpush1.msra.mxu0 0.0
        %3640 = vmatprep.subr.mxu0 0.0
        %3641 = vmatpush1.msra.mxu0 0.0
        %3642 = vmatprep.subr.mxu0 0.0
        %3643 = vmatpush1.msra.mxu0 0.0
        %3644 = vmatprep.subr.mxu0 0.0
        %3645 = vmatpush1.msra.mxu0 0.0
        %3646 = vmatprep.subr.mxu0 0.0
        %3647 = vmatpush1.msra.mxu0 0.0
        %3648 = vmatprep.mubr.f32.mxu0 0.0
        %v3649 = vand.u32 %v2957, 4294901760
        %v3650 = vsub.f32 %v2957, %v3649
        %3651 = vmatmul.mubr.f32.gmra.mrb[0].mxu0 %v3650
        %v3652 = vpop.f32.mrb[0].mxu0
        %v3653 = vadd.f32 %v3579, %v3652
        %v3654 = vpop.f32.mrb[0].mxu0
        %3655 = vdwg.mxu0
        %3656 = vmatprep.subr.mxu0 0.0
        %v3657 = vand.u32 %v2963, 4294901760
        %3658 = vmatpush1.msra.mxu0 %v3657
        %3659 = vmatprep.subr.mxu0 0.0
        %3660 = vmatpush1.msra.mxu0 0.0
        %3661 = vmatprep.subr.mxu0 0.0
        %3662 = vmatpush1.msra.mxu0 0.0
        %3663 = vmatprep.subr.mxu0 0.0
        %3664 = vmatpush1.msra.mxu0 0.0
        %3665 = vmatprep.subr.mxu0 0.0
        %3666 = vmatpush1.msra.mxu0 0.0
        %3667 = vmatprep.subr.mxu0 0.0
        %3668 = vmatpush1.msra.mxu0 0.0
        %3669 = vmatprep.subr.mxu0 0.0
        %3670 = vmatpush1.msra.mxu0 0.0
        %3671 = vmatprep.subr.mxu0 0.0
        %3672 = vmatpush1.msra.mxu0 0.0
        %3673 = vmatprep.subr.mxu0 0.0
        %3674 = vmatpush1.msra.mxu0 0.0
        %3675 = vmatprep.subr.mxu0 0.0
        %3676 = vmatpush1.msra.mxu0 0.0
        %3677 = vmatprep.subr.mxu0 0.0
        %3678 = vmatpush1.msra.mxu0 0.0
        %3679 = vmatprep.subr.mxu0 0.0
        %3680 = vmatpush1.msra.mxu0 0.0
        %3681 = vmatprep.subr.mxu0 0.0
        %3682 = vmatpush1.msra.mxu0 0.0
        %3683 = vmatprep.subr.mxu0 0.0
        %3684 = vmatpush1.msra.mxu0 0.0
        %3685 = vmatprep.subr.mxu0 0.0
        %3686 = vmatpush1.msra.mxu0 0.0
        %3687 = vmatprep.subr.mxu0 0.0
        %3688 = vmatpush1.msra.mxu0 0.0
        %3689 = vmatprep.subr.mxu0 0.0
        %3690 = vmatpush1.msra.mxu0 0.0
        %3691 = vmatprep.subr.mxu0 0.0
        %3692 = vmatpush1.msra.mxu0 0.0
        %3693 = vmatprep.subr.mxu0 0.0
        %3694 = vmatpush1.msra.mxu0 0.0
        %3695 = vmatprep.subr.mxu0 0.0
        %3696 = vmatpush1.msra.mxu0 0.0
        %3697 = vmatprep.subr.mxu0 0.0
        %3698 = vmatpush1.msra.mxu0 0.0
        %3699 = vmatprep.subr.mxu0 0.0
        %3700 = vmatpush1.msra.mxu0 0.0
        %3701 = vmatprep.subr.mxu0 0.0
        %3702 = vmatpush1.msra.mxu0 0.0
        %3703 = vmatprep.subr.mxu0 0.0
        %3704 = vmatpush1.msra.mxu0 0.0
        %3705 = vmatprep.subr.mxu0 0.0
        %3706 = vmatpush1.msra.mxu0 0.0
        %3707 = vmatprep.subr.mxu0 0.0
        %3708 = vmatpush1.msra.mxu0 0.0
        %3709 = vmatprep.subr.mxu0 0.0
        %3710 = vmatpush1.msra.mxu0 0.0
        %3711 = vmatprep.subr.mxu0 0.0
        %3712 = vmatpush1.msra.mxu0 0.0
        %3713 = vmatprep.subr.mxu0 0.0
        %3714 = vmatpush1.msra.mxu0 0.0
        %3715 = vmatprep.subr.mxu0 0.0
        %3716 = vmatpush1.msra.mxu0 0.0
        %3717 = vmatprep.subr.mxu0 0.0
        %3718 = vmatpush1.msra.mxu0 0.0
        %3719 = vmatprep.subr.mxu0 0.0
        %3720 = vmatpush1.msra.mxu0 0.0
        %3721 = vmatprep.mubr.f32.mxu0 0.0
        %v3722 = vand.u32 %v2957, 4294901760
        %v3723 = vsub.f32 %v2957, %v3722
        %v3724 = vand.u32 %v3723, 4294901760
        %3725 = vmatmul.mubr.f32.gmra.mrb[0].mxu0 %v3724
        %v3726 = vpop.f32.mrb[0].mxu0
        %v3727 = vadd.f32 %v3653, %v3726
        %v3728 = vpop.f32.mrb[0].mxu0
        %3729 = vdwg.mxu0
        %3730 = vmatprep.subr.mxu0 0.0
        %v3731 = vand.u32 %v2963, 4294901760
        %v3732 = vsub.f32 %v2963, %v3731
        %v3733 = vand.u32 %v3732, 4294901760
        %3734 = vmatpush1.msra.mxu0 %v3733
        %3735 = vmatprep.subr.mxu0 0.0
        %3736 = vmatpush1.msra.mxu0 0.0
        %3737 = vmatprep.subr.mxu0 0.0
        %3738 = vmatpush1.msra.mxu0 0.0
        %3739 = vmatprep.subr.mxu0 0.0
        %3740 = vmatpush1.msra.mxu0 0.0
        %3741 = vmatprep.subr.mxu0 0.0
        %3742 = vmatpush1.msra.mxu0 0.0
        %3743 = vmatprep.subr.mxu0 0.0
        %3744 = vmatpush1.msra.mxu0 0.0
        %3745 = vmatprep.subr.mxu0 0.0
        %3746 = vmatpush1.msra.mxu0 0.0
        %3747 = vmatprep.subr.mxu0 0.0
        %3748 = vmatpush1.msra.mxu0 0.0
        %3749 = vmatprep.subr.mxu0 0.0
        %3750 = vmatpush1.msra.mxu0 0.0
        %3751 = vmatprep.subr.mxu0 0.0
        %3752 = vmatpush1.msra.mxu0 0.0
        %3753 = vmatprep.subr.mxu0 0.0
        %3754 = vmatpush1.msra.mxu0 0.0
        %3755 = vmatprep.subr.mxu0 0.0
        %3756 = vmatpush1.msra.mxu0 0.0
        %3757 = vmatprep.subr.mxu0 0.0
        %3758 = vmatpush1.msra.mxu0 0.0
        %3759 = vmatprep.subr.mxu0 0.0
        %3760 = vmatpush1.msra.mxu0 0.0
        %3761 = vmatprep.subr.mxu0 0.0
        %3762 = vmatpush1.msra.mxu0 0.0
        %3763 = vmatprep.subr.mxu0 0.0
        %3764 = vmatpush1.msra.mxu0 0.0
        %3765 = vmatprep.subr.mxu0 0.0
        %3766 = vmatpush1.msra.mxu0 0.0
        %3767 = vmatprep.subr.mxu0 0.0
        %3768 = vmatpush1.msra.mxu0 0.0
        %3769 = vmatprep.subr.mxu0 0.0
        %3770 = vmatpush1.msra.mxu0 0.0
        %3771 = vmatprep.subr.mxu0 0.0
        %3772 = vmatpush1.msra.mxu0 0.0
        %3773 = vmatprep.subr.mxu0 0.0
        %3774 = vmatpush1.msra.mxu0 0.0
        %3775 = vmatprep.subr.mxu0 0.0
        %3776 = vmatpush1.msra.mxu0 0.0
        %3777 = vmatprep.subr.mxu0 0.0
        %3778 = vmatpush1.msra.mxu0 0.0
        %3779 = vmatprep.subr.mxu0 0.0
        %3780 = vmatpush1.msra.mxu0 0.0
        %3781 = vmatprep.subr.mxu0 0.0
        %3782 = vmatpush1.msra.mxu0 0.0
        %3783 = vmatprep.subr.mxu0 0.0
        %3784 = vmatpush1.msra.mxu0 0.0
        %3785 = vmatprep.subr.mxu0 0.0
        %3786 = vmatpush1.msra.mxu0 0.0
        %3787 = vmatprep.subr.mxu0 0.0
        %3788 = vmatpush1.msra.mxu0 0.0
        %3789 = vmatprep.subr.mxu0 0.0
        %3790 = vmatpush1.msra.mxu0 0.0
        %3791 = vmatprep.subr.mxu0 0.0
        %3792 = vmatpush1.msra.mxu0 0.0
        %3793 = vmatprep.subr.mxu0 0.0
        %3794 = vmatpush1.msra.mxu0 0.0
        %3795 = vmatprep.subr.mxu0 0.0
        %3796 = vmatpush1.msra.mxu0 0.0
        %3797 = vmatprep.mubr.f32.mxu0 0.0
        %v3798 = vand.u32 %v2957, 4294901760
        %3799 = vmatmul.mubr.f32.gmra.mrb[0].mxu0 %v3798
        %v3800 = vpop.f32.mrb[0].mxu0
        %v3801 = vadd.f32 %v3727, %v3800
        %v3802 = vpop.f32.mrb[0].mxu0
        %3803 = vdwg.mxu0
        %3804 = vmatprep.subr.mxu0 0.0
        %v3805 = vand.u32 %v2963, 4294901760
        %3806 = vmatpush1.msra.mxu0 %v3805
        %3807 = vmatprep.subr.mxu0 0.0
        %3808 = vmatpush1.msra.mxu0 0.0
        %3809 = vmatprep.subr.mxu0 0.0
        %3810 = vmatpush1.msra.mxu0 0.0
        %3811 = vmatprep.subr.mxu0 0.0
        %3812 = vmatpush1.msra.mxu0 0.0
        %3813 = vmatprep.subr.mxu0 0.0
        %3814 = vmatpush1.msra.mxu0 0.0
        %3815 = vmatprep.subr.mxu0 0.0
        %3816 = vmatpush1.msra.mxu0 0.0
        %3817 = vmatprep.subr.mxu0 0.0
        %3818 = vmatpush1.msra.mxu0 0.0
        %3819 = vmatprep.subr.mxu0 0.0
        %3820 = vmatpush1.msra.mxu0 0.0
        %3821 = vmatprep.subr.mxu0 0.0
        %3822 = vmatpush1.msra.mxu0 0.0
        %3823 = vmatprep.subr.mxu0 0.0
        %3824 = vmatpush1.msra.mxu0 0.0
        %3825 = vmatprep.subr.mxu0 0.0
        %3826 = vmatpush1.msra.mxu0 0.0
        %3827 = vmatprep.subr.mxu0 0.0
        %3828 = vmatpush1.msra.mxu0 0.0
        %3829 = vmatprep.subr.mxu0 0.0
        %3830 = vmatpush1.msra.mxu0 0.0
        %3831 = vmatprep.subr.mxu0 0.0
        %3832 = vmatpush1.msra.mxu0 0.0
        %3833 = vmatprep.subr.mxu0 0.0
        %3834 = vmatpush1.msra.mxu0 0.0
        %3835 = vmatprep.subr.mxu0 0.0
        %3836 = vmatpush1.msra.mxu0 0.0
        %3837 = vmatprep.subr.mxu0 0.0
        %3838 = vmatpush1.msra.mxu0 0.0
        %3839 = vmatprep.subr.mxu0 0.0
        %3840 = vmatpush1.msra.mxu0 0.0
        %3841 = vmatprep.subr.mxu0 0.0
        %3842 = vmatpush1.msra.mxu0 0.0
        %3843 = vmatprep.subr.mxu0 0.0
        %3844 = vmatpush1.msra.mxu0 0.0
        %3845 = vmatprep.subr.mxu0 0.0
        %3846 = vmatpush1.msra.mxu0 0.0
        %3847 = vmatprep.subr.mxu0 0.0
        %3848 = vmatpush1.msra.mxu0 0.0
        %3849 = vmatprep.subr.mxu0 0.0
        %3850 = vmatpush1.msra.mxu0 0.0
        %3851 = vmatprep.subr.mxu0 0.0
        %3852 = vmatpush1.msra.mxu0 0.0
        %3853 = vmatprep.subr.mxu0 0.0
        %3854 = vmatpush1.msra.mxu0 0.0
        %3855 = vmatprep.subr.mxu0 0.0
        %3856 = vmatpush1.msra.mxu0 0.0
        %3857 = vmatprep.subr.mxu0 0.0
        %3858 = vmatpush1.msra.mxu0 0.0
        %3859 = vmatprep.subr.mxu0 0.0
        %3860 = vmatpush1.msra.mxu0 0.0
        %3861 = vmatprep.subr.mxu0 0.0
        %3862 = vmatpush1.msra.mxu0 0.0
        %3863 = vmatprep.subr.mxu0 0.0
        %3864 = vmatpush1.msra.mxu0 0.0
        %3865 = vmatprep.subr.mxu0 0.0
        %3866 = vmatpush1.msra.mxu0 0.0
        %3867 = vmatprep.subr.mxu0 0.0
        %3868 = vmatpush1.msra.mxu0 0.0
        %3869 = vmatprep.mubr.f32.mxu0 0.0
        %v3870 = vand.u32 %v2957, 4294901760
        %3871 = vmatmul.mubr.f32.gmra.mrb[0].mxu0 %v3870
        %v3872 = vpop.f32.mrb[0].mxu0
        %v3873 = vadd.f32 %v3801, %v3872
        %v3874 = vpop.f32.mrb[0].mxu0
        %3875 = vdwg.mxu0
        %v3876 = vadd.f32 %v2937, %v3426
        %v3877 = vadd.f32 %v2938, %v3428
        %v3878 = vadd.f32 %v2939, %v3873
        %v3879 = vld [vmem:[%s141] sm:$0xff]
        %v3880 = vld [vmem:[%s141 + $0x8] sm:$0xf]
        %s3881 = scalar_lea.vmem %s1, 32
        %v3882 = vld [vmem:[%s3881] sm:$0xff]
        %v3885 = vcombine.high %v3879, %v3879
        %3886 = vrot.lane.b32.xlu0 %v3879, 109
        %v3887 = vpop.permute.xlu0 %3886
        %3888 = vrot.lane.b32.xlu0 %v3885, 109
        %v3889 = vpop.permute.xlu0 %3888
        %3890 = vrot.lane.b32.xlu0 %v3880, 109
        %v3891 = vpop.permute.xlu0 %3890
        %vm3892 = vcmask 891904
        %v3893 = vsel %vm3892, %v3887, %v3889
        %v3894 = vsel %vm3892, %v3889, %v3891
        %v3896 = vsel %vm159, %v3882, 0
        %v3898 = vsel %vm163, %v3893, 0
        %v3900 = vsel %vm163, %v3894, 0
        %v3902 = vsel %vm163, %v3891, 0
        %v3904 = vand.u32 %v3900, 4294901760
        %3905 = vmatprep.subr.mxu0 %v3904
        %v3906 = vand.u32 %v3898, 4294901760
        %3907 = vmatpush1.msra.mxu0 %v3906
        %3908 = vmatprep.subr.mxu0 0.0
        %3909 = vmatpush1.msra.mxu0 0.0
        %3910 = vmatprep.subr.mxu0 0.0
        %3911 = vmatpush1.msra.mxu0 0.0
        %3912 = vmatprep.subr.mxu0 0.0
        %3913 = vmatpush1.msra.mxu0 0.0
        %3914 = vmatprep.subr.mxu0 0.0
        %3915 = vmatpush1.msra.mxu0 0.0
        %3916 = vmatprep.subr.mxu0 0.0
        %3917 = vmatpush1.msra.mxu0 0.0
        %3918 = vmatprep.subr.mxu0 0.0
        %3919 = vmatpush1.msra.mxu0 0.0
        %3920 = vmatprep.subr.mxu0 0.0
        %3921 = vmatpush1.msra.mxu0 0.0
        %3922 = vmatprep.subr.mxu0 0.0
        %3923 = vmatpush1.msra.mxu0 0.0
        %3924 = vmatprep.subr.mxu0 0.0
        %3925 = vmatpush1.msra.mxu0 0.0
        %3926 = vmatprep.subr.mxu0 0.0
        %3927 = vmatpush1.msra.mxu0 0.0
        %3928 = vmatprep.subr.mxu0 0.0
        %3929 = vmatpush1.msra.mxu0 0.0
        %3930 = vmatprep.subr.mxu0 0.0
        %3931 = vmatpush1.msra.mxu0 0.0
        %3932 = vmatprep.subr.mxu0 0.0
        %3933 = vmatpush1.msra.mxu0 0.0
        %3934 = vmatprep.subr.mxu0 0.0
        %3935 = vmatpush1.msra.mxu0 0.0
        %3936 = vmatprep.subr.mxu0 0.0
        %3937 = vmatpush1.msra.mxu0 0.0
        %3938 = vmatprep.subr.mxu0 0.0
        %3939 = vmatpush1.msra.mxu0 0.0
        %3940 = vmatprep.subr.mxu0 0.0
        %3941 = vmatpush1.msra.mxu0 0.0
        %3942 = vmatprep.subr.mxu0 0.0
        %3943 = vmatpush1.msra.mxu0 0.0
        %3944 = vmatprep.subr.mxu0 0.0
        %3945 = vmatpush1.msra.mxu0 0.0
        %3946 = vmatprep.subr.mxu0 0.0
        %3947 = vmatpush1.msra.mxu0 0.0
        %3948 = vmatprep.subr.mxu0 0.0
        %3949 = vmatpush1.msra.mxu0 0.0
        %3950 = vmatprep.subr.mxu0 0.0
        %3951 = vmatpush1.msra.mxu0 0.0
        %3952 = vmatprep.subr.mxu0 0.0
        %3953 = vmatpush1.msra.mxu0 0.0
        %3954 = vmatprep.subr.mxu0 0.0
        %3955 = vmatpush1.msra.mxu0 0.0
        %3956 = vmatprep.subr.mxu0 0.0
        %3957 = vmatpush1.msra.mxu0 0.0
        %3958 = vmatprep.subr.mxu0 0.0
        %3959 = vmatpush1.msra.mxu0 0.0
        %3960 = vmatprep.subr.mxu0 0.0
        %3961 = vmatpush1.msra.mxu0 0.0
        %3962 = vmatprep.subr.mxu0 0.0
        %3963 = vmatpush1.msra.mxu0 0.0
        %3964 = vmatprep.subr.mxu0 0.0
        %3965 = vmatpush1.msra.mxu0 0.0
        %3966 = vmatprep.subr.mxu0 0.0
        %3967 = vmatpush1.msra.mxu0 0.0
        %3968 = vmatprep.subr.mxu0 0.0
        %3969 = vmatpush1.msra.mxu0 0.0
        %3970 = vmatprep.mubr.f32.mxu0 0.0
        %v3971 = vand.u32 %v3896, 4294901760
        %v3972 = vsub.f32 %v3896, %v3971
        %v3973 = vand.u32 %v3972, 4294901760
        %v3974 = vsub.f32 %v3972, %v3973
        %v3975 = vand.u32 %v3974, 4294901760
        %3976 = vmatmul.mubr.f32.gmra.mrb[0].mxu0 %v3975
        %v3977 = vpop.f32.mrb[0].mxu0
        %v3978 = vadd.f32 0.0, %v3977
        %v3979 = vpop.f32.mrb[0].mxu0
        %v3980 = vadd.f32 0.0, %v3979
        %3981 = vdwg.mxu0
        %v3982 = vand.u32 %v3900, 4294901760
        %v3983 = vsub.f32 %v3900, %v3982
        %v3984 = vand.u32 %v3983, 4294901760
        %v3985 = vsub.f32 %v3983, %v3984
        %v3986 = vand.u32 %v3985, 4294901760
        %3987 = vmatprep.subr.mxu0 %v3986
        %v3988 = vand.u32 %v3898, 4294901760
        %v3989 = vsub.f32 %v3898, %v3988
        %v3990 = vand.u32 %v3989, 4294901760
        %v3991 = vsub.f32 %v3989, %v3990
        %v3992 = vand.u32 %v3991, 4294901760
        %3993 = vmatpush1.msra.mxu0 %v3992
        %3994 = vmatprep.subr.mxu0 0.0
        %3995 = vmatpush1.msra.mxu0 0.0
        %3996 = vmatprep.subr.mxu0 0.0
        %3997 = vmatpush1.msra.mxu0 0.0
        %3998 = vmatprep.subr.mxu0 0.0
        %3999 = vmatpush1.msra.mxu0 0.0
        %4000 = vmatprep.subr.mxu0 0.0
        %4001 = vmatpush1.msra.mxu0 0.0
        %4002 = vmatprep.subr.mxu0 0.0
        %4003 = vmatpush1.msra.mxu0 0.0
        %4004 = vmatprep.subr.mxu0 0.0
        %4005 = vmatpush1.msra.mxu0 0.0
        %4006 = vmatprep.subr.mxu0 0.0
        %4007 = vmatpush1.msra.mxu0 0.0
        %4008 = vmatprep.subr.mxu0 0.0
        %4009 = vmatpush1.msra.mxu0 0.0
        %4010 = vmatprep.subr.mxu0 0.0
        %4011 = vmatpush1.msra.mxu0 0.0
        %4012 = vmatprep.subr.mxu0 0.0
        %4013 = vmatpush1.msra.mxu0 0.0
        %4014 = vmatprep.subr.mxu0 0.0
        %4015 = vmatpush1.msra.mxu0 0.0
        %4016 = vmatprep.subr.mxu0 0.0
        %4017 = vmatpush1.msra.mxu0 0.0
        %4018 = vmatprep.subr.mxu0 0.0
        %4019 = vmatpush1.msra.mxu0 0.0
        %4020 = vmatprep.subr.mxu0 0.0
        %4021 = vmatpush1.msra.mxu0 0.0
        %4022 = vmatprep.subr.mxu0 0.0
        %4023 = vmatpush1.msra.mxu0 0.0
        %4024 = vmatprep.subr.mxu0 0.0
        %4025 = vmatpush1.msra.mxu0 0.0
        %4026 = vmatprep.subr.mxu0 0.0
        %4027 = vmatpush1.msra.mxu0 0.0
        %4028 = vmatprep.subr.mxu0 0.0
        %4029 = vmatpush1.msra.mxu0 0.0
        %4030 = vmatprep.subr.mxu0 0.0
        %4031 = vmatpush1.msra.mxu0 0.0
        %4032 = vmatprep.subr.mxu0 0.0
        %4033 = vmatpush1.msra.mxu0 0.0
        %4034 = vmatprep.subr.mxu0 0.0
        %4035 = vmatpush1.msra.mxu0 0.0
        %4036 = vmatprep.subr.mxu0 0.0
        %4037 = vmatpush1.msra.mxu0 0.0
        %4038 = vmatprep.subr.mxu0 0.0
        %4039 = vmatpush1.msra.mxu0 0.0
        %4040 = vmatprep.subr.mxu0 0.0
        %4041 = vmatpush1.msra.mxu0 0.0
        %4042 = vmatprep.subr.mxu0 0.0
        %4043 = vmatpush1.msra.mxu0 0.0
        %4044 = vmatprep.subr.mxu0 0.0
        %4045 = vmatpush1.msra.mxu0 0.0
        %4046 = vmatprep.subr.mxu0 0.0
        %4047 = vmatpush1.msra.mxu0 0.0
        %4048 = vmatprep.subr.mxu0 0.0
        %4049 = vmatpush1.msra.mxu0 0.0
        %4050 = vmatprep.subr.mxu0 0.0
        %4051 = vmatpush1.msra.mxu0 0.0
        %4052 = vmatprep.subr.mxu0 0.0
        %4053 = vmatpush1.msra.mxu0 0.0
        %4054 = vmatprep.subr.mxu0 0.0
        %4055 = vmatpush1.msra.mxu0 0.0
        %4056 = vmatprep.mubr.f32.mxu0 0.0
        %v4057 = vand.u32 %v3896, 4294901760
        %4058 = vmatmul.mubr.f32.gmra.mrb[0].mxu0 %v4057
        %v4059 = vpop.f32.mrb[0].mxu0
        %v4060 = vadd.f32 %v3978, %v4059
        %v4061 = vpop.f32.mrb[0].mxu0
        %v4062 = vadd.f32 %v3980, %v4061
        %4063 = vdwg.mxu0
        %v4064 = vand.u32 %v3900, 4294901760
        %v4065 = vsub.f32 %v3900, %v4064
        %4066 = vmatprep.subr.mxu0 %v4065
        %v4067 = vand.u32 %v3898, 4294901760
        %v4068 = vsub.f32 %v3898, %v4067
        %4069 = vmatpush1.msra.mxu0 %v4068
        %4070 = vmatprep.subr.mxu0 0.0
        %4071 = vmatpush1.msra.mxu0 0.0
        %4072 = vmatprep.subr.mxu0 0.0
        %4073 = vmatpush1.msra.mxu0 0.0
        %4074 = vmatprep.subr.mxu0 0.0
        %4075 = vmatpush1.msra.mxu0 0.0
        %4076 = vmatprep.subr.mxu0 0.0
        %4077 = vmatpush1.msra.mxu0 0.0
        %4078 = vmatprep.subr.mxu0 0.0
        %4079 = vmatpush1.msra.mxu0 0.0
        %4080 = vmatprep.subr.mxu0 0.0
        %4081 = vmatpush1.msra.mxu0 0.0
        %4082 = vmatprep.subr.mxu0 0.0
        %4083 = vmatpush1.msra.mxu0 0.0
        %4084 = vmatprep.subr.mxu0 0.0
        %4085 = vmatpush1.msra.mxu0 0.0
        %4086 = vmatprep.subr.mxu0 0.0
        %4087 = vmatpush1.msra.mxu0 0.0
        %4088 = vmatprep.subr.mxu0 0.0
        %4089 = vmatpush1.msra.mxu0 0.0
        %4090 = vmatprep.subr.mxu0 0.0
        %4091 = vmatpush1.msra.mxu0 0.0
        %4092 = vmatprep.subr.mxu0 0.0
        %4093 = vmatpush1.msra.mxu0 0.0
        %4094 = vmatprep.subr.mxu0 0.0
        %4095 = vmatpush1.msra.mxu0 0.0
        %4096 = vmatprep.subr.mxu0 0.0
        %4097 = vmatpush1.msra.mxu0 0.0
        %4098 = vmatprep.subr.mxu0 0.0
        %4099 = vmatpush1.msra.mxu0 0.0
        %4100 = vmatprep.subr.mxu0 0.0
        %4101 = vmatpush1.msra.mxu0 0.0
        %4102 = vmatprep.subr.mxu0 0.0
        %4103 = vmatpush1.msra.mxu0 0.0
        %4104 = vmatprep.subr.mxu0 0.0
        %4105 = vmatpush1.msra.mxu0 0.0
        %4106 = vmatprep.subr.mxu0 0.0
        %4107 = vmatpush1.msra.mxu0 0.0
        %4108 = vmatprep.subr.mxu0 0.0
        %4109 = vmatpush1.msra.mxu0 0.0
        %4110 = vmatprep.subr.mxu0 0.0
        %4111 = vmatpush1.msra.mxu0 0.0
        %4112 = vmatprep.subr.mxu0 0.0
        %4113 = vmatpush1.msra.mxu0 0.0
        %4114 = vmatprep.subr.mxu0 0.0
        %4115 = vmatpush1.msra.mxu0 0.0
        %4116 = vmatprep.subr.mxu0 0.0
        %4117 = vmatpush1.msra.mxu0 0.0
        %4118 = vmatprep.subr.mxu0 0.0
        %4119 = vmatpush1.msra.mxu0 0.0
        %4120 = vmatprep.subr.mxu0 0.0
        %4121 = vmatpush1.msra.mxu0 0.0
        %4122 = vmatprep.subr.mxu0 0.0
        %4123 = vmatpush1.msra.mxu0 0.0
        %4124 = vmatprep.subr.mxu0 0.0
        %4125 = vmatpush1.msra.mxu0 0.0
        %4126 = vmatprep.subr.mxu0 0.0
        %4127 = vmatpush1.msra.mxu0 0.0
        %4128 = vmatprep.subr.mxu0 0.0
        %4129 = vmatpush1.msra.mxu0 0.0
        %4130 = vmatprep.subr.mxu0 0.0
        %4131 = vmatpush1.msra.mxu0 0.0
        %4132 = vmatprep.mubr.f32.mxu0 0.0
        %v4133 = vand.u32 %v3896, 4294901760
        %v4134 = vsub.f32 %v3896, %v4133
        %4135 = vmatmul.mubr.f32.gmra.mrb[0].mxu0 %v4134
        %v4136 = vpop.f32.mrb[0].mxu0
        %v4137 = vadd.f32 %v4060, %v4136
        %v4138 = vpop.f32.mrb[0].mxu0
        %v4139 = vadd.f32 %v4062, %v4138
        %4140 = vdwg.mxu0
        %v4141 = vand.u32 %v3900, 4294901760
        %4142 = vmatprep.subr.mxu0 %v4141
        %v4143 = vand.u32 %v3898, 4294901760
        %4144 = vmatpush1.msra.mxu0 %v4143
        %4145 = vmatprep.subr.mxu0 0.0
        %4146 = vmatpush1.msra.mxu0 0.0
        %4147 = vmatprep.subr.mxu0 0.0
        %4148 = vmatpush1.msra.mxu0 0.0
        %4149 = vmatprep.subr.mxu0 0.0
        %4150 = vmatpush1.msra.mxu0 0.0
        %4151 = vmatprep.subr.mxu0 0.0
        %4152 = vmatpush1.msra.mxu0 0.0
        %4153 = vmatprep.subr.mxu0 0.0
        %4154 = vmatpush1.msra.mxu0 0.0
        %4155 = vmatprep.subr.mxu0 0.0
        %4156 = vmatpush1.msra.mxu0 0.0
        %4157 = vmatprep.subr.mxu0 0.0
        %4158 = vmatpush1.msra.mxu0 0.0
        %4159 = vmatprep.subr.mxu0 0.0
        %4160 = vmatpush1.msra.mxu0 0.0
        %4161 = vmatprep.subr.mxu0 0.0
        %4162 = vmatpush1.msra.mxu0 0.0
        %4163 = vmatprep.subr.mxu0 0.0
        %4164 = vmatpush1.msra.mxu0 0.0
        %4165 = vmatprep.subr.mxu0 0.0
        %4166 = vmatpush1.msra.mxu0 0.0
        %4167 = vmatprep.subr.mxu0 0.0
        %4168 = vmatpush1.msra.mxu0 0.0
        %4169 = vmatprep.subr.mxu0 0.0
        %4170 = vmatpush1.msra.mxu0 0.0
        %4171 = vmatprep.subr.mxu0 0.0
        %4172 = vmatpush1.msra.mxu0 0.0
        %4173 = vmatprep.subr.mxu0 0.0
        %4174 = vmatpush1.msra.mxu0 0.0
        %4175 = vmatprep.subr.mxu0 0.0
        %4176 = vmatpush1.msra.mxu0 0.0
        %4177 = vmatprep.subr.mxu0 0.0
        %4178 = vmatpush1.msra.mxu0 0.0
        %4179 = vmatprep.subr.mxu0 0.0
        %4180 = vmatpush1.msra.mxu0 0.0
        %4181 = vmatprep.subr.mxu0 0.0
        %4182 = vmatpush1.msra.mxu0 0.0
        %4183 = vmatprep.subr.mxu0 0.0
        %4184 = vmatpush1.msra.mxu0 0.0
        %4185 = vmatprep.subr.mxu0 0.0
        %4186 = vmatpush1.msra.mxu0 0.0
        %4187 = vmatprep.subr.mxu0 0.0
        %4188 = vmatpush1.msra.mxu0 0.0
        %4189 = vmatprep.subr.mxu0 0.0
        %4190 = vmatpush1.msra.mxu0 0.0
        %4191 = vmatprep.subr.mxu0 0.0
        %4192 = vmatpush1.msra.mxu0 0.0
        %4193 = vmatprep.subr.mxu0 0.0
        %4194 = vmatpush1.msra.mxu0 0.0
        %4195 = vmatprep.subr.mxu0 0.0
        %4196 = vmatpush1.msra.mxu0 0.0
        %4197 = vmatprep.subr.mxu0 0.0
        %4198 = vmatpush1.msra.mxu0 0.0
        %4199 = vmatprep.subr.mxu0 0.0
        %4200 = vmatpush1.msra.mxu0 0.0
        %4201 = vmatprep.subr.mxu0 0.0
        %4202 = vmatpush1.msra.mxu0 0.0
        %4203 = vmatprep.subr.mxu0 0.0
        %4204 = vmatpush1.msra.mxu0 0.0
        %4205 = vmatprep.subr.mxu0 0.0
        %4206 = vmatpush1.msra.mxu0 0.0
        %4207 = vmatprep.mubr.f32.mxu0 0.0
        %v4208 = vand.u32 %v3896, 4294901760
        %v4209 = vsub.f32 %v3896, %v4208
        %v4210 = vand.u32 %v4209, 4294901760
        %4211 = vmatmul.mubr.f32.gmra.mrb[0].mxu0 %v4210
        %v4212 = vpop.f32.mrb[0].mxu0
        %v4213 = vadd.f32 %v4137, %v4212
        %v4214 = vpop.f32.mrb[0].mxu0
        %v4215 = vadd.f32 %v4139, %v4214
        %4216 = vdwg.mxu0
        %v4217 = vand.u32 %v3900, 4294901760
        %v4218 = vsub.f32 %v3900, %v4217
        %v4219 = vand.u32 %v4218, 4294901760
        %4220 = vmatprep.subr.mxu0 %v4219
        %v4221 = vand.u32 %v3898, 4294901760
        %v4222 = vsub.f32 %v3898, %v4221
        %v4223 = vand.u32 %v4222, 4294901760
        %4224 = vmatpush1.msra.mxu0 %v4223
        %4225 = vmatprep.subr.mxu0 0.0
        %4226 = vmatpush1.msra.mxu0 0.0
        %4227 = vmatprep.subr.mxu0 0.0
        %4228 = vmatpush1.msra.mxu0 0.0
        %4229 = vmatprep.subr.mxu0 0.0
        %4230 = vmatpush1.msra.mxu0 0.0
        %4231 = vmatprep.subr.mxu0 0.0
        %4232 = vmatpush1.msra.mxu0 0.0
        %4233 = vmatprep.subr.mxu0 0.0
        %4234 = vmatpush1.msra.mxu0 0.0
        %4235 = vmatprep.subr.mxu0 0.0
        %4236 = vmatpush1.msra.mxu0 0.0
        %4237 = vmatprep.subr.mxu0 0.0
        %4238 = vmatpush1.msra.mxu0 0.0
        %4239 = vmatprep.subr.mxu0 0.0
        %4240 = vmatpush1.msra.mxu0 0.0
        %4241 = vmatprep.subr.mxu0 0.0
        %4242 = vmatpush1.msra.mxu0 0.0
        %4243 = vmatprep.subr.mxu0 0.0
        %4244 = vmatpush1.msra.mxu0 0.0
        %4245 = vmatprep.subr.mxu0 0.0
        %4246 = vmatpush1.msra.mxu0 0.0
        %4247 = vmatprep.subr.mxu0 0.0
        %4248 = vmatpush1.msra.mxu0 0.0
        %4249 = vmatprep.subr.mxu0 0.0
        %4250 = vmatpush1.msra.mxu0 0.0
        %4251 = vmatprep.subr.mxu0 0.0
        %4252 = vmatpush1.msra.mxu0 0.0
        %4253 = vmatprep.subr.mxu0 0.0
        %4254 = vmatpush1.msra.mxu0 0.0
        %4255 = vmatprep.subr.mxu0 0.0
        %4256 = vmatpush1.msra.mxu0 0.0
        %4257 = vmatprep.subr.mxu0 0.0
        %4258 = vmatpush1.msra.mxu0 0.0
        %4259 = vmatprep.subr.mxu0 0.0
        %4260 = vmatpush1.msra.mxu0 0.0
        %4261 = vmatprep.subr.mxu0 0.0
        %4262 = vmatpush1.msra.mxu0 0.0
        %4263 = vmatprep.subr.mxu0 0.0
        %4264 = vmatpush1.msra.mxu0 0.0
        %4265 = vmatprep.subr.mxu0 0.0
        %4266 = vmatpush1.msra.mxu0 0.0
        %4267 = vmatprep.subr.mxu0 0.0
        %4268 = vmatpush1.msra.mxu0 0.0
        %4269 = vmatprep.subr.mxu0 0.0
        %4270 = vmatpush1.msra.mxu0 0.0
        %4271 = vmatprep.subr.mxu0 0.0
        %4272 = vmatpush1.msra.mxu0 0.0
        %4273 = vmatprep.subr.mxu0 0.0
        %4274 = vmatpush1.msra.mxu0 0.0
        %4275 = vmatprep.subr.mxu0 0.0
        %4276 = vmatpush1.msra.mxu0 0.0
        %4277 = vmatprep.subr.mxu0 0.0
        %4278 = vmatpush1.msra.mxu0 0.0
        %4279 = vmatprep.subr.mxu0 0.0
        %4280 = vmatpush1.msra.mxu0 0.0
        %4281 = vmatprep.subr.mxu0 0.0
        %4282 = vmatpush1.msra.mxu0 0.0
        %4283 = vmatprep.subr.mxu0 0.0
        %4284 = vmatpush1.msra.mxu0 0.0
        %4285 = vmatprep.subr.mxu0 0.0
        %4286 = vmatpush1.msra.mxu0 0.0
        %4287 = vmatprep.mubr.f32.mxu0 0.0
        %v4288 = vand.u32 %v3896, 4294901760
        %4289 = vmatmul.mubr.f32.gmra.mrb[0].mxu0 %v4288
        %v4290 = vpop.f32.mrb[0].mxu0
        %v4291 = vadd.f32 %v4213, %v4290
        %v4292 = vpop.f32.mrb[0].mxu0
        %v4293 = vadd.f32 %v4215, %v4292
        %4294 = vdwg.mxu0
        %v4295 = vand.u32 %v3900, 4294901760
        %4296 = vmatprep.subr.mxu0 %v4295
        %v4297 = vand.u32 %v3898, 4294901760
        %4298 = vmatpush1.msra.mxu0 %v4297
        %4299 = vmatprep.subr.mxu0 0.0
        %4300 = vmatpush1.msra.mxu0 0.0
        %4301 = vmatprep.subr.mxu0 0.0
        %4302 = vmatpush1.msra.mxu0 0.0
        %4303 = vmatprep.subr.mxu0 0.0
        %4304 = vmatpush1.msra.mxu0 0.0
        %4305 = vmatprep.subr.mxu0 0.0
        %4306 = vmatpush1.msra.mxu0 0.0
        %4307 = vmatprep.subr.mxu0 0.0
        %4308 = vmatpush1.msra.mxu0 0.0
        %4309 = vmatprep.subr.mxu0 0.0
        %4310 = vmatpush1.msra.mxu0 0.0
        %4311 = vmatprep.subr.mxu0 0.0
        %4312 = vmatpush1.msra.mxu0 0.0
        %4313 = vmatprep.subr.mxu0 0.0
        %4314 = vmatpush1.msra.mxu0 0.0
        %4315 = vmatprep.subr.mxu0 0.0
        %4316 = vmatpush1.msra.mxu0 0.0
        %4317 = vmatprep.subr.mxu0 0.0
        %4318 = vmatpush1.msra.mxu0 0.0
        %4319 = vmatprep.subr.mxu0 0.0
        %4320 = vmatpush1.msra.mxu0 0.0
        %4321 = vmatprep.subr.mxu0 0.0
        %4322 = vmatpush1.msra.mxu0 0.0
        %4323 = vmatprep.subr.mxu0 0.0
        %4324 = vmatpush1.msra.mxu0 0.0
        %4325 = vmatprep.subr.mxu0 0.0
        %4326 = vmatpush1.msra.mxu0 0.0
        %4327 = vmatprep.subr.mxu0 0.0
        %4328 = vmatpush1.msra.mxu0 0.0
        %4329 = vmatprep.subr.mxu0 0.0
        %4330 = vmatpush1.msra.mxu0 0.0
        %4331 = vmatprep.subr.mxu0 0.0
        %4332 = vmatpush1.msra.mxu0 0.0
        %4333 = vmatprep.subr.mxu0 0.0
        %4334 = vmatpush1.msra.mxu0 0.0
        %4335 = vmatprep.subr.mxu0 0.0
        %4336 = vmatpush1.msra.mxu0 0.0
        %4337 = vmatprep.subr.mxu0 0.0
        %4338 = vmatpush1.msra.mxu0 0.0
        %4339 = vmatprep.subr.mxu0 0.0
        %4340 = vmatpush1.msra.mxu0 0.0
        %4341 = vmatprep.subr.mxu0 0.0
        %4342 = vmatpush1.msra.mxu0 0.0
        %4343 = vmatprep.subr.mxu0 0.0
        %4344 = vmatpush1.msra.mxu0 0.0
        %4345 = vmatprep.subr.mxu0 0.0
        %4346 = vmatpush1.msra.mxu0 0.0
        %4347 = vmatprep.subr.mxu0 0.0
        %4348 = vmatpush1.msra.mxu0 0.0
        %4349 = vmatprep.subr.mxu0 0.0
        %4350 = vmatpush1.msra.mxu0 0.0
        %4351 = vmatprep.subr.mxu0 0.0
        %4352 = vmatpush1.msra.mxu0 0.0
        %4353 = vmatprep.subr.mxu0 0.0
        %4354 = vmatpush1.msra.mxu0 0.0
        %4355 = vmatprep.subr.mxu0 0.0
        %4356 = vmatpush1.msra.mxu0 0.0
        %4357 = vmatprep.subr.mxu0 0.0
        %4358 = vmatpush1.msra.mxu0 0.0
        %4359 = vmatprep.subr.mxu0 0.0
        %4360 = vmatpush1.msra.mxu0 0.0
        %4361 = vmatprep.mubr.f32.mxu0 0.0
        %v4362 = vand.u32 %v3896, 4294901760
        %4363 = vmatmul.mubr.f32.gmra.mrb[0].mxu0 %v4362
        %v4364 = vpop.f32.mrb[0].mxu0
        %v4365 = vadd.f32 %v4291, %v4364
        %v4366 = vpop.f32.mrb[0].mxu0
        %v4367 = vadd.f32 %v4293, %v4366
        %4368 = vdwg.mxu0
        %4369 = vmatprep.subr.mxu0 0.0
        %v4370 = vand.u32 %v3902, 4294901760
        %4371 = vmatpush1.msra.mxu0 %v4370
        %4372 = vmatprep.subr.mxu0 0.0
        %4373 = vmatpush1.msra.mxu0 0.0
        %4374 = vmatprep.subr.mxu0 0.0
        %4375 = vmatpush1.msra.mxu0 0.0
        %4376 = vmatprep.subr.mxu0 0.0
        %4377 = vmatpush1.msra.mxu0 0.0
        %4378 = vmatprep.subr.mxu0 0.0
        %4379 = vmatpush1.msra.mxu0 0.0
        %4380 = vmatprep.subr.mxu0 0.0
        %4381 = vmatpush1.msra.mxu0 0.0
        %4382 = vmatprep.subr.mxu0 0.0
        %4383 = vmatpush1.msra.mxu0 0.0
        %4384 = vmatprep.subr.mxu0 0.0
        %4385 = vmatpush1.msra.mxu0 0.0
        %4386 = vmatprep.subr.mxu0 0.0
        %4387 = vmatpush1.msra.mxu0 0.0
        %4388 = vmatprep.subr.mxu0 0.0
        %4389 = vmatpush1.msra.mxu0 0.0
        %4390 = vmatprep.subr.mxu0 0.0
        %4391 = vmatpush1.msra.mxu0 0.0
        %4392 = vmatprep.subr.mxu0 0.0
        %4393 = vmatpush1.msra.mxu0 0.0
        %4394 = vmatprep.subr.mxu0 0.0
        %4395 = vmatpush1.msra.mxu0 0.0
        %4396 = vmatprep.subr.mxu0 0.0
        %4397 = vmatpush1.msra.mxu0 0.0
        %4398 = vmatprep.subr.mxu0 0.0
        %4399 = vmatpush1.msra.mxu0 0.0
        %4400 = vmatprep.subr.mxu0 0.0
        %4401 = vmatpush1.msra.mxu0 0.0
        %4402 = vmatprep.subr.mxu0 0.0
        %4403 = vmatpush1.msra.mxu0 0.0
        %4404 = vmatprep.subr.mxu0 0.0
        %4405 = vmatpush1.msra.mxu0 0.0
        %4406 = vmatprep.subr.mxu0 0.0
        %4407 = vmatpush1.msra.mxu0 0.0
        %4408 = vmatprep.subr.mxu0 0.0
        %4409 = vmatpush1.msra.mxu0 0.0
        %4410 = vmatprep.subr.mxu0 0.0
        %4411 = vmatpush1.msra.mxu0 0.0
        %4412 = vmatprep.subr.mxu0 0.0
        %4413 = vmatpush1.msra.mxu0 0.0
        %4414 = vmatprep.subr.mxu0 0.0
        %4415 = vmatpush1.msra.mxu0 0.0
        %4416 = vmatprep.subr.mxu0 0.0
        %4417 = vmatpush1.msra.mxu0 0.0
        %4418 = vmatprep.subr.mxu0 0.0
        %4419 = vmatpush1.msra.mxu0 0.0
        %4420 = vmatprep.subr.mxu0 0.0
        %4421 = vmatpush1.msra.mxu0 0.0
        %4422 = vmatprep.subr.mxu0 0.0
        %4423 = vmatpush1.msra.mxu0 0.0
        %4424 = vmatprep.subr.mxu0 0.0
        %4425 = vmatpush1.msra.mxu0 0.0
        %4426 = vmatprep.subr.mxu0 0.0
        %4427 = vmatpush1.msra.mxu0 0.0
        %4428 = vmatprep.subr.mxu0 0.0
        %4429 = vmatpush1.msra.mxu0 0.0
        %4430 = vmatprep.subr.mxu0 0.0
        %4431 = vmatpush1.msra.mxu0 0.0
        %4432 = vmatprep.subr.mxu0 0.0
        %4433 = vmatpush1.msra.mxu0 0.0
        %4434 = vmatprep.mubr.f32.mxu0 0.0
        %v4435 = vand.u32 %v3896, 4294901760
        %v4436 = vsub.f32 %v3896, %v4435
        %v4437 = vand.u32 %v4436, 4294901760
        %v4438 = vsub.f32 %v4436, %v4437
        %v4439 = vand.u32 %v4438, 4294901760
        %4440 = vmatmul.mubr.f32.gmra.mrb[0].mxu0 %v4439
        %v4441 = vpop.f32.mrb[0].mxu0
        %v4442 = vadd.f32 0.0, %v4441
        %v4443 = vpop.f32.mrb[0].mxu0
        %4444 = vdwg.mxu0
        %4445 = vmatprep.subr.mxu0 0.0
        %v4446 = vand.u32 %v3902, 4294901760
        %v4447 = vsub.f32 %v3902, %v4446
        %v4448 = vand.u32 %v4447, 4294901760
        %v4449 = vsub.f32 %v4447, %v4448
        %v4450 = vand.u32 %v4449, 4294901760
        %4451 = vmatpush1.msra.mxu0 %v4450
        %4452 = vmatprep.subr.mxu0 0.0
        %4453 = vmatpush1.msra.mxu0 0.0
        %4454 = vmatprep.subr.mxu0 0.0
        %4455 = vmatpush1.msra.mxu0 0.0
        %4456 = vmatprep.subr.mxu0 0.0
        %4457 = vmatpush1.msra.mxu0 0.0
        %4458 = vmatprep.subr.mxu0 0.0
        %4459 = vmatpush1.msra.mxu0 0.0
        %4460 = vmatprep.subr.mxu0 0.0
        %4461 = vmatpush1.msra.mxu0 0.0
        %4462 = vmatprep.subr.mxu0 0.0
        %4463 = vmatpush1.msra.mxu0 0.0
        %4464 = vmatprep.subr.mxu0 0.0
        %4465 = vmatpush1.msra.mxu0 0.0
        %4466 = vmatprep.subr.mxu0 0.0
        %4467 = vmatpush1.msra.mxu0 0.0
        %4468 = vmatprep.subr.mxu0 0.0
        %4469 = vmatpush1.msra.mxu0 0.0
        %4470 = vmatprep.subr.mxu0 0.0
        %4471 = vmatpush1.msra.mxu0 0.0
        %4472 = vmatprep.subr.mxu0 0.0
        %4473 = vmatpush1.msra.mxu0 0.0
        %4474 = vmatprep.subr.mxu0 0.0
        %4475 = vmatpush1.msra.mxu0 0.0
        %4476 = vmatprep.subr.mxu0 0.0
        %4477 = vmatpush1.msra.mxu0 0.0
        %4478 = vmatprep.subr.mxu0 0.0
        %4479 = vmatpush1.msra.mxu0 0.0
        %4480 = vmatprep.subr.mxu0 0.0
        %4481 = vmatpush1.msra.mxu0 0.0
        %4482 = vmatprep.subr.mxu0 0.0
        %4483 = vmatpush1.msra.mxu0 0.0
        %4484 = vmatprep.subr.mxu0 0.0
        %4485 = vmatpush1.msra.mxu0 0.0
        %4486 = vmatprep.subr.mxu0 0.0
        %4487 = vmatpush1.msra.mxu0 0.0
        %4488 = vmatprep.subr.mxu0 0.0
        %4489 = vmatpush1.msra.mxu0 0.0
        %4490 = vmatprep.subr.mxu0 0.0
        %4491 = vmatpush1.msra.mxu0 0.0
        %4492 = vmatprep.subr.mxu0 0.0
        %4493 = vmatpush1.msra.mxu0 0.0
        %4494 = vmatprep.subr.mxu0 0.0
        %4495 = vmatpush1.msra.mxu0 0.0
        %4496 = vmatprep.subr.mxu0 0.0
        %4497 = vmatpush1.msra.mxu0 0.0
        %4498 = vmatprep.subr.mxu0 0.0
        %4499 = vmatpush1.msra.mxu0 0.0
        %4500 = vmatprep.subr.mxu0 0.0
        %4501 = vmatpush1.msra.mxu0 0.0
        %4502 = vmatprep.subr.mxu0 0.0
        %4503 = vmatpush1.msra.mxu0 0.0
        %4504 = vmatprep.subr.mxu0 0.0
        %4505 = vmatpush1.msra.mxu0 0.0
        %4506 = vmatprep.subr.mxu0 0.0
        %4507 = vmatpush1.msra.mxu0 0.0
        %4508 = vmatprep.subr.mxu0 0.0
        %4509 = vmatpush1.msra.mxu0 0.0
        %4510 = vmatprep.subr.mxu0 0.0
        %4511 = vmatpush1.msra.mxu0 0.0
        %4512 = vmatprep.subr.mxu0 0.0
        %4513 = vmatpush1.msra.mxu0 0.0
        %4514 = vmatprep.mubr.f32.mxu0 0.0
        %v4515 = vand.u32 %v3896, 4294901760
        %4516 = vmatmul.mubr.f32.gmra.mrb[0].mxu0 %v4515
        %v4517 = vpop.f32.mrb[0].mxu0
        %v4518 = vadd.f32 %v4442, %v4517
        %v4519 = vpop.f32.mrb[0].mxu0
        %4520 = vdwg.mxu0
        %4521 = vmatprep.subr.mxu0 0.0
        %v4522 = vand.u32 %v3902, 4294901760
        %v4523 = vsub.f32 %v3902, %v4522
        %4524 = vmatpush1.msra.mxu0 %v4523
        %4525 = vmatprep.subr.mxu0 0.0
        %4526 = vmatpush1.msra.mxu0 0.0
        %4527 = vmatprep.subr.mxu0 0.0
        %4528 = vmatpush1.msra.mxu0 0.0
        %4529 = vmatprep.subr.mxu0 0.0
        %4530 = vmatpush1.msra.mxu0 0.0
        %4531 = vmatprep.subr.mxu0 0.0
        %4532 = vmatpush1.msra.mxu0 0.0
        %4533 = vmatprep.subr.mxu0 0.0
        %4534 = vmatpush1.msra.mxu0 0.0
        %4535 = vmatprep.subr.mxu0 0.0
        %4536 = vmatpush1.msra.mxu0 0.0
        %4537 = vmatprep.subr.mxu0 0.0
        %4538 = vmatpush1.msra.mxu0 0.0
        %4539 = vmatprep.subr.mxu0 0.0
        %4540 = vmatpush1.msra.mxu0 0.0
        %4541 = vmatprep.subr.mxu0 0.0
        %4542 = vmatpush1.msra.mxu0 0.0
        %4543 = vmatprep.subr.mxu0 0.0
        %4544 = vmatpush1.msra.mxu0 0.0
        %4545 = vmatprep.subr.mxu0 0.0
        %4546 = vmatpush1.msra.mxu0 0.0
        %4547 = vmatprep.subr.mxu0 0.0
        %4548 = vmatpush1.msra.mxu0 0.0
        %4549 = vmatprep.subr.mxu0 0.0
        %4550 = vmatpush1.msra.mxu0 0.0
        %4551 = vmatprep.subr.mxu0 0.0
        %4552 = vmatpush1.msra.mxu0 0.0
        %4553 = vmatprep.subr.mxu0 0.0
        %4554 = vmatpush1.msra.mxu0 0.0
        %4555 = vmatprep.subr.mxu0 0.0
        %4556 = vmatpush1.msra.mxu0 0.0
        %4557 = vmatprep.subr.mxu0 0.0
        %4558 = vmatpush1.msra.mxu0 0.0
        %4559 = vmatprep.subr.mxu0 0.0
        %4560 = vmatpush1.msra.mxu0 0.0
        %4561 = vmatprep.subr.mxu0 0.0
        %4562 = vmatpush1.msra.mxu0 0.0
        %4563 = vmatprep.subr.mxu0 0.0
        %4564 = vmatpush1.msra.mxu0 0.0
        %4565 = vmatprep.subr.mxu0 0.0
        %4566 = vmatpush1.msra.mxu0 0.0
        %4567 = vmatprep.subr.mxu0 0.0
        %4568 = vmatpush1.msra.mxu0 0.0
        %4569 = vmatprep.subr.mxu0 0.0
        %4570 = vmatpush1.msra.mxu0 0.0
        %4571 = vmatprep.subr.mxu0 0.0
        %4572 = vmatpush1.msra.mxu0 0.0
        %4573 = vmatprep.subr.mxu0 0.0
        %4574 = vmatpush1.msra.mxu0 0.0
        %4575 = vmatprep.subr.mxu0 0.0
        %4576 = vmatpush1.msra.mxu0 0.0
        %4577 = vmatprep.subr.mxu0 0.0
        %4578 = vmatpush1.msra.mxu0 0.0
        %4579 = vmatprep.subr.mxu0 0.0
        %4580 = vmatpush1.msra.mxu0 0.0
        %4581 = vmatprep.subr.mxu0 0.0
        %4582 = vmatpush1.msra.mxu0 0.0
        %4583 = vmatprep.subr.mxu0 0.0
        %4584 = vmatpush1.msra.mxu0 0.0
        %4585 = vmatprep.subr.mxu0 0.0
        %4586 = vmatpush1.msra.mxu0 0.0
        %4587 = vmatprep.mubr.f32.mxu0 0.0
        %v4588 = vand.u32 %v3896, 4294901760
        %v4589 = vsub.f32 %v3896, %v4588
        %4590 = vmatmul.mubr.f32.gmra.mrb[0].mxu0 %v4589
        %v4591 = vpop.f32.mrb[0].mxu0
        %v4592 = vadd.f32 %v4518, %v4591
        %v4593 = vpop.f32.mrb[0].mxu0
        %4594 = vdwg.mxu0
        %4595 = vmatprep.subr.mxu0 0.0
        %v4596 = vand.u32 %v3902, 4294901760
        %4597 = vmatpush1.msra.mxu0 %v4596
        %4598 = vmatprep.subr.mxu0 0.0
        %4599 = vmatpush1.msra.mxu0 0.0
        %4600 = vmatprep.subr.mxu0 0.0
        %4601 = vmatpush1.msra.mxu0 0.0
        %4602 = vmatprep.subr.mxu0 0.0
        %4603 = vmatpush1.msra.mxu0 0.0
        %4604 = vmatprep.subr.mxu0 0.0
        %4605 = vmatpush1.msra.mxu0 0.0
        %4606 = vmatprep.subr.mxu0 0.0
        %4607 = vmatpush1.msra.mxu0 0.0
        %4608 = vmatprep.subr.mxu0 0.0
        %4609 = vmatpush1.msra.mxu0 0.0
        %4610 = vmatprep.subr.mxu0 0.0
        %4611 = vmatpush1.msra.mxu0 0.0
        %4612 = vmatprep.subr.mxu0 0.0
        %4613 = vmatpush1.msra.mxu0 0.0
        %4614 = vmatprep.subr.mxu0 0.0
        %4615 = vmatpush1.msra.mxu0 0.0
        %4616 = vmatprep.subr.mxu0 0.0
        %4617 = vmatpush1.msra.mxu0 0.0
        %4618 = vmatprep.subr.mxu0 0.0
        %4619 = vmatpush1.msra.mxu0 0.0
        %4620 = vmatprep.subr.mxu0 0.0
        %4621 = vmatpush1.msra.mxu0 0.0
        %4622 = vmatprep.subr.mxu0 0.0
        %4623 = vmatpush1.msra.mxu0 0.0
        %4624 = vmatprep.subr.mxu0 0.0
        %4625 = vmatpush1.msra.mxu0 0.0
        %4626 = vmatprep.subr.mxu0 0.0
        %4627 = vmatpush1.msra.mxu0 0.0
        %4628 = vmatprep.subr.mxu0 0.0
        %4629 = vmatpush1.msra.mxu0 0.0
        %4630 = vmatprep.subr.mxu0 0.0
        %4631 = vmatpush1.msra.mxu0 0.0
        %4632 = vmatprep.subr.mxu0 0.0
        %4633 = vmatpush1.msra.mxu0 0.0
        %4634 = vmatprep.subr.mxu0 0.0
        %4635 = vmatpush1.msra.mxu0 0.0
        %4636 = vmatprep.subr.mxu0 0.0
        %4637 = vmatpush1.msra.mxu0 0.0
        %4638 = vmatprep.subr.mxu0 0.0
        %4639 = vmatpush1.msra.mxu0 0.0
        %4640 = vmatprep.subr.mxu0 0.0
        %4641 = vmatpush1.msra.mxu0 0.0
        %4642 = vmatprep.subr.mxu0 0.0
        %4643 = vmatpush1.msra.mxu0 0.0
        %4644 = vmatprep.subr.mxu0 0.0
        %4645 = vmatpush1.msra.mxu0 0.0
        %4646 = vmatprep.subr.mxu0 0.0
        %4647 = vmatpush1.msra.mxu0 0.0
        %4648 = vmatprep.subr.mxu0 0.0
        %4649 = vmatpush1.msra.mxu0 0.0
        %4650 = vmatprep.subr.mxu0 0.0
        %4651 = vmatpush1.msra.mxu0 0.0
        %4652 = vmatprep.subr.mxu0 0.0
        %4653 = vmatpush1.msra.mxu0 0.0
        %4654 = vmatprep.subr.mxu0 0.0
        %4655 = vmatpush1.msra.mxu0 0.0
        %4656 = vmatprep.subr.mxu0 0.0
        %4657 = vmatpush1.msra.mxu0 0.0
        %4658 = vmatprep.subr.mxu0 0.0
        %4659 = vmatpush1.msra.mxu0 0.0
        %4660 = vmatprep.mubr.f32.mxu0 0.0
        %v4661 = vand.u32 %v3896, 4294901760
        %v4662 = vsub.f32 %v3896, %v4661
        %v4663 = vand.u32 %v4662, 4294901760
        %4664 = vmatmul.mubr.f32.gmra.mrb[0].mxu0 %v4663
        %v4665 = vpop.f32.mrb[0].mxu0
        %v4666 = vadd.f32 %v4592, %v4665
        %v4667 = vpop.f32.mrb[0].mxu0
        %4668 = vdwg.mxu0
        %4669 = vmatprep.subr.mxu0 0.0
        %v4670 = vand.u32 %v3902, 4294901760
        %v4671 = vsub.f32 %v3902, %v4670
        %v4672 = vand.u32 %v4671, 4294901760
        %4673 = vmatpush1.msra.mxu0 %v4672
        %4674 = vmatprep.subr.mxu0 0.0
        %4675 = vmatpush1.msra.mxu0 0.0
        %4676 = vmatprep.subr.mxu0 0.0
        %4677 = vmatpush1.msra.mxu0 0.0
        %4678 = vmatprep.subr.mxu0 0.0
        %4679 = vmatpush1.msra.mxu0 0.0
        %4680 = vmatprep.subr.mxu0 0.0
        %4681 = vmatpush1.msra.mxu0 0.0
        %4682 = vmatprep.subr.mxu0 0.0
        %4683 = vmatpush1.msra.mxu0 0.0
        %4684 = vmatprep.subr.mxu0 0.0
        %4685 = vmatpush1.msra.mxu0 0.0
        %4686 = vmatprep.subr.mxu0 0.0
        %4687 = vmatpush1.msra.mxu0 0.0
        %4688 = vmatprep.subr.mxu0 0.0
        %4689 = vmatpush1.msra.mxu0 0.0
        %4690 = vmatprep.subr.mxu0 0.0
        %4691 = vmatpush1.msra.mxu0 0.0
        %4692 = vmatprep.subr.mxu0 0.0
        %4693 = vmatpush1.msra.mxu0 0.0
        %4694 = vmatprep.subr.mxu0 0.0
        %4695 = vmatpush1.msra.mxu0 0.0
        %4696 = vmatprep.subr.mxu0 0.0
        %4697 = vmatpush1.msra.mxu0 0.0
        %4698 = vmatprep.subr.mxu0 0.0
        %4699 = vmatpush1.msra.mxu0 0.0
        %4700 = vmatprep.subr.mxu0 0.0
        %4701 = vmatpush1.msra.mxu0 0.0
        %4702 = vmatprep.subr.mxu0 0.0
        %4703 = vmatpush1.msra.mxu0 0.0
        %4704 = vmatprep.subr.mxu0 0.0
        %4705 = vmatpush1.msra.mxu0 0.0
        %4706 = vmatprep.subr.mxu0 0.0
        %4707 = vmatpush1.msra.mxu0 0.0
        %4708 = vmatprep.subr.mxu0 0.0
        %4709 = vmatpush1.msra.mxu0 0.0
        %4710 = vmatprep.subr.mxu0 0.0
        %4711 = vmatpush1.msra.mxu0 0.0
        %4712 = vmatprep.subr.mxu0 0.0
        %4713 = vmatpush1.msra.mxu0 0.0
        %4714 = vmatprep.subr.mxu0 0.0
        %4715 = vmatpush1.msra.mxu0 0.0
        %4716 = vmatprep.subr.mxu0 0.0
        %4717 = vmatpush1.msra.mxu0 0.0
        %4718 = vmatprep.subr.mxu0 0.0
        %4719 = vmatpush1.msra.mxu0 0.0
        %4720 = vmatprep.subr.mxu0 0.0
        %4721 = vmatpush1.msra.mxu0 0.0
        %4722 = vmatprep.subr.mxu0 0.0
        %4723 = vmatpush1.msra.mxu0 0.0
        %4724 = vmatprep.subr.mxu0 0.0
        %4725 = vmatpush1.msra.mxu0 0.0
        %4726 = vmatprep.subr.mxu0 0.0
        %4727 = vmatpush1.msra.mxu0 0.0
        %4728 = vmatprep.subr.mxu0 0.0
        %4729 = vmatpush1.msra.mxu0 0.0
        %4730 = vmatprep.subr.mxu0 0.0
        %4731 = vmatpush1.msra.mxu0 0.0
        %4732 = vmatprep.subr.mxu0 0.0
        %4733 = vmatpush1.msra.mxu0 0.0
        %4734 = vmatprep.subr.mxu0 0.0
        %4735 = vmatpush1.msra.mxu0 0.0
        %4736 = vmatprep.mubr.f32.mxu0 0.0
        %v4737 = vand.u32 %v3896, 4294901760
        %4738 = vmatmul.mubr.f32.gmra.mrb[0].mxu0 %v4737
        %v4739 = vpop.f32.mrb[0].mxu0
        %v4740 = vadd.f32 %v4666, %v4739
        %v4741 = vpop.f32.mrb[0].mxu0
        %4742 = vdwg.mxu0
        %4743 = vmatprep.subr.mxu0 0.0
        %v4744 = vand.u32 %v3902, 4294901760
        %4745 = vmatpush1.msra.mxu0 %v4744
        %4746 = vmatprep.subr.mxu0 0.0
        %4747 = vmatpush1.msra.mxu0 0.0
        %4748 = vmatprep.subr.mxu0 0.0
        %4749 = vmatpush1.msra.mxu0 0.0
        %4750 = vmatprep.subr.mxu0 0.0
        %4751 = vmatpush1.msra.mxu0 0.0
        %4752 = vmatprep.subr.mxu0 0.0
        %4753 = vmatpush1.msra.mxu0 0.0
        %4754 = vmatprep.subr.mxu0 0.0
        %4755 = vmatpush1.msra.mxu0 0.0
        %4756 = vmatprep.subr.mxu0 0.0
        %4757 = vmatpush1.msra.mxu0 0.0
        %4758 = vmatprep.subr.mxu0 0.0
        %4759 = vmatpush1.msra.mxu0 0.0
        %4760 = vmatprep.subr.mxu0 0.0
        %4761 = vmatpush1.msra.mxu0 0.0
        %4762 = vmatprep.subr.mxu0 0.0
        %4763 = vmatpush1.msra.mxu0 0.0
        %4764 = vmatprep.subr.mxu0 0.0
        %4765 = vmatpush1.msra.mxu0 0.0
        %4766 = vmatprep.subr.mxu0 0.0
        %4767 = vmatpush1.msra.mxu0 0.0
        %4768 = vmatprep.subr.mxu0 0.0
        %4769 = vmatpush1.msra.mxu0 0.0
        %4770 = vmatprep.subr.mxu0 0.0
        %4771 = vmatpush1.msra.mxu0 0.0
        %4772 = vmatprep.subr.mxu0 0.0
        %4773 = vmatpush1.msra.mxu0 0.0
        %4774 = vmatprep.subr.mxu0 0.0
        %4775 = vmatpush1.msra.mxu0 0.0
        %4776 = vmatprep.subr.mxu0 0.0
        %4777 = vmatpush1.msra.mxu0 0.0
        %4778 = vmatprep.subr.mxu0 0.0
        %4779 = vmatpush1.msra.mxu0 0.0
        %4780 = vmatprep.subr.mxu0 0.0
        %4781 = vmatpush1.msra.mxu0 0.0
        %4782 = vmatprep.subr.mxu0 0.0
        %4783 = vmatpush1.msra.mxu0 0.0
        %4784 = vmatprep.subr.mxu0 0.0
        %4785 = vmatpush1.msra.mxu0 0.0
        %4786 = vmatprep.subr.mxu0 0.0
        %4787 = vmatpush1.msra.mxu0 0.0
        %4788 = vmatprep.subr.mxu0 0.0
        %4789 = vmatpush1.msra.mxu0 0.0
        %4790 = vmatprep.subr.mxu0 0.0
        %4791 = vmatpush1.msra.mxu0 0.0
        %4792 = vmatprep.subr.mxu0 0.0
        %4793 = vmatpush1.msra.mxu0 0.0
        %4794 = vmatprep.subr.mxu0 0.0
        %4795 = vmatpush1.msra.mxu0 0.0
        %4796 = vmatprep.subr.mxu0 0.0
        %4797 = vmatpush1.msra.mxu0 0.0
        %4798 = vmatprep.subr.mxu0 0.0
        %4799 = vmatpush1.msra.mxu0 0.0
        %4800 = vmatprep.subr.mxu0 0.0
        %4801 = vmatpush1.msra.mxu0 0.0
        %4802 = vmatprep.subr.mxu0 0.0
        %4803 = vmatpush1.msra.mxu0 0.0
        %4804 = vmatprep.subr.mxu0 0.0
        %4805 = vmatpush1.msra.mxu0 0.0
        %4806 = vmatprep.subr.mxu0 0.0
        %4807 = vmatpush1.msra.mxu0 0.0
        %4808 = vmatprep.mubr.f32.mxu0 0.0
        %v4809 = vand.u32 %v3896, 4294901760
        %4810 = vmatmul.mubr.f32.gmra.mrb[0].mxu0 %v4809
        %v4811 = vpop.f32.mrb[0].mxu0
        %v4812 = vadd.f32 %v4740, %v4811
        %v4813 = vpop.f32.mrb[0].mxu0
        %4814 = vdwg.mxu0
        %v4815 = vadd.f32 %v3876, %v4365
        %v4816 = vadd.f32 %v3877, %v4367
        %v4817 = vadd.f32 %v3878, %v4812
        %v4818 = vld [vmem:[%s141] sm:$0xff]
        %v4819 = vld [vmem:[%s141 + $0x8] sm:$0xf]
        %s4820 = scalar_lea.vmem %s1, 40
        %v4821 = vld [vmem:[%s4820] sm:$0xff]
        %v4824 = vcombine.high %v4818, %v4818
        %4825 = vrot.lane.b32.xlu0 %v4818, 108
        %v4826 = vpop.permute.xlu0 %4825
        %4827 = vrot.lane.b32.xlu0 %v4824, 108
        %v4828 = vpop.permute.xlu0 %4827
        %4829 = vrot.lane.b32.xlu0 %v4819, 108
        %v4830 = vpop.permute.xlu0 %4829
        %vm4831 = vcmask 883712
        %v4832 = vsel %vm4831, %v4826, %v4828
        %v4833 = vsel %vm4831, %v4828, %v4830
        %v4835 = vsel %vm159, %v4821, 0
        %v4837 = vsel %vm163, %v4832, 0
        %v4839 = vsel %vm163, %v4833, 0
        %v4841 = vsel %vm163, %v4830, 0
        %v4843 = vand.u32 %v4839, 4294901760
        %4844 = vmatprep.subr.mxu0 %v4843
        %v4845 = vand.u32 %v4837, 4294901760
        %4846 = vmatpush1.msra.mxu0 %v4845
        %4847 = vmatprep.subr.mxu0 0.0
        %4848 = vmatpush1.msra.mxu0 0.0
        %4849 = vmatprep.subr.mxu0 0.0
        %4850 = vmatpush1.msra.mxu0 0.0
        %4851 = vmatprep.subr.mxu0 0.0
        %4852 = vmatpush1.msra.mxu0 0.0
        %4853 = vmatprep.subr.mxu0 0.0
        %4854 = vmatpush1.msra.mxu0 0.0
        %4855 = vmatprep.subr.mxu0 0.0
        %4856 = vmatpush1.msra.mxu0 0.0
        %4857 = vmatprep.subr.mxu0 0.0
        %4858 = vmatpush1.msra.mxu0 0.0
        %4859 = vmatprep.subr.mxu0 0.0
        %4860 = vmatpush1.msra.mxu0 0.0
        %4861 = vmatprep.subr.mxu0 0.0
        %4862 = vmatpush1.msra.mxu0 0.0
        %4863 = vmatprep.subr.mxu0 0.0
        %4864 = vmatpush1.msra.mxu0 0.0
        %4865 = vmatprep.subr.mxu0 0.0
        %4866 = vmatpush1.msra.mxu0 0.0
        %4867 = vmatprep.subr.mxu0 0.0
        %4868 = vmatpush1.msra.mxu0 0.0
        %4869 = vmatprep.subr.mxu0 0.0
        %4870 = vmatpush1.msra.mxu0 0.0
        %4871 = vmatprep.subr.mxu0 0.0
        %4872 = vmatpush1.msra.mxu0 0.0
        %4873 = vmatprep.subr.mxu0 0.0
        %4874 = vmatpush1.msra.mxu0 0.0
        %4875 = vmatprep.subr.mxu0 0.0
        %4876 = vmatpush1.msra.mxu0 0.0
        %4877 = vmatprep.subr.mxu0 0.0
        %4878 = vmatpush1.msra.mxu0 0.0
        %4879 = vmatprep.subr.mxu0 0.0
        %4880 = vmatpush1.msra.mxu0 0.0
        %4881 = vmatprep.subr.mxu0 0.0
        %4882 = vmatpush1.msra.mxu0 0.0
        %4883 = vmatprep.subr.mxu0 0.0
        %4884 = vmatpush1.msra.mxu0 0.0
        %4885 = vmatprep.subr.mxu0 0.0
        %4886 = vmatpush1.msra.mxu0 0.0
        %4887 = vmatprep.subr.mxu0 0.0
        %4888 = vmatpush1.msra.mxu0 0.0
        %4889 = vmatprep.subr.mxu0 0.0
        %4890 = vmatpush1.msra.mxu0 0.0
        %4891 = vmatprep.subr.mxu0 0.0
        %4892 = vmatpush1.msra.mxu0 0.0
        %4893 = vmatprep.subr.mxu0 0.0
        %4894 = vmatpush1.msra.mxu0 0.0
        %4895 = vmatprep.subr.mxu0 0.0
        %4896 = vmatpush1.msra.mxu0 0.0
        %4897 = vmatprep.subr.mxu0 0.0
        %4898 = vmatpush1.msra.mxu0 0.0
        %4899 = vmatprep.subr.mxu0 0.0
        %4900 = vmatpush1.msra.mxu0 0.0
        %4901 = vmatprep.subr.mxu0 0.0
        %4902 = vmatpush1.msra.mxu0 0.0
        %4903 = vmatprep.subr.mxu0 0.0
        %4904 = vmatpush1.msra.mxu0 0.0
        %4905 = vmatprep.subr.mxu0 0.0
        %4906 = vmatpush1.msra.mxu0 0.0
        %4907 = vmatprep.subr.mxu0 0.0
        %4908 = vmatpush1.msra.mxu0 0.0
        %4909 = vmatprep.mubr.f32.mxu0 0.0
        %v4910 = vand.u32 %v4835, 4294901760
        %v4911 = vsub.f32 %v4835, %v4910
        %v4912 = vand.u32 %v4911, 4294901760
        %v4913 = vsub.f32 %v4911, %v4912
        %v4914 = vand.u32 %v4913, 4294901760
        %4915 = vmatmul.mubr.f32.gmra.mrb[0].mxu0 %v4914
        %v4916 = vpop.f32.mrb[0].mxu0
        %v4917 = vadd.f32 0.0, %v4916
        %v4918 = vpop.f32.mrb[0].mxu0
        %v4919 = vadd.f32 0.0, %v4918
        %4920 = vdwg.mxu0
        %v4921 = vand.u32 %v4839, 4294901760
        %v4922 = vsub.f32 %v4839, %v4921
        %v4923 = vand.u32 %v4922, 4294901760
        %v4924 = vsub.f32 %v4922, %v4923
        %v4925 = vand.u32 %v4924, 4294901760
        %4926 = vmatprep.subr.mxu0 %v4925
        %v4927 = vand.u32 %v4837, 4294901760
        %v4928 = vsub.f32 %v4837, %v4927
        %v4929 = vand.u32 %v4928, 4294901760
        %v4930 = vsub.f32 %v4928, %v4929
        %v4931 = vand.u32 %v4930, 4294901760
        %4932 = vmatpush1.msra.mxu0 %v4931
        %4933 = vmatprep.subr.mxu0 0.0
        %4934 = vmatpush1.msra.mxu0 0.0
        %4935 = vmatprep.subr.mxu0 0.0
        %4936 = vmatpush1.msra.mxu0 0.0
        %4937 = vmatprep.subr.mxu0 0.0
        %4938 = vmatpush1.msra.mxu0 0.0
        %4939 = vmatprep.subr.mxu0 0.0
        %4940 = vmatpush1.msra.mxu0 0.0
        %4941 = vmatprep.subr.mxu0 0.0
        %4942 = vmatpush1.msra.mxu0 0.0
        %4943 = vmatprep.subr.mxu0 0.0
        %4944 = vmatpush1.msra.mxu0 0.0
        %4945 = vmatprep.subr.mxu0 0.0
        %4946 = vmatpush1.msra.mxu0 0.0
        %4947 = vmatprep.subr.mxu0 0.0
        %4948 = vmatpush1.msra.mxu0 0.0
        %4949 = vmatprep.subr.mxu0 0.0
        %4950 = vmatpush1.msra.mxu0 0.0
        %4951 = vmatprep.subr.mxu0 0.0
        %4952 = vmatpush1.msra.mxu0 0.0
        %4953 = vmatprep.subr.mxu0 0.0
        %4954 = vmatpush1.msra.mxu0 0.0
        %4955 = vmatprep.subr.mxu0 0.0
        %4956 = vmatpush1.msra.mxu0 0.0
        %4957 = vmatprep.subr.mxu0 0.0
        %4958 = vmatpush1.msra.mxu0 0.0
        %4959 = vmatprep.subr.mxu0 0.0
        %4960 = vmatpush1.msra.mxu0 0.0
        %4961 = vmatprep.subr.mxu0 0.0
        %4962 = vmatpush1.msra.mxu0 0.0
        %4963 = vmatprep.subr.mxu0 0.0
        %4964 = vmatpush1.msra.mxu0 0.0
        %4965 = vmatprep.subr.mxu0 0.0
        %4966 = vmatpush1.msra.mxu0 0.0
        %4967 = vmatprep.subr.mxu0 0.0
        %4968 = vmatpush1.msra.mxu0 0.0
        %4969 = vmatprep.subr.mxu0 0.0
        %4970 = vmatpush1.msra.mxu0 0.0
        %4971 = vmatprep.subr.mxu0 0.0
        %4972 = vmatpush1.msra.mxu0 0.0
        %4973 = vmatprep.subr.mxu0 0.0
        %4974 = vmatpush1.msra.mxu0 0.0
        %4975 = vmatprep.subr.mxu0 0.0
        %4976 = vmatpush1.msra.mxu0 0.0
        %4977 = vmatprep.subr.mxu0 0.0
        %4978 = vmatpush1.msra.mxu0 0.0
        %4979 = vmatprep.subr.mxu0 0.0
        %4980 = vmatpush1.msra.mxu0 0.0
        %4981 = vmatprep.subr.mxu0 0.0
        %4982 = vmatpush1.msra.mxu0 0.0
        %4983 = vmatprep.subr.mxu0 0.0
        %4984 = vmatpush1.msra.mxu0 0.0
        %4985 = vmatprep.subr.mxu0 0.0
        %4986 = vmatpush1.msra.mxu0 0.0
        %4987 = vmatprep.subr.mxu0 0.0
        %4988 = vmatpush1.msra.mxu0 0.0
        %4989 = vmatprep.subr.mxu0 0.0
        %4990 = vmatpush1.msra.mxu0 0.0
        %4991 = vmatprep.subr.mxu0 0.0
        %4992 = vmatpush1.msra.mxu0 0.0
        %4993 = vmatprep.subr.mxu0 0.0
        %4994 = vmatpush1.msra.mxu0 0.0
        %4995 = vmatprep.mubr.f32.mxu0 0.0
        %v4996 = vand.u32 %v4835, 4294901760
        %4997 = vmatmul.mubr.f32.gmra.mrb[0].mxu0 %v4996
        %v4998 = vpop.f32.mrb[0].mxu0
        %v4999 = vadd.f32 %v4917, %v4998
        %v5000 = vpop.f32.mrb[0].mxu0
        %v5001 = vadd.f32 %v4919, %v5000
        %5002 = vdwg.mxu0
        %v5003 = vand.u32 %v4839, 4294901760
        %v5004 = vsub.f32 %v4839, %v5003
        %5005 = vmatprep.subr.mxu0 %v5004
        %v5006 = vand.u32 %v4837, 4294901760
        %v5007 = vsub.f32 %v4837, %v5006
        %5008 = vmatpush1.msra.mxu0 %v5007
        %5009 = vmatprep.subr.mxu0 0.0
        %5010 = vmatpush1.msra.mxu0 0.0
        %5011 = vmatprep.subr.mxu0 0.0
        %5012 = vmatpush1.msra.mxu0 0.0
        %5013 = vmatprep.subr.mxu0 0.0
        %5014 = vmatpush1.msra.mxu0 0.0
        %5015 = vmatprep.subr.mxu0 0.0
        %5016 = vmatpush1.msra.mxu0 0.0
        %5017 = vmatprep.subr.mxu0 0.0
        %5018 = vmatpush1.msra.mxu0 0.0
        %5019 = vmatprep.subr.mxu0 0.0
        %5020 = vmatpush1.msra.mxu0 0.0
        %5021 = vmatprep.subr.mxu0 0.0
        %5022 = vmatpush1.msra.mxu0 0.0
        %5023 = vmatprep.subr.mxu0 0.0
        %5024 = vmatpush1.msra.mxu0 0.0
        %5025 = vmatprep.subr.mxu0 0.0
        %5026 = vmatpush1.msra.mxu0 0.0
        %5027 = vmatprep.subr.mxu0 0.0
        %5028 = vmatpush1.msra.mxu0 0.0
        %5029 = vmatprep.subr.mxu0 0.0
        %5030 = vmatpush1.msra.mxu0 0.0
        %5031 = vmatprep.subr.mxu0 0.0
        %5032 = vmatpush1.msra.mxu0 0.0
        %5033 = vmatprep.subr.mxu0 0.0
        %5034 = vmatpush1.msra.mxu0 0.0
        %5035 = vmatprep.subr.mxu0 0.0
        %5036 = vmatpush1.msra.mxu0 0.0
        %5037 = vmatprep.subr.mxu0 0.0
        %5038 = vmatpush1.msra.mxu0 0.0
        %5039 = vmatprep.subr.mxu0 0.0
        %5040 = vmatpush1.msra.mxu0 0.0
        %5041 = vmatprep.subr.mxu0 0.0
        %5042 = vmatpush1.msra.mxu0 0.0
        %5043 = vmatprep.subr.mxu0 0.0
        %5044 = vmatpush1.msra.mxu0 0.0
        %5045 = vmatprep.subr.mxu0 0.0
        %5046 = vmatpush1.msra.mxu0 0.0
        %5047 = vmatprep.subr.mxu0 0.0
        %5048 = vmatpush1.msra.mxu0 0.0
        %5049 = vmatprep.subr.mxu0 0.0
        %5050 = vmatpush1.msra.mxu0 0.0
        %5051 = vmatprep.subr.mxu0 0.0
        %5052 = vmatpush1.msra.mxu0 0.0
        %5053 = vmatprep.subr.mxu0 0.0
        %5054 = vmatpush1.msra.mxu0 0.0
        %5055 = vmatprep.subr.mxu0 0.0
        %5056 = vmatpush1.msra.mxu0 0.0
        %5057 = vmatprep.subr.mxu0 0.0
        %5058 = vmatpush1.msra.mxu0 0.0
        %5059 = vmatprep.subr.mxu0 0.0
        %5060 = vmatpush1.msra.mxu0 0.0
        %5061 = vmatprep.subr.mxu0 0.0
        %5062 = vmatpush1.msra.mxu0 0.0
        %5063 = vmatprep.subr.mxu0 0.0
        %5064 = vmatpush1.msra.mxu0 0.0
        %5065 = vmatprep.subr.mxu0 0.0
        %5066 = vmatpush1.msra.mxu0 0.0
        %5067 = vmatprep.subr.mxu0 0.0
        %5068 = vmatpush1.msra.mxu0 0.0
        %5069 = vmatprep.subr.mxu0 0.0
        %5070 = vmatpush1.msra.mxu0 0.0
        %5071 = vmatprep.mubr.f32.mxu0 0.0
        %v5072 = vand.u32 %v4835, 4294901760
        %v5073 = vsub.f32 %v4835, %v5072
        %5074 = vmatmul.mubr.f32.gmra.mrb[0].mxu0 %v5073
        %v5075 = vpop.f32.mrb[0].mxu0
        %v5076 = vadd.f32 %v4999, %v5075
        %v5077 = vpop.f32.mrb[0].mxu0
        %v5078 = vadd.f32 %v5001, %v5077
        %5079 = vdwg.mxu0
        %v5080 = vand.u32 %v4839, 4294901760
        %5081 = vmatprep.subr.mxu0 %v5080
        %v5082 = vand.u32 %v4837, 4294901760
        %5083 = vmatpush1.msra.mxu0 %v5082
        %5084 = vmatprep.subr.mxu0 0.0
        %5085 = vmatpush1.msra.mxu0 0.0
        %5086 = vmatprep.subr.mxu0 0.0
        %5087 = vmatpush1.msra.mxu0 0.0
        %5088 = vmatprep.subr.mxu0 0.0
        %5089 = vmatpush1.msra.mxu0 0.0
        %5090 = vmatprep.subr.mxu0 0.0
        %5091 = vmatpush1.msra.mxu0 0.0
        %5092 = vmatprep.subr.mxu0 0.0
        %5093 = vmatpush1.msra.mxu0 0.0
        %5094 = vmatprep.subr.mxu0 0.0
        %5095 = vmatpush1.msra.mxu0 0.0
        %5096 = vmatprep.subr.mxu0 0.0
        %5097 = vmatpush1.msra.mxu0 0.0
        %5098 = vmatprep.subr.mxu0 0.0
        %5099 = vmatpush1.msra.mxu0 0.0
        %5100 = vmatprep.subr.mxu0 0.0
        %5101 = vmatpush1.msra.mxu0 0.0
        %5102 = vmatprep.subr.mxu0 0.0
        %5103 = vmatpush1.msra.mxu0 0.0
        %5104 = vmatprep.subr.mxu0 0.0
        %5105 = vmatpush1.msra.mxu0 0.0
        %5106 = vmatprep.subr.mxu0 0.0
        %5107 = vmatpush1.msra.mxu0 0.0
        %5108 = vmatprep.subr.mxu0 0.0
        %5109 = vmatpush1.msra.mxu0 0.0
        %5110 = vmatprep.subr.mxu0 0.0
        %5111 = vmatpush1.msra.mxu0 0.0
        %5112 = vmatprep.subr.mxu0 0.0
        %5113 = vmatpush1.msra.mxu0 0.0
        %5114 = vmatprep.subr.mxu0 0.0
        %5115 = vmatpush1.msra.mxu0 0.0
        %5116 = vmatprep.subr.mxu0 0.0
        %5117 = vmatpush1.msra.mxu0 0.0
        %5118 = vmatprep.subr.mxu0 0.0
        %5119 = vmatpush1.msra.mxu0 0.0
        %5120 = vmatprep.subr.mxu0 0.0
        %5121 = vmatpush1.msra.mxu0 0.0
        %5122 = vmatprep.subr.mxu0 0.0
        %5123 = vmatpush1.msra.mxu0 0.0
        %5124 = vmatprep.subr.mxu0 0.0
        %5125 = vmatpush1.msra.mxu0 0.0
        %5126 = vmatprep.subr.mxu0 0.0
        %5127 = vmatpush1.msra.mxu0 0.0
        %5128 = vmatprep.subr.mxu0 0.0
        %5129 = vmatpush1.msra.mxu0 0.0
        %5130 = vmatprep.subr.mxu0 0.0
        %5131 = vmatpush1.msra.mxu0 0.0
        %5132 = vmatprep.subr.mxu0 0.0
        %5133 = vmatpush1.msra.mxu0 0.0
        %5134 = vmatprep.subr.mxu0 0.0
        %5135 = vmatpush1.msra.mxu0 0.0
        %5136 = vmatprep.subr.mxu0 0.0
        %5137 = vmatpush1.msra.mxu0 0.0
        %5138 = vmatprep.subr.mxu0 0.0
        %5139 = vmatpush1.msra.mxu0 0.0
        %5140 = vmatprep.subr.mxu0 0.0
        %5141 = vmatpush1.msra.mxu0 0.0
        %5142 = vmatprep.subr.mxu0 0.0
        %5143 = vmatpush1.msra.mxu0 0.0
        %5144 = vmatprep.subr.mxu0 0.0
        %5145 = vmatpush1.msra.mxu0 0.0
        %5146 = vmatprep.mubr.f32.mxu0 0.0
        %v5147 = vand.u32 %v4835, 4294901760
        %v5148 = vsub.f32 %v4835, %v5147
        %v5149 = vand.u32 %v5148, 4294901760
        %5150 = vmatmul.mubr.f32.gmra.mrb[0].mxu0 %v5149
        %v5151 = vpop.f32.mrb[0].mxu0
        %v5152 = vadd.f32 %v5076, %v5151
        %v5153 = vpop.f32.mrb[0].mxu0
        %v5154 = vadd.f32 %v5078, %v5153
        %5155 = vdwg.mxu0
        %v5156 = vand.u32 %v4839, 4294901760
        %v5157 = vsub.f32 %v4839, %v5156
        %v5158 = vand.u32 %v5157, 4294901760
        %5159 = vmatprep.subr.mxu0 %v5158
        %v5160 = vand.u32 %v4837, 4294901760
        %v5161 = vsub.f32 %v4837, %v5160
        %v5162 = vand.u32 %v5161, 4294901760
        %5163 = vmatpush1.msra.mxu0 %v5162
        %5164 = vmatprep.subr.mxu0 0.0
        %5165 = vmatpush1.msra.mxu0 0.0
        %5166 = vmatprep.subr.mxu0 0.0
        %5167 = vmatpush1.msra.mxu0 0.0
        %5168 = vmatprep.subr.mxu0 0.0
        %5169 = vmatpush1.msra.mxu0 0.0
        %5170 = vmatprep.subr.mxu0 0.0
        %5171 = vmatpush1.msra.mxu0 0.0
        %5172 = vmatprep.subr.mxu0 0.0
        %5173 = vmatpush1.msra.mxu0 0.0
        %5174 = vmatprep.subr.mxu0 0.0
        %5175 = vmatpush1.msra.mxu0 0.0
        %5176 = vmatprep.subr.mxu0 0.0
        %5177 = vmatpush1.msra.mxu0 0.0
        %5178 = vmatprep.subr.mxu0 0.0
        %5179 = vmatpush1.msra.mxu0 0.0
        %5180 = vmatprep.subr.mxu0 0.0
        %5181 = vmatpush1.msra.mxu0 0.0
        %5182 = vmatprep.subr.mxu0 0.0
        %5183 = vmatpush1.msra.mxu0 0.0
        %5184 = vmatprep.subr.mxu0 0.0
        %5185 = vmatpush1.msra.mxu0 0.0
        %5186 = vmatprep.subr.mxu0 0.0
        %5187 = vmatpush1.msra.mxu0 0.0
        %5188 = vmatprep.subr.mxu0 0.0
        %5189 = vmatpush1.msra.mxu0 0.0
        %5190 = vmatprep.subr.mxu0 0.0
        %5191 = vmatpush1.msra.mxu0 0.0
        %5192 = vmatprep.subr.mxu0 0.0
        %5193 = vmatpush1.msra.mxu0 0.0
        %5194 = vmatprep.subr.mxu0 0.0
        %5195 = vmatpush1.msra.mxu0 0.0
        %5196 = vmatprep.subr.mxu0 0.0
        %5197 = vmatpush1.msra.mxu0 0.0
        %5198 = vmatprep.subr.mxu0 0.0
        %5199 = vmatpush1.msra.mxu0 0.0
        %5200 = vmatprep.subr.mxu0 0.0
        %5201 = vmatpush1.msra.mxu0 0.0
        %5202 = vmatprep.subr.mxu0 0.0
        %5203 = vmatpush1.msra.mxu0 0.0
        %5204 = vmatprep.subr.mxu0 0.0
        %5205 = vmatpush1.msra.mxu0 0.0
        %5206 = vmatprep.subr.mxu0 0.0
        %5207 = vmatpush1.msra.mxu0 0.0
        %5208 = vmatprep.subr.mxu0 0.0
        %5209 = vmatpush1.msra.mxu0 0.0
        %5210 = vmatprep.subr.mxu0 0.0
        %5211 = vmatpush1.msra.mxu0 0.0
        %5212 = vmatprep.subr.mxu0 0.0
        %5213 = vmatpush1.msra.mxu0 0.0
        %5214 = vmatprep.subr.mxu0 0.0
        %5215 = vmatpush1.msra.mxu0 0.0
        %5216 = vmatprep.subr.mxu0 0.0
        %5217 = vmatpush1.msra.mxu0 0.0
        %5218 = vmatprep.subr.mxu0 0.0
        %5219 = vmatpush1.msra.mxu0 0.0
        %5220 = vmatprep.subr.mxu0 0.0
        %5221 = vmatpush1.msra.mxu0 0.0
        %5222 = vmatprep.subr.mxu0 0.0
        %5223 = vmatpush1.msra.mxu0 0.0
        %5224 = vmatprep.subr.mxu0 0.0
        %5225 = vmatpush1.msra.mxu0 0.0
        %5226 = vmatprep.mubr.f32.mxu0 0.0
        %v5227 = vand.u32 %v4835, 4294901760
        %5228 = vmatmul.mubr.f32.gmra.mrb[0].mxu0 %v5227
        %v5229 = vpop.f32.mrb[0].mxu0
        %v5230 = vadd.f32 %v5152, %v5229
        %v5231 = vpop.f32.mrb[0].mxu0
        %v5232 = vadd.f32 %v5154, %v5231
        %5233 = vdwg.mxu0
        %v5234 = vand.u32 %v4839, 4294901760
        %5235 = vmatprep.subr.mxu0 %v5234
        %v5236 = vand.u32 %v4837, 4294901760
        %5237 = vmatpush1.msra.mxu0 %v5236
        %5238 = vmatprep.subr.mxu0 0.0
        %5239 = vmatpush1.msra.mxu0 0.0
        %5240 = vmatprep.subr.mxu0 0.0
        %5241 = vmatpush1.msra.mxu0 0.0
        %5242 = vmatprep.subr.mxu0 0.0
        %5243 = vmatpush1.msra.mxu0 0.0
        %5244 = vmatprep.subr.mxu0 0.0
        %5245 = vmatpush1.msra.mxu0 0.0
        %5246 = vmatprep.subr.mxu0 0.0
        %5247 = vmatpush1.msra.mxu0 0.0
        %5248 = vmatprep.subr.mxu0 0.0
        %5249 = vmatpush1.msra.mxu0 0.0
        %5250 = vmatprep.subr.mxu0 0.0
        %5251 = vmatpush1.msra.mxu0 0.0
        %5252 = vmatprep.subr.mxu0 0.0
        %5253 = vmatpush1.msra.mxu0 0.0
        %5254 = vmatprep.subr.mxu0 0.0
        %5255 = vmatpush1.msra.mxu0 0.0
        %5256 = vmatprep.subr.mxu0 0.0
        %5257 = vmatpush1.msra.mxu0 0.0
        %5258 = vmatprep.subr.mxu0 0.0
        %5259 = vmatpush1.msra.mxu0 0.0
        %5260 = vmatprep.subr.mxu0 0.0
        %5261 = vmatpush1.msra.mxu0 0.0
        %5262 = vmatprep.subr.mxu0 0.0
        %5263 = vmatpush1.msra.mxu0 0.0
        %5264 = vmatprep.subr.mxu0 0.0
        %5265 = vmatpush1.msra.mxu0 0.0
        %5266 = vmatprep.subr.mxu0 0.0
        %5267 = vmatpush1.msra.mxu0 0.0
        %5268 = vmatprep.subr.mxu0 0.0
        %5269 = vmatpush1.msra.mxu0 0.0
        %5270 = vmatprep.subr.mxu0 0.0
        %5271 = vmatpush1.msra.mxu0 0.0
        %5272 = vmatprep.subr.mxu0 0.0
        %5273 = vmatpush1.msra.mxu0 0.0
        %5274 = vmatprep.subr.mxu0 0.0
        %5275 = vmatpush1.msra.mxu0 0.0
        %5276 = vmatprep.subr.mxu0 0.0
        %5277 = vmatpush1.msra.mxu0 0.0
        %5278 = vmatprep.subr.mxu0 0.0
        %5279 = vmatpush1.msra.mxu0 0.0
        %5280 = vmatprep.subr.mxu0 0.0
        %5281 = vmatpush1.msra.mxu0 0.0
        %5282 = vmatprep.subr.mxu0 0.0
        %5283 = vmatpush1.msra.mxu0 0.0
        %5284 = vmatprep.subr.mxu0 0.0
        %5285 = vmatpush1.msra.mxu0 0.0
        %5286 = vmatprep.subr.mxu0 0.0
        %5287 = vmatpush1.msra.mxu0 0.0
        %5288 = vmatprep.subr.mxu0 0.0
        %5289 = vmatpush1.msra.mxu0 0.0
        %5290 = vmatprep.subr.mxu0 0.0
        %5291 = vmatpush1.msra.mxu0 0.0
        %5292 = vmatprep.subr.mxu0 0.0
        %5293 = vmatpush1.msra.mxu0 0.0
        %5294 = vmatprep.subr.mxu0 0.0
        %5295 = vmatpush1.msra.mxu0 0.0
        %5296 = vmatprep.subr.mxu0 0.0
        %5297 = vmatpush1.msra.mxu0 0.0
        %5298 = vmatprep.subr.mxu0 0.0
        %5299 = vmatpush1.msra.mxu0 0.0
        %5300 = vmatprep.mubr.f32.mxu0 0.0
        %v5301 = vand.u32 %v4835, 4294901760
        %5302 = vmatmul.mubr.f32.gmra.mrb[0].mxu0 %v5301
        %v5303 = vpop.f32.mrb[0].mxu0
        %v5304 = vadd.f32 %v5230, %v5303
        %v5305 = vpop.f32.mrb[0].mxu0
        %v5306 = vadd.f32 %v5232, %v5305
        %5307 = vdwg.mxu0
        %5308 = vmatprep.subr.mxu0 0.0
        %v5309 = vand.u32 %v4841, 4294901760
        %5310 = vmatpush1.msra.mxu0 %v5309
        %5311 = vmatprep.subr.mxu0 0.0
        %5312 = vmatpush1.msra.mxu0 0.0
        %5313 = vmatprep.subr.mxu0 0.0
        %5314 = vmatpush1.msra.mxu0 0.0
        %5315 = vmatprep.subr.mxu0 0.0
        %5316 = vmatpush1.msra.mxu0 0.0
        %5317 = vmatprep.subr.mxu0 0.0
        %5318 = vmatpush1.msra.mxu0 0.0
        %5319 = vmatprep.subr.mxu0 0.0
        %5320 = vmatpush1.msra.mxu0 0.0
        %5321 = vmatprep.subr.mxu0 0.0
        %5322 = vmatpush1.msra.mxu0 0.0
        %5323 = vmatprep.subr.mxu0 0.0
        %5324 = vmatpush1.msra.mxu0 0.0
        %5325 = vmatprep.subr.mxu0 0.0
        %5326 = vmatpush1.msra.mxu0 0.0
        %5327 = vmatprep.subr.mxu0 0.0
        %5328 = vmatpush1.msra.mxu0 0.0
        %5329 = vmatprep.subr.mxu0 0.0
        %5330 = vmatpush1.msra.mxu0 0.0
        %5331 = vmatprep.subr.mxu0 0.0
        %5332 = vmatpush1.msra.mxu0 0.0
        %5333 = vmatprep.subr.mxu0 0.0
        %5334 = vmatpush1.msra.mxu0 0.0
        %5335 = vmatprep.subr.mxu0 0.0
        %5336 = vmatpush1.msra.mxu0 0.0
        %5337 = vmatprep.subr.mxu0 0.0
        %5338 = vmatpush1.msra.mxu0 0.0
        %5339 = vmatprep.subr.mxu0 0.0
        %5340 = vmatpush1.msra.mxu0 0.0
        %5341 = vmatprep.subr.mxu0 0.0
        %5342 = vmatpush1.msra.mxu0 0.0
        %5343 = vmatprep.subr.mxu0 0.0
        %5344 = vmatpush1.msra.mxu0 0.0
        %5345 = vmatprep.subr.mxu0 0.0
        %5346 = vmatpush1.msra.mxu0 0.0
        %5347 = vmatprep.subr.mxu0 0.0
        %5348 = vmatpush1.msra.mxu0 0.0
        %5349 = vmatprep.subr.mxu0 0.0
        %5350 = vmatpush1.msra.mxu0 0.0
        %5351 = vmatprep.subr.mxu0 0.0
        %5352 = vmatpush1.msra.mxu0 0.0
        %5353 = vmatprep.subr.mxu0 0.0
        %5354 = vmatpush1.msra.mxu0 0.0
        %5355 = vmatprep.subr.mxu0 0.0
        %5356 = vmatpush1.msra.mxu0 0.0
        %5357 = vmatprep.subr.mxu0 0.0
        %5358 = vmatpush1.msra.mxu0 0.0
        %5359 = vmatprep.subr.mxu0 0.0
        %5360 = vmatpush1.msra.mxu0 0.0
        %5361 = vmatprep.subr.mxu0 0.0
        %5362 = vmatpush1.msra.mxu0 0.0
        %5363 = vmatprep.subr.mxu0 0.0
        %5364 = vmatpush1.msra.mxu0 0.0
        %5365 = vmatprep.subr.mxu0 0.0
        %5366 = vmatpush1.msra.mxu0 0.0
        %5367 = vmatprep.subr.mxu0 0.0
        %5368 = vmatpush1.msra.mxu0 0.0
        %5369 = vmatprep.subr.mxu0 0.0
        %5370 = vmatpush1.msra.mxu0 0.0
        %5371 = vmatprep.subr.mxu0 0.0
        %5372 = vmatpush1.msra.mxu0 0.0
        %5373 = vmatprep.mubr.f32.mxu0 0.0
        %v5374 = vand.u32 %v4835, 4294901760
        %v5375 = vsub.f32 %v4835, %v5374
        %v5376 = vand.u32 %v5375, 4294901760
        %v5377 = vsub.f32 %v5375, %v5376
        %v5378 = vand.u32 %v5377, 4294901760
        %5379 = vmatmul.mubr.f32.gmra.mrb[0].mxu0 %v5378
        %v5380 = vpop.f32.mrb[0].mxu0
        %v5381 = vadd.f32 0.0, %v5380
        %v5382 = vpop.f32.mrb[0].mxu0
        %5383 = vdwg.mxu0
        %5384 = vmatprep.subr.mxu0 0.0
        %v5385 = vand.u32 %v4841, 4294901760
        %v5386 = vsub.f32 %v4841, %v5385
        %v5387 = vand.u32 %v5386, 4294901760
        %v5388 = vsub.f32 %v5386, %v5387
        %v5389 = vand.u32 %v5388, 4294901760
        %5390 = vmatpush1.msra.mxu0 %v5389
        %5391 = vmatprep.subr.mxu0 0.0
        %5392 = vmatpush1.msra.mxu0 0.0
        %5393 = vmatprep.subr.mxu0 0.0
        %5394 = vmatpush1.msra.mxu0 0.0
        %5395 = vmatprep.subr.mxu0 0.0
        %5396 = vmatpush1.msra.mxu0 0.0
        %5397 = vmatprep.subr.mxu0 0.0
        %5398 = vmatpush1.msra.mxu0 0.0
        %5399 = vmatprep.subr.mxu0 0.0
        %5400 = vmatpush1.msra.mxu0 0.0
        %5401 = vmatprep.subr.mxu0 0.0
        %5402 = vmatpush1.msra.mxu0 0.0
        %5403 = vmatprep.subr.mxu0 0.0
        %5404 = vmatpush1.msra.mxu0 0.0
        %5405 = vmatprep.subr.mxu0 0.0
        %5406 = vmatpush1.msra.mxu0 0.0
        %5407 = vmatprep.subr.mxu0 0.0
        %5408 = vmatpush1.msra.mxu0 0.0
        %5409 = vmatprep.subr.mxu0 0.0
        %5410 = vmatpush1.msra.mxu0 0.0
        %5411 = vmatprep.subr.mxu0 0.0
        %5412 = vmatpush1.msra.mxu0 0.0
        %5413 = vmatprep.subr.mxu0 0.0
        %5414 = vmatpush1.msra.mxu0 0.0
        %5415 = vmatprep.subr.mxu0 0.0
        %5416 = vmatpush1.msra.mxu0 0.0
        %5417 = vmatprep.subr.mxu0 0.0
        %5418 = vmatpush1.msra.mxu0 0.0
        %5419 = vmatprep.subr.mxu0 0.0
        %5420 = vmatpush1.msra.mxu0 0.0
        %5421 = vmatprep.subr.mxu0 0.0
        %5422 = vmatpush1.msra.mxu0 0.0
        %5423 = vmatprep.subr.mxu0 0.0
        %5424 = vmatpush1.msra.mxu0 0.0
        %5425 = vmatprep.subr.mxu0 0.0
        %5426 = vmatpush1.msra.mxu0 0.0
        %5427 = vmatprep.subr.mxu0 0.0
        %5428 = vmatpush1.msra.mxu0 0.0
        %5429 = vmatprep.subr.mxu0 0.0
        %5430 = vmatpush1.msra.mxu0 0.0
        %5431 = vmatprep.subr.mxu0 0.0
        %5432 = vmatpush1.msra.mxu0 0.0
        %5433 = vmatprep.subr.mxu0 0.0
        %5434 = vmatpush1.msra.mxu0 0.0
        %5435 = vmatprep.subr.mxu0 0.0
        %5436 = vmatpush1.msra.mxu0 0.0
        %5437 = vmatprep.subr.mxu0 0.0
        %5438 = vmatpush1.msra.mxu0 0.0
        %5439 = vmatprep.subr.mxu0 0.0
        %5440 = vmatpush1.msra.mxu0 0.0
        %5441 = vmatprep.subr.mxu0 0.0
        %5442 = vmatpush1.msra.mxu0 0.0
        %5443 = vmatprep.subr.mxu0 0.0
        %5444 = vmatpush1.msra.mxu0 0.0
        %5445 = vmatprep.subr.mxu0 0.0
        %5446 = vmatpush1.msra.mxu0 0.0
        %5447 = vmatprep.subr.mxu0 0.0
        %5448 = vmatpush1.msra.mxu0 0.0
        %5449 = vmatprep.subr.mxu0 0.0
        %5450 = vmatpush1.msra.mxu0 0.0
        %5451 = vmatprep.subr.mxu0 0.0
        %5452 = vmatpush1.msra.mxu0 0.0
        %5453 = vmatprep.mubr.f32.mxu0 0.0
        %v5454 = vand.u32 %v4835, 4294901760
        %5455 = vmatmul.mubr.f32.gmra.mrb[0].mxu0 %v5454
        %v5456 = vpop.f32.mrb[0].mxu0
        %v5457 = vadd.f32 %v5381, %v5456
        %v5458 = vpop.f32.mrb[0].mxu0
        %5459 = vdwg.mxu0
        %5460 = vmatprep.subr.mxu0 0.0
        %v5461 = vand.u32 %v4841, 4294901760
        %v5462 = vsub.f32 %v4841, %v5461
        %5463 = vmatpush1.msra.mxu0 %v5462
        %5464 = vmatprep.subr.mxu0 0.0
        %5465 = vmatpush1.msra.mxu0 0.0
        %5466 = vmatprep.subr.mxu0 0.0
        %5467 = vmatpush1.msra.mxu0 0.0
        %5468 = vmatprep.subr.mxu0 0.0
        %5469 = vmatpush1.msra.mxu0 0.0
        %5470 = vmatprep.subr.mxu0 0.0
        %5471 = vmatpush1.msra.mxu0 0.0
        %5472 = vmatprep.subr.mxu0 0.0
        %5473 = vmatpush1.msra.mxu0 0.0
        %5474 = vmatprep.subr.mxu0 0.0
        %5475 = vmatpush1.msra.mxu0 0.0
        %5476 = vmatprep.subr.mxu0 0.0
        %5477 = vmatpush1.msra.mxu0 0.0
        %5478 = vmatprep.subr.mxu0 0.0
        %5479 = vmatpush1.msra.mxu0 0.0
        %5480 = vmatprep.subr.mxu0 0.0
        %5481 = vmatpush1.msra.mxu0 0.0
        %5482 = vmatprep.subr.mxu0 0.0
        %5483 = vmatpush1.msra.mxu0 0.0
        %5484 = vmatprep.subr.mxu0 0.0
        %5485 = vmatpush1.msra.mxu0 0.0
        %5486 = vmatprep.subr.mxu0 0.0
        %5487 = vmatpush1.msra.mxu0 0.0
        %5488 = vmatprep.subr.mxu0 0.0
        %5489 = vmatpush1.msra.mxu0 0.0
        %5490 = vmatprep.subr.mxu0 0.0
        %5491 = vmatpush1.msra.mxu0 0.0
        %5492 = vmatprep.subr.mxu0 0.0
        %5493 = vmatpush1.msra.mxu0 0.0
        %5494 = vmatprep.subr.mxu0 0.0
        %5495 = vmatpush1.msra.mxu0 0.0
        %5496 = vmatprep.subr.mxu0 0.0
        %5497 = vmatpush1.msra.mxu0 0.0
        %5498 = vmatprep.subr.mxu0 0.0
        %5499 = vmatpush1.msra.mxu0 0.0
        %5500 = vmatprep.subr.mxu0 0.0
        %5501 = vmatpush1.msra.mxu0 0.0
        %5502 = vmatprep.subr.mxu0 0.0
        %5503 = vmatpush1.msra.mxu0 0.0
        %5504 = vmatprep.subr.mxu0 0.0
        %5505 = vmatpush1.msra.mxu0 0.0
        %5506 = vmatprep.subr.mxu0 0.0
        %5507 = vmatpush1.msra.mxu0 0.0
        %5508 = vmatprep.subr.mxu0 0.0
        %5509 = vmatpush1.msra.mxu0 0.0
        %5510 = vmatprep.subr.mxu0 0.0
        %5511 = vmatpush1.msra.mxu0 0.0
        %5512 = vmatprep.subr.mxu0 0.0
        %5513 = vmatpush1.msra.mxu0 0.0
        %5514 = vmatprep.subr.mxu0 0.0
        %5515 = vmatpush1.msra.mxu0 0.0
        %5516 = vmatprep.subr.mxu0 0.0
        %5517 = vmatpush1.msra.mxu0 0.0
        %5518 = vmatprep.subr.mxu0 0.0
        %5519 = vmatpush1.msra.mxu0 0.0
        %5520 = vmatprep.subr.mxu0 0.0
        %5521 = vmatpush1.msra.mxu0 0.0
        %5522 = vmatprep.subr.mxu0 0.0
        %5523 = vmatpush1.msra.mxu0 0.0
        %5524 = vmatprep.subr.mxu0 0.0
        %5525 = vmatpush1.msra.mxu0 0.0
        %5526 = vmatprep.mubr.f32.mxu0 0.0
        %v5527 = vand.u32 %v4835, 4294901760
        %v5528 = vsub.f32 %v4835, %v5527
        %5529 = vmatmul.mubr.f32.gmra.mrb[0].mxu0 %v5528
        %v5530 = vpop.f32.mrb[0].mxu0
        %v5531 = vadd.f32 %v5457, %v5530
        %v5532 = vpop.f32.mrb[0].mxu0
        %5533 = vdwg.mxu0
        %5534 = vmatprep.subr.mxu0 0.0
        %v5535 = vand.u32 %v4841, 4294901760
        %5536 = vmatpush1.msra.mxu0 %v5535
        %5537 = vmatprep.subr.mxu0 0.0
        %5538 = vmatpush1.msra.mxu0 0.0
        %5539 = vmatprep.subr.mxu0 0.0
        %5540 = vmatpush1.msra.mxu0 0.0
        %5541 = vmatprep.subr.mxu0 0.0
        %5542 = vmatpush1.msra.mxu0 0.0
        %5543 = vmatprep.subr.mxu0 0.0
        %5544 = vmatpush1.msra.mxu0 0.0
        %5545 = vmatprep.subr.mxu0 0.0
        %5546 = vmatpush1.msra.mxu0 0.0
        %5547 = vmatprep.subr.mxu0 0.0
        %5548 = vmatpush1.msra.mxu0 0.0
        %5549 = vmatprep.subr.mxu0 0.0
        %5550 = vmatpush1.msra.mxu0 0.0
        %5551 = vmatprep.subr.mxu0 0.0
        %5552 = vmatpush1.msra.mxu0 0.0
        %5553 = vmatprep.subr.mxu0 0.0
        %5554 = vmatpush1.msra.mxu0 0.0
        %5555 = vmatprep.subr.mxu0 0.0
        %5556 = vmatpush1.msra.mxu0 0.0
        %5557 = vmatprep.subr.mxu0 0.0
        %5558 = vmatpush1.msra.mxu0 0.0
        %5559 = vmatprep.subr.mxu0 0.0
        %5560 = vmatpush1.msra.mxu0 0.0
        %5561 = vmatprep.subr.mxu0 0.0
        %5562 = vmatpush1.msra.mxu0 0.0
        %5563 = vmatprep.subr.mxu0 0.0
        %5564 = vmatpush1.msra.mxu0 0.0
        %5565 = vmatprep.subr.mxu0 0.0
        %5566 = vmatpush1.msra.mxu0 0.0
        %5567 = vmatprep.subr.mxu0 0.0
        %5568 = vmatpush1.msra.mxu0 0.0
        %5569 = vmatprep.subr.mxu0 0.0
        %5570 = vmatpush1.msra.mxu0 0.0
        %5571 = vmatprep.subr.mxu0 0.0
        %5572 = vmatpush1.msra.mxu0 0.0
        %5573 = vmatprep.subr.mxu0 0.0
        %5574 = vmatpush1.msra.mxu0 0.0
        %5575 = vmatprep.subr.mxu0 0.0
        %5576 = vmatpush1.msra.mxu0 0.0
        %5577 = vmatprep.subr.mxu0 0.0
        %5578 = vmatpush1.msra.mxu0 0.0
        %5579 = vmatprep.subr.mxu0 0.0
        %5580 = vmatpush1.msra.mxu0 0.0
        %5581 = vmatprep.subr.mxu0 0.0
        %5582 = vmatpush1.msra.mxu0 0.0
        %5583 = vmatprep.subr.mxu0 0.0
        %5584 = vmatpush1.msra.mxu0 0.0
        %5585 = vmatprep.subr.mxu0 0.0
        %5586 = vmatpush1.msra.mxu0 0.0
        %5587 = vmatprep.subr.mxu0 0.0
        %5588 = vmatpush1.msra.mxu0 0.0
        %5589 = vmatprep.subr.mxu0 0.0
        %5590 = vmatpush1.msra.mxu0 0.0
        %5591 = vmatprep.subr.mxu0 0.0
        %5592 = vmatpush1.msra.mxu0 0.0
        %5593 = vmatprep.subr.mxu0 0.0
        %5594 = vmatpush1.msra.mxu0 0.0
        %5595 = vmatprep.subr.mxu0 0.0
        %5596 = vmatpush1.msra.mxu0 0.0
        %5597 = vmatprep.subr.mxu0 0.0
        %5598 = vmatpush1.msra.mxu0 0.0
        %5599 = vmatprep.mubr.f32.mxu0 0.0
        %v5600 = vand.u32 %v4835, 4294901760
        %v5601 = vsub.f32 %v4835, %v5600
        %v5602 = vand.u32 %v5601, 4294901760
        %5603 = vmatmul.mubr.f32.gmra.mrb[0].mxu0 %v5602
        %v5604 = vpop.f32.mrb[0].mxu0
        %v5605 = vadd.f32 %v5531, %v5604
        %v5606 = vpop.f32.mrb[0].mxu0
        %5607 = vdwg.mxu0
        %5608 = vmatprep.subr.mxu0 0.0
        %v5609 = vand.u32 %v4841, 4294901760
        %v5610 = vsub.f32 %v4841, %v5609
        %v5611 = vand.u32 %v5610, 4294901760
        %5612 = vmatpush1.msra.mxu0 %v5611
        %5613 = vmatprep.subr.mxu0 0.0
        %5614 = vmatpush1.msra.mxu0 0.0
        %5615 = vmatprep.subr.mxu0 0.0
        %5616 = vmatpush1.msra.mxu0 0.0
        %5617 = vmatprep.subr.mxu0 0.0
        %5618 = vmatpush1.msra.mxu0 0.0
        %5619 = vmatprep.subr.mxu0 0.0
        %5620 = vmatpush1.msra.mxu0 0.0
        %5621 = vmatprep.subr.mxu0 0.0
        %5622 = vmatpush1.msra.mxu0 0.0
        %5623 = vmatprep.subr.mxu0 0.0
        %5624 = vmatpush1.msra.mxu0 0.0
        %5625 = vmatprep.subr.mxu0 0.0
        %5626 = vmatpush1.msra.mxu0 0.0
        %5627 = vmatprep.subr.mxu0 0.0
        %5628 = vmatpush1.msra.mxu0 0.0
        %5629 = vmatprep.subr.mxu0 0.0
        %5630 = vmatpush1.msra.mxu0 0.0
        %5631 = vmatprep.subr.mxu0 0.0
        %5632 = vmatpush1.msra.mxu0 0.0
        %5633 = vmatprep.subr.mxu0 0.0
        %5634 = vmatpush1.msra.mxu0 0.0
        %5635 = vmatprep.subr.mxu0 0.0
        %5636 = vmatpush1.msra.mxu0 0.0
        %5637 = vmatprep.subr.mxu0 0.0
        %5638 = vmatpush1.msra.mxu0 0.0
        %5639 = vmatprep.subr.mxu0 0.0
        %5640 = vmatpush1.msra.mxu0 0.0
        %5641 = vmatprep.subr.mxu0 0.0
        %5642 = vmatpush1.msra.mxu0 0.0
        %5643 = vmatprep.subr.mxu0 0.0
        %5644 = vmatpush1.msra.mxu0 0.0
        %5645 = vmatprep.subr.mxu0 0.0
        %5646 = vmatpush1.msra.mxu0 0.0
        %5647 = vmatprep.subr.mxu0 0.0
        %5648 = vmatpush1.msra.mxu0 0.0
        %5649 = vmatprep.subr.mxu0 0.0
        %5650 = vmatpush1.msra.mxu0 0.0
        %5651 = vmatprep.subr.mxu0 0.0
        %5652 = vmatpush1.msra.mxu0 0.0
        %5653 = vmatprep.subr.mxu0 0.0
        %5654 = vmatpush1.msra.mxu0 0.0
        %5655 = vmatprep.subr.mxu0 0.0
        %5656 = vmatpush1.msra.mxu0 0.0
        %5657 = vmatprep.subr.mxu0 0.0
        %5658 = vmatpush1.msra.mxu0 0.0
        %5659 = vmatprep.subr.mxu0 0.0
        %5660 = vmatpush1.msra.mxu0 0.0
        %5661 = vmatprep.subr.mxu0 0.0
        %5662 = vmatpush1.msra.mxu0 0.0
        %5663 = vmatprep.subr.mxu0 0.0
        %5664 = vmatpush1.msra.mxu0 0.0
        %5665 = vmatprep.subr.mxu0 0.0
        %5666 = vmatpush1.msra.mxu0 0.0
        %5667 = vmatprep.subr.mxu0 0.0
        %5668 = vmatpush1.msra.mxu0 0.0
        %5669 = vmatprep.subr.mxu0 0.0
        %5670 = vmatpush1.msra.mxu0 0.0
        %5671 = vmatprep.subr.mxu0 0.0
        %5672 = vmatpush1.msra.mxu0 0.0
        %5673 = vmatprep.subr.mxu0 0.0
        %5674 = vmatpush1.msra.mxu0 0.0
        %5675 = vmatprep.mubr.f32.mxu0 0.0
        %v5676 = vand.u32 %v4835, 4294901760
        %5677 = vmatmul.mubr.f32.gmra.mrb[0].mxu0 %v5676
        %v5678 = vpop.f32.mrb[0].mxu0
        %v5679 = vadd.f32 %v5605, %v5678
        %v5680 = vpop.f32.mrb[0].mxu0
        %5681 = vdwg.mxu0
        %5682 = vmatprep.subr.mxu0 0.0
        %v5683 = vand.u32 %v4841, 4294901760
        %5684 = vmatpush1.msra.mxu0 %v5683
        %5685 = vmatprep.subr.mxu0 0.0
        %5686 = vmatpush1.msra.mxu0 0.0
        %5687 = vmatprep.subr.mxu0 0.0
        %5688 = vmatpush1.msra.mxu0 0.0
        %5689 = vmatprep.subr.mxu0 0.0
        %5690 = vmatpush1.msra.mxu0 0.0
        %5691 = vmatprep.subr.mxu0 0.0
        %5692 = vmatpush1.msra.mxu0 0.0
        %5693 = vmatprep.subr.mxu0 0.0
        %5694 = vmatpush1.msra.mxu0 0.0
        %5695 = vmatprep.subr.mxu0 0.0
        %5696 = vmatpush1.msra.mxu0 0.0
        %5697 = vmatprep.subr.mxu0 0.0
        %5698 = vmatpush1.msra.mxu0 0.0
        %5699 = vmatprep.subr.mxu0 0.0
        %5700 = vmatpush1.msra.mxu0 0.0
        %5701 = vmatprep.subr.mxu0 0.0
        %5702 = vmatpush1.msra.mxu0 0.0
        %5703 = vmatprep.subr.mxu0 0.0
        %5704 = vmatpush1.msra.mxu0 0.0
        %5705 = vmatprep.subr.mxu0 0.0
        %5706 = vmatpush1.msra.mxu0 0.0
        %5707 = vmatprep.subr.mxu0 0.0
        %5708 = vmatpush1.msra.mxu0 0.0
        %5709 = vmatprep.subr.mxu0 0.0
        %5710 = vmatpush1.msra.mxu0 0.0
        %5711 = vmatprep.subr.mxu0 0.0
        %5712 = vmatpush1.msra.mxu0 0.0
        %5713 = vmatprep.subr.mxu0 0.0
        %5714 = vmatpush1.msra.mxu0 0.0
        %5715 = vmatprep.subr.mxu0 0.0
        %5716 = vmatpush1.msra.mxu0 0.0
        %5717 = vmatprep.subr.mxu0 0.0
        %5718 = vmatpush1.msra.mxu0 0.0
        %5719 = vmatprep.subr.mxu0 0.0
        %5720 = vmatpush1.msra.mxu0 0.0
        %5721 = vmatprep.subr.mxu0 0.0
        %5722 = vmatpush1.msra.mxu0 0.0
        %5723 = vmatprep.subr.mxu0 0.0
        %5724 = vmatpush1.msra.mxu0 0.0
        %5725 = vmatprep.subr.mxu0 0.0
        %5726 = vmatpush1.msra.mxu0 0.0
        %5727 = vmatprep.subr.mxu0 0.0
        %5728 = vmatpush1.msra.mxu0 0.0
        %5729 = vmatprep.subr.mxu0 0.0
        %5730 = vmatpush1.msra.mxu0 0.0
        %5731 = vmatprep.subr.mxu0 0.0
        %5732 = vmatpush1.msra.mxu0 0.0
        %5733 = vmatprep.subr.mxu0 0.0
        %5734 = vmatpush1.msra.mxu0 0.0
        %5735 = vmatprep.subr.mxu0 0.0
        %5736 = vmatpush1.msra.mxu0 0.0
        %5737 = vmatprep.subr.mxu0 0.0
        %5738 = vmatpush1.msra.mxu0 0.0
        %5739 = vmatprep.subr.mxu0 0.0
        %5740 = vmatpush1.msra.mxu0 0.0
        %5741 = vmatprep.subr.mxu0 0.0
        %5742 = vmatpush1.msra.mxu0 0.0
        %5743 = vmatprep.subr.mxu0 0.0
        %5744 = vmatpush1.msra.mxu0 0.0
        %5745 = vmatprep.subr.mxu0 0.0
        %5746 = vmatpush1.msra.mxu0 0.0
        %5747 = vmatprep.mubr.f32.mxu0 0.0
        %v5748 = vand.u32 %v4835, 4294901760
        %5749 = vmatmul.mubr.f32.gmra.mrb[0].mxu0 %v5748
        %v5750 = vpop.f32.mrb[0].mxu0
        %v5751 = vadd.f32 %v5679, %v5750
        %v5752 = vpop.f32.mrb[0].mxu0
        %5753 = vdwg.mxu0
        %v5754 = vadd.f32 %v4815, %v5304
        %v5755 = vadd.f32 %v4816, %v5306
        %v5756 = vadd.f32 %v4817, %v5751
        %v5757 = vld [vmem:[%s141] sm:$0xff]
        %v5758 = vld [vmem:[%s141 + $0x8] sm:$0xf]
        %s5759 = scalar_lea.vmem %s1, 48
        %v5760 = vld [vmem:[%s5759] sm:$0xff]
        %v5763 = vcombine.high %v5757, %v5757
        %5764 = vrot.lane.b32.xlu0 %v5757, 92
        %v5765 = vpop.permute.xlu0 %5764
        %5766 = vrot.lane.b32.xlu0 %v5763, 92
        %v5767 = vpop.permute.xlu0 %5766
        %5768 = vrot.lane.b32.xlu0 %v5758, 92
        %v5769 = vpop.permute.xlu0 %5768
        %vm5770 = vcmask 752640
        %v5771 = vsel %vm5770, %v5765, %v5767
        %v5772 = vsel %vm5770, %v5767, %v5769
        %v5774 = vsel %vm159, %v5760, 0
        %v5776 = vsel %vm163, %v5771, 0
        %v5778 = vsel %vm163, %v5772, 0
        %v5780 = vsel %vm163, %v5769, 0
        %v5782 = vand.u32 %v5778, 4294901760
        %5783 = vmatprep.subr.mxu0 %v5782
        %v5784 = vand.u32 %v5776, 4294901760
        %5785 = vmatpush1.msra.mxu0 %v5784
        %5786 = vmatprep.subr.mxu0 0.0
        %5787 = vmatpush1.msra.mxu0 0.0
        %5788 = vmatprep.subr.mxu0 0.0
        %5789 = vmatpush1.msra.mxu0 0.0
        %5790 = vmatprep.subr.mxu0 0.0
        %5791 = vmatpush1.msra.mxu0 0.0
        %5792 = vmatprep.subr.mxu0 0.0
        %5793 = vmatpush1.msra.mxu0 0.0
        %5794 = vmatprep.subr.mxu0 0.0
        %5795 = vmatpush1.msra.mxu0 0.0
        %5796 = vmatprep.subr.mxu0 0.0
        %5797 = vmatpush1.msra.mxu0 0.0
        %5798 = vmatprep.subr.mxu0 0.0
        %5799 = vmatpush1.msra.mxu0 0.0
        %5800 = vmatprep.subr.mxu0 0.0
        %5801 = vmatpush1.msra.mxu0 0.0
        %5802 = vmatprep.subr.mxu0 0.0
        %5803 = vmatpush1.msra.mxu0 0.0
        %5804 = vmatprep.subr.mxu0 0.0
        %5805 = vmatpush1.msra.mxu0 0.0
        %5806 = vmatprep.subr.mxu0 0.0
        %5807 = vmatpush1.msra.mxu0 0.0
        %5808 = vmatprep.subr.mxu0 0.0
        %5809 = vmatpush1.msra.mxu0 0.0
        %5810 = vmatprep.subr.mxu0 0.0
        %5811 = vmatpush1.msra.mxu0 0.0
        %5812 = vmatprep.subr.mxu0 0.0
        %5813 = vmatpush1.msra.mxu0 0.0
        %5814 = vmatprep.subr.mxu0 0.0
        %5815 = vmatpush1.msra.mxu0 0.0
        %5816 = vmatprep.subr.mxu0 0.0
        %5817 = vmatpush1.msra.mxu0 0.0
        %5818 = vmatprep.subr.mxu0 0.0
        %5819 = vmatpush1.msra.mxu0 0.0
        %5820 = vmatprep.subr.mxu0 0.0
        %5821 = vmatpush1.msra.mxu0 0.0
        %5822 = vmatprep.subr.mxu0 0.0
        %5823 = vmatpush1.msra.mxu0 0.0
        %5824 = vmatprep.subr.mxu0 0.0
        %5825 = vmatpush1.msra.mxu0 0.0
        %5826 = vmatprep.subr.mxu0 0.0
        %5827 = vmatpush1.msra.mxu0 0.0
        %5828 = vmatprep.subr.mxu0 0.0
        %5829 = vmatpush1.msra.mxu0 0.0
        %5830 = vmatprep.subr.mxu0 0.0
        %5831 = vmatpush1.msra.mxu0 0.0
        %5832 = vmatprep.subr.mxu0 0.0
        %5833 = vmatpush1.msra.mxu0 0.0
        %5834 = vmatprep.subr.mxu0 0.0
        %5835 = vmatpush1.msra.mxu0 0.0
        %5836 = vmatprep.subr.mxu0 0.0
        %5837 = vmatpush1.msra.mxu0 0.0
        %5838 = vmatprep.subr.mxu0 0.0
        %5839 = vmatpush1.msra.mxu0 0.0
        %5840 = vmatprep.subr.mxu0 0.0
        %5841 = vmatpush1.msra.mxu0 0.0
        %5842 = vmatprep.subr.mxu0 0.0
        %5843 = vmatpush1.msra.mxu0 0.0
        %5844 = vmatprep.subr.mxu0 0.0
        %5845 = vmatpush1.msra.mxu0 0.0
        %5846 = vmatprep.subr.mxu0 0.0
        %5847 = vmatpush1.msra.mxu0 0.0
        %5848 = vmatprep.mubr.f32.mxu0 0.0
        %v5849 = vand.u32 %v5774, 4294901760
        %v5850 = vsub.f32 %v5774, %v5849
        %v5851 = vand.u32 %v5850, 4294901760
        %v5852 = vsub.f32 %v5850, %v5851
        %v5853 = vand.u32 %v5852, 4294901760
        %5854 = vmatmul.mubr.f32.gmra.mrb[0].mxu0 %v5853
        %v5855 = vpop.f32.mrb[0].mxu0
        %v5856 = vadd.f32 0.0, %v5855
        %v5857 = vpop.f32.mrb[0].mxu0
        %v5858 = vadd.f32 0.0, %v5857
        %5859 = vdwg.mxu0
        %v5860 = vand.u32 %v5778, 4294901760
        %v5861 = vsub.f32 %v5778, %v5860
        %v5862 = vand.u32 %v5861, 4294901760
        %v5863 = vsub.f32 %v5861, %v5862
        %v5864 = vand.u32 %v5863, 4294901760
        %5865 = vmatprep.subr.mxu0 %v5864
        %v5866 = vand.u32 %v5776, 4294901760
        %v5867 = vsub.f32 %v5776, %v5866
        %v5868 = vand.u32 %v5867, 4294901760
        %v5869 = vsub.f32 %v5867, %v5868
        %v5870 = vand.u32 %v5869, 4294901760
        %5871 = vmatpush1.msra.mxu0 %v5870
        %5872 = vmatprep.subr.mxu0 0.0
        %5873 = vmatpush1.msra.mxu0 0.0
        %5874 = vmatprep.subr.mxu0 0.0
        %5875 = vmatpush1.msra.mxu0 0.0
        %5876 = vmatprep.subr.mxu0 0.0
        %5877 = vmatpush1.msra.mxu0 0.0
        %5878 = vmatprep.subr.mxu0 0.0
        %5879 = vmatpush1.msra.mxu0 0.0
        %5880 = vmatprep.subr.mxu0 0.0
        %5881 = vmatpush1.msra.mxu0 0.0
        %5882 = vmatprep.subr.mxu0 0.0
        %5883 = vmatpush1.msra.mxu0 0.0
        %5884 = vmatprep.subr.mxu0 0.0
        %5885 = vmatpush1.msra.mxu0 0.0
        %5886 = vmatprep.subr.mxu0 0.0
        %5887 = vmatpush1.msra.mxu0 0.0
        %5888 = vmatprep.subr.mxu0 0.0
        %5889 = vmatpush1.msra.mxu0 0.0
        %5890 = vmatprep.subr.mxu0 0.0
        %5891 = vmatpush1.msra.mxu0 0.0
        %5892 = vmatprep.subr.mxu0 0.0
        %5893 = vmatpush1.msra.mxu0 0.0
        %5894 = vmatprep.subr.mxu0 0.0
        %5895 = vmatpush1.msra.mxu0 0.0
        %5896 = vmatprep.subr.mxu0 0.0
        %5897 = vmatpush1.msra.mxu0 0.0
        %5898 = vmatprep.subr.mxu0 0.0
        %5899 = vmatpush1.msra.mxu0 0.0
        %5900 = vmatprep.subr.mxu0 0.0
        %5901 = vmatpush1.msra.mxu0 0.0
        %5902 = vmatprep.subr.mxu0 0.0
        %5903 = vmatpush1.msra.mxu0 0.0
        %5904 = vmatprep.subr.mxu0 0.0
        %5905 = vmatpush1.msra.mxu0 0.0
        %5906 = vmatprep.subr.mxu0 0.0
        %5907 = vmatpush1.msra.mxu0 0.0
        %5908 = vmatprep.subr.mxu0 0.0
        %5909 = vmatpush1.msra.mxu0 0.0
        %5910 = vmatprep.subr.mxu0 0.0
        %5911 = vmatpush1.msra.mxu0 0.0
        %5912 = vmatprep.subr.mxu0 0.0
        %5913 = vmatpush1.msra.mxu0 0.0
        %5914 = vmatprep.subr.mxu0 0.0
        %5915 = vmatpush1.msra.mxu0 0.0
        %5916 = vmatprep.subr.mxu0 0.0
        %5917 = vmatpush1.msra.mxu0 0.0
        %5918 = vmatprep.subr.mxu0 0.0
        %5919 = vmatpush1.msra.mxu0 0.0
        %5920 = vmatprep.subr.mxu0 0.0
        %5921 = vmatpush1.msra.mxu0 0.0
        %5922 = vmatprep.subr.mxu0 0.0
        %5923 = vmatpush1.msra.mxu0 0.0
        %5924 = vmatprep.subr.mxu0 0.0
        %5925 = vmatpush1.msra.mxu0 0.0
        %5926 = vmatprep.subr.mxu0 0.0
        %5927 = vmatpush1.msra.mxu0 0.0
        %5928 = vmatprep.subr.mxu0 0.0
        %5929 = vmatpush1.msra.mxu0 0.0
        %5930 = vmatprep.subr.mxu0 0.0
        %5931 = vmatpush1.msra.mxu0 0.0
        %5932 = vmatprep.subr.mxu0 0.0
        %5933 = vmatpush1.msra.mxu0 0.0
        %5934 = vmatprep.mubr.f32.mxu0 0.0
        %v5935 = vand.u32 %v5774, 4294901760
        %5936 = vmatmul.mubr.f32.gmra.mrb[0].mxu0 %v5935
        %v5937 = vpop.f32.mrb[0].mxu0
        %v5938 = vadd.f32 %v5856, %v5937
        %v5939 = vpop.f32.mrb[0].mxu0
        %v5940 = vadd.f32 %v5858, %v5939
        %5941 = vdwg.mxu0
        %v5942 = vand.u32 %v5778, 4294901760
        %v5943 = vsub.f32 %v5778, %v5942
        %5944 = vmatprep.subr.mxu0 %v5943
        %v5945 = vand.u32 %v5776, 4294901760
        %v5946 = vsub.f32 %v5776, %v5945
        %5947 = vmatpush1.msra.mxu0 %v5946
        %5948 = vmatprep.subr.mxu0 0.0
        %5949 = vmatpush1.msra.mxu0 0.0
        %5950 = vmatprep.subr.mxu0 0.0
        %5951 = vmatpush1.msra.mxu0 0.0
        %5952 = vmatprep.subr.mxu0 0.0
        %5953 = vmatpush1.msra.mxu0 0.0
        %5954 = vmatprep.subr.mxu0 0.0
        %5955 = vmatpush1.msra.mxu0 0.0
        %5956 = vmatprep.subr.mxu0 0.0
        %5957 = vmatpush1.msra.mxu0 0.0
        %5958 = vmatprep.subr.mxu0 0.0
        %5959 = vmatpush1.msra.mxu0 0.0
        %5960 = vmatprep.subr.mxu0 0.0
        %5961 = vmatpush1.msra.mxu0 0.0
        %5962 = vmatprep.subr.mxu0 0.0
        %5963 = vmatpush1.msra.mxu0 0.0
        %5964 = vmatprep.subr.mxu0 0.0
        %5965 = vmatpush1.msra.mxu0 0.0
        %5966 = vmatprep.subr.mxu0 0.0
        %5967 = vmatpush1.msra.mxu0 0.0
        %5968 = vmatprep.subr.mxu0 0.0
        %5969 = vmatpush1.msra.mxu0 0.0
        %5970 = vmatprep.subr.mxu0 0.0
        %5971 = vmatpush1.msra.mxu0 0.0
        %5972 = vmatprep.subr.mxu0 0.0
        %5973 = vmatpush1.msra.mxu0 0.0
        %5974 = vmatprep.subr.mxu0 0.0
        %5975 = vmatpush1.msra.mxu0 0.0
        %5976 = vmatprep.subr.mxu0 0.0
        %5977 = vmatpush1.msra.mxu0 0.0
        %5978 = vmatprep.subr.mxu0 0.0
        %5979 = vmatpush1.msra.mxu0 0.0
        %5980 = vmatprep.subr.mxu0 0.0
        %5981 = vmatpush1.msra.mxu0 0.0
        %5982 = vmatprep.subr.mxu0 0.0
        %5983 = vmatpush1.msra.mxu0 0.0
        %5984 = vmatprep.subr.mxu0 0.0
        %5985 = vmatpush1.msra.mxu0 0.0
        %5986 = vmatprep.subr.mxu0 0.0
        %5987 = vmatpush1.msra.mxu0 0.0
        %5988 = vmatprep.subr.mxu0 0.0
        %5989 = vmatpush1.msra.mxu0 0.0
        %5990 = vmatprep.subr.mxu0 0.0
        %5991 = vmatpush1.msra.mxu0 0.0
        %5992 = vmatprep.subr.mxu0 0.0
        %5993 = vmatpush1.msra.mxu0 0.0
        %5994 = vmatprep.subr.mxu0 0.0
        %5995 = vmatpush1.msra.mxu0 0.0
        %5996 = vmatprep.subr.mxu0 0.0
        %5997 = vmatpush1.msra.mxu0 0.0
        %5998 = vmatprep.subr.mxu0 0.0
        %5999 = vmatpush1.msra.mxu0 0.0
        %6000 = vmatprep.subr.mxu0 0.0
        %6001 = vmatpush1.msra.mxu0 0.0
        %6002 = vmatprep.subr.mxu0 0.0
        %6003 = vmatpush1.msra.mxu0 0.0
        %6004 = vmatprep.subr.mxu0 0.0
        %6005 = vmatpush1.msra.mxu0 0.0
        %6006 = vmatprep.subr.mxu0 0.0
        %6007 = vmatpush1.msra.mxu0 0.0
        %6008 = vmatprep.subr.mxu0 0.0
        %6009 = vmatpush1.msra.mxu0 0.0
        %6010 = vmatprep.mubr.f32.mxu0 0.0
        %v6011 = vand.u32 %v5774, 4294901760
        %v6012 = vsub.f32 %v5774, %v6011
        %6013 = vmatmul.mubr.f32.gmra.mrb[0].mxu0 %v6012
        %v6014 = vpop.f32.mrb[0].mxu0
        %v6015 = vadd.f32 %v5938, %v6014
        %v6016 = vpop.f32.mrb[0].mxu0
        %v6017 = vadd.f32 %v5940, %v6016
        %6018 = vdwg.mxu0
        %v6019 = vand.u32 %v5778, 4294901760
        %6020 = vmatprep.subr.mxu0 %v6019
        %v6021 = vand.u32 %v5776, 4294901760
        %6022 = vmatpush1.msra.mxu0 %v6021
        %6023 = vmatprep.subr.mxu0 0.0
        %6024 = vmatpush1.msra.mxu0 0.0
        %6025 = vmatprep.subr.mxu0 0.0
        %6026 = vmatpush1.msra.mxu0 0.0
        %6027 = vmatprep.subr.mxu0 0.0
        %6028 = vmatpush1.msra.mxu0 0.0
        %6029 = vmatprep.subr.mxu0 0.0
        %6030 = vmatpush1.msra.mxu0 0.0
        %6031 = vmatprep.subr.mxu0 0.0
        %6032 = vmatpush1.msra.mxu0 0.0
        %6033 = vmatprep.subr.mxu0 0.0
        %6034 = vmatpush1.msra.mxu0 0.0
        %6035 = vmatprep.subr.mxu0 0.0
        %6036 = vmatpush1.msra.mxu0 0.0
        %6037 = vmatprep.subr.mxu0 0.0
        %6038 = vmatpush1.msra.mxu0 0.0
        %6039 = vmatprep.subr.mxu0 0.0
        %6040 = vmatpush1.msra.mxu0 0.0
        %6041 = vmatprep.subr.mxu0 0.0
        %6042 = vmatpush1.msra.mxu0 0.0
        %6043 = vmatprep.subr.mxu0 0.0
        %6044 = vmatpush1.msra.mxu0 0.0
        %6045 = vmatprep.subr.mxu0 0.0
        %6046 = vmatpush1.msra.mxu0 0.0
        %6047 = vmatprep.subr.mxu0 0.0
        %6048 = vmatpush1.msra.mxu0 0.0
        %6049 = vmatprep.subr.mxu0 0.0
        %6050 = vmatpush1.msra.mxu0 0.0
        %6051 = vmatprep.subr.mxu0 0.0
        %6052 = vmatpush1.msra.mxu0 0.0
        %6053 = vmatprep.subr.mxu0 0.0
        %6054 = vmatpush1.msra.mxu0 0.0
        %6055 = vmatprep.subr.mxu0 0.0
        %6056 = vmatpush1.msra.mxu0 0.0
        %6057 = vmatprep.subr.mxu0 0.0
        %6058 = vmatpush1.msra.mxu0 0.0
        %6059 = vmatprep.subr.mxu0 0.0
        %6060 = vmatpush1.msra.mxu0 0.0
        %6061 = vmatprep.subr.mxu0 0.0
        %6062 = vmatpush1.msra.mxu0 0.0
        %6063 = vmatprep.subr.mxu0 0.0
        %6064 = vmatpush1.msra.mxu0 0.0
        %6065 = vmatprep.subr.mxu0 0.0
        %6066 = vmatpush1.msra.mxu0 0.0
        %6067 = vmatprep.subr.mxu0 0.0
        %6068 = vmatpush1.msra.mxu0 0.0
        %6069 = vmatprep.subr.mxu0 0.0
        %6070 = vmatpush1.msra.mxu0 0.0
        %6071 = vmatprep.subr.mxu0 0.0
        %6072 = vmatpush1.msra.mxu0 0.0
        %6073 = vmatprep.subr.mxu0 0.0
        %6074 = vmatpush1.msra.mxu0 0.0
        %6075 = vmatprep.subr.mxu0 0.0
        %6076 = vmatpush1.msra.mxu0 0.0
        %6077 = vmatprep.subr.mxu0 0.0
        %6078 = vmatpush1.msra.mxu0 0.0
        %6079 = vmatprep.subr.mxu0 0.0
        %6080 = vmatpush1.msra.mxu0 0.0
        %6081 = vmatprep.subr.mxu0 0.0
        %6082 = vmatpush1.msra.mxu0 0.0
        %6083 = vmatprep.subr.mxu0 0.0
        %6084 = vmatpush1.msra.mxu0 0.0
        %6085 = vmatprep.mubr.f32.mxu0 0.0
        %v6086 = vand.u32 %v5774, 4294901760
        %v6087 = vsub.f32 %v5774, %v6086
        %v6088 = vand.u32 %v6087, 4294901760
        %6089 = vmatmul.mubr.f32.gmra.mrb[0].mxu0 %v6088
        %v6090 = vpop.f32.mrb[0].mxu0
        %v6091 = vadd.f32 %v6015, %v6090
        %v6092 = vpop.f32.mrb[0].mxu0
        %v6093 = vadd.f32 %v6017, %v6092
        %6094 = vdwg.mxu0
        %v6095 = vand.u32 %v5778, 4294901760
        %v6096 = vsub.f32 %v5778, %v6095
        %v6097 = vand.u32 %v6096, 4294901760
        %6098 = vmatprep.subr.mxu0 %v6097
        %v6099 = vand.u32 %v5776, 4294901760
        %v6100 = vsub.f32 %v5776, %v6099
        %v6101 = vand.u32 %v6100, 4294901760
        %6102 = vmatpush1.msra.mxu0 %v6101
        %6103 = vmatprep.subr.mxu0 0.0
        %6104 = vmatpush1.msra.mxu0 0.0
        %6105 = vmatprep.subr.mxu0 0.0
        %6106 = vmatpush1.msra.mxu0 0.0
        %6107 = vmatprep.subr.mxu0 0.0
        %6108 = vmatpush1.msra.mxu0 0.0
        %6109 = vmatprep.subr.mxu0 0.0
        %6110 = vmatpush1.msra.mxu0 0.0
        %6111 = vmatprep.subr.mxu0 0.0
        %6112 = vmatpush1.msra.mxu0 0.0
        %6113 = vmatprep.subr.mxu0 0.0
        %6114 = vmatpush1.msra.mxu0 0.0
        %6115 = vmatprep.subr.mxu0 0.0
        %6116 = vmatpush1.msra.mxu0 0.0
        %6117 = vmatprep.subr.mxu0 0.0
        %6118 = vmatpush1.msra.mxu0 0.0
        %6119 = vmatprep.subr.mxu0 0.0
        %6120 = vmatpush1.msra.mxu0 0.0
        %6121 = vmatprep.subr.mxu0 0.0
        %6122 = vmatpush1.msra.mxu0 0.0
        %6123 = vmatprep.subr.mxu0 0.0
        %6124 = vmatpush1.msra.mxu0 0.0
        %6125 = vmatprep.subr.mxu0 0.0
        %6126 = vmatpush1.msra.mxu0 0.0
        %6127 = vmatprep.subr.mxu0 0.0
        %6128 = vmatpush1.msra.mxu0 0.0
        %6129 = vmatprep.subr.mxu0 0.0
        %6130 = vmatpush1.msra.mxu0 0.0
        %6131 = vmatprep.subr.mxu0 0.0
        %6132 = vmatpush1.msra.mxu0 0.0
        %6133 = vmatprep.subr.mxu0 0.0
        %6134 = vmatpush1.msra.mxu0 0.0
        %6135 = vmatprep.subr.mxu0 0.0
        %6136 = vmatpush1.msra.mxu0 0.0
        %6137 = vmatprep.subr.mxu0 0.0
        %6138 = vmatpush1.msra.mxu0 0.0
        %6139 = vmatprep.subr.mxu0 0.0
        %6140 = vmatpush1.msra.mxu0 0.0
        %6141 = vmatprep.subr.mxu0 0.0
        %6142 = vmatpush1.msra.mxu0 0.0
        %6143 = vmatprep.subr.mxu0 0.0
        %6144 = vmatpush1.msra.mxu0 0.0
        %6145 = vmatprep.subr.mxu0 0.0
        %6146 = vmatpush1.msra.mxu0 0.0
        %6147 = vmatprep.subr.mxu0 0.0
        %6148 = vmatpush1.msra.mxu0 0.0
        %6149 = vmatprep.subr.mxu0 0.0
        %6150 = vmatpush1.msra.mxu0 0.0
        %6151 = vmatprep.subr.mxu0 0.0
        %6152 = vmatpush1.msra.mxu0 0.0
        %6153 = vmatprep.subr.mxu0 0.0
        %6154 = vmatpush1.msra.mxu0 0.0
        %6155 = vmatprep.subr.mxu0 0.0
        %6156 = vmatpush1.msra.mxu0 0.0
        %6157 = vmatprep.subr.mxu0 0.0
        %6158 = vmatpush1.msra.mxu0 0.0
        %6159 = vmatprep.subr.mxu0 0.0
        %6160 = vmatpush1.msra.mxu0 0.0
        %6161 = vmatprep.subr.mxu0 0.0
        %6162 = vmatpush1.msra.mxu0 0.0
        %6163 = vmatprep.subr.mxu0 0.0
        %6164 = vmatpush1.msra.mxu0 0.0
        %6165 = vmatprep.mubr.f32.mxu0 0.0
        %v6166 = vand.u32 %v5774, 4294901760
        %6167 = vmatmul.mubr.f32.gmra.mrb[0].mxu0 %v6166
        %v6168 = vpop.f32.mrb[0].mxu0
        %v6169 = vadd.f32 %v6091, %v6168
        %v6170 = vpop.f32.mrb[0].mxu0
        %v6171 = vadd.f32 %v6093, %v6170
        %6172 = vdwg.mxu0
        %v6173 = vand.u32 %v5778, 4294901760
        %6174 = vmatprep.subr.mxu0 %v6173
        %v6175 = vand.u32 %v5776, 4294901760
        %6176 = vmatpush1.msra.mxu0 %v6175
        %6177 = vmatprep.subr.mxu0 0.0
        %6178 = vmatpush1.msra.mxu0 0.0
        %6179 = vmatprep.subr.mxu0 0.0
        %6180 = vmatpush1.msra.mxu0 0.0
        %6181 = vmatprep.subr.mxu0 0.0
        %6182 = vmatpush1.msra.mxu0 0.0
        %6183 = vmatprep.subr.mxu0 0.0
        %6184 = vmatpush1.msra.mxu0 0.0
        %6185 = vmatprep.subr.mxu0 0.0
        %6186 = vmatpush1.msra.mxu0 0.0
        %6187 = vmatprep.subr.mxu0 0.0
        %6188 = vmatpush1.msra.mxu0 0.0
        %6189 = vmatprep.subr.mxu0 0.0
        %6190 = vmatpush1.msra.mxu0 0.0
        %6191 = vmatprep.subr.mxu0 0.0
        %6192 = vmatpush1.msra.mxu0 0.0
        %6193 = vmatprep.subr.mxu0 0.0
        %6194 = vmatpush1.msra.mxu0 0.0
        %6195 = vmatprep.subr.mxu0 0.0
        %6196 = vmatpush1.msra.mxu0 0.0
        %6197 = vmatprep.subr.mxu0 0.0
        %6198 = vmatpush1.msra.mxu0 0.0
        %6199 = vmatprep.subr.mxu0 0.0
        %6200 = vmatpush1.msra.mxu0 0.0
        %6201 = vmatprep.subr.mxu0 0.0
        %6202 = vmatpush1.msra.mxu0 0.0
        %6203 = vmatprep.subr.mxu0 0.0
        %6204 = vmatpush1.msra.mxu0 0.0
        %6205 = vmatprep.subr.mxu0 0.0
        %6206 = vmatpush1.msra.mxu0 0.0
        %6207 = vmatprep.subr.mxu0 0.0
        %6208 = vmatpush1.msra.mxu0 0.0
        %6209 = vmatprep.subr.mxu0 0.0
        %6210 = vmatpush1.msra.mxu0 0.0
        %6211 = vmatprep.subr.mxu0 0.0
        %6212 = vmatpush1.msra.mxu0 0.0
        %6213 = vmatprep.subr.mxu0 0.0
        %6214 = vmatpush1.msra.mxu0 0.0
        %6215 = vmatprep.subr.mxu0 0.0
        %6216 = vmatpush1.msra.mxu0 0.0
        %6217 = vmatprep.subr.mxu0 0.0
        %6218 = vmatpush1.msra.mxu0 0.0
        %6219 = vmatprep.subr.mxu0 0.0
        %6220 = vmatpush1.msra.mxu0 0.0
        %6221 = vmatprep.subr.mxu0 0.0
        %6222 = vmatpush1.msra.mxu0 0.0
        %6223 = vmatprep.subr.mxu0 0.0
        %6224 = vmatpush1.msra.mxu0 0.0
        %6225 = vmatprep.subr.mxu0 0.0
        %6226 = vmatpush1.msra.mxu0 0.0
        %6227 = vmatprep.subr.mxu0 0.0
        %6228 = vmatpush1.msra.mxu0 0.0
        %6229 = vmatprep.subr.mxu0 0.0
        %6230 = vmatpush1.msra.mxu0 0.0
        %6231 = vmatprep.subr.mxu0 0.0
        %6232 = vmatpush1.msra.mxu0 0.0
        %6233 = vmatprep.subr.mxu0 0.0
        %6234 = vmatpush1.msra.mxu0 0.0
        %6235 = vmatprep.subr.mxu0 0.0
        %6236 = vmatpush1.msra.mxu0 0.0
        %6237 = vmatprep.subr.mxu0 0.0
        %6238 = vmatpush1.msra.mxu0 0.0
        %6239 = vmatprep.mubr.f32.mxu0 0.0
        %v6240 = vand.u32 %v5774, 4294901760
        %6241 = vmatmul.mubr.f32.gmra.mrb[0].mxu0 %v6240
        %v6242 = vpop.f32.mrb[0].mxu0
        %v6243 = vadd.f32 %v6169, %v6242
        %v6244 = vpop.f32.mrb[0].mxu0
        %v6245 = vadd.f32 %v6171, %v6244
        %6246 = vdwg.mxu0
        %6247 = vmatprep.subr.mxu0 0.0
        %v6248 = vand.u32 %v5780, 4294901760
        %6249 = vmatpush1.msra.mxu0 %v6248
        %6250 = vmatprep.subr.mxu0 0.0
        %6251 = vmatpush1.msra.mxu0 0.0
        %6252 = vmatprep.subr.mxu0 0.0
        %6253 = vmatpush1.msra.mxu0 0.0
        %6254 = vmatprep.subr.mxu0 0.0
        %6255 = vmatpush1.msra.mxu0 0.0
        %6256 = vmatprep.subr.mxu0 0.0
        %6257 = vmatpush1.msra.mxu0 0.0
        %6258 = vmatprep.subr.mxu0 0.0
        %6259 = vmatpush1.msra.mxu0 0.0
        %6260 = vmatprep.subr.mxu0 0.0
        %6261 = vmatpush1.msra.mxu0 0.0
        %6262 = vmatprep.subr.mxu0 0.0
        %6263 = vmatpush1.msra.mxu0 0.0
        %6264 = vmatprep.subr.mxu0 0.0
        %6265 = vmatpush1.msra.mxu0 0.0
        %6266 = vmatprep.subr.mxu0 0.0
        %6267 = vmatpush1.msra.mxu0 0.0
        %6268 = vmatprep.subr.mxu0 0.0
        %6269 = vmatpush1.msra.mxu0 0.0
        %6270 = vmatprep.subr.mxu0 0.0
        %6271 = vmatpush1.msra.mxu0 0.0
        %6272 = vmatprep.subr.mxu0 0.0
        %6273 = vmatpush1.msra.mxu0 0.0
        %6274 = vmatprep.subr.mxu0 0.0
        %6275 = vmatpush1.msra.mxu0 0.0
        %6276 = vmatprep.subr.mxu0 0.0
        %6277 = vmatpush1.msra.mxu0 0.0
        %6278 = vmatprep.subr.mxu0 0.0
        %6279 = vmatpush1.msra.mxu0 0.0
        %6280 = vmatprep.subr.mxu0 0.0
        %6281 = vmatpush1.msra.mxu0 0.0
        %6282 = vmatprep.subr.mxu0 0.0
        %6283 = vmatpush1.msra.mxu0 0.0
        %6284 = vmatprep.subr.mxu0 0.0
        %6285 = vmatpush1.msra.mxu0 0.0
        %6286 = vmatprep.subr.mxu0 0.0
        %6287 = vmatpush1.msra.mxu0 0.0
        %6288 = vmatprep.subr.mxu0 0.0
        %6289 = vmatpush1.msra.mxu0 0.0
        %6290 = vmatprep.subr.mxu0 0.0
        %6291 = vmatpush1.msra.mxu0 0.0
        %6292 = vmatprep.subr.mxu0 0.0
        %6293 = vmatpush1.msra.mxu0 0.0
        %6294 = vmatprep.subr.mxu0 0.0
        %6295 = vmatpush1.msra.mxu0 0.0
        %6296 = vmatprep.subr.mxu0 0.0
        %6297 = vmatpush1.msra.mxu0 0.0
        %6298 = vmatprep.subr.mxu0 0.0
        %6299 = vmatpush1.msra.mxu0 0.0
        %6300 = vmatprep.subr.mxu0 0.0
        %6301 = vmatpush1.msra.mxu0 0.0
        %6302 = vmatprep.subr.mxu0 0.0
        %6303 = vmatpush1.msra.mxu0 0.0
        %6304 = vmatprep.subr.mxu0 0.0
        %6305 = vmatpush1.msra.mxu0 0.0
        %6306 = vmatprep.subr.mxu0 0.0
        %6307 = vmatpush1.msra.mxu0 0.0
        %6308 = vmatprep.subr.mxu0 0.0
        %6309 = vmatpush1.msra.mxu0 0.0
        %6310 = vmatprep.subr.mxu0 0.0
        %6311 = vmatpush1.msra.mxu0 0.0
        %6312 = vmatprep.mubr.f32.mxu0 0.0
        %v6313 = vand.u32 %v5774, 4294901760
        %v6314 = vsub.f32 %v5774, %v6313
        %v6315 = vand.u32 %v6314, 4294901760
        %v6316 = vsub.f32 %v6314, %v6315
        %v6317 = vand.u32 %v6316, 4294901760
        %6318 = vmatmul.mubr.f32.gmra.mrb[0].mxu0 %v6317
        %v6319 = vpop.f32.mrb[0].mxu0
        %v6320 = vadd.f32 0.0, %v6319
        %v6321 = vpop.f32.mrb[0].mxu0
        %6322 = vdwg.mxu0
        %6323 = vmatprep.subr.mxu0 0.0
        %v6324 = vand.u32 %v5780, 4294901760
        %v6325 = vsub.f32 %v5780, %v6324
        %v6326 = vand.u32 %v6325, 4294901760
        %v6327 = vsub.f32 %v6325, %v6326
        %v6328 = vand.u32 %v6327, 4294901760
        %6329 = vmatpush1.msra.mxu0 %v6328
        %6330 = vmatprep.subr.mxu0 0.0
        %6331 = vmatpush1.msra.mxu0 0.0
        %6332 = vmatprep.subr.mxu0 0.0
        %6333 = vmatpush1.msra.mxu0 0.0
        %6334 = vmatprep.subr.mxu0 0.0
        %6335 = vmatpush1.msra.mxu0 0.0
        %6336 = vmatprep.subr.mxu0 0.0
        %6337 = vmatpush1.msra.mxu0 0.0
        %6338 = vmatprep.subr.mxu0 0.0
        %6339 = vmatpush1.msra.mxu0 0.0
        %6340 = vmatprep.subr.mxu0 0.0
        %6341 = vmatpush1.msra.mxu0 0.0
        %6342 = vmatprep.subr.mxu0 0.0
        %6343 = vmatpush1.msra.mxu0 0.0
        %6344 = vmatprep.subr.mxu0 0.0
        %6345 = vmatpush1.msra.mxu0 0.0
        %6346 = vmatprep.subr.mxu0 0.0
        %6347 = vmatpush1.msra.mxu0 0.0
        %6348 = vmatprep.subr.mxu0 0.0
        %6349 = vmatpush1.msra.mxu0 0.0
        %6350 = vmatprep.subr.mxu0 0.0
        %6351 = vmatpush1.msra.mxu0 0.0
        %6352 = vmatprep.subr.mxu0 0.0
        %6353 = vmatpush1.msra.mxu0 0.0
        %6354 = vmatprep.subr.mxu0 0.0
        %6355 = vmatpush1.msra.mxu0 0.0
        %6356 = vmatprep.subr.mxu0 0.0
        %6357 = vmatpush1.msra.mxu0 0.0
        %6358 = vmatprep.subr.mxu0 0.0
        %6359 = vmatpush1.msra.mxu0 0.0
        %6360 = vmatprep.subr.mxu0 0.0
        %6361 = vmatpush1.msra.mxu0 0.0
        %6362 = vmatprep.subr.mxu0 0.0
        %6363 = vmatpush1.msra.mxu0 0.0
        %6364 = vmatprep.subr.mxu0 0.0
        %6365 = vmatpush1.msra.mxu0 0.0
        %6366 = vmatprep.subr.mxu0 0.0
        %6367 = vmatpush1.msra.mxu0 0.0
        %6368 = vmatprep.subr.mxu0 0.0
        %6369 = vmatpush1.msra.mxu0 0.0
        %6370 = vmatprep.subr.mxu0 0.0
        %6371 = vmatpush1.msra.mxu0 0.0
        %6372 = vmatprep.subr.mxu0 0.0
        %6373 = vmatpush1.msra.mxu0 0.0
        %6374 = vmatprep.subr.mxu0 0.0
        %6375 = vmatpush1.msra.mxu0 0.0
        %6376 = vmatprep.subr.mxu0 0.0
        %6377 = vmatpush1.msra.mxu0 0.0
        %6378 = vmatprep.subr.mxu0 0.0
        %6379 = vmatpush1.msra.mxu0 0.0
        %6380 = vmatprep.subr.mxu0 0.0
        %6381 = vmatpush1.msra.mxu0 0.0
        %6382 = vmatprep.subr.mxu0 0.0
        %6383 = vmatpush1.msra.mxu0 0.0
        %6384 = vmatprep.subr.mxu0 0.0
        %6385 = vmatpush1.msra.mxu0 0.0
        %6386 = vmatprep.subr.mxu0 0.0
        %6387 = vmatpush1.msra.mxu0 0.0
        %6388 = vmatprep.subr.mxu0 0.0
        %6389 = vmatpush1.msra.mxu0 0.0
        %6390 = vmatprep.subr.mxu0 0.0
        %6391 = vmatpush1.msra.mxu0 0.0
        %6392 = vmatprep.mubr.f32.mxu0 0.0
        %v6393 = vand.u32 %v5774, 4294901760
        %6394 = vmatmul.mubr.f32.gmra.mrb[0].mxu0 %v6393
        %v6395 = vpop.f32.mrb[0].mxu0
        %v6396 = vadd.f32 %v6320, %v6395
        %v6397 = vpop.f32.mrb[0].mxu0
        %6398 = vdwg.mxu0
        %6399 = vmatprep.subr.mxu0 0.0
        %v6400 = vand.u32 %v5780, 4294901760
        %v6401 = vsub.f32 %v5780, %v6400
        %6402 = vmatpush1.msra.mxu0 %v6401
        %6403 = vmatprep.subr.mxu0 0.0
        %6404 = vmatpush1.msra.mxu0 0.0
        %6405 = vmatprep.subr.mxu0 0.0
        %6406 = vmatpush1.msra.mxu0 0.0
        %6407 = vmatprep.subr.mxu0 0.0
        %6408 = vmatpush1.msra.mxu0 0.0
        %6409 = vmatprep.subr.mxu0 0.0
        %6410 = vmatpush1.msra.mxu0 0.0
        %6411 = vmatprep.subr.mxu0 0.0
        %6412 = vmatpush1.msra.mxu0 0.0
        %6413 = vmatprep.subr.mxu0 0.0
        %6414 = vmatpush1.msra.mxu0 0.0
        %6415 = vmatprep.subr.mxu0 0.0
        %6416 = vmatpush1.msra.mxu0 0.0
        %6417 = vmatprep.subr.mxu0 0.0
        %6418 = vmatpush1.msra.mxu0 0.0
        %6419 = vmatprep.subr.mxu0 0.0
        %6420 = vmatpush1.msra.mxu0 0.0
        %6421 = vmatprep.subr.mxu0 0.0
        %6422 = vmatpush1.msra.mxu0 0.0
        %6423 = vmatprep.subr.mxu0 0.0
        %6424 = vmatpush1.msra.mxu0 0.0
        %6425 = vmatprep.subr.mxu0 0.0
        %6426 = vmatpush1.msra.mxu0 0.0
        %6427 = vmatprep.subr.mxu0 0.0
        %6428 = vmatpush1.msra.mxu0 0.0
        %6429 = vmatprep.subr.mxu0 0.0
        %6430 = vmatpush1.msra.mxu0 0.0
        %6431 = vmatprep.subr.mxu0 0.0
        %6432 = vmatpush1.msra.mxu0 0.0
        %6433 = vmatprep.subr.mxu0 0.0
        %6434 = vmatpush1.msra.mxu0 0.0
        %6435 = vmatprep.subr.mxu0 0.0
        %6436 = vmatpush1.msra.mxu0 0.0
        %6437 = vmatprep.subr.mxu0 0.0
        %6438 = vmatpush1.msra.mxu0 0.0
        %6439 = vmatprep.subr.mxu0 0.0
        %6440 = vmatpush1.msra.mxu0 0.0
        %6441 = vmatprep.subr.mxu0 0.0
        %6442 = vmatpush1.msra.mxu0 0.0
        %6443 = vmatprep.subr.mxu0 0.0
        %6444 = vmatpush1.msra.mxu0 0.0
        %6445 = vmatprep.subr.mxu0 0.0
        %6446 = vmatpush1.msra.mxu0 0.0
        %6447 = vmatprep.subr.mxu0 0.0
        %6448 = vmatpush1.msra.mxu0 0.0
        %6449 = vmatprep.subr.mxu0 0.0
        %6450 = vmatpush1.msra.mxu0 0.0
        %6451 = vmatprep.subr.mxu0 0.0
        %6452 = vmatpush1.msra.mxu0 0.0
        %6453 = vmatprep.subr.mxu0 0.0
        %6454 = vmatpush1.msra.mxu0 0.0
        %6455 = vmatprep.subr.mxu0 0.0
        %6456 = vmatpush1.msra.mxu0 0.0
        %6457 = vmatprep.subr.mxu0 0.0
        %6458 = vmatpush1.msra.mxu0 0.0
        %6459 = vmatprep.subr.mxu0 0.0
        %6460 = vmatpush1.msra.mxu0 0.0
        %6461 = vmatprep.subr.mxu0 0.0
        %6462 = vmatpush1.msra.mxu0 0.0
        %6463 = vmatprep.subr.mxu0 0.0
        %6464 = vmatpush1.msra.mxu0 0.0
        %6465 = vmatprep.mubr.f32.mxu0 0.0
        %v6466 = vand.u32 %v5774, 4294901760
        %v6467 = vsub.f32 %v5774, %v6466
        %6468 = vmatmul.mubr.f32.gmra.mrb[0].mxu0 %v6467
        %v6469 = vpop.f32.mrb[0].mxu0
        %v6470 = vadd.f32 %v6396, %v6469
        %v6471 = vpop.f32.mrb[0].mxu0
        %6472 = vdwg.mxu0
        %6473 = vmatprep.subr.mxu0 0.0
        %v6474 = vand.u32 %v5780, 4294901760
        %6475 = vmatpush1.msra.mxu0 %v6474
        %6476 = vmatprep.subr.mxu0 0.0
        %6477 = vmatpush1.msra.mxu0 0.0
        %6478 = vmatprep.subr.mxu0 0.0
        %6479 = vmatpush1.msra.mxu0 0.0
        %6480 = vmatprep.subr.mxu0 0.0
        %6481 = vmatpush1.msra.mxu0 0.0
        %6482 = vmatprep.subr.mxu0 0.0
        %6483 = vmatpush1.msra.mxu0 0.0
        %6484 = vmatprep.subr.mxu0 0.0
        %6485 = vmatpush1.msra.mxu0 0.0
        %6486 = vmatprep.subr.mxu0 0.0
        %6487 = vmatpush1.msra.mxu0 0.0
        %6488 = vmatprep.subr.mxu0 0.0
        %6489 = vmatpush1.msra.mxu0 0.0
        %6490 = vmatprep.subr.mxu0 0.0
        %6491 = vmatpush1.msra.mxu0 0.0
        %6492 = vmatprep.subr.mxu0 0.0
        %6493 = vmatpush1.msra.mxu0 0.0
        %6494 = vmatprep.subr.mxu0 0.0
        %6495 = vmatpush1.msra.mxu0 0.0
        %6496 = vmatprep.subr.mxu0 0.0
        %6497 = vmatpush1.msra.mxu0 0.0
        %6498 = vmatprep.subr.mxu0 0.0
        %6499 = vmatpush1.msra.mxu0 0.0
        %6500 = vmatprep.subr.mxu0 0.0
        %6501 = vmatpush1.msra.mxu0 0.0
        %6502 = vmatprep.subr.mxu0 0.0
        %6503 = vmatpush1.msra.mxu0 0.0
        %6504 = vmatprep.subr.mxu0 0.0
        %6505 = vmatpush1.msra.mxu0 0.0
        %6506 = vmatprep.subr.mxu0 0.0
        %6507 = vmatpush1.msra.mxu0 0.0
        %6508 = vmatprep.subr.mxu0 0.0
        %6509 = vmatpush1.msra.mxu0 0.0
        %6510 = vmatprep.subr.mxu0 0.0
        %6511 = vmatpush1.msra.mxu0 0.0
        %6512 = vmatprep.subr.mxu0 0.0
        %6513 = vmatpush1.msra.mxu0 0.0
        %6514 = vmatprep.subr.mxu0 0.0
        %6515 = vmatpush1.msra.mxu0 0.0
        %6516 = vmatprep.subr.mxu0 0.0
        %6517 = vmatpush1.msra.mxu0 0.0
        %6518 = vmatprep.subr.mxu0 0.0
        %6519 = vmatpush1.msra.mxu0 0.0
        %6520 = vmatprep.subr.mxu0 0.0
        %6521 = vmatpush1.msra.mxu0 0.0
        %6522 = vmatprep.subr.mxu0 0.0
        %6523 = vmatpush1.msra.mxu0 0.0
        %6524 = vmatprep.subr.mxu0 0.0
        %6525 = vmatpush1.msra.mxu0 0.0
        %6526 = vmatprep.subr.mxu0 0.0
        %6527 = vmatpush1.msra.mxu0 0.0
        %6528 = vmatprep.subr.mxu0 0.0
        %6529 = vmatpush1.msra.mxu0 0.0
        %6530 = vmatprep.subr.mxu0 0.0
        %6531 = vmatpush1.msra.mxu0 0.0
        %6532 = vmatprep.subr.mxu0 0.0
        %6533 = vmatpush1.msra.mxu0 0.0
        %6534 = vmatprep.subr.mxu0 0.0
        %6535 = vmatpush1.msra.mxu0 0.0
        %6536 = vmatprep.subr.mxu0 0.0
        %6537 = vmatpush1.msra.mxu0 0.0
        %6538 = vmatprep.mubr.f32.mxu0 0.0
        %v6539 = vand.u32 %v5774, 4294901760
        %v6540 = vsub.f32 %v5774, %v6539
        %v6541 = vand.u32 %v6540, 4294901760
        %6542 = vmatmul.mubr.f32.gmra.mrb[0].mxu0 %v6541
        %v6543 = vpop.f32.mrb[0].mxu0
        %v6544 = vadd.f32 %v6470, %v6543
        %v6545 = vpop.f32.mrb[0].mxu0
        %6546 = vdwg.mxu0
        %6547 = vmatprep.subr.mxu0 0.0
        %v6548 = vand.u32 %v5780, 4294901760
        %v6549 = vsub.f32 %v5780, %v6548
        %v6550 = vand.u32 %v6549, 4294901760
        %6551 = vmatpush1.msra.mxu0 %v6550
        %6552 = vmatprep.subr.mxu0 0.0
        %6553 = vmatpush1.msra.mxu0 0.0
        %6554 = vmatprep.subr.mxu0 0.0
        %6555 = vmatpush1.msra.mxu0 0.0
        %6556 = vmatprep.subr.mxu0 0.0
        %6557 = vmatpush1.msra.mxu0 0.0
        %6558 = vmatprep.subr.mxu0 0.0
        %6559 = vmatpush1.msra.mxu0 0.0
        %6560 = vmatprep.subr.mxu0 0.0
        %6561 = vmatpush1.msra.mxu0 0.0
        %6562 = vmatprep.subr.mxu0 0.0
        %6563 = vmatpush1.msra.mxu0 0.0
        %6564 = vmatprep.subr.mxu0 0.0
        %6565 = vmatpush1.msra.mxu0 0.0
        %6566 = vmatprep.subr.mxu0 0.0
        %6567 = vmatpush1.msra.mxu0 0.0
        %6568 = vmatprep.subr.mxu0 0.0
        %6569 = vmatpush1.msra.mxu0 0.0
        %6570 = vmatprep.subr.mxu0 0.0
        %6571 = vmatpush1.msra.mxu0 0.0
        %6572 = vmatprep.subr.mxu0 0.0
        %6573 = vmatpush1.msra.mxu0 0.0
        %6574 = vmatprep.subr.mxu0 0.0
        %6575 = vmatpush1.msra.mxu0 0.0
        %6576 = vmatprep.subr.mxu0 0.0
        %6577 = vmatpush1.msra.mxu0 0.0
        %6578 = vmatprep.subr.mxu0 0.0
        %6579 = vmatpush1.msra.mxu0 0.0
        %6580 = vmatprep.subr.mxu0 0.0
        %6581 = vmatpush1.msra.mxu0 0.0
        %6582 = vmatprep.subr.mxu0 0.0
        %6583 = vmatpush1.msra.mxu0 0.0
        %6584 = vmatprep.subr.mxu0 0.0
        %6585 = vmatpush1.msra.mxu0 0.0
        %6586 = vmatprep.subr.mxu0 0.0
        %6587 = vmatpush1.msra.mxu0 0.0
        %6588 = vmatprep.subr.mxu0 0.0
        %6589 = vmatpush1.msra.mxu0 0.0
        %6590 = vmatprep.subr.mxu0 0.0
        %6591 = vmatpush1.msra.mxu0 0.0
        %6592 = vmatprep.subr.mxu0 0.0
        %6593 = vmatpush1.msra.mxu0 0.0
        %6594 = vmatprep.subr.mxu0 0.0
        %6595 = vmatpush1.msra.mxu0 0.0
        %6596 = vmatprep.subr.mxu0 0.0
        %6597 = vmatpush1.msra.mxu0 0.0
        %6598 = vmatprep.subr.mxu0 0.0
        %6599 = vmatpush1.msra.mxu0 0.0
        %6600 = vmatprep.subr.mxu0 0.0
        %6601 = vmatpush1.msra.mxu0 0.0
        %6602 = vmatprep.subr.mxu0 0.0
        %6603 = vmatpush1.msra.mxu0 0.0
        %6604 = vmatprep.subr.mxu0 0.0
        %6605 = vmatpush1.msra.mxu0 0.0
        %6606 = vmatprep.subr.mxu0 0.0
        %6607 = vmatpush1.msra.mxu0 0.0
        %6608 = vmatprep.subr.mxu0 0.0
        %6609 = vmatpush1.msra.mxu0 0.0
        %6610 = vmatprep.subr.mxu0 0.0
        %6611 = vmatpush1.msra.mxu0 0.0
        %6612 = vmatprep.subr.mxu0 0.0
        %6613 = vmatpush1.msra.mxu0 0.0
        %6614 = vmatprep.mubr.f32.mxu0 0.0
        %v6615 = vand.u32 %v5774, 4294901760
        %6616 = vmatmul.mubr.f32.gmra.mrb[0].mxu0 %v6615
        %v6617 = vpop.f32.mrb[0].mxu0
        %v6618 = vadd.f32 %v6544, %v6617
        %v6619 = vpop.f32.mrb[0].mxu0
        %6620 = vdwg.mxu0
        %6621 = vmatprep.subr.mxu0 0.0
        %v6622 = vand.u32 %v5780, 4294901760
        %6623 = vmatpush1.msra.mxu0 %v6622
        %6624 = vmatprep.subr.mxu0 0.0
        %6625 = vmatpush1.msra.mxu0 0.0
        %6626 = vmatprep.subr.mxu0 0.0
        %6627 = vmatpush1.msra.mxu0 0.0
        %6628 = vmatprep.subr.mxu0 0.0
        %6629 = vmatpush1.msra.mxu0 0.0
        %6630 = vmatprep.subr.mxu0 0.0
        %6631 = vmatpush1.msra.mxu0 0.0
        %6632 = vmatprep.subr.mxu0 0.0
        %6633 = vmatpush1.msra.mxu0 0.0
        %6634 = vmatprep.subr.mxu0 0.0
        %6635 = vmatpush1.msra.mxu0 0.0
        %6636 = vmatprep.subr.mxu0 0.0
        %6637 = vmatpush1.msra.mxu0 0.0
        %6638 = vmatprep.subr.mxu0 0.0
        %6639 = vmatpush1.msra.mxu0 0.0
        %6640 = vmatprep.subr.mxu0 0.0
        %6641 = vmatpush1.msra.mxu0 0.0
        %6642 = vmatprep.subr.mxu0 0.0
        %6643 = vmatpush1.msra.mxu0 0.0
        %6644 = vmatprep.subr.mxu0 0.0
        %6645 = vmatpush1.msra.mxu0 0.0
        %6646 = vmatprep.subr.mxu0 0.0
        %6647 = vmatpush1.msra.mxu0 0.0
        %6648 = vmatprep.subr.mxu0 0.0
        %6649 = vmatpush1.msra.mxu0 0.0
        %6650 = vmatprep.subr.mxu0 0.0
        %6651 = vmatpush1.msra.mxu0 0.0
        %6652 = vmatprep.subr.mxu0 0.0
        %6653 = vmatpush1.msra.mxu0 0.0
        %6654 = vmatprep.subr.mxu0 0.0
        %6655 = vmatpush1.msra.mxu0 0.0
        %6656 = vmatprep.subr.mxu0 0.0
        %6657 = vmatpush1.msra.mxu0 0.0
        %6658 = vmatprep.subr.mxu0 0.0
        %6659 = vmatpush1.msra.mxu0 0.0
        %6660 = vmatprep.subr.mxu0 0.0
        %6661 = vmatpush1.msra.mxu0 0.0
        %6662 = vmatprep.subr.mxu0 0.0
        %6663 = vmatpush1.msra.mxu0 0.0
        %6664 = vmatprep.subr.mxu0 0.0
        %6665 = vmatpush1.msra.mxu0 0.0
        %6666 = vmatprep.subr.mxu0 0.0
        %6667 = vmatpush1.msra.mxu0 0.0
        %6668 = vmatprep.subr.mxu0 0.0
        %6669 = vmatpush1.msra.mxu0 0.0
        %6670 = vmatprep.subr.mxu0 0.0
        %6671 = vmatpush1.msra.mxu0 0.0
        %6672 = vmatprep.subr.mxu0 0.0
        %6673 = vmatpush1.msra.mxu0 0.0
        %6674 = vmatprep.subr.mxu0 0.0
        %6675 = vmatpush1.msra.mxu0 0.0
        %6676 = vmatprep.subr.mxu0 0.0
        %6677 = vmatpush1.msra.mxu0 0.0
        %6678 = vmatprep.subr.mxu0 0.0
        %6679 = vmatpush1.msra.mxu0 0.0
        %6680 = vmatprep.subr.mxu0 0.0
        %6681 = vmatpush1.msra.mxu0 0.0
        %6682 = vmatprep.subr.mxu0 0.0
        %6683 = vmatpush1.msra.mxu0 0.0
        %6684 = vmatprep.subr.mxu0 0.0
        %6685 = vmatpush1.msra.mxu0 0.0
        %6686 = vmatprep.mubr.f32.mxu0 0.0
        %v6687 = vand.u32 %v5774, 4294901760
        %6688 = vmatmul.mubr.f32.gmra.mrb[0].mxu0 %v6687
        %v6689 = vpop.f32.mrb[0].mxu0
        %v6690 = vadd.f32 %v6618, %v6689
        %v6691 = vpop.f32.mrb[0].mxu0
        %6692 = vdwg.mxu0
        %v6693 = vadd.f32 %v5754, %v6243
        %v6694 = vadd.f32 %v5755, %v6245
        %v6695 = vadd.f32 %v5756, %v6690
        %v6696 = vld [vmem:[%s141] sm:$0xff]
        %v6697 = vld [vmem:[%s141 + $0x8] sm:$0xf]
        %s6698 = scalar_lea.vmem %s1, 56
        %v6699 = vld [vmem:[%s6698] sm:$0xff]
        %v6702 = vcombine.high %v6696, %v6696
        %6703 = vrot.lane.b32.xlu0 %v6696, 91
        %v6704 = vpop.permute.xlu0 %6703
        %6705 = vrot.lane.b32.xlu0 %v6702, 91
        %v6706 = vpop.permute.xlu0 %6705
        %6707 = vrot.lane.b32.xlu0 %v6697, 91
        %v6708 = vpop.permute.xlu0 %6707
        %vm6709 = vcmask 744448
        %v6710 = vsel %vm6709, %v6704, %v6706
        %v6711 = vsel %vm6709, %v6706, %v6708
        %v6713 = vsel %vm159, %v6699, 0
        %v6715 = vsel %vm163, %v6710, 0
        %v6717 = vsel %vm163, %v6711, 0
        %v6719 = vsel %vm163, %v6708, 0
        %v6721 = vand.u32 %v6717, 4294901760
        %6722 = vmatprep.subr.mxu0 %v6721
        %v6723 = vand.u32 %v6715, 4294901760
        %6724 = vmatpush1.msra.mxu0 %v6723
        %6725 = vmatprep.subr.mxu0 0.0
        %6726 = vmatpush1.msra.mxu0 0.0
        %6727 = vmatprep.subr.mxu0 0.0
        %6728 = vmatpush1.msra.mxu0 0.0
        %6729 = vmatprep.subr.mxu0 0.0
        %6730 = vmatpush1.msra.mxu0 0.0
        %6731 = vmatprep.subr.mxu0 0.0
        %6732 = vmatpush1.msra.mxu0 0.0
        %6733 = vmatprep.subr.mxu0 0.0
        %6734 = vmatpush1.msra.mxu0 0.0
        %6735 = vmatprep.subr.mxu0 0.0
        %6736 = vmatpush1.msra.mxu0 0.0
        %6737 = vmatprep.subr.mxu0 0.0
        %6738 = vmatpush1.msra.mxu0 0.0
        %6739 = vmatprep.subr.mxu0 0.0
        %6740 = vmatpush1.msra.mxu0 0.0
        %6741 = vmatprep.subr.mxu0 0.0
        %6742 = vmatpush1.msra.mxu0 0.0
        %6743 = vmatprep.subr.mxu0 0.0
        %6744 = vmatpush1.msra.mxu0 0.0
        %6745 = vmatprep.subr.mxu0 0.0
        %6746 = vmatpush1.msra.mxu0 0.0
        %6747 = vmatprep.subr.mxu0 0.0
        %6748 = vmatpush1.msra.mxu0 0.0
        %6749 = vmatprep.subr.mxu0 0.0
        %6750 = vmatpush1.msra.mxu0 0.0
        %6751 = vmatprep.subr.mxu0 0.0
        %6752 = vmatpush1.msra.mxu0 0.0
        %6753 = vmatprep.subr.mxu0 0.0
        %6754 = vmatpush1.msra.mxu0 0.0
        %6755 = vmatprep.subr.mxu0 0.0
        %6756 = vmatpush1.msra.mxu0 0.0
        %6757 = vmatprep.subr.mxu0 0.0
        %6758 = vmatpush1.msra.mxu0 0.0
        %6759 = vmatprep.subr.mxu0 0.0
        %6760 = vmatpush1.msra.mxu0 0.0
        %6761 = vmatprep.subr.mxu0 0.0
        %6762 = vmatpush1.msra.mxu0 0.0
        %6763 = vmatprep.subr.mxu0 0.0
        %6764 = vmatpush1.msra.mxu0 0.0
        %6765 = vmatprep.subr.mxu0 0.0
        %6766 = vmatpush1.msra.mxu0 0.0
        %6767 = vmatprep.subr.mxu0 0.0
        %6768 = vmatpush1.msra.mxu0 0.0
        %6769 = vmatprep.subr.mxu0 0.0
        %6770 = vmatpush1.msra.mxu0 0.0
        %6771 = vmatprep.subr.mxu0 0.0
        %6772 = vmatpush1.msra.mxu0 0.0
        %6773 = vmatprep.subr.mxu0 0.0
        %6774 = vmatpush1.msra.mxu0 0.0
        %6775 = vmatprep.subr.mxu0 0.0
        %6776 = vmatpush1.msra.mxu0 0.0
        %6777 = vmatprep.subr.mxu0 0.0
        %6778 = vmatpush1.msra.mxu0 0.0
        %6779 = vmatprep.subr.mxu0 0.0
        %6780 = vmatpush1.msra.mxu0 0.0
        %6781 = vmatprep.subr.mxu0 0.0
        %6782 = vmatpush1.msra.mxu0 0.0
        %6783 = vmatprep.subr.mxu0 0.0
        %6784 = vmatpush1.msra.mxu0 0.0
        %6785 = vmatprep.subr.mxu0 0.0
        %6786 = vmatpush1.msra.mxu0 0.0
        %6787 = vmatprep.mubr.f32.mxu0 0.0
        %v6788 = vand.u32 %v6713, 4294901760
        %v6789 = vsub.f32 %v6713, %v6788
        %v6790 = vand.u32 %v6789, 4294901760
        %v6791 = vsub.f32 %v6789, %v6790
        %v6792 = vand.u32 %v6791, 4294901760
        %6793 = vmatmul.mubr.f32.gmra.mrb[0].mxu0 %v6792
        %v6794 = vpop.f32.mrb[0].mxu0
        %v6795 = vadd.f32 0.0, %v6794
        %v6796 = vpop.f32.mrb[0].mxu0
        %v6797 = vadd.f32 0.0, %v6796
        %6798 = vdwg.mxu0
        %v6799 = vand.u32 %v6717, 4294901760
        %v6800 = vsub.f32 %v6717, %v6799
        %v6801 = vand.u32 %v6800, 4294901760
        %v6802 = vsub.f32 %v6800, %v6801
        %v6803 = vand.u32 %v6802, 4294901760
        %6804 = vmatprep.subr.mxu0 %v6803
        %v6805 = vand.u32 %v6715, 4294901760
        %v6806 = vsub.f32 %v6715, %v6805
        %v6807 = vand.u32 %v6806, 4294901760
        %v6808 = vsub.f32 %v6806, %v6807
        %v6809 = vand.u32 %v6808, 4294901760
        %6810 = vmatpush1.msra.mxu0 %v6809
        %6811 = vmatprep.subr.mxu0 0.0
        %6812 = vmatpush1.msra.mxu0 0.0
        %6813 = vmatprep.subr.mxu0 0.0
        %6814 = vmatpush1.msra.mxu0 0.0
        %6815 = vmatprep.subr.mxu0 0.0
        %6816 = vmatpush1.msra.mxu0 0.0
        %6817 = vmatprep.subr.mxu0 0.0
        %6818 = vmatpush1.msra.mxu0 0.0
        %6819 = vmatprep.subr.mxu0 0.0
        %6820 = vmatpush1.msra.mxu0 0.0
        %6821 = vmatprep.subr.mxu0 0.0
        %6822 = vmatpush1.msra.mxu0 0.0
        %6823 = vmatprep.subr.mxu0 0.0
        %6824 = vmatpush1.msra.mxu0 0.0
        %6825 = vmatprep.subr.mxu0 0.0
        %6826 = vmatpush1.msra.mxu0 0.0
        %6827 = vmatprep.subr.mxu0 0.0
        %6828 = vmatpush1.msra.mxu0 0.0
        %6829 = vmatprep.subr.mxu0 0.0
        %6830 = vmatpush1.msra.mxu0 0.0
        %6831 = vmatprep.subr.mxu0 0.0
        %6832 = vmatpush1.msra.mxu0 0.0
        %6833 = vmatprep.subr.mxu0 0.0
        %6834 = vmatpush1.msra.mxu0 0.0
        %6835 = vmatprep.subr.mxu0 0.0
        %6836 = vmatpush1.msra.mxu0 0.0
        %6837 = vmatprep.subr.mxu0 0.0
        %6838 = vmatpush1.msra.mxu0 0.0
        %6839 = vmatprep.subr.mxu0 0.0
        %6840 = vmatpush1.msra.mxu0 0.0
        %6841 = vmatprep.subr.mxu0 0.0
        %6842 = vmatpush1.msra.mxu0 0.0
        %6843 = vmatprep.subr.mxu0 0.0
        %6844 = vmatpush1.msra.mxu0 0.0
        %6845 = vmatprep.subr.mxu0 0.0
        %6846 = vmatpush1.msra.mxu0 0.0
        %6847 = vmatprep.subr.mxu0 0.0
        %6848 = vmatpush1.msra.mxu0 0.0
        %6849 = vmatprep.subr.mxu0 0.0
        %6850 = vmatpush1.msra.mxu0 0.0
        %6851 = vmatprep.subr.mxu0 0.0
        %6852 = vmatpush1.msra.mxu0 0.0
        %6853 = vmatprep.subr.mxu0 0.0
        %6854 = vmatpush1.msra.mxu0 0.0
        %6855 = vmatprep.subr.mxu0 0.0
        %6856 = vmatpush1.msra.mxu0 0.0
        %6857 = vmatprep.subr.mxu0 0.0
        %6858 = vmatpush1.msra.mxu0 0.0
        %6859 = vmatprep.subr.mxu0 0.0
        %6860 = vmatpush1.msra.mxu0 0.0
        %6861 = vmatprep.subr.mxu0 0.0
        %6862 = vmatpush1.msra.mxu0 0.0
        %6863 = vmatprep.subr.mxu0 0.0
        %6864 = vmatpush1.msra.mxu0 0.0
        %6865 = vmatprep.subr.mxu0 0.0
        %6866 = vmatpush1.msra.mxu0 0.0
        %6867 = vmatprep.subr.mxu0 0.0
        %6868 = vmatpush1.msra.mxu0 0.0
        %6869 = vmatprep.subr.mxu0 0.0
        %6870 = vmatpush1.msra.mxu0 0.0
        %6871 = vmatprep.subr.mxu0 0.0
        %6872 = vmatpush1.msra.mxu0 0.0
        %6873 = vmatprep.mubr.f32.mxu0 0.0
        %v6874 = vand.u32 %v6713, 4294901760
        %6875 = vmatmul.mubr.f32.gmra.mrb[0].mxu0 %v6874
        %v6876 = vpop.f32.mrb[0].mxu0
        %v6877 = vadd.f32 %v6795, %v6876
        %v6878 = vpop.f32.mrb[0].mxu0
        %v6879 = vadd.f32 %v6797, %v6878
        %6880 = vdwg.mxu0
        %v6881 = vand.u32 %v6717, 4294901760
        %v6882 = vsub.f32 %v6717, %v6881
        %6883 = vmatprep.subr.mxu0 %v6882
        %v6884 = vand.u32 %v6715, 4294901760
        %v6885 = vsub.f32 %v6715, %v6884
        %6886 = vmatpush1.msra.mxu0 %v6885
        %6887 = vmatprep.subr.mxu0 0.0
        %6888 = vmatpush1.msra.mxu0 0.0
        %6889 = vmatprep.subr.mxu0 0.0
        %6890 = vmatpush1.msra.mxu0 0.0
        %6891 = vmatprep.subr.mxu0 0.0
        %6892 = vmatpush1.msra.mxu0 0.0
        %6893 = vmatprep.subr.mxu0 0.0
        %6894 = vmatpush1.msra.mxu0 0.0
        %6895 = vmatprep.subr.mxu0 0.0
        %6896 = vmatpush1.msra.mxu0 0.0
        %6897 = vmatprep.subr.mxu0 0.0
        %6898 = vmatpush1.msra.mxu0 0.0
        %6899 = vmatprep.subr.mxu0 0.0
        %6900 = vmatpush1.msra.mxu0 0.0
        %6901 = vmatprep.subr.mxu0 0.0
        %6902 = vmatpush1.msra.mxu0 0.0
        %6903 = vmatprep.subr.mxu0 0.0
        %6904 = vmatpush1.msra.mxu0 0.0
        %6905 = vmatprep.subr.mxu0 0.0
        %6906 = vmatpush1.msra.mxu0 0.0
        %6907 = vmatprep.subr.mxu0 0.0
        %6908 = vmatpush1.msra.mxu0 0.0
        %6909 = vmatprep.subr.mxu0 0.0
        %6910 = vmatpush1.msra.mxu0 0.0
        %6911 = vmatprep.subr.mxu0 0.0
        %6912 = vmatpush1.msra.mxu0 0.0
        %6913 = vmatprep.subr.mxu0 0.0
        %6914 = vmatpush1.msra.mxu0 0.0
        %6915 = vmatprep.subr.mxu0 0.0
        %6916 = vmatpush1.msra.mxu0 0.0
        %6917 = vmatprep.subr.mxu0 0.0
        %6918 = vmatpush1.msra.mxu0 0.0
        %6919 = vmatprep.subr.mxu0 0.0
        %6920 = vmatpush1.msra.mxu0 0.0
        %6921 = vmatprep.subr.mxu0 0.0
        %6922 = vmatpush1.msra.mxu0 0.0
        %6923 = vmatprep.subr.mxu0 0.0
        %6924 = vmatpush1.msra.mxu0 0.0
        %6925 = vmatprep.subr.mxu0 0.0
        %6926 = vmatpush1.msra.mxu0 0.0
        %6927 = vmatprep.subr.mxu0 0.0
        %6928 = vmatpush1.msra.mxu0 0.0
        %6929 = vmatprep.subr.mxu0 0.0
        %6930 = vmatpush1.msra.mxu0 0.0
        %6931 = vmatprep.subr.mxu0 0.0
        %6932 = vmatpush1.msra.mxu0 0.0
        %6933 = vmatprep.subr.mxu0 0.0
        %6934 = vmatpush1.msra.mxu0 0.0
        %6935 = vmatprep.subr.mxu0 0.0
        %6936 = vmatpush1.msra.mxu0 0.0
        %6937 = vmatprep.subr.mxu0 0.0
        %6938 = vmatpush1.msra.mxu0 0.0
        %6939 = vmatprep.subr.mxu0 0.0
        %6940 = vmatpush1.msra.mxu0 0.0
        %6941 = vmatprep.subr.mxu0 0.0
        %6942 = vmatpush1.msra.mxu0 0.0
        %6943 = vmatprep.subr.mxu0 0.0
        %6944 = vmatpush1.msra.mxu0 0.0
        %6945 = vmatprep.subr.mxu0 0.0
        %6946 = vmatpush1.msra.mxu0 0.0
        %6947 = vmatprep.subr.mxu0 0.0
        %6948 = vmatpush1.msra.mxu0 0.0
        %6949 = vmatprep.mubr.f32.mxu0 0.0
        %v6950 = vand.u32 %v6713, 4294901760
        %v6951 = vsub.f32 %v6713, %v6950
        %6952 = vmatmul.mubr.f32.gmra.mrb[0].mxu0 %v6951
        %v6953 = vpop.f32.mrb[0].mxu0
        %v6954 = vadd.f32 %v6877, %v6953
        %v6955 = vpop.f32.mrb[0].mxu0
        %v6956 = vadd.f32 %v6879, %v6955
        %6957 = vdwg.mxu0
        %v6958 = vand.u32 %v6717, 4294901760
        %6959 = vmatprep.subr.mxu0 %v6958
        %v6960 = vand.u32 %v6715, 4294901760
        %6961 = vmatpush1.msra.mxu0 %v6960
        %6962 = vmatprep.subr.mxu0 0.0
        %6963 = vmatpush1.msra.mxu0 0.0
        %6964 = vmatprep.subr.mxu0 0.0
        %6965 = vmatpush1.msra.mxu0 0.0
        %6966 = vmatprep.subr.mxu0 0.0
        %6967 = vmatpush1.msra.mxu0 0.0
        %6968 = vmatprep.subr.mxu0 0.0
        %6969 = vmatpush1.msra.mxu0 0.0
        %6970 = vmatprep.subr.mxu0 0.0
        %6971 = vmatpush1.msra.mxu0 0.0
        %6972 = vmatprep.subr.mxu0 0.0
        %6973 = vmatpush1.msra.mxu0 0.0
        %6974 = vmatprep.subr.mxu0 0.0
        %6975 = vmatpush1.msra.mxu0 0.0
        %6976 = vmatprep.subr.mxu0 0.0
        %6977 = vmatpush1.msra.mxu0 0.0
        %6978 = vmatprep.subr.mxu0 0.0
        %6979 = vmatpush1.msra.mxu0 0.0
        %6980 = vmatprep.subr.mxu0 0.0
        %6981 = vmatpush1.msra.mxu0 0.0
        %6982 = vmatprep.subr.mxu0 0.0
        %6983 = vmatpush1.msra.mxu0 0.0
        %6984 = vmatprep.subr.mxu0 0.0
        %6985 = vmatpush1.msra.mxu0 0.0
        %6986 = vmatprep.subr.mxu0 0.0
        %6987 = vmatpush1.msra.mxu0 0.0
        %6988 = vmatprep.subr.mxu0 0.0
        %6989 = vmatpush1.msra.mxu0 0.0
        %6990 = vmatprep.subr.mxu0 0.0
        %6991 = vmatpush1.msra.mxu0 0.0
        %6992 = vmatprep.subr.mxu0 0.0
        %6993 = vmatpush1.msra.mxu0 0.0
        %6994 = vmatprep.subr.mxu0 0.0
        %6995 = vmatpush1.msra.mxu0 0.0
        %6996 = vmatprep.subr.mxu0 0.0
        %6997 = vmatpush1.msra.mxu0 0.0
        %6998 = vmatprep.subr.mxu0 0.0
        %6999 = vmatpush1.msra.mxu0 0.0
        %7000 = vmatprep.subr.mxu0 0.0
        %7001 = vmatpush1.msra.mxu0 0.0
        %7002 = vmatprep.subr.mxu0 0.0
        %7003 = vmatpush1.msra.mxu0 0.0
        %7004 = vmatprep.subr.mxu0 0.0
        %7005 = vmatpush1.msra.mxu0 0.0
        %7006 = vmatprep.subr.mxu0 0.0
        %7007 = vmatpush1.msra.mxu0 0.0
        %7008 = vmatprep.subr.mxu0 0.0
        %7009 = vmatpush1.msra.mxu0 0.0
        %7010 = vmatprep.subr.mxu0 0.0
        %7011 = vmatpush1.msra.mxu0 0.0
        %7012 = vmatprep.subr.mxu0 0.0
        %7013 = vmatpush1.msra.mxu0 0.0
        %7014 = vmatprep.subr.mxu0 0.0
        %7015 = vmatpush1.msra.mxu0 0.0
        %7016 = vmatprep.subr.mxu0 0.0
        %7017 = vmatpush1.msra.mxu0 0.0
        %7018 = vmatprep.subr.mxu0 0.0
        %7019 = vmatpush1.msra.mxu0 0.0
        %7020 = vmatprep.subr.mxu0 0.0
        %7021 = vmatpush1.msra.mxu0 0.0
        %7022 = vmatprep.subr.mxu0 0.0
        %7023 = vmatpush1.msra.mxu0 0.0
        %7024 = vmatprep.mubr.f32.mxu0 0.0
        %v7025 = vand.u32 %v6713, 4294901760
        %v7026 = vsub.f32 %v6713, %v7025
        %v7027 = vand.u32 %v7026, 4294901760
        %7028 = vmatmul.mubr.f32.gmra.mrb[0].mxu0 %v7027
        %v7029 = vpop.f32.mrb[0].mxu0
        %v7030 = vadd.f32 %v6954, %v7029
        %v7031 = vpop.f32.mrb[0].mxu0
        %v7032 = vadd.f32 %v6956, %v7031
        %7033 = vdwg.mxu0
        %v7034 = vand.u32 %v6717, 4294901760
        %v7035 = vsub.f32 %v6717, %v7034
        %v7036 = vand.u32 %v7035, 4294901760
        %7037 = vmatprep.subr.mxu0 %v7036
        %v7038 = vand.u32 %v6715, 4294901760
        %v7039 = vsub.f32 %v6715, %v7038
        %v7040 = vand.u32 %v7039, 4294901760
        %7041 = vmatpush1.msra.mxu0 %v7040
        %7042 = vmatprep.subr.mxu0 0.0
        %7043 = vmatpush1.msra.mxu0 0.0
        %7044 = vmatprep.subr.mxu0 0.0
        %7045 = vmatpush1.msra.mxu0 0.0
        %7046 = vmatprep.subr.mxu0 0.0
        %7047 = vmatpush1.msra.mxu0 0.0
        %7048 = vmatprep.subr.mxu0 0.0
        %7049 = vmatpush1.msra.mxu0 0.0
        %7050 = vmatprep.subr.mxu0 0.0
        %7051 = vmatpush1.msra.mxu0 0.0
        %7052 = vmatprep.subr.mxu0 0.0
        %7053 = vmatpush1.msra.mxu0 0.0
        %7054 = vmatprep.subr.mxu0 0.0
        %7055 = vmatpush1.msra.mxu0 0.0
        %7056 = vmatprep.subr.mxu0 0.0
        %7057 = vmatpush1.msra.mxu0 0.0
        %7058 = vmatprep.subr.mxu0 0.0
        %7059 = vmatpush1.msra.mxu0 0.0
        %7060 = vmatprep.subr.mxu0 0.0
        %7061 = vmatpush1.msra.mxu0 0.0
        %7062 = vmatprep.subr.mxu0 0.0
        %7063 = vmatpush1.msra.mxu0 0.0
        %7064 = vmatprep.subr.mxu0 0.0
        %7065 = vmatpush1.msra.mxu0 0.0
        %7066 = vmatprep.subr.mxu0 0.0
        %7067 = vmatpush1.msra.mxu0 0.0
        %7068 = vmatprep.subr.mxu0 0.0
        %7069 = vmatpush1.msra.mxu0 0.0
        %7070 = vmatprep.subr.mxu0 0.0
        %7071 = vmatpush1.msra.mxu0 0.0
        %7072 = vmatprep.subr.mxu0 0.0
        %7073 = vmatpush1.msra.mxu0 0.0
        %7074 = vmatprep.subr.mxu0 0.0
        %7075 = vmatpush1.msra.mxu0 0.0
        %7076 = vmatprep.subr.mxu0 0.0
        %7077 = vmatpush1.msra.mxu0 0.0
        %7078 = vmatprep.subr.mxu0 0.0
        %7079 = vmatpush1.msra.mxu0 0.0
        %7080 = vmatprep.subr.mxu0 0.0
        %7081 = vmatpush1.msra.mxu0 0.0
        %7082 = vmatprep.subr.mxu0 0.0
        %7083 = vmatpush1.msra.mxu0 0.0
        %7084 = vmatprep.subr.mxu0 0.0
        %7085 = vmatpush1.msra.mxu0 0.0
        %7086 = vmatprep.subr.mxu0 0.0
        %7087 = vmatpush1.msra.mxu0 0.0
        %7088 = vmatprep.subr.mxu0 0.0
        %7089 = vmatpush1.msra.mxu0 0.0
        %7090 = vmatprep.subr.mxu0 0.0
        %7091 = vmatpush1.msra.mxu0 0.0
        %7092 = vmatprep.subr.mxu0 0.0
        %7093 = vmatpush1.msra.mxu0 0.0
        %7094 = vmatprep.subr.mxu0 0.0
        %7095 = vmatpush1.msra.mxu0 0.0
        %7096 = vmatprep.subr.mxu0 0.0
        %7097 = vmatpush1.msra.mxu0 0.0
        %7098 = vmatprep.subr.mxu0 0.0
        %7099 = vmatpush1.msra.mxu0 0.0
        %7100 = vmatprep.subr.mxu0 0.0
        %7101 = vmatpush1.msra.mxu0 0.0
        %7102 = vmatprep.subr.mxu0 0.0
        %7103 = vmatpush1.msra.mxu0 0.0
        %7104 = vmatprep.mubr.f32.mxu0 0.0
        %v7105 = vand.u32 %v6713, 4294901760
        %7106 = vmatmul.mubr.f32.gmra.mrb[0].mxu0 %v7105
        %v7107 = vpop.f32.mrb[0].mxu0
        %v7108 = vadd.f32 %v7030, %v7107
        %v7109 = vpop.f32.mrb[0].mxu0
        %v7110 = vadd.f32 %v7032, %v7109
        %7111 = vdwg.mxu0
        %v7112 = vand.u32 %v6717, 4294901760
        %7113 = vmatprep.subr.mxu0 %v7112
        %v7114 = vand.u32 %v6715, 4294901760
        %7115 = vmatpush1.msra.mxu0 %v7114
        %7116 = vmatprep.subr.mxu0 0.0
        %7117 = vmatpush1.msra.mxu0 0.0
        %7118 = vmatprep.subr.mxu0 0.0
        %7119 = vmatpush1.msra.mxu0 0.0
        %7120 = vmatprep.subr.mxu0 0.0
        %7121 = vmatpush1.msra.mxu0 0.0
        %7122 = vmatprep.subr.mxu0 0.0
        %7123 = vmatpush1.msra.mxu0 0.0
        %7124 = vmatprep.subr.mxu0 0.0
        %7125 = vmatpush1.msra.mxu0 0.0
        %7126 = vmatprep.subr.mxu0 0.0
        %7127 = vmatpush1.msra.mxu0 0.0
        %7128 = vmatprep.subr.mxu0 0.0
        %7129 = vmatpush1.msra.mxu0 0.0
        %7130 = vmatprep.subr.mxu0 0.0
        %7131 = vmatpush1.msra.mxu0 0.0
        %7132 = vmatprep.subr.mxu0 0.0
        %7133 = vmatpush1.msra.mxu0 0.0
        %7134 = vmatprep.subr.mxu0 0.0
        %7135 = vmatpush1.msra.mxu0 0.0
        %7136 = vmatprep.subr.mxu0 0.0
        %7137 = vmatpush1.msra.mxu0 0.0
        %7138 = vmatprep.subr.mxu0 0.0
        %7139 = vmatpush1.msra.mxu0 0.0
        %7140 = vmatprep.subr.mxu0 0.0
        %7141 = vmatpush1.msra.mxu0 0.0
        %7142 = vmatprep.subr.mxu0 0.0
        %7143 = vmatpush1.msra.mxu0 0.0
        %7144 = vmatprep.subr.mxu0 0.0
        %7145 = vmatpush1.msra.mxu0 0.0
        %7146 = vmatprep.subr.mxu0 0.0
        %7147 = vmatpush1.msra.mxu0 0.0
        %7148 = vmatprep.subr.mxu0 0.0
        %7149 = vmatpush1.msra.mxu0 0.0
        %7150 = vmatprep.subr.mxu0 0.0
        %7151 = vmatpush1.msra.mxu0 0.0
        %7152 = vmatprep.subr.mxu0 0.0
        %7153 = vmatpush1.msra.mxu0 0.0
        %7154 = vmatprep.subr.mxu0 0.0
        %7155 = vmatpush1.msra.mxu0 0.0
        %7156 = vmatprep.subr.mxu0 0.0
        %7157 = vmatpush1.msra.mxu0 0.0
        %7158 = vmatprep.subr.mxu0 0.0
        %7159 = vmatpush1.msra.mxu0 0.0
        %7160 = vmatprep.subr.mxu0 0.0
        %7161 = vmatpush1.msra.mxu0 0.0
        %7162 = vmatprep.subr.mxu0 0.0
        %7163 = vmatpush1.msra.mxu0 0.0
        %7164 = vmatprep.subr.mxu0 0.0
        %7165 = vmatpush1.msra.mxu0 0.0
        %7166 = vmatprep.subr.mxu0 0.0
        %7167 = vmatpush1.msra.mxu0 0.0
        %7168 = vmatprep.subr.mxu0 0.0
        %7169 = vmatpush1.msra.mxu0 0.0
        %7170 = vmatprep.subr.mxu0 0.0
        %7171 = vmatpush1.msra.mxu0 0.0
        %7172 = vmatprep.subr.mxu0 0.0
        %7173 = vmatpush1.msra.mxu0 0.0
        %7174 = vmatprep.subr.mxu0 0.0
        %7175 = vmatpush1.msra.mxu0 0.0
        %7176 = vmatprep.subr.mxu0 0.0
        %7177 = vmatpush1.msra.mxu0 0.0
        %7178 = vmatprep.mubr.f32.mxu0 0.0
        %v7179 = vand.u32 %v6713, 4294901760
        %7180 = vmatmul.mubr.f32.gmra.mrb[0].mxu0 %v7179
        %v7181 = vpop.f32.mrb[0].mxu0
        %v7182 = vadd.f32 %v7108, %v7181
        %v7183 = vpop.f32.mrb[0].mxu0
        %v7184 = vadd.f32 %v7110, %v7183
        %7185 = vdwg.mxu0
        %7186 = vmatprep.subr.mxu0 0.0
        %v7187 = vand.u32 %v6719, 4294901760
        %7188 = vmatpush1.msra.mxu0 %v7187
        %7189 = vmatprep.subr.mxu0 0.0
        %7190 = vmatpush1.msra.mxu0 0.0
        %7191 = vmatprep.subr.mxu0 0.0
        %7192 = vmatpush1.msra.mxu0 0.0
        %7193 = vmatprep.subr.mxu0 0.0
        %7194 = vmatpush1.msra.mxu0 0.0
        %7195 = vmatprep.subr.mxu0 0.0
        %7196 = vmatpush1.msra.mxu0 0.0
        %7197 = vmatprep.subr.mxu0 0.0
        %7198 = vmatpush1.msra.mxu0 0.0
        %7199 = vmatprep.subr.mxu0 0.0
        %7200 = vmatpush1.msra.mxu0 0.0
        %7201 = vmatprep.subr.mxu0 0.0
        %7202 = vmatpush1.msra.mxu0 0.0
        %7203 = vmatprep.subr.mxu0 0.0
        %7204 = vmatpush1.msra.mxu0 0.0
        %7205 = vmatprep.subr.mxu0 0.0
        %7206 = vmatpush1.msra.mxu0 0.0
        %7207 = vmatprep.subr.mxu0 0.0
        %7208 = vmatpush1.msra.mxu0 0.0
        %7209 = vmatprep.subr.mxu0 0.0
        %7210 = vmatpush1.msra.mxu0 0.0
        %7211 = vmatprep.subr.mxu0 0.0
        %7212 = vmatpush1.msra.mxu0 0.0
        %7213 = vmatprep.subr.mxu0 0.0
        %7214 = vmatpush1.msra.mxu0 0.0
        %7215 = vmatprep.subr.mxu0 0.0
        %7216 = vmatpush1.msra.mxu0 0.0
        %7217 = vmatprep.subr.mxu0 0.0
        %7218 = vmatpush1.msra.mxu0 0.0
        %7219 = vmatprep.subr.mxu0 0.0
        %7220 = vmatpush1.msra.mxu0 0.0
        %7221 = vmatprep.subr.mxu0 0.0
        %7222 = vmatpush1.msra.mxu0 0.0
        %7223 = vmatprep.subr.mxu0 0.0
        %7224 = vmatpush1.msra.mxu0 0.0
        %7225 = vmatprep.subr.mxu0 0.0
        %7226 = vmatpush1.msra.mxu0 0.0
        %7227 = vmatprep.subr.mxu0 0.0
        %7228 = vmatpush1.msra.mxu0 0.0
        %7229 = vmatprep.subr.mxu0 0.0
        %7230 = vmatpush1.msra.mxu0 0.0
        %7231 = vmatprep.subr.mxu0 0.0
        %7232 = vmatpush1.msra.mxu0 0.0
        %7233 = vmatprep.subr.mxu0 0.0
        %7234 = vmatpush1.msra.mxu0 0.0
        %7235 = vmatprep.subr.mxu0 0.0
        %7236 = vmatpush1.msra.mxu0 0.0
        %7237 = vmatprep.subr.mxu0 0.0
        %7238 = vmatpush1.msra.mxu0 0.0
        %7239 = vmatprep.subr.mxu0 0.0
        %7240 = vmatpush1.msra.mxu0 0.0
        %7241 = vmatprep.subr.mxu0 0.0
        %7242 = vmatpush1.msra.mxu0 0.0
        %7243 = vmatprep.subr.mxu0 0.0
        %7244 = vmatpush1.msra.mxu0 0.0
        %7245 = vmatprep.subr.mxu0 0.0
        %7246 = vmatpush1.msra.mxu0 0.0
        %7247 = vmatprep.subr.mxu0 0.0
        %7248 = vmatpush1.msra.mxu0 0.0
        %7249 = vmatprep.subr.mxu0 0.0
        %7250 = vmatpush1.msra.mxu0 0.0
        %7251 = vmatprep.mubr.f32.mxu0 0.0
        %v7252 = vand.u32 %v6713, 4294901760
        %v7253 = vsub.f32 %v6713, %v7252
        %v7254 = vand.u32 %v7253, 4294901760
        %v7255 = vsub.f32 %v7253, %v7254
        %v7256 = vand.u32 %v7255, 4294901760
        %7257 = vmatmul.mubr.f32.gmra.mrb[0].mxu0 %v7256
        %v7258 = vpop.f32.mrb[0].mxu0
        %v7259 = vadd.f32 0.0, %v7258
        %v7260 = vpop.f32.mrb[0].mxu0
        %7261 = vdwg.mxu0
        %7262 = vmatprep.subr.mxu0 0.0
        %v7263 = vand.u32 %v6719, 4294901760
        %v7264 = vsub.f32 %v6719, %v7263
        %v7265 = vand.u32 %v7264, 4294901760
        %v7266 = vsub.f32 %v7264, %v7265
        %v7267 = vand.u32 %v7266, 4294901760
        %7268 = vmatpush1.msra.mxu0 %v7267
        %7269 = vmatprep.subr.mxu0 0.0
        %7270 = vmatpush1.msra.mxu0 0.0
        %7271 = vmatprep.subr.mxu0 0.0
        %7272 = vmatpush1.msra.mxu0 0.0
        %7273 = vmatprep.subr.mxu0 0.0
        %7274 = vmatpush1.msra.mxu0 0.0
        %7275 = vmatprep.subr.mxu0 0.0
        %7276 = vmatpush1.msra.mxu0 0.0
        %7277 = vmatprep.subr.mxu0 0.0
        %7278 = vmatpush1.msra.mxu0 0.0
        %7279 = vmatprep.subr.mxu0 0.0
        %7280 = vmatpush1.msra.mxu0 0.0
        %7281 = vmatprep.subr.mxu0 0.0
        %7282 = vmatpush1.msra.mxu0 0.0
        %7283 = vmatprep.subr.mxu0 0.0
        %7284 = vmatpush1.msra.mxu0 0.0
        %7285 = vmatprep.subr.mxu0 0.0
        %7286 = vmatpush1.msra.mxu0 0.0
        %7287 = vmatprep.subr.mxu0 0.0
        %7288 = vmatpush1.msra.mxu0 0.0
        %7289 = vmatprep.subr.mxu0 0.0
        %7290 = vmatpush1.msra.mxu0 0.0
        %7291 = vmatprep.subr.mxu0 0.0
        %7292 = vmatpush1.msra.mxu0 0.0
        %7293 = vmatprep.subr.mxu0 0.0
        %7294 = vmatpush1.msra.mxu0 0.0
        %7295 = vmatprep.subr.mxu0 0.0
        %7296 = vmatpush1.msra.mxu0 0.0
        %7297 = vmatprep.subr.mxu0 0.0
        %7298 = vmatpush1.msra.mxu0 0.0
        %7299 = vmatprep.subr.mxu0 0.0
        %7300 = vmatpush1.msra.mxu0 0.0
        %7301 = vmatprep.subr.mxu0 0.0
        %7302 = vmatpush1.msra.mxu0 0.0
        %7303 = vmatprep.subr.mxu0 0.0
        %7304 = vmatpush1.msra.mxu0 0.0
        %7305 = vmatprep.subr.mxu0 0.0
        %7306 = vmatpush1.msra.mxu0 0.0
        %7307 = vmatprep.subr.mxu0 0.0
        %7308 = vmatpush1.msra.mxu0 0.0
        %7309 = vmatprep.subr.mxu0 0.0
        %7310 = vmatpush1.msra.mxu0 0.0
        %7311 = vmatprep.subr.mxu0 0.0
        %7312 = vmatpush1.msra.mxu0 0.0
        %7313 = vmatprep.subr.mxu0 0.0
        %7314 = vmatpush1.msra.mxu0 0.0
        %7315 = vmatprep.subr.mxu0 0.0
        %7316 = vmatpush1.msra.mxu0 0.0
        %7317 = vmatprep.subr.mxu0 0.0
        %7318 = vmatpush1.msra.mxu0 0.0
        %7319 = vmatprep.subr.mxu0 0.0
        %7320 = vmatpush1.msra.mxu0 0.0
        %7321 = vmatprep.subr.mxu0 0.0
        %7322 = vmatpush1.msra.mxu0 0.0
        %7323 = vmatprep.subr.mxu0 0.0
        %7324 = vmatpush1.msra.mxu0 0.0
        %7325 = vmatprep.subr.mxu0 0.0
        %7326 = vmatpush1.msra.mxu0 0.0
        %7327 = vmatprep.subr.mxu0 0.0
        %7328 = vmatpush1.msra.mxu0 0.0
        %7329 = vmatprep.subr.mxu0 0.0
        %7330 = vmatpush1.msra.mxu0 0.0
        %7331 = vmatprep.mubr.f32.mxu0 0.0
        %v7332 = vand.u32 %v6713, 4294901760
        %7333 = vmatmul.mubr.f32.gmra.mrb[0].mxu0 %v7332
        %v7334 = vpop.f32.mrb[0].mxu0
        %v7335 = vadd.f32 %v7259, %v7334
        %v7336 = vpop.f32.mrb[0].mxu0
        %7337 = vdwg.mxu0
        %7338 = vmatprep.subr.mxu0 0.0
        %v7339 = vand.u32 %v6719, 4294901760
        %v7340 = vsub.f32 %v6719, %v7339
        %7341 = vmatpush1.msra.mxu0 %v7340
        %7342 = vmatprep.subr.mxu0 0.0
        %7343 = vmatpush1.msra.mxu0 0.0
        %7344 = vmatprep.subr.mxu0 0.0
        %7345 = vmatpush1.msra.mxu0 0.0
        %7346 = vmatprep.subr.mxu0 0.0
        %7347 = vmatpush1.msra.mxu0 0.0
        %7348 = vmatprep.subr.mxu0 0.0
        %7349 = vmatpush1.msra.mxu0 0.0
        %7350 = vmatprep.subr.mxu0 0.0
        %7351 = vmatpush1.msra.mxu0 0.0
        %7352 = vmatprep.subr.mxu0 0.0
        %7353 = vmatpush1.msra.mxu0 0.0
        %7354 = vmatprep.subr.mxu0 0.0
        %7355 = vmatpush1.msra.mxu0 0.0
        %7356 = vmatprep.subr.mxu0 0.0
        %7357 = vmatpush1.msra.mxu0 0.0
        %7358 = vmatprep.subr.mxu0 0.0
        %7359 = vmatpush1.msra.mxu0 0.0
        %7360 = vmatprep.subr.mxu0 0.0
        %7361 = vmatpush1.msra.mxu0 0.0
        %7362 = vmatprep.subr.mxu0 0.0
        %7363 = vmatpush1.msra.mxu0 0.0
        %7364 = vmatprep.subr.mxu0 0.0
        %7365 = vmatpush1.msra.mxu0 0.0
        %7366 = vmatprep.subr.mxu0 0.0
        %7367 = vmatpush1.msra.mxu0 0.0
        %7368 = vmatprep.subr.mxu0 0.0
        %7369 = vmatpush1.msra.mxu0 0.0
        %7370 = vmatprep.subr.mxu0 0.0
        %7371 = vmatpush1.msra.mxu0 0.0
        %7372 = vmatprep.subr.mxu0 0.0
        %7373 = vmatpush1.msra.mxu0 0.0
        %7374 = vmatprep.subr.mxu0 0.0
        %7375 = vmatpush1.msra.mxu0 0.0
        %7376 = vmatprep.subr.mxu0 0.0
        %7377 = vmatpush1.msra.mxu0 0.0
        %7378 = vmatprep.subr.mxu0 0.0
        %7379 = vmatpush1.msra.mxu0 0.0
        %7380 = vmatprep.subr.mxu0 0.0
        %7381 = vmatpush1.msra.mxu0 0.0
        %7382 = vmatprep.subr.mxu0 0.0
        %7383 = vmatpush1.msra.mxu0 0.0
        %7384 = vmatprep.subr.mxu0 0.0
        %7385 = vmatpush1.msra.mxu0 0.0
        %7386 = vmatprep.subr.mxu0 0.0
        %7387 = vmatpush1.msra.mxu0 0.0
        %7388 = vmatprep.subr.mxu0 0.0
        %7389 = vmatpush1.msra.mxu0 0.0
        %7390 = vmatprep.subr.mxu0 0.0
        %7391 = vmatpush1.msra.mxu0 0.0
        %7392 = vmatprep.subr.mxu0 0.0
        %7393 = vmatpush1.msra.mxu0 0.0
        %7394 = vmatprep.subr.mxu0 0.0
        %7395 = vmatpush1.msra.mxu0 0.0
        %7396 = vmatprep.subr.mxu0 0.0
        %7397 = vmatpush1.msra.mxu0 0.0
        %7398 = vmatprep.subr.mxu0 0.0
        %7399 = vmatpush1.msra.mxu0 0.0
        %7400 = vmatprep.subr.mxu0 0.0
        %7401 = vmatpush1.msra.mxu0 0.0
        %7402 = vmatprep.subr.mxu0 0.0
        %7403 = vmatpush1.msra.mxu0 0.0
        %7404 = vmatprep.mubr.f32.mxu0 0.0
        %v7405 = vand.u32 %v6713, 4294901760
        %v7406 = vsub.f32 %v6713, %v7405
        %7407 = vmatmul.mubr.f32.gmra.mrb[0].mxu0 %v7406
        %v7408 = vpop.f32.mrb[0].mxu0
        %v7409 = vadd.f32 %v7335, %v7408
        %v7410 = vpop.f32.mrb[0].mxu0
        %7411 = vdwg.mxu0
        %7412 = vmatprep.subr.mxu0 0.0
        %v7413 = vand.u32 %v6719, 4294901760
        %7414 = vmatpush1.msra.mxu0 %v7413
        %7415 = vmatprep.subr.mxu0 0.0
        %7416 = vmatpush1.msra.mxu0 0.0
        %7417 = vmatprep.subr.mxu0 0.0
        %7418 = vmatpush1.msra.mxu0 0.0
        %7419 = vmatprep.subr.mxu0 0.0
        %7420 = vmatpush1.msra.mxu0 0.0
        %7421 = vmatprep.subr.mxu0 0.0
        %7422 = vmatpush1.msra.mxu0 0.0
        %7423 = vmatprep.subr.mxu0 0.0
        %7424 = vmatpush1.msra.mxu0 0.0
        %7425 = vmatprep.subr.mxu0 0.0
        %7426 = vmatpush1.msra.mxu0 0.0
        %7427 = vmatprep.subr.mxu0 0.0
        %7428 = vmatpush1.msra.mxu0 0.0
        %7429 = vmatprep.subr.mxu0 0.0
        %7430 = vmatpush1.msra.mxu0 0.0
        %7431 = vmatprep.subr.mxu0 0.0
        %7432 = vmatpush1.msra.mxu0 0.0
        %7433 = vmatprep.subr.mxu0 0.0
        %7434 = vmatpush1.msra.mxu0 0.0
        %7435 = vmatprep.subr.mxu0 0.0
        %7436 = vmatpush1.msra.mxu0 0.0
        %7437 = vmatprep.subr.mxu0 0.0
        %7438 = vmatpush1.msra.mxu0 0.0
        %7439 = vmatprep.subr.mxu0 0.0
        %7440 = vmatpush1.msra.mxu0 0.0
        %7441 = vmatprep.subr.mxu0 0.0
        %7442 = vmatpush1.msra.mxu0 0.0
        %7443 = vmatprep.subr.mxu0 0.0
        %7444 = vmatpush1.msra.mxu0 0.0
        %7445 = vmatprep.subr.mxu0 0.0
        %7446 = vmatpush1.msra.mxu0 0.0
        %7447 = vmatprep.subr.mxu0 0.0
        %7448 = vmatpush1.msra.mxu0 0.0
        %7449 = vmatprep.subr.mxu0 0.0
        %7450 = vmatpush1.msra.mxu0 0.0
        %7451 = vmatprep.subr.mxu0 0.0
        %7452 = vmatpush1.msra.mxu0 0.0
        %7453 = vmatprep.subr.mxu0 0.0
        %7454 = vmatpush1.msra.mxu0 0.0
        %7455 = vmatprep.subr.mxu0 0.0
        %7456 = vmatpush1.msra.mxu0 0.0
        %7457 = vmatprep.subr.mxu0 0.0
        %7458 = vmatpush1.msra.mxu0 0.0
        %7459 = vmatprep.subr.mxu0 0.0
        %7460 = vmatpush1.msra.mxu0 0.0
        %7461 = vmatprep.subr.mxu0 0.0
        %7462 = vmatpush1.msra.mxu0 0.0
        %7463 = vmatprep.subr.mxu0 0.0
        %7464 = vmatpush1.msra.mxu0 0.0
        %7465 = vmatprep.subr.mxu0 0.0
        %7466 = vmatpush1.msra.mxu0 0.0
        %7467 = vmatprep.subr.mxu0 0.0
        %7468 = vmatpush1.msra.mxu0 0.0
        %7469 = vmatprep.subr.mxu0 0.0
        %7470 = vmatpush1.msra.mxu0 0.0
        %7471 = vmatprep.subr.mxu0 0.0
        %7472 = vmatpush1.msra.mxu0 0.0
        %7473 = vmatprep.subr.mxu0 0.0
        %7474 = vmatpush1.msra.mxu0 0.0
        %7475 = vmatprep.subr.mxu0 0.0
        %7476 = vmatpush1.msra.mxu0 0.0
        %7477 = vmatprep.mubr.f32.mxu0 0.0
        %v7478 = vand.u32 %v6713, 4294901760
        %v7479 = vsub.f32 %v6713, %v7478
        %v7480 = vand.u32 %v7479, 4294901760
        %7481 = vmatmul.mubr.f32.gmra.mrb[0].mxu0 %v7480
        %v7482 = vpop.f32.mrb[0].mxu0
        %v7483 = vadd.f32 %v7409, %v7482
        %v7484 = vpop.f32.mrb[0].mxu0
        %7485 = vdwg.mxu0
        %7486 = vmatprep.subr.mxu0 0.0
        %v7487 = vand.u32 %v6719, 4294901760
        %v7488 = vsub.f32 %v6719, %v7487
        %v7489 = vand.u32 %v7488, 4294901760
        %7490 = vmatpush1.msra.mxu0 %v7489
        %7491 = vmatprep.subr.mxu0 0.0
        %7492 = vmatpush1.msra.mxu0 0.0
        %7493 = vmatprep.subr.mxu0 0.0
        %7494 = vmatpush1.msra.mxu0 0.0
        %7495 = vmatprep.subr.mxu0 0.0
        %7496 = vmatpush1.msra.mxu0 0.0
        %7497 = vmatprep.subr.mxu0 0.0
        %7498 = vmatpush1.msra.mxu0 0.0
        %7499 = vmatprep.subr.mxu0 0.0
        %7500 = vmatpush1.msra.mxu0 0.0
        %7501 = vmatprep.subr.mxu0 0.0
        %7502 = vmatpush1.msra.mxu0 0.0
        %7503 = vmatprep.subr.mxu0 0.0
        %7504 = vmatpush1.msra.mxu0 0.0
        %7505 = vmatprep.subr.mxu0 0.0
        %7506 = vmatpush1.msra.mxu0 0.0
        %7507 = vmatprep.subr.mxu0 0.0
        %7508 = vmatpush1.msra.mxu0 0.0
        %7509 = vmatprep.subr.mxu0 0.0
        %7510 = vmatpush1.msra.mxu0 0.0
        %7511 = vmatprep.subr.mxu0 0.0
        %7512 = vmatpush1.msra.mxu0 0.0
        %7513 = vmatprep.subr.mxu0 0.0
        %7514 = vmatpush1.msra.mxu0 0.0
        %7515 = vmatprep.subr.mxu0 0.0
        %7516 = vmatpush1.msra.mxu0 0.0
        %7517 = vmatprep.subr.mxu0 0.0
        %7518 = vmatpush1.msra.mxu0 0.0
        %7519 = vmatprep.subr.mxu0 0.0
        %7520 = vmatpush1.msra.mxu0 0.0
        %7521 = vmatprep.subr.mxu0 0.0
        %7522 = vmatpush1.msra.mxu0 0.0
        %7523 = vmatprep.subr.mxu0 0.0
        %7524 = vmatpush1.msra.mxu0 0.0
        %7525 = vmatprep.subr.mxu0 0.0
        %7526 = vmatpush1.msra.mxu0 0.0
        %7527 = vmatprep.subr.mxu0 0.0
        %7528 = vmatpush1.msra.mxu0 0.0
        %7529 = vmatprep.subr.mxu0 0.0
        %7530 = vmatpush1.msra.mxu0 0.0
        %7531 = vmatprep.subr.mxu0 0.0
        %7532 = vmatpush1.msra.mxu0 0.0
        %7533 = vmatprep.subr.mxu0 0.0
        %7534 = vmatpush1.msra.mxu0 0.0
        %7535 = vmatprep.subr.mxu0 0.0
        %7536 = vmatpush1.msra.mxu0 0.0
        %7537 = vmatprep.subr.mxu0 0.0
        %7538 = vmatpush1.msra.mxu0 0.0
        %7539 = vmatprep.subr.mxu0 0.0
        %7540 = vmatpush1.msra.mxu0 0.0
        %7541 = vmatprep.subr.mxu0 0.0
        %7542 = vmatpush1.msra.mxu0 0.0
        %7543 = vmatprep.subr.mxu0 0.0
        %7544 = vmatpush1.msra.mxu0 0.0
        %7545 = vmatprep.subr.mxu0 0.0
        %7546 = vmatpush1.msra.mxu0 0.0
        %7547 = vmatprep.subr.mxu0 0.0
        %7548 = vmatpush1.msra.mxu0 0.0
        %7549 = vmatprep.subr.mxu0 0.0
        %7550 = vmatpush1.msra.mxu0 0.0
        %7551 = vmatprep.subr.mxu0 0.0
        %7552 = vmatpush1.msra.mxu0 0.0
        %7553 = vmatprep.mubr.f32.mxu0 0.0
        %v7554 = vand.u32 %v6713, 4294901760
        %7555 = vmatmul.mubr.f32.gmra.mrb[0].mxu0 %v7554
        %v7556 = vpop.f32.mrb[0].mxu0
        %v7557 = vadd.f32 %v7483, %v7556
        %v7558 = vpop.f32.mrb[0].mxu0
        %7559 = vdwg.mxu0
        %7560 = vmatprep.subr.mxu0 0.0
        %v7561 = vand.u32 %v6719, 4294901760
        %7562 = vmatpush1.msra.mxu0 %v7561
        %7563 = vmatprep.subr.mxu0 0.0
        %7564 = vmatpush1.msra.mxu0 0.0
        %7565 = vmatprep.subr.mxu0 0.0
        %7566 = vmatpush1.msra.mxu0 0.0
        %7567 = vmatprep.subr.mxu0 0.0
        %7568 = vmatpush1.msra.mxu0 0.0
        %7569 = vmatprep.subr.mxu0 0.0
        %7570 = vmatpush1.msra.mxu0 0.0
        %7571 = vmatprep.subr.mxu0 0.0
        %7572 = vmatpush1.msra.mxu0 0.0
        %7573 = vmatprep.subr.mxu0 0.0
        %7574 = vmatpush1.msra.mxu0 0.0
        %7575 = vmatprep.subr.mxu0 0.0
        %7576 = vmatpush1.msra.mxu0 0.0
        %7577 = vmatprep.subr.mxu0 0.0
        %7578 = vmatpush1.msra.mxu0 0.0
        %7579 = vmatprep.subr.mxu0 0.0
        %7580 = vmatpush1.msra.mxu0 0.0
        %7581 = vmatprep.subr.mxu0 0.0
        %7582 = vmatpush1.msra.mxu0 0.0
        %7583 = vmatprep.subr.mxu0 0.0
        %7584 = vmatpush1.msra.mxu0 0.0
        %7585 = vmatprep.subr.mxu0 0.0
        %7586 = vmatpush1.msra.mxu0 0.0
        %7587 = vmatprep.subr.mxu0 0.0
        %7588 = vmatpush1.msra.mxu0 0.0
        %7589 = vmatprep.subr.mxu0 0.0
        %7590 = vmatpush1.msra.mxu0 0.0
        %7591 = vmatprep.subr.mxu0 0.0
        %7592 = vmatpush1.msra.mxu0 0.0
        %7593 = vmatprep.subr.mxu0 0.0
        %7594 = vmatpush1.msra.mxu0 0.0
        %7595 = vmatprep.subr.mxu0 0.0
        %7596 = vmatpush1.msra.mxu0 0.0
        %7597 = vmatprep.subr.mxu0 0.0
        %7598 = vmatpush1.msra.mxu0 0.0
        %7599 = vmatprep.subr.mxu0 0.0
        %7600 = vmatpush1.msra.mxu0 0.0
        %7601 = vmatprep.subr.mxu0 0.0
        %7602 = vmatpush1.msra.mxu0 0.0
        %7603 = vmatprep.subr.mxu0 0.0
        %7604 = vmatpush1.msra.mxu0 0.0
        %7605 = vmatprep.subr.mxu0 0.0
        %7606 = vmatpush1.msra.mxu0 0.0
        %7607 = vmatprep.subr.mxu0 0.0
        %7608 = vmatpush1.msra.mxu0 0.0
        %7609 = vmatprep.subr.mxu0 0.0
        %7610 = vmatpush1.msra.mxu0 0.0
        %7611 = vmatprep.subr.mxu0 0.0
        %7612 = vmatpush1.msra.mxu0 0.0
        %7613 = vmatprep.subr.mxu0 0.0
        %7614 = vmatpush1.msra.mxu0 0.0
        %7615 = vmatprep.subr.mxu0 0.0
        %7616 = vmatpush1.msra.mxu0 0.0
        %7617 = vmatprep.subr.mxu0 0.0
        %7618 = vmatpush1.msra.mxu0 0.0
        %7619 = vmatprep.subr.mxu0 0.0
        %7620 = vmatpush1.msra.mxu0 0.0
        %7621 = vmatprep.subr.mxu0 0.0
        %7622 = vmatpush1.msra.mxu0 0.0
        %7623 = vmatprep.subr.mxu0 0.0
        %7624 = vmatpush1.msra.mxu0 0.0
        %7625 = vmatprep.mubr.f32.mxu0 0.0
        %v7626 = vand.u32 %v6713, 4294901760
        %7627 = vmatmul.mubr.f32.gmra.mrb[0].mxu0 %v7626
        %v7628 = vpop.f32.mrb[0].mxu0
        %v7629 = vadd.f32 %v7557, %v7628
        %v7630 = vpop.f32.mrb[0].mxu0
        %7631 = vdwg.mxu0
        %v7632 = vadd.f32 %v6693, %v7182
        %v7633 = vadd.f32 %v6694, %v7184
        %v7634 = vadd.f32 %v6695, %v7629
        %v7635 = vld [vmem:[%s141] sm:$0xff]
        %v7636 = vld [vmem:[%s141 + $0x8] sm:$0xf]
        %s7637 = scalar_lea.vmem %s1, 64
        %v7638 = vld [vmem:[%s7637] sm:$0xff]
        %v7641 = vcombine.high %v7635, %v7635
        %7642 = vrot.lane.b32.xlu0 %v7635, 90
        %v7643 = vpop.permute.xlu0 %7642
        %7644 = vrot.lane.b32.xlu0 %v7641, 90
        %v7645 = vpop.permute.xlu0 %7644
        %7646 = vrot.lane.b32.xlu0 %v7636, 90
        %v7647 = vpop.permute.xlu0 %7646
        %vm7648 = vcmask 736256
        %v7649 = vsel %vm7648, %v7643, %v7645
        %v7650 = vsel %vm7648, %v7645, %v7647
        %v7652 = vsel %vm159, %v7638, 0
        %v7654 = vsel %vm163, %v7649, 0
        %v7656 = vsel %vm163, %v7650, 0
        %v7658 = vsel %vm163, %v7647, 0
        %v7660 = vand.u32 %v7656, 4294901760
        %7661 = vmatprep.subr.mxu0 %v7660
        %v7662 = vand.u32 %v7654, 4294901760
        %7663 = vmatpush1.msra.mxu0 %v7662
        %7664 = vmatprep.subr.mxu0 0.0
        %7665 = vmatpush1.msra.mxu0 0.0
        %7666 = vmatprep.subr.mxu0 0.0
        %7667 = vmatpush1.msra.mxu0 0.0
        %7668 = vmatprep.subr.mxu0 0.0
        %7669 = vmatpush1.msra.mxu0 0.0
        %7670 = vmatprep.subr.mxu0 0.0
        %7671 = vmatpush1.msra.mxu0 0.0
        %7672 = vmatprep.subr.mxu0 0.0
        %7673 = vmatpush1.msra.mxu0 0.0
        %7674 = vmatprep.subr.mxu0 0.0
        %7675 = vmatpush1.msra.mxu0 0.0
        %7676 = vmatprep.subr.mxu0 0.0
        %7677 = vmatpush1.msra.mxu0 0.0
        %7678 = vmatprep.subr.mxu0 0.0
        %7679 = vmatpush1.msra.mxu0 0.0
        %7680 = vmatprep.subr.mxu0 0.0
        %7681 = vmatpush1.msra.mxu0 0.0
        %7682 = vmatprep.subr.mxu0 0.0
        %7683 = vmatpush1.msra.mxu0 0.0
        %7684 = vmatprep.subr.mxu0 0.0
        %7685 = vmatpush1.msra.mxu0 0.0
        %7686 = vmatprep.subr.mxu0 0.0
        %7687 = vmatpush1.msra.mxu0 0.0
        %7688 = vmatprep.subr.mxu0 0.0
        %7689 = vmatpush1.msra.mxu0 0.0
        %7690 = vmatprep.subr.mxu0 0.0
        %7691 = vmatpush1.msra.mxu0 0.0
        %7692 = vmatprep.subr.mxu0 0.0
        %7693 = vmatpush1.msra.mxu0 0.0
        %7694 = vmatprep.subr.mxu0 0.0
        %7695 = vmatpush1.msra.mxu0 0.0
        %7696 = vmatprep.subr.mxu0 0.0
        %7697 = vmatpush1.msra.mxu0 0.0
        %7698 = vmatprep.subr.mxu0 0.0
        %7699 = vmatpush1.msra.mxu0 0.0
        %7700 = vmatprep.subr.mxu0 0.0
        %7701 = vmatpush1.msra.mxu0 0.0
        %7702 = vmatprep.subr.mxu0 0.0
        %7703 = vmatpush1.msra.mxu0 0.0
        %7704 = vmatprep.subr.mxu0 0.0
        %7705 = vmatpush1.msra.mxu0 0.0
        %7706 = vmatprep.subr.mxu0 0.0
        %7707 = vmatpush1.msra.mxu0 0.0
        %7708 = vmatprep.subr.mxu0 0.0
        %7709 = vmatpush1.msra.mxu0 0.0
        %7710 = vmatprep.subr.mxu0 0.0
        %7711 = vmatpush1.msra.mxu0 0.0
        %7712 = vmatprep.subr.mxu0 0.0
        %7713 = vmatpush1.msra.mxu0 0.0
        %7714 = vmatprep.subr.mxu0 0.0
        %7715 = vmatpush1.msra.mxu0 0.0
        %7716 = vmatprep.subr.mxu0 0.0
        %7717 = vmatpush1.msra.mxu0 0.0
        %7718 = vmatprep.subr.mxu0 0.0
        %7719 = vmatpush1.msra.mxu0 0.0
        %7720 = vmatprep.subr.mxu0 0.0
        %7721 = vmatpush1.msra.mxu0 0.0
        %7722 = vmatprep.subr.mxu0 0.0
        %7723 = vmatpush1.msra.mxu0 0.0
        %7724 = vmatprep.subr.mxu0 0.0
        %7725 = vmatpush1.msra.mxu0 0.0
        %7726 = vmatprep.mubr.f32.mxu0 0.0
        %v7727 = vand.u32 %v7652, 4294901760
        %v7728 = vsub.f32 %v7652, %v7727
        %v7729 = vand.u32 %v7728, 4294901760
        %v7730 = vsub.f32 %v7728, %v7729
        %v7731 = vand.u32 %v7730, 4294901760
        %7732 = vmatmul.mubr.f32.gmra.mrb[0].mxu0 %v7731
        %v7733 = vpop.f32.mrb[0].mxu0
        %v7734 = vadd.f32 0.0, %v7733
        %v7735 = vpop.f32.mrb[0].mxu0
        %v7736 = vadd.f32 0.0, %v7735
        %7737 = vdwg.mxu0
        %v7738 = vand.u32 %v7656, 4294901760
        %v7739 = vsub.f32 %v7656, %v7738
        %v7740 = vand.u32 %v7739, 4294901760
        %v7741 = vsub.f32 %v7739, %v7740
        %v7742 = vand.u32 %v7741, 4294901760
        %7743 = vmatprep.subr.mxu0 %v7742
        %v7744 = vand.u32 %v7654, 4294901760
        %v7745 = vsub.f32 %v7654, %v7744
        %v7746 = vand.u32 %v7745, 4294901760
        %v7747 = vsub.f32 %v7745, %v7746
        %v7748 = vand.u32 %v7747, 4294901760
        %7749 = vmatpush1.msra.mxu0 %v7748
        %7750 = vmatprep.subr.mxu0 0.0
        %7751 = vmatpush1.msra.mxu0 0.0
        %7752 = vmatprep.subr.mxu0 0.0
        %7753 = vmatpush1.msra.mxu0 0.0
        %7754 = vmatprep.subr.mxu0 0.0
        %7755 = vmatpush1.msra.mxu0 0.0
        %7756 = vmatprep.subr.mxu0 0.0
        %7757 = vmatpush1.msra.mxu0 0.0
        %7758 = vmatprep.subr.mxu0 0.0
        %7759 = vmatpush1.msra.mxu0 0.0
        %7760 = vmatprep.subr.mxu0 0.0
        %7761 = vmatpush1.msra.mxu0 0.0
        %7762 = vmatprep.subr.mxu0 0.0
        %7763 = vmatpush1.msra.mxu0 0.0
        %7764 = vmatprep.subr.mxu0 0.0
        %7765 = vmatpush1.msra.mxu0 0.0
        %7766 = vmatprep.subr.mxu0 0.0
        %7767 = vmatpush1.msra.mxu0 0.0
        %7768 = vmatprep.subr.mxu0 0.0
        %7769 = vmatpush1.msra.mxu0 0.0
        %7770 = vmatprep.subr.mxu0 0.0
        %7771 = vmatpush1.msra.mxu0 0.0
        %7772 = vmatprep.subr.mxu0 0.0
        %7773 = vmatpush1.msra.mxu0 0.0
        %7774 = vmatprep.subr.mxu0 0.0
        %7775 = vmatpush1.msra.mxu0 0.0
        %7776 = vmatprep.subr.mxu0 0.0
        %7777 = vmatpush1.msra.mxu0 0.0
        %7778 = vmatprep.subr.mxu0 0.0
        %7779 = vmatpush1.msra.mxu0 0.0
        %7780 = vmatprep.subr.mxu0 0.0
        %7781 = vmatpush1.msra.mxu0 0.0
        %7782 = vmatprep.subr.mxu0 0.0
        %7783 = vmatpush1.msra.mxu0 0.0
        %7784 = vmatprep.subr.mxu0 0.0
        %7785 = vmatpush1.msra.mxu0 0.0
        %7786 = vmatprep.subr.mxu0 0.0
        %7787 = vmatpush1.msra.mxu0 0.0
        %7788 = vmatprep.subr.mxu0 0.0
        %7789 = vmatpush1.msra.mxu0 0.0
        %7790 = vmatprep.subr.mxu0 0.0
        %7791 = vmatpush1.msra.mxu0 0.0
        %7792 = vmatprep.subr.mxu0 0.0
        %7793 = vmatpush1.msra.mxu0 0.0
        %7794 = vmatprep.subr.mxu0 0.0
        %7795 = vmatpush1.msra.mxu0 0.0
        %7796 = vmatprep.subr.mxu0 0.0
        %7797 = vmatpush1.msra.mxu0 0.0
        %7798 = vmatprep.subr.mxu0 0.0
        %7799 = vmatpush1.msra.mxu0 0.0
        %7800 = vmatprep.subr.mxu0 0.0
        %7801 = vmatpush1.msra.mxu0 0.0
        %7802 = vmatprep.subr.mxu0 0.0
        %7803 = vmatpush1.msra.mxu0 0.0
        %7804 = vmatprep.subr.mxu0 0.0
        %7805 = vmatpush1.msra.mxu0 0.0
        %7806 = vmatprep.subr.mxu0 0.0
        %7807 = vmatpush1.msra.mxu0 0.0
        %7808 = vmatprep.subr.mxu0 0.0
        %7809 = vmatpush1.msra.mxu0 0.0
        %7810 = vmatprep.subr.mxu0 0.0
        %7811 = vmatpush1.msra.mxu0 0.0
        %7812 = vmatprep.mubr.f32.mxu0 0.0
        %v7813 = vand.u32 %v7652, 4294901760
        %7814 = vmatmul.mubr.f32.gmra.mrb[0].mxu0 %v7813
        %v7815 = vpop.f32.mrb[0].mxu0
        %v7816 = vadd.f32 %v7734, %v7815
        %v7817 = vpop.f32.mrb[0].mxu0
        %v7818 = vadd.f32 %v7736, %v7817
        %7819 = vdwg.mxu0
        %v7820 = vand.u32 %v7656, 4294901760
        %v7821 = vsub.f32 %v7656, %v7820
        %7822 = vmatprep.subr.mxu0 %v7821
        %v7823 = vand.u32 %v7654, 4294901760
        %v7824 = vsub.f32 %v7654, %v7823
        %7825 = vmatpush1.msra.mxu0 %v7824
        %7826 = vmatprep.subr.mxu0 0.0
        %7827 = vmatpush1.msra.mxu0 0.0
        %7828 = vmatprep.subr.mxu0 0.0
        %7829 = vmatpush1.msra.mxu0 0.0
        %7830 = vmatprep.subr.mxu0 0.0
        %7831 = vmatpush1.msra.mxu0 0.0
        %7832 = vmatprep.subr.mxu0 0.0
        %7833 = vmatpush1.msra.mxu0 0.0
        %7834 = vmatprep.subr.mxu0 0.0
        %7835 = vmatpush1.msra.mxu0 0.0
        %7836 = vmatprep.subr.mxu0 0.0
        %7837 = vmatpush1.msra.mxu0 0.0
        %7838 = vmatprep.subr.mxu0 0.0
        %7839 = vmatpush1.msra.mxu0 0.0
        %7840 = vmatprep.subr.mxu0 0.0
        %7841 = vmatpush1.msra.mxu0 0.0
        %7842 = vmatprep.subr.mxu0 0.0
        %7843 = vmatpush1.msra.mxu0 0.0
        %7844 = vmatprep.subr.mxu0 0.0
        %7845 = vmatpush1.msra.mxu0 0.0
        %7846 = vmatprep.subr.mxu0 0.0
        %7847 = vmatpush1.msra.mxu0 0.0
        %7848 = vmatprep.subr.mxu0 0.0
        %7849 = vmatpush1.msra.mxu0 0.0
        %7850 = vmatprep.subr.mxu0 0.0
        %7851 = vmatpush1.msra.mxu0 0.0
        %7852 = vmatprep.subr.mxu0 0.0
        %7853 = vmatpush1.msra.mxu0 0.0
        %7854 = vmatprep.subr.mxu0 0.0
        %7855 = vmatpush1.msra.mxu0 0.0
        %7856 = vmatprep.subr.mxu0 0.0
        %7857 = vmatpush1.msra.mxu0 0.0
        %7858 = vmatprep.subr.mxu0 0.0
        %7859 = vmatpush1.msra.mxu0 0.0
        %7860 = vmatprep.subr.mxu0 0.0
        %7861 = vmatpush1.msra.mxu0 0.0
        %7862 = vmatprep.subr.mxu0 0.0
        %7863 = vmatpush1.msra.mxu0 0.0
        %7864 = vmatprep.subr.mxu0 0.0
        %7865 = vmatpush1.msra.mxu0 0.0
        %7866 = vmatprep.subr.mxu0 0.0
        %7867 = vmatpush1.msra.mxu0 0.0
        %7868 = vmatprep.subr.mxu0 0.0
        %7869 = vmatpush1.msra.mxu0 0.0
        %7870 = vmatprep.subr.mxu0 0.0
        %7871 = vmatpush1.msra.mxu0 0.0
        %7872 = vmatprep.subr.mxu0 0.0
        %7873 = vmatpush1.msra.mxu0 0.0
        %7874 = vmatprep.subr.mxu0 0.0
        %7875 = vmatpush1.msra.mxu0 0.0
        %7876 = vmatprep.subr.mxu0 0.0
        %7877 = vmatpush1.msra.mxu0 0.0
        %7878 = vmatprep.subr.mxu0 0.0
        %7879 = vmatpush1.msra.mxu0 0.0
        %7880 = vmatprep.subr.mxu0 0.0
        %7881 = vmatpush1.msra.mxu0 0.0
        %7882 = vmatprep.subr.mxu0 0.0
        %7883 = vmatpush1.msra.mxu0 0.0
        %7884 = vmatprep.subr.mxu0 0.0
        %7885 = vmatpush1.msra.mxu0 0.0
        %7886 = vmatprep.subr.mxu0 0.0
        %7887 = vmatpush1.msra.mxu0 0.0
        %7888 = vmatprep.mubr.f32.mxu0 0.0
        %v7889 = vand.u32 %v7652, 4294901760
        %v7890 = vsub.f32 %v7652, %v7889
        %7891 = vmatmul.mubr.f32.gmra.mrb[0].mxu0 %v7890
        %v7892 = vpop.f32.mrb[0].mxu0
        %v7893 = vadd.f32 %v7816, %v7892
        %v7894 = vpop.f32.mrb[0].mxu0
        %v7895 = vadd.f32 %v7818, %v7894
        %7896 = vdwg.mxu0
        %v7897 = vand.u32 %v7656, 4294901760
        %7898 = vmatprep.subr.mxu0 %v7897
        %v7899 = vand.u32 %v7654, 4294901760
        %7900 = vmatpush1.msra.mxu0 %v7899
        %7901 = vmatprep.subr.mxu0 0.0
        %7902 = vmatpush1.msra.mxu0 0.0
        %7903 = vmatprep.subr.mxu0 0.0
        %7904 = vmatpush1.msra.mxu0 0.0
        %7905 = vmatprep.subr.mxu0 0.0
        %7906 = vmatpush1.msra.mxu0 0.0
        %7907 = vmatprep.subr.mxu0 0.0
        %7908 = vmatpush1.msra.mxu0 0.0
        %7909 = vmatprep.subr.mxu0 0.0
        %7910 = vmatpush1.msra.mxu0 0.0
        %7911 = vmatprep.subr.mxu0 0.0
        %7912 = vmatpush1.msra.mxu0 0.0
        %7913 = vmatprep.subr.mxu0 0.0
        %7914 = vmatpush1.msra.mxu0 0.0
        %7915 = vmatprep.subr.mxu0 0.0
        %7916 = vmatpush1.msra.mxu0 0.0
        %7917 = vmatprep.subr.mxu0 0.0
        %7918 = vmatpush1.msra.mxu0 0.0
        %7919 = vmatprep.subr.mxu0 0.0
        %7920 = vmatpush1.msra.mxu0 0.0
        %7921 = vmatprep.subr.mxu0 0.0
        %7922 = vmatpush1.msra.mxu0 0.0
        %7923 = vmatprep.subr.mxu0 0.0
        %7924 = vmatpush1.msra.mxu0 0.0
        %7925 = vmatprep.subr.mxu0 0.0
        %7926 = vmatpush1.msra.mxu0 0.0
        %7927 = vmatprep.subr.mxu0 0.0
        %7928 = vmatpush1.msra.mxu0 0.0
        %7929 = vmatprep.subr.mxu0 0.0
        %7930 = vmatpush1.msra.mxu0 0.0
        %7931 = vmatprep.subr.mxu0 0.0
        %7932 = vmatpush1.msra.mxu0 0.0
        %7933 = vmatprep.subr.mxu0 0.0
        %7934 = vmatpush1.msra.mxu0 0.0
        %7935 = vmatprep.subr.mxu0 0.0
        %7936 = vmatpush1.msra.mxu0 0.0
        %7937 = vmatprep.subr.mxu0 0.0
        %7938 = vmatpush1.msra.mxu0 0.0
        %7939 = vmatprep.subr.mxu0 0.0
        %7940 = vmatpush1.msra.mxu0 0.0
        %7941 = vmatprep.subr.mxu0 0.0
        %7942 = vmatpush1.msra.mxu0 0.0
        %7943 = vmatprep.subr.mxu0 0.0
        %7944 = vmatpush1.msra.mxu0 0.0
        %7945 = vmatprep.subr.mxu0 0.0
        %7946 = vmatpush1.msra.mxu0 0.0
        %7947 = vmatprep.subr.mxu0 0.0
        %7948 = vmatpush1.msra.mxu0 0.0
        %7949 = vmatprep.subr.mxu0 0.0
        %7950 = vmatpush1.msra.mxu0 0.0
        %7951 = vmatprep.subr.mxu0 0.0
        %7952 = vmatpush1.msra.mxu0 0.0
        %7953 = vmatprep.subr.mxu0 0.0
        %7954 = vmatpush1.msra.mxu0 0.0
        %7955 = vmatprep.subr.mxu0 0.0
        %7956 = vmatpush1.msra.mxu0 0.0
        %7957 = vmatprep.subr.mxu0 0.0
        %7958 = vmatpush1.msra.mxu0 0.0
        %7959 = vmatprep.subr.mxu0 0.0
        %7960 = vmatpush1.msra.mxu0 0.0
        %7961 = vmatprep.subr.mxu0 0.0
        %7962 = vmatpush1.msra.mxu0 0.0
        %7963 = vmatprep.mubr.f32.mxu0 0.0
        %v7964 = vand.u32 %v7652, 4294901760
        %v7965 = vsub.f32 %v7652, %v7964
        %v7966 = vand.u32 %v7965, 4294901760
        %7967 = vmatmul.mubr.f32.gmra.mrb[0].mxu0 %v7966
        %v7968 = vpop.f32.mrb[0].mxu0
        %v7969 = vadd.f32 %v7893, %v7968
        %v7970 = vpop.f32.mrb[0].mxu0
        %v7971 = vadd.f32 %v7895, %v7970
        %7972 = vdwg.mxu0
        %v7973 = vand.u32 %v7656, 4294901760
        %v7974 = vsub.f32 %v7656, %v7973
        %v7975 = vand.u32 %v7974, 4294901760
        %7976 = vmatprep.subr.mxu0 %v7975
        %v7977 = vand.u32 %v7654, 4294901760
        %v7978 = vsub.f32 %v7654, %v7977
        %v7979 = vand.u32 %v7978, 4294901760
        %7980 = vmatpush1.msra.mxu0 %v7979
        %7981 = vmatprep.subr.mxu0 0.0
        %7982 = vmatpush1.msra.mxu0 0.0
        %7983 = vmatprep.subr.mxu0 0.0
        %7984 = vmatpush1.msra.mxu0 0.0
        %7985 = vmatprep.subr.mxu0 0.0
        %7986 = vmatpush1.msra.mxu0 0.0
        %7987 = vmatprep.subr.mxu0 0.0
        %7988 = vmatpush1.msra.mxu0 0.0
        %7989 = vmatprep.subr.mxu0 0.0
        %7990 = vmatpush1.msra.mxu0 0.0
        %7991 = vmatprep.subr.mxu0 0.0
        %7992 = vmatpush1.msra.mxu0 0.0
        %7993 = vmatprep.subr.mxu0 0.0
        %7994 = vmatpush1.msra.mxu0 0.0
        %7995 = vmatprep.subr.mxu0 0.0
        %7996 = vmatpush1.msra.mxu0 0.0
        %7997 = vmatprep.subr.mxu0 0.0
        %7998 = vmatpush1.msra.mxu0 0.0
        %7999 = vmatprep.subr.mxu0 0.0
        %8000 = vmatpush1.msra.mxu0 0.0
        %8001 = vmatprep.subr.mxu0 0.0
        %8002 = vmatpush1.msra.mxu0 0.0
        %8003 = vmatprep.subr.mxu0 0.0
        %8004 = vmatpush1.msra.mxu0 0.0
        %8005 = vmatprep.subr.mxu0 0.0
        %8006 = vmatpush1.msra.mxu0 0.0
        %8007 = vmatprep.subr.mxu0 0.0
        %8008 = vmatpush1.msra.mxu0 0.0
        %8009 = vmatprep.subr.mxu0 0.0
        %8010 = vmatpush1.msra.mxu0 0.0
        %8011 = vmatprep.subr.mxu0 0.0
        %8012 = vmatpush1.msra.mxu0 0.0
        %8013 = vmatprep.subr.mxu0 0.0
        %8014 = vmatpush1.msra.mxu0 0.0
        %8015 = vmatprep.subr.mxu0 0.0
        %8016 = vmatpush1.msra.mxu0 0.0
        %8017 = vmatprep.subr.mxu0 0.0
        %8018 = vmatpush1.msra.mxu0 0.0
        %8019 = vmatprep.subr.mxu0 0.0
        %8020 = vmatpush1.msra.mxu0 0.0
        %8021 = vmatprep.subr.mxu0 0.0
        %8022 = vmatpush1.msra.mxu0 0.0
        %8023 = vmatprep.subr.mxu0 0.0
        %8024 = vmatpush1.msra.mxu0 0.0
        %8025 = vmatprep.subr.mxu0 0.0
        %8026 = vmatpush1.msra.mxu0 0.0
        %8027 = vmatprep.subr.mxu0 0.0
        %8028 = vmatpush1.msra.mxu0 0.0
        %8029 = vmatprep.subr.mxu0 0.0
        %8030 = vmatpush1.msra.mxu0 0.0
        %8031 = vmatprep.subr.mxu0 0.0
        %8032 = vmatpush1.msra.mxu0 0.0
        %8033 = vmatprep.subr.mxu0 0.0
        %8034 = vmatpush1.msra.mxu0 0.0
        %8035 = vmatprep.subr.mxu0 0.0
        %8036 = vmatpush1.msra.mxu0 0.0
        %8037 = vmatprep.subr.mxu0 0.0
        %8038 = vmatpush1.msra.mxu0 0.0
        %8039 = vmatprep.subr.mxu0 0.0
        %8040 = vmatpush1.msra.mxu0 0.0
        %8041 = vmatprep.subr.mxu0 0.0
        %8042 = vmatpush1.msra.mxu0 0.0
        %8043 = vmatprep.mubr.f32.mxu0 0.0
        %v8044 = vand.u32 %v7652, 4294901760
        %8045 = vmatmul.mubr.f32.gmra.mrb[0].mxu0 %v8044
        %v8046 = vpop.f32.mrb[0].mxu0
        %v8047 = vadd.f32 %v7969, %v8046
        %v8048 = vpop.f32.mrb[0].mxu0
        %v8049 = vadd.f32 %v7971, %v8048
        %8050 = vdwg.mxu0
        %v8051 = vand.u32 %v7656, 4294901760
        %8052 = vmatprep.subr.mxu0 %v8051
        %v8053 = vand.u32 %v7654, 4294901760
        %8054 = vmatpush1.msra.mxu0 %v8053
        %8055 = vmatprep.subr.mxu0 0.0
        %8056 = vmatpush1.msra.mxu0 0.0
        %8057 = vmatprep.subr.mxu0 0.0
        %8058 = vmatpush1.msra.mxu0 0.0
        %8059 = vmatprep.subr.mxu0 0.0
        %8060 = vmatpush1.msra.mxu0 0.0
        %8061 = vmatprep.subr.mxu0 0.0
        %8062 = vmatpush1.msra.mxu0 0.0
        %8063 = vmatprep.subr.mxu0 0.0
        %8064 = vmatpush1.msra.mxu0 0.0
        %8065 = vmatprep.subr.mxu0 0.0
        %8066 = vmatpush1.msra.mxu0 0.0
        %8067 = vmatprep.subr.mxu0 0.0
        %8068 = vmatpush1.msra.mxu0 0.0
        %8069 = vmatprep.subr.mxu0 0.0
        %8070 = vmatpush1.msra.mxu0 0.0
        %8071 = vmatprep.subr.mxu0 0.0
        %8072 = vmatpush1.msra.mxu0 0.0
        %8073 = vmatprep.subr.mxu0 0.0
        %8074 = vmatpush1.msra.mxu0 0.0
        %8075 = vmatprep.subr.mxu0 0.0
        %8076 = vmatpush1.msra.mxu0 0.0
        %8077 = vmatprep.subr.mxu0 0.0
        %8078 = vmatpush1.msra.mxu0 0.0
        %8079 = vmatprep.subr.mxu0 0.0
        %8080 = vmatpush1.msra.mxu0 0.0
        %8081 = vmatprep.subr.mxu0 0.0
        %8082 = vmatpush1.msra.mxu0 0.0
        %8083 = vmatprep.subr.mxu0 0.0
        %8084 = vmatpush1.msra.mxu0 0.0
        %8085 = vmatprep.subr.mxu0 0.0
        %8086 = vmatpush1.msra.mxu0 0.0
        %8087 = vmatprep.subr.mxu0 0.0
        %8088 = vmatpush1.msra.mxu0 0.0
        %8089 = vmatprep.subr.mxu0 0.0
        %8090 = vmatpush1.msra.mxu0 0.0
        %8091 = vmatprep.subr.mxu0 0.0
        %8092 = vmatpush1.msra.mxu0 0.0
        %8093 = vmatprep.subr.mxu0 0.0
        %8094 = vmatpush1.msra.mxu0 0.0
        %8095 = vmatprep.subr.mxu0 0.0
        %8096 = vmatpush1.msra.mxu0 0.0
        %8097 = vmatprep.subr.mxu0 0.0
        %8098 = vmatpush1.msra.mxu0 0.0
        %8099 = vmatprep.subr.mxu0 0.0
        %8100 = vmatpush1.msra.mxu0 0.0
        %8101 = vmatprep.subr.mxu0 0.0
        %8102 = vmatpush1.msra.mxu0 0.0
        %8103 = vmatprep.subr.mxu0 0.0
        %8104 = vmatpush1.msra.mxu0 0.0
        %8105 = vmatprep.subr.mxu0 0.0
        %8106 = vmatpush1.msra.mxu0 0.0
        %8107 = vmatprep.subr.mxu0 0.0
        %8108 = vmatpush1.msra.mxu0 0.0
        %8109 = vmatprep.subr.mxu0 0.0
        %8110 = vmatpush1.msra.mxu0 0.0
        %8111 = vmatprep.subr.mxu0 0.0
        %8112 = vmatpush1.msra.mxu0 0.0
        %8113 = vmatprep.subr.mxu0 0.0
        %8114 = vmatpush1.msra.mxu0 0.0
        %8115 = vmatprep.subr.mxu0 0.0
        %8116 = vmatpush1.msra.mxu0 0.0
        %8117 = vmatprep.mubr.f32.mxu0 0.0
        %v8118 = vand.u32 %v7652, 4294901760
        %8119 = vmatmul.mubr.f32.gmra.mrb[0].mxu0 %v8118
        %v8120 = vpop.f32.mrb[0].mxu0
        %v8121 = vadd.f32 %v8047, %v8120
        %v8122 = vpop.f32.mrb[0].mxu0
        %v8123 = vadd.f32 %v8049, %v8122
        %8124 = vdwg.mxu0
        %8125 = vmatprep.subr.mxu0 0.0
        %v8126 = vand.u32 %v7658, 4294901760
        %8127 = vmatpush1.msra.mxu0 %v8126
        %8128 = vmatprep.subr.mxu0 0.0
        %8129 = vmatpush1.msra.mxu0 0.0
        %8130 = vmatprep.subr.mxu0 0.0
        %8131 = vmatpush1.msra.mxu0 0.0
        %8132 = vmatprep.subr.mxu0 0.0
        %8133 = vmatpush1.msra.mxu0 0.0
        %8134 = vmatprep.subr.mxu0 0.0
        %8135 = vmatpush1.msra.mxu0 0.0
        %8136 = vmatprep.subr.mxu0 0.0
        %8137 = vmatpush1.msra.mxu0 0.0
        %8138 = vmatprep.subr.mxu0 0.0
        %8139 = vmatpush1.msra.mxu0 0.0
        %8140 = vmatprep.subr.mxu0 0.0
        %8141 = vmatpush1.msra.mxu0 0.0
        %8142 = vmatprep.subr.mxu0 0.0
        %8143 = vmatpush1.msra.mxu0 0.0
        %8144 = vmatprep.subr.mxu0 0.0
        %8145 = vmatpush1.msra.mxu0 0.0
        %8146 = vmatprep.subr.mxu0 0.0
        %8147 = vmatpush1.msra.mxu0 0.0
        %8148 = vmatprep.subr.mxu0 0.0
        %8149 = vmatpush1.msra.mxu0 0.0
        %8150 = vmatprep.subr.mxu0 0.0
        %8151 = vmatpush1.msra.mxu0 0.0
        %8152 = vmatprep.subr.mxu0 0.0
        %8153 = vmatpush1.msra.mxu0 0.0
        %8154 = vmatprep.subr.mxu0 0.0
        %8155 = vmatpush1.msra.mxu0 0.0
        %8156 = vmatprep.subr.mxu0 0.0
        %8157 = vmatpush1.msra.mxu0 0.0
        %8158 = vmatprep.subr.mxu0 0.0
        %8159 = vmatpush1.msra.mxu0 0.0
        %8160 = vmatprep.subr.mxu0 0.0
        %8161 = vmatpush1.msra.mxu0 0.0
        %8162 = vmatprep.subr.mxu0 0.0
        %8163 = vmatpush1.msra.mxu0 0.0
        %8164 = vmatprep.subr.mxu0 0.0
        %8165 = vmatpush1.msra.mxu0 0.0
        %8166 = vmatprep.subr.mxu0 0.0
        %8167 = vmatpush1.msra.mxu0 0.0
        %8168 = vmatprep.subr.mxu0 0.0
        %8169 = vmatpush1.msra.mxu0 0.0
        %8170 = vmatprep.subr.mxu0 0.0
        %8171 = vmatpush1.msra.mxu0 0.0
        %8172 = vmatprep.subr.mxu0 0.0
        %8173 = vmatpush1.msra.mxu0 0.0
        %8174 = vmatprep.subr.mxu0 0.0
        %8175 = vmatpush1.msra.mxu0 0.0
        %8176 = vmatprep.subr.mxu0 0.0
        %8177 = vmatpush1.msra.mxu0 0.0
        %8178 = vmatprep.subr.mxu0 0.0
        %8179 = vmatpush1.msra.mxu0 0.0
        %8180 = vmatprep.subr.mxu0 0.0
        %8181 = vmatpush1.msra.mxu0 0.0
        %8182 = vmatprep.subr.mxu0 0.0
        %8183 = vmatpush1.msra.mxu0 0.0
        %8184 = vmatprep.subr.mxu0 0.0
        %8185 = vmatpush1.msra.mxu0 0.0
        %8186 = vmatprep.subr.mxu0 0.0
        %8187 = vmatpush1.msra.mxu0 0.0
        %8188 = vmatprep.subr.mxu0 0.0
        %8189 = vmatpush1.msra.mxu0 0.0
        %8190 = vmatprep.mubr.f32.mxu0 0.0
        %v8191 = vand.u32 %v7652, 4294901760
        %v8192 = vsub.f32 %v7652, %v8191
        %v8193 = vand.u32 %v8192, 4294901760
        %v8194 = vsub.f32 %v8192, %v8193
        %v8195 = vand.u32 %v8194, 4294901760
        %8196 = vmatmul.mubr.f32.gmra.mrb[0].mxu0 %v8195
        %v8197 = vpop.f32.mrb[0].mxu0
        %v8198 = vadd.f32 0.0, %v8197
        %v8199 = vpop.f32.mrb[0].mxu0
        %8200 = vdwg.mxu0
        %8201 = vmatprep.subr.mxu0 0.0
        %v8202 = vand.u32 %v7658, 4294901760
        %v8203 = vsub.f32 %v7658, %v8202
        %v8204 = vand.u32 %v8203, 4294901760
        %v8205 = vsub.f32 %v8203, %v8204
        %v8206 = vand.u32 %v8205, 4294901760
        %8207 = vmatpush1.msra.mxu0 %v8206
        %8208 = vmatprep.subr.mxu0 0.0
        %8209 = vmatpush1.msra.mxu0 0.0
        %8210 = vmatprep.subr.mxu0 0.0
        %8211 = vmatpush1.msra.mxu0 0.0
        %8212 = vmatprep.subr.mxu0 0.0
        %8213 = vmatpush1.msra.mxu0 0.0
        %8214 = vmatprep.subr.mxu0 0.0
        %8215 = vmatpush1.msra.mxu0 0.0
        %8216 = vmatprep.subr.mxu0 0.0
        %8217 = vmatpush1.msra.mxu0 0.0
        %8218 = vmatprep.subr.mxu0 0.0
        %8219 = vmatpush1.msra.mxu0 0.0
        %8220 = vmatprep.subr.mxu0 0.0
        %8221 = vmatpush1.msra.mxu0 0.0
        %8222 = vmatprep.subr.mxu0 0.0
        %8223 = vmatpush1.msra.mxu0 0.0
        %8224 = vmatprep.subr.mxu0 0.0
        %8225 = vmatpush1.msra.mxu0 0.0
        %8226 = vmatprep.subr.mxu0 0.0
        %8227 = vmatpush1.msra.mxu0 0.0
        %8228 = vmatprep.subr.mxu0 0.0
        %8229 = vmatpush1.msra.mxu0 0.0
        %8230 = vmatprep.subr.mxu0 0.0
        %8231 = vmatpush1.msra.mxu0 0.0
        %8232 = vmatprep.subr.mxu0 0.0
        %8233 = vmatpush1.msra.mxu0 0.0
        %8234 = vmatprep.subr.mxu0 0.0
        %8235 = vmatpush1.msra.mxu0 0.0
        %8236 = vmatprep.subr.mxu0 0.0
        %8237 = vmatpush1.msra.mxu0 0.0
        %8238 = vmatprep.subr.mxu0 0.0
        %8239 = vmatpush1.msra.mxu0 0.0
        %8240 = vmatprep.subr.mxu0 0.0
        %8241 = vmatpush1.msra.mxu0 0.0
        %8242 = vmatprep.subr.mxu0 0.0
        %8243 = vmatpush1.msra.mxu0 0.0
        %8244 = vmatprep.subr.mxu0 0.0
        %8245 = vmatpush1.msra.mxu0 0.0
        %8246 = vmatprep.subr.mxu0 0.0
        %8247 = vmatpush1.msra.mxu0 0.0
        %8248 = vmatprep.subr.mxu0 0.0
        %8249 = vmatpush1.msra.mxu0 0.0
        %8250 = vmatprep.subr.mxu0 0.0
        %8251 = vmatpush1.msra.mxu0 0.0
        %8252 = vmatprep.subr.mxu0 0.0
        %8253 = vmatpush1.msra.mxu0 0.0
        %8254 = vmatprep.subr.mxu0 0.0
        %8255 = vmatpush1.msra.mxu0 0.0
        %8256 = vmatprep.subr.mxu0 0.0
        %8257 = vmatpush1.msra.mxu0 0.0
        %8258 = vmatprep.subr.mxu0 0.0
        %8259 = vmatpush1.msra.mxu0 0.0
        %8260 = vmatprep.subr.mxu0 0.0
        %8261 = vmatpush1.msra.mxu0 0.0
        %8262 = vmatprep.subr.mxu0 0.0
        %8263 = vmatpush1.msra.mxu0 0.0
        %8264 = vmatprep.subr.mxu0 0.0
        %8265 = vmatpush1.msra.mxu0 0.0
        %8266 = vmatprep.subr.mxu0 0.0
        %8267 = vmatpush1.msra.mxu0 0.0
        %8268 = vmatprep.subr.mxu0 0.0
        %8269 = vmatpush1.msra.mxu0 0.0
        %8270 = vmatprep.mubr.f32.mxu0 0.0
        %v8271 = vand.u32 %v7652, 4294901760
        %8272 = vmatmul.mubr.f32.gmra.mrb[0].mxu0 %v8271
        %v8273 = vpop.f32.mrb[0].mxu0
        %v8274 = vadd.f32 %v8198, %v8273
        %v8275 = vpop.f32.mrb[0].mxu0
        %8276 = vdwg.mxu0
        %8277 = vmatprep.subr.mxu0 0.0
        %v8278 = vand.u32 %v7658, 4294901760
        %v8279 = vsub.f32 %v7658, %v8278
        %8280 = vmatpush1.msra.mxu0 %v8279
        %8281 = vmatprep.subr.mxu0 0.0
        %8282 = vmatpush1.msra.mxu0 0.0
        %8283 = vmatprep.subr.mxu0 0.0
        %8284 = vmatpush1.msra.mxu0 0.0
        %8285 = vmatprep.subr.mxu0 0.0
        %8286 = vmatpush1.msra.mxu0 0.0
        %8287 = vmatprep.subr.mxu0 0.0
        %8288 = vmatpush1.msra.mxu0 0.0
        %8289 = vmatprep.subr.mxu0 0.0
        %8290 = vmatpush1.msra.mxu0 0.0
        %8291 = vmatprep.subr.mxu0 0.0
        %8292 = vmatpush1.msra.mxu0 0.0
        %8293 = vmatprep.subr.mxu0 0.0
        %8294 = vmatpush1.msra.mxu0 0.0
        %8295 = vmatprep.subr.mxu0 0.0
        %8296 = vmatpush1.msra.mxu0 0.0
        %8297 = vmatprep.subr.mxu0 0.0
        %8298 = vmatpush1.msra.mxu0 0.0
        %8299 = vmatprep.subr.mxu0 0.0
        %8300 = vmatpush1.msra.mxu0 0.0
        %8301 = vmatprep.subr.mxu0 0.0
        %8302 = vmatpush1.msra.mxu0 0.0
        %8303 = vmatprep.subr.mxu0 0.0
        %8304 = vmatpush1.msra.mxu0 0.0
        %8305 = vmatprep.subr.mxu0 0.0
        %8306 = vmatpush1.msra.mxu0 0.0
        %8307 = vmatprep.subr.mxu0 0.0
        %8308 = vmatpush1.msra.mxu0 0.0
        %8309 = vmatprep.subr.mxu0 0.0
        %8310 = vmatpush1.msra.mxu0 0.0
        %8311 = vmatprep.subr.mxu0 0.0
        %8312 = vmatpush1.msra.mxu0 0.0
        %8313 = vmatprep.subr.mxu0 0.0
        %8314 = vmatpush1.msra.mxu0 0.0
        %8315 = vmatprep.subr.mxu0 0.0
        %8316 = vmatpush1.msra.mxu0 0.0
        %8317 = vmatprep.subr.mxu0 0.0
        %8318 = vmatpush1.msra.mxu0 0.0
        %8319 = vmatprep.subr.mxu0 0.0
        %8320 = vmatpush1.msra.mxu0 0.0
        %8321 = vmatprep.subr.mxu0 0.0
        %8322 = vmatpush1.msra.mxu0 0.0
        %8323 = vmatprep.subr.mxu0 0.0
        %8324 = vmatpush1.msra.mxu0 0.0
        %8325 = vmatprep.subr.mxu0 0.0
        %8326 = vmatpush1.msra.mxu0 0.0
        %8327 = vmatprep.subr.mxu0 0.0
        %8328 = vmatpush1.msra.mxu0 0.0
        %8329 = vmatprep.subr.mxu0 0.0
        %8330 = vmatpush1.msra.mxu0 0.0
        %8331 = vmatprep.subr.mxu0 0.0
        %8332 = vmatpush1.msra.mxu0 0.0
        %8333 = vmatprep.subr.mxu0 0.0
        %8334 = vmatpush1.msra.mxu0 0.0
        %8335 = vmatprep.subr.mxu0 0.0
        %8336 = vmatpush1.msra.mxu0 0.0
        %8337 = vmatprep.subr.mxu0 0.0
        %8338 = vmatpush1.msra.mxu0 0.0
        %8339 = vmatprep.subr.mxu0 0.0
        %8340 = vmatpush1.msra.mxu0 0.0
        %8341 = vmatprep.subr.mxu0 0.0
        %8342 = vmatpush1.msra.mxu0 0.0
        %8343 = vmatprep.mubr.f32.mxu0 0.0
        %v8344 = vand.u32 %v7652, 4294901760
        %v8345 = vsub.f32 %v7652, %v8344
        %8346 = vmatmul.mubr.f32.gmra.mrb[0].mxu0 %v8345
        %v8347 = vpop.f32.mrb[0].mxu0
        %v8348 = vadd.f32 %v8274, %v8347
        %v8349 = vpop.f32.mrb[0].mxu0
        %8350 = vdwg.mxu0
        %8351 = vmatprep.subr.mxu0 0.0
        %v8352 = vand.u32 %v7658, 4294901760
        %8353 = vmatpush1.msra.mxu0 %v8352
        %8354 = vmatprep.subr.mxu0 0.0
        %8355 = vmatpush1.msra.mxu0 0.0
        %8356 = vmatprep.subr.mxu0 0.0
        %8357 = vmatpush1.msra.mxu0 0.0
        %8358 = vmatprep.subr.mxu0 0.0
        %8359 = vmatpush1.msra.mxu0 0.0
        %8360 = vmatprep.subr.mxu0 0.0
        %8361 = vmatpush1.msra.mxu0 0.0
        %8362 = vmatprep.subr.mxu0 0.0
        %8363 = vmatpush1.msra.mxu0 0.0
        %8364 = vmatprep.subr.mxu0 0.0
        %8365 = vmatpush1.msra.mxu0 0.0
        %8366 = vmatprep.subr.mxu0 0.0
        %8367 = vmatpush1.msra.mxu0 0.0
        %8368 = vmatprep.subr.mxu0 0.0
        %8369 = vmatpush1.msra.mxu0 0.0
        %8370 = vmatprep.subr.mxu0 0.0
        %8371 = vmatpush1.msra.mxu0 0.0
        %8372 = vmatprep.subr.mxu0 0.0
        %8373 = vmatpush1.msra.mxu0 0.0
        %8374 = vmatprep.subr.mxu0 0.0
        %8375 = vmatpush1.msra.mxu0 0.0
        %8376 = vmatprep.subr.mxu0 0.0
        %8377 = vmatpush1.msra.mxu0 0.0
        %8378 = vmatprep.subr.mxu0 0.0
        %8379 = vmatpush1.msra.mxu0 0.0
        %8380 = vmatprep.subr.mxu0 0.0
        %8381 = vmatpush1.msra.mxu0 0.0
        %8382 = vmatprep.subr.mxu0 0.0
        %8383 = vmatpush1.msra.mxu0 0.0
        %8384 = vmatprep.subr.mxu0 0.0
        %8385 = vmatpush1.msra.mxu0 0.0
        %8386 = vmatprep.subr.mxu0 0.0
        %8387 = vmatpush1.msra.mxu0 0.0
        %8388 = vmatprep.subr.mxu0 0.0
        %8389 = vmatpush1.msra.mxu0 0.0
        %8390 = vmatprep.subr.mxu0 0.0
        %8391 = vmatpush1.msra.mxu0 0.0
        %8392 = vmatprep.subr.mxu0 0.0
        %8393 = vmatpush1.msra.mxu0 0.0
        %8394 = vmatprep.subr.mxu0 0.0
        %8395 = vmatpush1.msra.mxu0 0.0
        %8396 = vmatprep.subr.mxu0 0.0
        %8397 = vmatpush1.msra.mxu0 0.0
        %8398 = vmatprep.subr.mxu0 0.0
        %8399 = vmatpush1.msra.mxu0 0.0
        %8400 = vmatprep.subr.mxu0 0.0
        %8401 = vmatpush1.msra.mxu0 0.0
        %8402 = vmatprep.subr.mxu0 0.0
        %8403 = vmatpush1.msra.mxu0 0.0
        %8404 = vmatprep.subr.mxu0 0.0
        %8405 = vmatpush1.msra.mxu0 0.0
        %8406 = vmatprep.subr.mxu0 0.0
        %8407 = vmatpush1.msra.mxu0 0.0
        %8408 = vmatprep.subr.mxu0 0.0
        %8409 = vmatpush1.msra.mxu0 0.0
        %8410 = vmatprep.subr.mxu0 0.0
        %8411 = vmatpush1.msra.mxu0 0.0
        %8412 = vmatprep.subr.mxu0 0.0
        %8413 = vmatpush1.msra.mxu0 0.0
        %8414 = vmatprep.subr.mxu0 0.0
        %8415 = vmatpush1.msra.mxu0 0.0
        %8416 = vmatprep.mubr.f32.mxu0 0.0
        %v8417 = vand.u32 %v7652, 4294901760
        %v8418 = vsub.f32 %v7652, %v8417
        %v8419 = vand.u32 %v8418, 4294901760
        %8420 = vmatmul.mubr.f32.gmra.mrb[0].mxu0 %v8419
        %v8421 = vpop.f32.mrb[0].mxu0
        %v8422 = vadd.f32 %v8348, %v8421
        %v8423 = vpop.f32.mrb[0].mxu0
        %8424 = vdwg.mxu0
        %8425 = vmatprep.subr.mxu0 0.0
        %v8426 = vand.u32 %v7658, 4294901760
        %v8427 = vsub.f32 %v7658, %v8426
        %v8428 = vand.u32 %v8427, 4294901760
        %8429 = vmatpush1.msra.mxu0 %v8428
        %8430 = vmatprep.subr.mxu0 0.0
        %8431 = vmatpush1.msra.mxu0 0.0
        %8432 = vmatprep.subr.mxu0 0.0
        %8433 = vmatpush1.msra.mxu0 0.0
        %8434 = vmatprep.subr.mxu0 0.0
        %8435 = vmatpush1.msra.mxu0 0.0
        %8436 = vmatprep.subr.mxu0 0.0
        %8437 = vmatpush1.msra.mxu0 0.0
        %8438 = vmatprep.subr.mxu0 0.0
        %8439 = vmatpush1.msra.mxu0 0.0
        %8440 = vmatprep.subr.mxu0 0.0
        %8441 = vmatpush1.msra.mxu0 0.0
        %8442 = vmatprep.subr.mxu0 0.0
        %8443 = vmatpush1.msra.mxu0 0.0
        %8444 = vmatprep.subr.mxu0 0.0
        %8445 = vmatpush1.msra.mxu0 0.0
        %8446 = vmatprep.subr.mxu0 0.0
        %8447 = vmatpush1.msra.mxu0 0.0
        %8448 = vmatprep.subr.mxu0 0.0
        %8449 = vmatpush1.msra.mxu0 0.0
        %8450 = vmatprep.subr.mxu0 0.0
        %8451 = vmatpush1.msra.mxu0 0.0
        %8452 = vmatprep.subr.mxu0 0.0
        %8453 = vmatpush1.msra.mxu0 0.0
        %8454 = vmatprep.subr.mxu0 0.0
        %8455 = vmatpush1.msra.mxu0 0.0
        %8456 = vmatprep.subr.mxu0 0.0
        %8457 = vmatpush1.msra.mxu0 0.0
        %8458 = vmatprep.subr.mxu0 0.0
        %8459 = vmatpush1.msra.mxu0 0.0
        %8460 = vmatprep.subr.mxu0 0.0
        %8461 = vmatpush1.msra.mxu0 0.0
        %8462 = vmatprep.subr.mxu0 0.0
        %8463 = vmatpush1.msra.mxu0 0.0
        %8464 = vmatprep.subr.mxu0 0.0
        %8465 = vmatpush1.msra.mxu0 0.0
        %8466 = vmatprep.subr.mxu0 0.0
        %8467 = vmatpush1.msra.mxu0 0.0
        %8468 = vmatprep.subr.mxu0 0.0
        %8469 = vmatpush1.msra.mxu0 0.0
        %8470 = vmatprep.subr.mxu0 0.0
        %8471 = vmatpush1.msra.mxu0 0.0
        %8472 = vmatprep.subr.mxu0 0.0
        %8473 = vmatpush1.msra.mxu0 0.0
        %8474 = vmatprep.subr.mxu0 0.0
        %8475 = vmatpush1.msra.mxu0 0.0
        %8476 = vmatprep.subr.mxu0 0.0
        %8477 = vmatpush1.msra.mxu0 0.0
        %8478 = vmatprep.subr.mxu0 0.0
        %8479 = vmatpush1.msra.mxu0 0.0
        %8480 = vmatprep.subr.mxu0 0.0
        %8481 = vmatpush1.msra.mxu0 0.0
        %8482 = vmatprep.subr.mxu0 0.0
        %8483 = vmatpush1.msra.mxu0 0.0
        %8484 = vmatprep.subr.mxu0 0.0
        %8485 = vmatpush1.msra.mxu0 0.0
        %8486 = vmatprep.subr.mxu0 0.0
        %8487 = vmatpush1.msra.mxu0 0.0
        %8488 = vmatprep.subr.mxu0 0.0
        %8489 = vmatpush1.msra.mxu0 0.0
        %8490 = vmatprep.subr.mxu0 0.0
        %8491 = vmatpush1.msra.mxu0 0.0
        %8492 = vmatprep.mubr.f32.mxu0 0.0
        %v8493 = vand.u32 %v7652, 4294901760
        %8494 = vmatmul.mubr.f32.gmra.mrb[0].mxu0 %v8493
        %v8495 = vpop.f32.mrb[0].mxu0
        %v8496 = vadd.f32 %v8422, %v8495
        %v8497 = vpop.f32.mrb[0].mxu0
        %8498 = vdwg.mxu0
        %8499 = vmatprep.subr.mxu0 0.0
        %v8500 = vand.u32 %v7658, 4294901760
        %8501 = vmatpush1.msra.mxu0 %v8500
        %8502 = vmatprep.subr.mxu0 0.0
        %8503 = vmatpush1.msra.mxu0 0.0
        %8504 = vmatprep.subr.mxu0 0.0
        %8505 = vmatpush1.msra.mxu0 0.0
        %8506 = vmatprep.subr.mxu0 0.0
        %8507 = vmatpush1.msra.mxu0 0.0
        %8508 = vmatprep.subr.mxu0 0.0
        %8509 = vmatpush1.msra.mxu0 0.0
        %8510 = vmatprep.subr.mxu0 0.0
        %8511 = vmatpush1.msra.mxu0 0.0
        %8512 = vmatprep.subr.mxu0 0.0
        %8513 = vmatpush1.msra.mxu0 0.0
        %8514 = vmatprep.subr.mxu0 0.0
        %8515 = vmatpush1.msra.mxu0 0.0
        %8516 = vmatprep.subr.mxu0 0.0
        %8517 = vmatpush1.msra.mxu0 0.0
        %8518 = vmatprep.subr.mxu0 0.0
        %8519 = vmatpush1.msra.mxu0 0.0
        %8520 = vmatprep.subr.mxu0 0.0
        %8521 = vmatpush1.msra.mxu0 0.0
        %8522 = vmatprep.subr.mxu0 0.0
        %8523 = vmatpush1.msra.mxu0 0.0
        %8524 = vmatprep.subr.mxu0 0.0
        %8525 = vmatpush1.msra.mxu0 0.0
        %8526 = vmatprep.subr.mxu0 0.0
        %8527 = vmatpush1.msra.mxu0 0.0
        %8528 = vmatprep.subr.mxu0 0.0
        %8529 = vmatpush1.msra.mxu0 0.0
        %8530 = vmatprep.subr.mxu0 0.0
        %8531 = vmatpush1.msra.mxu0 0.0
        %8532 = vmatprep.subr.mxu0 0.0
        %8533 = vmatpush1.msra.mxu0 0.0
        %8534 = vmatprep.subr.mxu0 0.0
        %8535 = vmatpush1.msra.mxu0 0.0
        %8536 = vmatprep.subr.mxu0 0.0
        %8537 = vmatpush1.msra.mxu0 0.0
        %8538 = vmatprep.subr.mxu0 0.0
        %8539 = vmatpush1.msra.mxu0 0.0
        %8540 = vmatprep.subr.mxu0 0.0
        %8541 = vmatpush1.msra.mxu0 0.0
        %8542 = vmatprep.subr.mxu0 0.0
        %8543 = vmatpush1.msra.mxu0 0.0
        %8544 = vmatprep.subr.mxu0 0.0
        %8545 = vmatpush1.msra.mxu0 0.0
        %8546 = vmatprep.subr.mxu0 0.0
        %8547 = vmatpush1.msra.mxu0 0.0
        %8548 = vmatprep.subr.mxu0 0.0
        %8549 = vmatpush1.msra.mxu0 0.0
        %8550 = vmatprep.subr.mxu0 0.0
        %8551 = vmatpush1.msra.mxu0 0.0
        %8552 = vmatprep.subr.mxu0 0.0
        %8553 = vmatpush1.msra.mxu0 0.0
        %8554 = vmatprep.subr.mxu0 0.0
        %8555 = vmatpush1.msra.mxu0 0.0
        %8556 = vmatprep.subr.mxu0 0.0
        %8557 = vmatpush1.msra.mxu0 0.0
        %8558 = vmatprep.subr.mxu0 0.0
        %8559 = vmatpush1.msra.mxu0 0.0
        %8560 = vmatprep.subr.mxu0 0.0
        %8561 = vmatpush1.msra.mxu0 0.0
        %8562 = vmatprep.subr.mxu0 0.0
        %8563 = vmatpush1.msra.mxu0 0.0
        %8564 = vmatprep.mubr.f32.mxu0 0.0
        %v8565 = vand.u32 %v7652, 4294901760
        %8566 = vmatmul.mubr.f32.gmra.mrb[0].mxu0 %v8565
        %v8567 = vpop.f32.mrb[0].mxu0
        %v8568 = vadd.f32 %v8496, %v8567
        %v8569 = vpop.f32.mrb[0].mxu0
        %8570 = vdwg.mxu0
        %v8571 = vadd.f32 %v7632, %v8121
        %v8572 = vadd.f32 %v7633, %v8123
        %v8573 = vadd.f32 %v7634, %v8568
        %8574 = vst [vmem:[%s136] sm:$0xff] %v8571
        %8575 = vst [vmem:[%s136 + $0x8] sm:$0xff] %v8572
        %vm8576 = vcmask 261120
        %8577 = vst.msk [vmem:[%s136 + $0x10] sm:$0xff] %vm8576, %v8573
        %s8578 = sand.u32 %s71, 1
        %s8579 = scalar_lea.sflag [#allocation3], %s8578
        %s8580 = sand.u32 %s71, 1
        %s8581 = smul.addr %s8580, 24
        %s8582 = scalar_lea.vmem [#allocation2], %s8581
        // Predicated region
        $region29: #{tpu_custom_call.1} parent=27 // pred_check
          %p8583 = pneg %p81
        $region30: #{tpu_custom_call.1} parent=27 // pred_check_branch
          %8585 = sbr.rel (%p8583) target = $region32
        $region31: #{tpu_custom_call.1} parent=27 // pred_region
          %s8587 = ssub.s32 384, 384
          %8588 = vsyncadd %s8579, %s8587
          %s8589 = smul.addr %s16, 3
          %s8590 = smul.addr %s8589, 128
          %s8591 = scalar_lea.hbm %s2, %s8590
          %s8593 = sshll.u32 %s8582, 4
          %s8594 = int_to_ptr.vmem [resolvable:$true] %s8593
          %8596 = dma.vmem_to_hbm [thread:$0]  %s8594, 384, %s8591, %s8579
        $region32: #{tpu_custom_call.1} parent=27 // pred_fallthru
          _
      $region28: #{tpu_custom_call.1} parent=5 // pred_fallthru
        _
      %p8597 = scmp.le.s32.totalorder 2, %s11
      // Predicated region
      $region33: #{tpu_custom_call.1} parent=5 // pred_check
        %p8598 = pneg %p8597
      $region34: #{tpu_custom_call.1} parent=5 // pred_check_branch
        %8600 = sbr.rel (%p8598) target = $region36
      $region35: #{tpu_custom_call.1} parent=5 // pred_region
        %s8601 = ssub.s32 %s11, 2
        // Predicated region
        $region37: #{tpu_custom_call.1} parent=35 // pred_check
          %p8602 = pneg %p87
        $region38: #{tpu_custom_call.1} parent=35 // pred_check_branch
          %8604 = sbr.rel (%p8602) target = $region40
        $region39: #{tpu_custom_call.1} parent=35 // pred_region
          %s8605 = sand.u32 %s72, 1
          %s8606 = scalar_lea.sflag [#allocation3], %s8605
          %s8607 = sand.u32 %s72, 1
          %s8608 = smul.addr %s8607, 24
          %s8609 = scalar_lea.vmem [#allocation2], %s8608
          %8610 = dma.done %s8606, 384
        $region40: #{tpu_custom_call.1} parent=35 // pred_fallthru
          _
      $region36: #{tpu_custom_call.1} parent=5 // pred_fallthru
        _
    $region6: #{tpu_custom_call.1} parent=1 // loop_footer
      %s15 = sadd.s32 1, %s11
    $region7: #{tpu_custom_call.1} parent=1 // loop_footer_branch
      %10 = sbr.rel target = $region3
    $region8: #{tpu_custom_call.1} parent=1 // loop_exit
      _
    %8611 = vsyncpa [#allocation3], 1
    %s8612 = scalar_lea.sflag [#allocation3], 1
    %8613 = vsyncpa %s8612, 1

</llo_original>
